<compile_context>
chip_gen: v6e
topology: v6e:2x2x1
jax: 0.10.0
libtpu: 0.0.40
codegen_flags: <defaults>
</compile_context>

<pallas_src>
import functools

import jax
import jax.numpy as jnp
from jax.experimental import pallas as pl
from jax.experimental.pallas import tpu as pltpu

cfg = {'BOT50': ['Bottleneck', [3, 4, 6, 3]],
       'BOT101': ['Bottleneck', [3, 4, 23, 3]],
       'BOT152': ['Bottleneck', [3, 8, 36, 3]]}

_VMEM_LIMIT = 32 * 1024 * 1024


def _cp():
  return pltpu.CompilerParams(dimension_semantics=("parallel",),
                              vmem_limit_bytes=_VMEM_LIMIT)


# ----------------------------------------------------------------------------
# Pallas kernels
# ----------------------------------------------------------------------------
def _mm_kernel(a_ref, b_ref, sb_ref, o_ref, *, relu, relu_a):
  a = a_ref[...]
  if relu_a:
    a = jnp.maximum(a, 0)
  y = jnp.dot(a, b_ref[...], preferred_element_type=jnp.float32)
  y = y * sb_ref[0:1, :] + sb_ref[1:2, :]
  if relu:
    y = jnp.maximum(y, 0.0)
  o_ref[...] = y.astype(o_ref.dtype)


def _mm_res_kernel(a_ref, b_ref, sb_ref, r_ref, o_ref, *, relu, relu_a):
  a = a_ref[...]
  if relu_a:
    a = jnp.maximum(a, 0)
  y = jnp.dot(a, b_ref[...], preferred_element_type=jnp.float32)
  y = y * sb_ref[0:1, :] + sb_ref[1:2, :] + r_ref[...].astype(jnp.float32)
  if relu:
    y = jnp.maximum(y, 0.0)
  o_ref[...] = y.astype(o_ref.dtype)


def _pick_tm(m):
  for t in (512, 256, 128):
    if m % t == 0:
      return t
  return m


def matmul_affine(a, b, scale, bias, residual=None, relu=False, relu_a=False,
                  out_dtype=jnp.bfloat16):
  """(M,K)@(K,N) * scale + bias [+residual] [relu]; bf16 MXU, f32 epilogue."""
  M0, K = a.shape
  N = b.shape[1]
  a = a.astype(jnp.bfloat16)
  b = b.astype(jnp.bfloat16)
  if residual is not None:
    residual = residual.astype(jnp.bfloat16)

  tm = _pick_tm(M0)
  M = M0
  if tm == M0 and M0 > 512:            # keep tiles bounded (v7x: 64 MiB VMEM)
    M = ((M0 + 255) // 256) * 256
    a = jnp.pad(a, ((0, M - M0), (0, 0)))
    if residual is not None:
      residual = jnp.pad(residual, ((0, M - M0), (0, 0)))
    tm = 256

  sb = jnp.stack([scale.astype(jnp.float32), bias.astype(jnp.float32)])
  grid = (M // tm,)
  a_spec = pl.BlockSpec((tm, K), lambda i: (i, 0))
  b_spec = pl.BlockSpec((K, N), lambda i: (0, 0))
  sb_spec = pl.BlockSpec((2, N), lambda i: (0, 0))
  o_spec = pl.BlockSpec((tm, N), lambda i: (i, 0))
  out_shape = jax.ShapeDtypeStruct((M, N), out_dtype)

  if residual is None:
    out = pl.pallas_call(
        functools.partial(_mm_kernel, relu=relu, relu_a=relu_a),
        out_shape=out_shape, grid=grid,
        in_specs=[a_spec, b_spec, sb_spec], out_specs=o_spec,
        compiler_params=_cp(),
    )(a, b, sb)
  else:
    r_spec = pl.BlockSpec((tm, N), lambda i: (i, 0))
    out = pl.pallas_call(
        functools.partial(_mm_res_kernel, relu=relu, relu_a=relu_a),
        out_shape=out_shape, grid=grid,
        in_specs=[a_spec, b_spec, sb_spec, r_spec], out_specs=o_spec,
        compiler_params=_cp(),
    )(a, b, sb, residual)
  return out if M == M0 else out[:M0]


def _conv3x3_kernel(x_ref, w_ref, sb_ref, o_ref, *, offsets, lq, relu):
  cout = w_ref.shape[2]
  acc = jnp.zeros((lq, cout), jnp.float32)
  for t, off in enumerate(offsets):          # 9 statically-shifted matmuls
    xt = x_ref[0, off:off + lq, :]
    acc = acc + jnp.dot(xt, w_ref[t], preferred_element_type=jnp.float32)
  y = acc * sb_ref[0:1, :] + sb_ref[1:2, :]
  if relu:
    y = jnp.maximum(y, 0.0)
  o_ref[0] = y.astype(o_ref.dtype)


def conv3x3_bn(x, w, scale, bias, stride=1, relu=True):
  """3x3 conv (pad=1) + folded BN (+ReLU), NHWC, direct (no im2col expansion).

  The padded image is flattened to (Hp*Wp, Cin) with a (Wp+1) zero guard band
  on both ends so every tap is a static in-bounds row-shifted slice; stride-2
  output is subsampled from the stride-1 result (small extra compute).
  """
  N, H, W, Cin = x.shape
  Cout = w.shape[0]
  Hp, Wp = H + 2, W + 2
  guard = Wp + 1
  Lq = Hp * Wp
  Lx = Lq + 2 * guard

  xp = jnp.pad(x, ((0, 0), (1, 1), (1, 1), (0, 0))).reshape(N, Lq, Cin)
  xe = jnp.pad(xp, ((0, 0), (guard, guard), (0, 0))).astype(jnp.bfloat16)
  wmat = jnp.transpose(w, (2, 3, 1, 0)).reshape(9, Cin, Cout).astype(jnp.bfloat16)
  sb = jnp.stack([scale.astype(jnp.float32), bias.astype(jnp.float32)])
  offsets = [guard + (di - 1) * Wp + (dj - 1)
             for di in range(3) for dj in range(3)]

  y = pl.pallas_call(
      functools.partial(_conv3x3_kernel, offsets=offsets, lq=Lq, relu=relu),
      out_shape=jax.ShapeDtypeStruct((N, Lq, Cout), jnp.bfloat16),
      grid=(N,),
      in_specs=[pl.BlockSpec((1, Lx, Cin), lambda i: (i, 0, 0)),
                pl.BlockSpec((9, Cin, Cout), lambda i: (0, 0, 0)),
                pl.BlockSpec((2, Cout), lambda i: (0, 0))],
      out_specs=pl.BlockSpec((1, Lq, Cout), lambda i: (i, 0, 0)),
      compiler_params=_cp(),
  )(xe, wmat, sb)

  y = y.reshape(N, Hp, Wp, Cout)[:, 1:1 + H, 1:1 + W, :]
  if stride > 1:
    y = y[:, ::stride, ::stride, :]
  return y


def _mhsa_kernel(q_ref, k_ref, v_ref, p_ref, sb_ref, o_ref):
  q = q_ref[0]                       # (heads, L, d)  bf16, d lane-dense
  k = k_ref[0]
  v = v_ref[0]
  p = p_ref[...]                     # (heads, L, d)
  cc = jnp.einsum('hid,hjd->hij', q, k, preferred_element_type=jnp.float32)
  cp_ = jnp.einsum('hid,hjd->hij', p, q, preferred_element_type=jnp.float32)
  e = cc + cp_
  e = e - jnp.max(e, axis=-1, keepdims=True)
  w = jnp.exp(e)
  attn = w * pl.reciprocal(jnp.sum(w, axis=-1, keepdims=True), approx=True)
  out = jnp.einsum('hij,hjd->hid', attn.astype(v.dtype), v,
                   preferred_element_type=jnp.float32)
  out = out * sb_ref[0] + sb_ref[1]  # folded BN2 scale/bias epilogue
  o_ref[0] = out.astype(o_ref.dtype)


def mhsa_attention(q, k, v, pos, scale, bias):
  """q,k,v: (N, heads, L, d); pos: (heads, L, d); scale/bias: (heads*d,)."""
  N, Hh, L, D = q.shape
  q = q.astype(jnp.bfloat16)
  k = k.astype(jnp.bfloat16)
  v = v.astype(jnp.bfloat16)
  pos = pos.astype(jnp.bfloat16)
  sb = jnp.stack([scale.astype(jnp.float32),
                  bias.astype(jnp.float32)]).reshape(2, Hh, 1, D)
  qkv_spec = pl.BlockSpec((1, Hh, L, D), lambda i: (i, 0, 0, 0))
  return pl.pallas_call(
      _mhsa_kernel,
      out_shape=jax.ShapeDtypeStruct((N, Hh, L, D), jnp.bfloat16),
      grid=(N,),
      in_specs=[qkv_spec, qkv_spec, qkv_spec,
                pl.BlockSpec((Hh, L, D), lambda i: (0, 0, 0)),
                pl.BlockSpec((2, Hh, 1, D), lambda i: (0, 0, 0, 0))],
      out_specs=qkv_spec,
      compiler_params=_cp(),
  )(q, k, v, pos, sb)


# ----------------------------------------------------------------------------
# Plain-JAX glue (NHWC-resident; only cheap reshapes / small pools remain)
# ----------------------------------------------------------------------------
def conv1x1_bn(x, w, scale, bias, stride=1, relu=True, relu_a=False,
               residual=None):
  """1x1 conv + folded BN (+residual) (+ReLU) on NHWC via one matmul kernel."""
  if stride > 1:
    x = x[:, ::stride, ::stride, :]
  N, H, W, Cin = x.shape
  Cout = w.shape[0]
  a = x.reshape(N * H * W, Cin)
  b = w.reshape(Cout, Cin).T
  y = matmul_affine(a, b, scale, bias, residual=residual, relu=relu,
                    relu_a=relu_a)
  return y.reshape(N, H, W, Cout)


def mhsa_forward(x, blk):
  """x: (N, H, W, C) NHWC.  Fused q/k/v projection + attention + folded BN2."""
  N, H, W, C = x.shape
  heads = blk['heads']
  d = C // heads
  L = H * W
  flat = x.reshape(N * L, C)
  qkv = matmul_affine(flat, blk['qkv_w'], jnp.ones((3 * C,), jnp.float32),
                      blk['qkv_b'], relu=False)
  qkv = qkv.reshape(N, L, 3, heads, d)
  q = qkv[:, :, 0].transpose(0, 2, 1, 3)      # (N, heads, L, d)
  k = qkv[:, :, 1].transpose(0, 2, 1, 3)
  v = qkv[:, :, 2].transpose(0, 2, 1, 3)
  pos = (blk['rel_h'] + blk['rel_w']).reshape(heads, d, L).transpose(0, 2, 1)
  out = mhsa_attention(q, k, v, pos, blk['bn2_s'], blk['bn2_b'])
  return out.transpose(0, 2, 1, 3).reshape(N, H, W, C)


def bottleneck_forward(x, blk):
  stride, mhsa = blk['stride'], blk['mhsa']
  out = conv1x1_bn(x, blk['conv1_w'], blk['bn1_s'], blk['bn1_b'],
                   stride=1, relu=True)
  if not mhsa:
    out = conv3x3_bn(out, blk['conv2_w'], blk['bn2_s'], blk['bn2_b'],
                     stride=stride, relu=True)
    relu_a = False
  else:
    out = mhsa_forward(out, blk)               # BN2 affine fused in kernel
    if stride == 2:                            # AvgPool2d(2, 2)
      N, H, W, C = out.shape
      out = out.astype(jnp.float32).reshape(
          N, H // 2, 2, W // 2, 2, C).mean(axis=(2, 4)).astype(jnp.bfloat16)
    relu_a = True                              # ReLU fused into conv3 input

  if 'sc_w' in blk:
    sc = conv1x1_bn(x, blk['sc_w'], blk['sc_s'], blk['sc_b'],
                    stride=stride, relu=False)
  else:
    sc = x
  Ns, Hs, Ws, Cs = sc.shape
  res_flat = sc.reshape(Ns * Hs * Ws, Cs)
  out = conv1x1_bn(out, blk['conv3_w'], blk['bn3_s'], blk['bn3_b'],
                   stride=1, relu=True, relu_a=relu_a, residual=res_flat)
  return out


def botnet_forward(x, params):
  out = x.transpose(0, 2, 3, 1)                # one-time NCHW -> NHWC
  out = conv3x3_bn(out, params['conv1_w'], params['bn1_s'], params['bn1_b'],
                   stride=1, relu=True)
  for layer in params['layers']:
    for blk in layer:
      out = bottleneck_forward(out, blk)
  N, H, W, C = out.shape
  pooled = out.astype(jnp.float32).reshape(
      N, H // 4, 4, W // 4, 4, C).mean(axis=(2, 4))          # F.avg_pool2d(.,4)
  pooled = pooled.transpose(0, 3, 1, 2).reshape(N, -1)       # NCHW flatten
  nc = params['lin_w'].shape[0]
  return matmul_affine(pooled, params['lin_w'].T,
                       jnp.ones((nc,), jnp.float32), params['lin_b'],
                       relu=False, out_dtype=jnp.float32)


# ----------------------------------------------------------------------------
# Deterministic parameter initialization (synthetic, no checkpoint)
# ----------------------------------------------------------------------------
def _init_conv(key, cout, cin, k):
  fan_in = cin * k * k
  return jax.random.normal(key, (cout, cin, k, k), jnp.float32) * jnp.sqrt(
      2.0 / fan_in)


def _init_bn(key, c, eps=1e-5):
  k1, k2 = jax.random.split(key)
  gamma = 1.0 + 0.1 * jax.random.normal(k1, (c,), jnp.float32)
  beta = 0.05 * jax.random.normal(k2, (c,), jnp.float32)
  # eval-mode BN with running_mean=0, running_var=1 folded into scale/bias
  scale = gamma / jnp.sqrt(1.0 + eps)
  return scale, beta


def init_params(key, name='BOT50', num_classes=10, resolution=(32, 32)):
  feats = cfg[name][1]
  keys = iter(jax.random.split(key, 8192))
  nk = lambda: next(keys)

  params = {'conv1_w': _init_conv(nk(), 64, 3, 3)}
  params['bn1_s'], params['bn1_b'] = _init_bn(nk(), 64)

  in_planes = 64
  res = list(resolution)
  heads = 4
  layers = []
  layer_defs = [(feats[0], 64, 1, False), (feats[1], 128, 2, False),
                (feats[2], 256, 2, False), (feats[3], 512, 2, True)]
  for feature, planes, stride0, mhsa in layer_defs:
    strides = [stride0] + [1] * (feature - 1)
    blocks = []
    for s in strides:
      blk = {'stride': s, 'mhsa': mhsa, 'heads': heads}
      blk['conv1_w'] = _init_conv(nk(), planes, in_planes, 1)
      blk['bn1_s'], blk['bn1_b'] = _init_bn(nk(), planes)
      if not mhsa:
        blk['conv2_w'] = _init_conv(nk(), planes, planes, 3)
      else:
        d = planes // heads
        ws, bs = [], []
        for _ in range(3):                       # q, k, v (1x1 conv, bias)
          w = jax.random.normal(nk(), (planes, planes),
                                jnp.float32) / jnp.sqrt(planes)
          b = 0.01 * jax.random.normal(nk(), (planes,), jnp.float32)
          ws.append(w.T)                         # (Cin, Cout)
          bs.append(b)
        blk['qkv_w'] = jnp.concatenate(ws, axis=1)       # (C, 3C)
        blk['qkv_b'] = jnp.concatenate(bs, axis=0)       # (3C,)
        blk['rel_h'] = jax.random.normal(nk(), (1, heads, d, 1, res[1]),
                                         jnp.float32)
        blk['rel_w'] = jax.random.normal(nk(), (1, heads, d, res[0], 1),
                                         jnp.float32)
      blk['bn2_s'], blk['bn2_b'] = _init_bn(nk(), planes)
      blk['conv3_w'] = _init_conv(nk(), 4 * planes, planes, 1)
      blk['bn3_s'], blk['bn3_b'] = _init_bn(nk(), 4 * planes)
      if s != 1 or in_planes != 4 * planes:
        blk['sc_w'] = _init_conv(nk(), 4 * planes, in_planes, 1)
        blk['sc_s'], blk['sc_b'] = _init_bn(nk(), 4 * planes)
      blocks.append(blk)
      if s == 2:
        res[0] //= 2
        res[1] //= 2
      in_planes = planes * 4
    layers.append(blocks)
  params['layers'] = layers
  params['lin_w'] = jax.random.normal(
      nk(), (num_classes, 512 * 4), jnp.float32) / jnp.sqrt(512 * 4)
  params['lin_b'] = jnp.zeros((num_classes,), jnp.float32)
  return params


if __name__ == "__main__":
  key = jax.random.PRNGKey(0)
  pkey, xkey = jax.random.split(key)
  params = init_params(pkey, 'BOT50', num_classes=10, resolution=(32, 32))
  x = jax.random.normal(xkey, (2, 3, 32, 32), jnp.float32)   # NCHW like PyTorch
  logits = botnet_forward(x, params)
  logits = jax.block_until_ready(logits)
  assert logits.shape == (2, 10), logits.shape
  assert bool(jnp.all(jnp.isfinite(logits)))
  print("KERNEL_OK")
</pallas_src>

<mosaic_0001>
module attributes {stable_mosaic.version = 11 : i64} {
  func.func @_conv3x3_kernel(%arg0: i32, %arg1: memref<1x1226x3xbf16, #tpu.memory_space<vmem>>, %arg2: memref<9x3x64xbf16, #tpu.memory_space<vmem>>, %arg3: memref<2x64xf32, #tpu.memory_space<vmem>>, %arg4: memref<1x1156x64xbf16, #tpu.memory_space<vmem>>) attributes {dimension_semantics = [#tpu.dimension_semantics<parallel>], iteration_bounds = array<i64: 2>, scalar_prefetch = 0 : i64, scratch_operands = 0 : i64, tpu.core_type = #tpu.core_type<tc>, window_params = [{transform_indices = @transform_0, window_bounds = array<i64: 1, 1226, 3>}, {pipeline_mode = #tpu.pipeline_mode<synchronous>, transform_indices = @transform_1, window_bounds = array<i64: 9, 3, 64>}, {pipeline_mode = #tpu.pipeline_mode<synchronous>, transform_indices = @transform_2, window_bounds = array<i64: 2, 64>}, {transform_indices = @transform_3, window_bounds = array<i64: 1, 1156, 64>}]} {
    %cst = arith.constant 0.000000e+00 : f32
    %0 = vector.broadcast %cst : f32 to vector<1156x64xf32>
    %c0 = arith.constant 0 : index
    %c0_0 = arith.constant 0 : index
    %c0_1 = arith.constant 0 : index
    %1 = vector.load %arg1[%c0, %c0_0, %c0_1] : memref<1x1226x3xbf16, #tpu.memory_space<vmem>>, vector<1x1156x3xbf16>
    %2 = vector.shape_cast %1 : vector<1x1156x3xbf16> to vector<1156x3xbf16>
    %c0_2 = arith.constant 0 : index
    %c0_3 = arith.constant 0 : index
    %c0_4 = arith.constant 0 : index
    %3 = vector.load %arg2[%c0_2, %c0_3, %c0_4] : memref<9x3x64xbf16, #tpu.memory_space<vmem>>, vector<1x3x64xbf16>
    %4 = vector.shape_cast %3 : vector<1x3x64xbf16> to vector<3x64xbf16>
    %cst_5 = arith.constant dense<0.000000e+00> : vector<1156x64xf32>
    %5 = tpu.matmul %2, %4, %cst_5 {dimension_numbers = #tpu.dot_dimension_numbers<[1], [0], [0], [1], [0, 0, 1, 1], [], []>} : vector<1156x3xbf16>, vector<3x64xbf16>, vector<1156x64xf32> -> vector<1156x64xf32>
    %6 = arith.addf %0, %5 : vector<1156x64xf32>
    %c0_6 = arith.constant 0 : index
    %c1 = arith.constant 1 : index
    %c0_7 = arith.constant 0 : index
    %7 = vector.load %arg1[%c0_6, %c1, %c0_7] : memref<1x1226x3xbf16, #tpu.memory_space<vmem>>, vector<1x1156x3xbf16>
    %8 = vector.shape_cast %7 : vector<1x1156x3xbf16> to vector<1156x3xbf16>
    %c1_8 = arith.constant 1 : index
    %c0_9 = arith.constant 0 : index
    %c0_10 = arith.constant 0 : index
    %9 = vector.load %arg2[%c1_8, %c0_9, %c0_10] : memref<9x3x64xbf16, #tpu.memory_space<vmem>>, vector<1x3x64xbf16>
    %10 = vector.shape_cast %9 : vector<1x3x64xbf16> to vector<3x64xbf16>
    %cst_11 = arith.constant dense<0.000000e+00> : vector<1156x64xf32>
    %11 = tpu.matmul %8, %10, %cst_11 {dimension_numbers = #tpu.dot_dimension_numbers<[1], [0], [0], [1], [0, 0, 1, 1], [], []>} : vector<1156x3xbf16>, vector<3x64xbf16>, vector<1156x64xf32> -> vector<1156x64xf32>
    %12 = arith.addf %6, %11 : vector<1156x64xf32>
    %c0_12 = arith.constant 0 : index
    %c2 = arith.constant 2 : index
    %c0_13 = arith.constant 0 : index
    %13 = vector.load %arg1[%c0_12, %c2, %c0_13] : memref<1x1226x3xbf16, #tpu.memory_space<vmem>>, vector<1x1156x3xbf16>
    %14 = vector.shape_cast %13 : vector<1x1156x3xbf16> to vector<1156x3xbf16>
    %c2_14 = arith.constant 2 : index
    %c0_15 = arith.constant 0 : index
    %c0_16 = arith.constant 0 : index
    %15 = vector.load %arg2[%c2_14, %c0_15, %c0_16] : memref<9x3x64xbf16, #tpu.memory_space<vmem>>, vector<1x3x64xbf16>
    %16 = vector.shape_cast %15 : vector<1x3x64xbf16> to vector<3x64xbf16>
    %cst_17 = arith.constant dense<0.000000e+00> : vector<1156x64xf32>
    %17 = tpu.matmul %14, %16, %cst_17 {dimension_numbers = #tpu.dot_dimension_numbers<[1], [0], [0], [1], [0, 0, 1, 1], [], []>} : vector<1156x3xbf16>, vector<3x64xbf16>, vector<1156x64xf32> -> vector<1156x64xf32>
    %18 = arith.addf %12, %17 : vector<1156x64xf32>
    %c0_18 = arith.constant 0 : index
    %c34 = arith.constant 34 : index
    %c0_19 = arith.constant 0 : index
    %19 = vector.load %arg1[%c0_18, %c34, %c0_19] : memref<1x1226x3xbf16, #tpu.memory_space<vmem>>, vector<1x1156x3xbf16>
    %20 = vector.shape_cast %19 : vector<1x1156x3xbf16> to vector<1156x3xbf16>
    %c3 = arith.constant 3 : index
    %c0_20 = arith.constant 0 : index
    %c0_21 = arith.constant 0 : index
    %21 = vector.load %arg2[%c3, %c0_20, %c0_21] : memref<9x3x64xbf16, #tpu.memory_space<vmem>>, vector<1x3x64xbf16>
    %22 = vector.shape_cast %21 : vector<1x3x64xbf16> to vector<3x64xbf16>
    %cst_22 = arith.constant dense<0.000000e+00> : vector<1156x64xf32>
    %23 = tpu.matmul %20, %22, %cst_22 {dimension_numbers = #tpu.dot_dimension_numbers<[1], [0], [0], [1], [0, 0, 1, 1], [], []>} : vector<1156x3xbf16>, vector<3x64xbf16>, vector<1156x64xf32> -> vector<1156x64xf32>
    %24 = arith.addf %18, %23 : vector<1156x64xf32>
    %c0_23 = arith.constant 0 : index
    %c35 = arith.constant 35 : index
    %c0_24 = arith.constant 0 : index
    %25 = vector.load %arg1[%c0_23, %c35, %c0_24] : memref<1x1226x3xbf16, #tpu.memory_space<vmem>>, vector<1x1156x3xbf16>
    %26 = vector.shape_cast %25 : vector<1x1156x3xbf16> to vector<1156x3xbf16>
    %c4 = arith.constant 4 : index
    %c0_25 = arith.constant 0 : index
    %c0_26 = arith.constant 0 : index
    %27 = vector.load %arg2[%c4, %c0_25, %c0_26] : memref<9x3x64xbf16, #tpu.memory_space<vmem>>, vector<1x3x64xbf16>
    %28 = vector.shape_cast %27 : vector<1x3x64xbf16> to vector<3x64xbf16>
    %cst_27 = arith.constant dense<0.000000e+00> : vector<1156x64xf32>
    %29 = tpu.matmul %26, %28, %cst_27 {dimension_numbers = #tpu.dot_dimension_numbers<[1], [0], [0], [1], [0, 0, 1, 1], [], []>} : vector<1156x3xbf16>, vector<3x64xbf16>, vector<1156x64xf32> -> vector<1156x64xf32>
    %30 = arith.addf %24, %29 : vector<1156x64xf32>
    %c0_28 = arith.constant 0 : index
    %c36 = arith.constant 36 : index
    %c0_29 = arith.constant 0 : index
    %31 = vector.load %arg1[%c0_28, %c36, %c0_29] : memref<1x1226x3xbf16, #tpu.memory_space<vmem>>, vector<1x1156x3xbf16>
    %32 = vector.shape_cast %31 : vector<1x1156x3xbf16> to vector<1156x3xbf16>
    %c5 = arith.constant 5 : index
    %c0_30 = arith.constant 0 : index
    %c0_31 = arith.constant 0 : index
    %33 = vector.load %arg2[%c5, %c0_30, %c0_31] : memref<9x3x64xbf16, #tpu.memory_space<vmem>>, vector<1x3x64xbf16>
    %34 = vector.shape_cast %33 : vector<1x3x64xbf16> to vector<3x64xbf16>
    %cst_32 = arith.constant dense<0.000000e+00> : vector<1156x64xf32>
    %35 = tpu.matmul %32, %34, %cst_32 {dimension_numbers = #tpu.dot_dimension_numbers<[1], [0], [0], [1], [0, 0, 1, 1], [], []>} : vector<1156x3xbf16>, vector<3x64xbf16>, vector<1156x64xf32> -> vector<1156x64xf32>
    %36 = arith.addf %30, %35 : vector<1156x64xf32>
    %c0_33 = arith.constant 0 : index
    %c68 = arith.constant 68 : index
    %c0_34 = arith.constant 0 : index
    %37 = vector.load %arg1[%c0_33, %c68, %c0_34] : memref<1x1226x3xbf16, #tpu.memory_space<vmem>>, vector<1x1156x3xbf16>
    %38 = vector.shape_cast %37 : vector<1x1156x3xbf16> to vector<1156x3xbf16>
    %c6 = arith.constant 6 : index
    %c0_35 = arith.constant 0 : index
    %c0_36 = arith.constant 0 : index
    %39 = vector.load %arg2[%c6, %c0_35, %c0_36] : memref<9x3x64xbf16, #tpu.memory_space<vmem>>, vector<1x3x64xbf16>
    %40 = vector.shape_cast %39 : vector<1x3x64xbf16> to vector<3x64xbf16>
    %cst_37 = arith.constant dense<0.000000e+00> : vector<1156x64xf32>
    %41 = tpu.matmul %38, %40, %cst_37 {dimension_numbers = #tpu.dot_dimension_numbers<[1], [0], [0], [1], [0, 0, 1, 1], [], []>} : vector<1156x3xbf16>, vector<3x64xbf16>, vector<1156x64xf32> -> vector<1156x64xf32>
    %42 = arith.addf %36, %41 : vector<1156x64xf32>
    %c0_38 = arith.constant 0 : index
    %c69 = arith.constant 69 : index
    %c0_39 = arith.constant 0 : index
    %43 = vector.load %arg1[%c0_38, %c69, %c0_39] : memref<1x1226x3xbf16, #tpu.memory_space<vmem>>, vector<1x1156x3xbf16>
    %44 = vector.shape_cast %43 : vector<1x1156x3xbf16> to vector<1156x3xbf16>
    %c7 = arith.constant 7 : index
    %c0_40 = arith.constant 0 : index
    %c0_41 = arith.constant 0 : index
    %45 = vector.load %arg2[%c7, %c0_40, %c0_41] : memref<9x3x64xbf16, #tpu.memory_space<vmem>>, vector<1x3x64xbf16>
    %46 = vector.shape_cast %45 : vector<1x3x64xbf16> to vector<3x64xbf16>
    %cst_42 = arith.constant dense<0.000000e+00> : vector<1156x64xf32>
    %47 = tpu.matmul %44, %46, %cst_42 {dimension_numbers = #tpu.dot_dimension_numbers<[1], [0], [0], [1], [0, 0, 1, 1], [], []>} : vector<1156x3xbf16>, vector<3x64xbf16>, vector<1156x64xf32> -> vector<1156x64xf32>
    %48 = arith.addf %42, %47 : vector<1156x64xf32>
    %c0_43 = arith.constant 0 : index
    %c70 = arith.constant 70 : index
    %c0_44 = arith.constant 0 : index
    %49 = vector.load %arg1[%c0_43, %c70, %c0_44] : memref<1x1226x3xbf16, #tpu.memory_space<vmem>>, vector<1x1156x3xbf16>
    %50 = vector.shape_cast %49 : vector<1x1156x3xbf16> to vector<1156x3xbf16>
    %c8 = arith.constant 8 : index
    %c0_45 = arith.constant 0 : index
    %c0_46 = arith.constant 0 : index
    %51 = vector.load %arg2[%c8, %c0_45, %c0_46] : memref<9x3x64xbf16, #tpu.memory_space<vmem>>, vector<1x3x64xbf16>
    %52 = vector.shape_cast %51 : vector<1x3x64xbf16> to vector<3x64xbf16>
    %cst_47 = arith.constant dense<0.000000e+00> : vector<1156x64xf32>
    %53 = tpu.matmul %50, %52, %cst_47 {dimension_numbers = #tpu.dot_dimension_numbers<[1], [0], [0], [1], [0, 0, 1, 1], [], []>} : vector<1156x3xbf16>, vector<3x64xbf16>, vector<1156x64xf32> -> vector<1156x64xf32>
    %54 = arith.addf %48, %53 : vector<1156x64xf32>
    %c0_48 = arith.constant 0 : index
    %c0_49 = arith.constant 0 : index
    %55 = vector.load %arg3[%c0_48, %c0_49] : memref<2x64xf32, #tpu.memory_space<vmem>>, vector<1x64xf32>
    %56 = vector.broadcast %55 : vector<1x64xf32> to vector<1156x64xf32>
    %57 = arith.mulf %54, %56 : vector<1156x64xf32>
    %c1_50 = arith.constant 1 : index
    %c0_51 = arith.constant 0 : index
    %58 = vector.load %arg3[%c1_50, %c0_51] : memref<2x64xf32, #tpu.memory_space<vmem>>, vector<1x64xf32>
    %59 = vector.broadcast %58 : vector<1x64xf32> to vector<1156x64xf32>
    %60 = arith.addf %57, %59 : vector<1156x64xf32>
    %cst_52 = arith.constant 0.000000e+00 : f32
    %61 = vector.broadcast %cst_52 : f32 to vector<1156x64xf32>
    %62 = arith.maximumf %60, %61 : vector<1156x64xf32>
    %63 = arith.truncf %62 : vector<1156x64xf32> to vector<1156x64xbf16>
    %c0_53 = arith.constant 0 : index
    %c0_54 = arith.constant 0 : index
    %c0_55 = arith.constant 0 : index
    %64 = vector.load %arg4[%c0_53, %c0_54, %c0_55] : memref<1x1156x64xbf16, #tpu.memory_space<vmem>>, vector<1x1156x64xbf16>
    %65 = vector.shape_cast %64 : vector<1x1156x64xbf16> to vector<1156x64xbf16>
    %66 = vector.shape_cast %63 : vector<1156x64xbf16> to vector<1x1156x64xbf16>
    tpu.vector_store %arg4[%c0_53, %c0_54, %c0_55], %66 {strides = array<i32>} : memref<1x1156x64xbf16, #tpu.memory_space<vmem>>, vector<1x1156x64xbf16>,
    return
  }
  func.func @transform_0(%arg0: i32) -> (i32, i32, i32) {
    %c0_i32 = arith.constant 0 : i32
    %c0_i32_0 = arith.constant 0 : i32
    %c0_i32_1 = arith.constant 0 : i32
    return %arg0, %c0_i32, %c0_i32_0 : i32, i32, i32
  }
  func.func @transform_1(%arg0: i32) -> (i32, i32, i32) {
    %c0_i32 = arith.constant 0 : i32
    %c0_i32_0 = arith.constant 0 : i32
    %c0_i32_1 = arith.constant 0 : i32
    %c0_i32_2 = arith.constant 0 : i32
    return %c0_i32, %c0_i32_0, %c0_i32_1 : i32, i32, i32
  }
  func.func @transform_2(%arg0: i32) -> (i32, i32) {
    %c0_i32 = arith.constant 0 : i32
    %c0_i32_0 = arith.constant 0 : i32
    %c0_i32_1 = arith.constant 0 : i32
    return %c0_i32, %c0_i32_0 : i32, i32
  }
  func.func @transform_3(%arg0: i32) -> (i32, i32, i32) {
    %c0_i32 = arith.constant 0 : i32
    %c0_i32_0 = arith.constant 0 : i32
    %c0_i32_1 = arith.constant 0 : i32
    return %arg0, %c0_i32, %c0_i32_0 : i32, i32, i32
  }
}

</mosaic_0001>

<llo_original>
// kernel: tpu_custom_call.1
$region0: #{tpu_custom_call.1}
  #allocation0 [shape = 'u32[]', space=smem, size = 0x4, offset = 0x4, fixed_abs, tag = 'smem constant byte address 0x4 - core index']
  #allocation1 [shape = 'u32[144,128]{1,0:T(1,128)}', space=vmem, size = 0x12000, scoped, tag = 'internal scratch']
  %s0 = inlined_call_operand.vmem [shape: bf16[2,1226,3], index: 0, kind: input, shape index: {}]
  %s1 = inlined_call_operand.vmem [shape: bf16[9,3,64], index: 1, kind: input, shape index: {}]
  %s2 = inlined_call_operand.vmem [shape: f32[2,64], index: 2, kind: input, shape index: {}]
  %s3 = inlined_call_operand.vmem [shape: bf16[2,1156,64], index: 3, kind: output, shape index: {}]
  %s4 = sld [smem:[#allocation0]]
  $region45: #{tpu_custom_call.1} parent=0
    _
  %s6 = ssub.s32 1, %s4
  %s7 = scalar_select 0, %s6, %s4
  loop: start=0, step=1, limit=4
  $region2: #{tpu_custom_call.1} parent=0 // loop_pre_header
    _
  $region3: #{tpu_custom_call.1} parent=0 // loop_header
    %s9 = sphi 0, %s13
    %p10 = scmp.ge.s32.totalorder %s9, 4
    %s19 = sphi 0, %s21
    %s22 = sphi 0, %s19
    %s23 = sphi 0, %s22
    %s39 = sphi 0, %s23
    %s43 = sphi 0, %s43
    %s45 = sphi 0, %s43
    %s46 = sphi 0, %s45
    %s60 = sphi 0, %s46
    %s64 = sphi 0, %s64
    %s66 = sphi 0, %s64
    %s67 = sphi 0, %s66
    %s81 = sphi 0, %s67
    %s87 = sphi 0, %s89
    %s90 = sphi 0, %s87
    %s91 = sphi 0, %s90
    %s107 = sphi 0, %s91
  $region4: #{tpu_custom_call.1} parent=0 // loop_header_branch
    %12 = sbr.rel (%p10) target = $region8
  $region5: #{tpu_custom_call.1} parent=0 // loop_body
    %s14 = ssub.s32 %s9, 1
    %s15 = ssub.s32 %s9, 2
    %s16 = sadd.s32 %s9, 1
    %s17 = ssub.s32 %s9, %s16
    %p18 = scmp.eq.s32.totalorder %s17, 0
    %s20 = sadd.s32 %s19, 1
    %s21 = scalar_select %p18, %s19, %s20
    %p24 = pneg %p18
    %p25 = scmp.eq.s32.totalorder %s9, 1
    %p26 = por %p24, %p25
    %p27 = scmp.ne.s32.totalorder %s19, %s22
    %p28 = scmp.eq.s32.totalorder %s9, 0
    %p29 = por %p27, %p28
    %p30 = scmp.ne.s32.totalorder %s19, %s22
    %p31 = scmp.eq.s32.totalorder %s14, 1
    %p32 = por %p30, %p31
    %p33 = scmp.ne.s32.totalorder %s22, %s23
    %p34 = scmp.eq.s32.totalorder %s14, 0
    %p35 = por %p33, %p34
    %p36 = scmp.ne.s32.totalorder %s22, %s23
    %p37 = scmp.eq.s32.totalorder %s15, 1
    %p38 = por %p36, %p37
    %p40 = scmp.ne.s32.totalorder %s23, %s39
    %p41 = scmp.eq.s32.totalorder %s15, 0
    %p42 = por %p40, %p41
    %s44 = sadd.s32 %s43, 1
    %p47 = scmp.eq.s32.totalorder %s9, 1
    %p48 = scmp.ne.s32.totalorder %s43, %s45
    %p49 = scmp.eq.s32.totalorder %s9, 0
    %p50 = por %p48, %p49
    %p51 = scmp.ne.s32.totalorder %s43, %s45
    %p52 = scmp.eq.s32.totalorder %s14, 1
    %p53 = por %p51, %p52
    %p54 = scmp.ne.s32.totalorder %s45, %s46
    %p55 = scmp.eq.s32.totalorder %s14, 0
    %p56 = por %p54, %p55
    %p57 = scmp.ne.s32.totalorder %s45, %s46
    %p58 = scmp.eq.s32.totalorder %s15, 1
    %p59 = por %p57, %p58
    %p61 = scmp.ne.s32.totalorder %s46, %s60
    %p62 = scmp.eq.s32.totalorder %s15, 0
    %p63 = por %p61, %p62
    %s65 = sadd.s32 %s64, 1
    %p68 = scmp.eq.s32.totalorder %s9, 1
    %p69 = scmp.ne.s32.totalorder %s64, %s66
    %p70 = scmp.eq.s32.totalorder %s9, 0
    %p71 = por %p69, %p70
    %p72 = scmp.ne.s32.totalorder %s64, %s66
    %p73 = scmp.eq.s32.totalorder %s14, 1
    %p74 = por %p72, %p73
    %p75 = scmp.ne.s32.totalorder %s66, %s67
    %p76 = scmp.eq.s32.totalorder %s14, 0
    %p77 = por %p75, %p76
    %p78 = scmp.ne.s32.totalorder %s66, %s67
    %p79 = scmp.eq.s32.totalorder %s15, 1
    %p80 = por %p78, %p79
    %p82 = scmp.ne.s32.totalorder %s67, %s81
    %p83 = scmp.eq.s32.totalorder %s15, 0
    %p84 = por %p82, %p83
    %s85 = ssub.s32 %s9, %s16
    %p86 = scmp.eq.s32.totalorder %s85, 0
    %s88 = sadd.s32 %s87, 1
    %s89 = scalar_select %p86, %s87, %s88
    %p92 = pneg %p86
    %p93 = scmp.eq.s32.totalorder %s9, 1
    %p94 = por %p92, %p93
    %p95 = scmp.ne.s32.totalorder %s87, %s90
    %p96 = scmp.eq.s32.totalorder %s9, 0
    %p97 = por %p95, %p96
    %p98 = scmp.ne.s32.totalorder %s87, %s90
    %p99 = scmp.eq.s32.totalorder %s14, 1
    %p100 = por %p98, %p99
    %p101 = scmp.ne.s32.totalorder %s90, %s91
    %p102 = scmp.eq.s32.totalorder %s14, 0
    %p103 = por %p101, %p102
    %p104 = scmp.ne.s32.totalorder %s90, %s91
    %p105 = scmp.eq.s32.totalorder %s15, 1
    %p106 = por %p104, %p105
    %p108 = scmp.ne.s32.totalorder %s91, %s107
    %p109 = scmp.eq.s32.totalorder %s15, 0
    %p110 = por %p108, %p109
    %p111 = scmp.le.s32.totalorder 1, %s9
    %p112 = scmp.lt.s32.totalorder %s9, 3
    %p113 = pnand %p111, %p112
    %p114 = pneg %p113
    // Predicated region
    $region9: #{tpu_custom_call.1} parent=5 // pred_check
      _
    $region10: #{tpu_custom_call.1} parent=5 // pred_check_branch
      %116 = sbr.rel (%p113) target = $region12
    $region11: #{tpu_custom_call.1} parent=5 // pred_region
      %s117 = ssub.s32 %s9, 1
      // Predicated region
      $region13: #{tpu_custom_call.1} parent=11 // pred_check
        %p118 = pneg %p56
      $region14: #{tpu_custom_call.1} parent=11 // pred_check_branch
        %120 = sbr.rel (%p118) target = $region16
      $region15: #{tpu_custom_call.1} parent=11 // pred_region
        _
      $region16: #{tpu_custom_call.1} parent=11 // pred_fallthru
        _
      // Predicated region
      $region17: #{tpu_custom_call.1} parent=11 // pred_check
        %p121 = pneg %p77
      $region18: #{tpu_custom_call.1} parent=11 // pred_check_branch
        %123 = sbr.rel (%p121) target = $region20
      $region19: #{tpu_custom_call.1} parent=11 // pred_region
        _
      $region20: #{tpu_custom_call.1} parent=11 // pred_fallthru
        _
    $region12: #{tpu_custom_call.1} parent=5 // pred_fallthru
      _
    %p124 = scmp.lt.s32.totalorder %s9, 2
    // Predicated region
    $region21: #{tpu_custom_call.1} parent=5 // pred_check
      %p125 = pneg %p124
    $region22: #{tpu_custom_call.1} parent=5 // pred_check_branch
      %127 = sbr.rel (%p125) target = $region24
    $region23: #{tpu_custom_call.1} parent=5 // pred_region
      // Predicated region
      $region25: #{tpu_custom_call.1} parent=23 // pred_check
        %p128 = pneg %p29
      $region26: #{tpu_custom_call.1} parent=23 // pred_check_branch
        %130 = sbr.rel (%p128) target = $region28
      $region27: #{tpu_custom_call.1} parent=23 // pred_region
        %p131 = scmp.lt.s32.totalorder %s9, 1
        %s132 = scalar_select %p131, %s9, 1
        %s133 = smul.addr %s132, 154
        %s134 = smul.addr %s133, 4
        %s135 = scalar_lea.vmem %s0, %s134
      $region28: #{tpu_custom_call.1} parent=23 // pred_fallthru
        _
    $region24: #{tpu_custom_call.1} parent=5 // pred_fallthru
      _
    %p136 = scmp.le.s32.totalorder 1, %s9
    %p137 = scmp.lt.s32.totalorder %s9, 3
    %p138 = pnand %p136, %p137
    %p139 = pneg %p138
    // Predicated region
    $region29: #{tpu_custom_call.1} parent=5 // pred_check
      _
    $region30: #{tpu_custom_call.1} parent=5 // pred_check_branch
      %141 = sbr.rel (%p138) target = $region32
    $region31: #{tpu_custom_call.1} parent=5 // pred_region
      %s142 = ssub.s32 %s9, 1
      %p143 = scmp.lt.s32.totalorder %s14, 1
      %s144 = scalar_select %p143, %s14, 1
      %s145 = smul.addr %s144, 154
      %s146 = smul.addr %s145, 4
      %s147 = scalar_lea.vmem %s0, %s146
      %p148 = pneg %p35
      %p149 = pneg %p32
      %p150 = pneg %p56
      %p151 = pneg %p53
      %p152 = pneg %p77
      %p153 = pneg %p74
      %p154 = pneg %p103
      %p155 = pneg %p100
      %p156 = scmp.lt.s32.totalorder %s14, 1
      %s157 = scalar_select %p156, %s14, 1
      %s158 = smul.addr %s157, 145
      %s159 = smul.addr %s158, 4
      %s160 = scalar_lea.vmem %s3, %s159
      %p161 = scmp.lt.s32.totalorder %s14, 1
      %s162 = scalar_select %p161, %s14, 1
      %s163 = smul.addr %s162, 154
      %s164 = smul.addr %s163, 4
      %s165 = scalar_lea.vmem %s0, %s164
      %p166 = scmp.lt.s32.totalorder %s14, 1
      %s167 = scalar_select %p166, %s14, 1
      %s168 = smul.addr %s167, 145
      %s169 = smul.addr %s168, 4
      %s170 = scalar_lea.vmem %s3, %s169
      %v172 = vld [vmem:[%s165] sm:$0xf]
      %v173 = vld [vmem:[%s165 + $0x4] sm:$0xf]
      %v174 = vld [vmem:[%s165 + $0x8] sm:$0xf]
      %v175 = vld [vmem:[%s165 + $0xc] sm:$0xf]
      %v176 = vld [vmem:[%s165 + $0x10] sm:$0xf]
      %v177 = vld [vmem:[%s165 + $0x14] sm:$0xf]
      %v178 = vld [vmem:[%s165 + $0x18] sm:$0xf]
      %v179 = vld [vmem:[%s165 + $0x1c] sm:$0xf]
      %v180 = vld [vmem:[%s165 + $0x20] sm:$0xf]
      %v181 = vld [vmem:[%s165 + $0x24] sm:$0xf]
      %v182 = vld [vmem:[%s165 + $0x28] sm:$0xf]
      %v183 = vld [vmem:[%s165 + $0x2c] sm:$0xf]
      %v184 = vld [vmem:[%s165 + $0x30] sm:$0xf]
      %v185 = vld [vmem:[%s165 + $0x34] sm:$0xf]
      %v186 = vld [vmem:[%s165 + $0x38] sm:$0xf]
      %v187 = vld [vmem:[%s165 + $0x3c] sm:$0xf]
      %v188 = vld [vmem:[%s165 + $0x40] sm:$0xf]
      %v189 = vld [vmem:[%s165 + $0x44] sm:$0xf]
      %v190 = vld [vmem:[%s165 + $0x48] sm:$0xf]
      %v191 = vld [vmem:[%s165 + $0x4c] sm:$0xf]
      %v192 = vld [vmem:[%s165 + $0x50] sm:$0xf]
      %v193 = vld [vmem:[%s165 + $0x54] sm:$0xf]
      %v194 = vld [vmem:[%s165 + $0x58] sm:$0xf]
      %v195 = vld [vmem:[%s165 + $0x5c] sm:$0xf]
      %v196 = vld [vmem:[%s165 + $0x60] sm:$0xf]
      %v197 = vld [vmem:[%s165 + $0x64] sm:$0xf]
      %v198 = vld [vmem:[%s165 + $0x68] sm:$0xf]
      %v199 = vld [vmem:[%s165 + $0x6c] sm:$0xf]
      %v200 = vld [vmem:[%s165 + $0x70] sm:$0xf]
      %v201 = vld [vmem:[%s165 + $0x74] sm:$0xf]
      %v202 = vld [vmem:[%s165 + $0x78] sm:$0xf]
      %v203 = vld [vmem:[%s165 + $0x7c] sm:$0xf]
      %v204 = vld [vmem:[%s165 + $0x80] sm:$0xf]
      %v205 = vld [vmem:[%s165 + $0x84] sm:$0xf]
      %v206 = vld [vmem:[%s165 + $0x88] sm:$0xf]
      %v207 = vld [vmem:[%s165 + $0x8c] sm:$0xf]
      %v208 = vld [vmem:[%s165 + $0x90] sm:$0xf]
      %v209 = vld [vmem:[%s165 + $0x94] sm:$0xf]
      %v210 = vld [vmem:[%s165 + $0x98] sm:$0xf]
      %v211 = vld [vmem:[%s165 + $0x9c] sm:$0xf]
      %v212 = vld [vmem:[%s165 + $0xa0] sm:$0xf]
      %v213 = vld [vmem:[%s165 + $0xa4] sm:$0xf]
      %v214 = vld [vmem:[%s165 + $0xa8] sm:$0xf]
      %v215 = vld [vmem:[%s165 + $0xac] sm:$0xf]
      %v216 = vld [vmem:[%s165 + $0xb0] sm:$0xf]
      %v217 = vld [vmem:[%s165 + $0xb4] sm:$0xf]
      %v218 = vld [vmem:[%s165 + $0xb8] sm:$0xf]
      %v219 = vld [vmem:[%s165 + $0xbc] sm:$0xf]
      %v220 = vld [vmem:[%s165 + $0xc0] sm:$0xf]
      %v221 = vld [vmem:[%s165 + $0xc4] sm:$0xf]
      %v222 = vld [vmem:[%s165 + $0xc8] sm:$0xf]
      %v223 = vld [vmem:[%s165 + $0xcc] sm:$0xf]
      %v224 = vld [vmem:[%s165 + $0xd0] sm:$0xf]
      %v225 = vld [vmem:[%s165 + $0xd4] sm:$0xf]
      %v226 = vld [vmem:[%s165 + $0xd8] sm:$0xf]
      %v227 = vld [vmem:[%s165 + $0xdc] sm:$0xf]
      %v228 = vld [vmem:[%s165 + $0xe0] sm:$0xf]
      %v229 = vld [vmem:[%s165 + $0xe4] sm:$0xf]
      %v230 = vld [vmem:[%s165 + $0xe8] sm:$0xf]
      %v231 = vld [vmem:[%s165 + $0xec] sm:$0xf]
      %v232 = vld [vmem:[%s165 + $0xf0] sm:$0xf]
      %v233 = vld [vmem:[%s165 + $0xf4] sm:$0xf]
      %v234 = vld [vmem:[%s165 + $0xf8] sm:$0xf]
      %v235 = vld [vmem:[%s165 + $0xfc] sm:$0xf]
      %v236 = vld [vmem:[%s165 + $0x100] sm:$0xf]
      %v237 = vld [vmem:[%s165 + $0x104] sm:$0xf]
      %v238 = vld [vmem:[%s165 + $0x108] sm:$0xf]
      %v239 = vld [vmem:[%s165 + $0x10c] sm:$0xf]
      %v240 = vld [vmem:[%s165 + $0x110] sm:$0xf]
      %v241 = vld [vmem:[%s165 + $0x114] sm:$0xf]
      %v242 = vld [vmem:[%s165 + $0x118] sm:$0xf]
      %v243 = vld [vmem:[%s165 + $0x11c] sm:$0xf]
      %v244 = vld [vmem:[%s165 + $0x120] sm:$0xf]
      %v245 = vld [vmem:[%s165 + $0x124] sm:$0xf]
      %v246 = vld [vmem:[%s165 + $0x128] sm:$0xf]
      %v247 = vld [vmem:[%s165 + $0x12c] sm:$0xf]
      %v248 = vld [vmem:[%s165 + $0x130] sm:$0xf]
      %v249 = vld [vmem:[%s165 + $0x134] sm:$0xf]
      %v250 = vld [vmem:[%s165 + $0x138] sm:$0xf]
      %v251 = vld [vmem:[%s165 + $0x13c] sm:$0xf]
      %v252 = vld [vmem:[%s165 + $0x140] sm:$0xf]
      %v253 = vld [vmem:[%s165 + $0x144] sm:$0xf]
      %v254 = vld [vmem:[%s165 + $0x148] sm:$0xf]
      %v255 = vld [vmem:[%s165 + $0x14c] sm:$0xf]
      %v256 = vld [vmem:[%s165 + $0x150] sm:$0xf]
      %v257 = vld [vmem:[%s165 + $0x154] sm:$0xf]
      %v258 = vld [vmem:[%s165 + $0x158] sm:$0xf]
      %v259 = vld [vmem:[%s165 + $0x15c] sm:$0xf]
      %v260 = vld [vmem:[%s165 + $0x160] sm:$0xf]
      %v261 = vld [vmem:[%s165 + $0x164] sm:$0xf]
      %v262 = vld [vmem:[%s165 + $0x168] sm:$0xf]
      %v263 = vld [vmem:[%s165 + $0x16c] sm:$0xf]
      %v264 = vld [vmem:[%s165 + $0x170] sm:$0xf]
      %v265 = vld [vmem:[%s165 + $0x174] sm:$0xf]
      %v266 = vld [vmem:[%s165 + $0x178] sm:$0xf]
      %v267 = vld [vmem:[%s165 + $0x17c] sm:$0xf]
      %v268 = vld [vmem:[%s165 + $0x180] sm:$0xf]
      %v269 = vld [vmem:[%s165 + $0x184] sm:$0xf]
      %v270 = vld [vmem:[%s165 + $0x188] sm:$0xf]
      %v271 = vld [vmem:[%s165 + $0x18c] sm:$0xf]
      %v272 = vld [vmem:[%s165 + $0x190] sm:$0xf]
      %v273 = vld [vmem:[%s165 + $0x194] sm:$0xf]
      %v274 = vld [vmem:[%s165 + $0x198] sm:$0xf]
      %v275 = vld [vmem:[%s165 + $0x19c] sm:$0xf]
      %v276 = vld [vmem:[%s165 + $0x1a0] sm:$0xf]
      %v277 = vld [vmem:[%s165 + $0x1a4] sm:$0xf]
      %v278 = vld [vmem:[%s165 + $0x1a8] sm:$0xf]
      %v279 = vld [vmem:[%s165 + $0x1ac] sm:$0xf]
      %v280 = vld [vmem:[%s165 + $0x1b0] sm:$0xf]
      %v281 = vld [vmem:[%s165 + $0x1b4] sm:$0xf]
      %v282 = vld [vmem:[%s165 + $0x1b8] sm:$0xf]
      %v283 = vld [vmem:[%s165 + $0x1bc] sm:$0xf]
      %v284 = vld [vmem:[%s165 + $0x1c0] sm:$0xf]
      %v285 = vld [vmem:[%s165 + $0x1c4] sm:$0xf]
      %v286 = vld [vmem:[%s165 + $0x1c8] sm:$0xf]
      %v287 = vld [vmem:[%s165 + $0x1cc] sm:$0xf]
      %v288 = vld [vmem:[%s165 + $0x1d0] sm:$0xf]
      %v289 = vld [vmem:[%s165 + $0x1d4] sm:$0xf]
      %v290 = vld [vmem:[%s165 + $0x1d8] sm:$0xf]
      %v291 = vld [vmem:[%s165 + $0x1dc] sm:$0xf]
      %v292 = vld [vmem:[%s165 + $0x1e0] sm:$0xf]
      %v293 = vld [vmem:[%s165 + $0x1e4] sm:$0xf]
      %v294 = vld [vmem:[%s165 + $0x1e8] sm:$0xf]
      %v295 = vld [vmem:[%s165 + $0x1ec] sm:$0xf]
      %v296 = vld [vmem:[%s165 + $0x1f0] sm:$0xf]
      %v297 = vld [vmem:[%s165 + $0x1f4] sm:$0xf]
      %v298 = vld [vmem:[%s165 + $0x1f8] sm:$0xf]
      %v299 = vld [vmem:[%s165 + $0x1fc] sm:$0xf]
      %v300 = vld [vmem:[%s165 + $0x200] sm:$0xf]
      %v301 = vld [vmem:[%s165 + $0x204] sm:$0xf]
      %v302 = vld [vmem:[%s165 + $0x208] sm:$0xf]
      %v303 = vld [vmem:[%s165 + $0x20c] sm:$0xf]
      %v304 = vld [vmem:[%s165 + $0x210] sm:$0xf]
      %v305 = vld [vmem:[%s165 + $0x214] sm:$0xf]
      %v306 = vld [vmem:[%s165 + $0x218] sm:$0xf]
      %v307 = vld [vmem:[%s165 + $0x21c] sm:$0xf]
      %v308 = vld [vmem:[%s165 + $0x220] sm:$0xf]
      %v309 = vld [vmem:[%s165 + $0x224] sm:$0xf]
      %v310 = vld [vmem:[%s165 + $0x228] sm:$0xf]
      %v311 = vld [vmem:[%s165 + $0x22c] sm:$0xf]
      %v312 = vld [vmem:[%s165 + $0x230] sm:$0xf]
      %v313 = vld [vmem:[%s165 + $0x234] sm:$0xf]
      %v314 = vld [vmem:[%s165 + $0x238] sm:$0xf]
      %v315 = vld [vmem:[%s165 + $0x23c] sm:$0xf]
      %v316 = vld [vmem:[%s165 + $0x240] sm:$0x3]
      %v317 = vld [vmem:[%s1] sm:$0x3]
      %v318 = vld [vmem:[%s165 + $0x240] sm:$0x7]
      %s319 = scalar_lea.vmem %s1, 2
      %v320 = vld [vmem:[%s319] sm:$0x3]
      %v466 = vunpack.c.l.b16 %v172
      %v467 = vunpack.c.l.b16 %v173
      %v468 = vunpack.c.l.b16 %v174
      %v469 = vunpack.c.l.b16 %v175
      %v470 = vunpack.c.l.b16 %v176
      %v471 = vunpack.c.l.b16 %v177
      %v472 = vunpack.c.l.b16 %v178
      %v473 = vunpack.c.l.b16 %v179
      %v474 = vunpack.c.l.b16 %v180
      %v475 = vunpack.c.l.b16 %v181
      %v476 = vunpack.c.l.b16 %v182
      %v477 = vunpack.c.l.b16 %v183
      %v478 = vunpack.c.l.b16 %v184
      %v479 = vunpack.c.l.b16 %v185
      %v480 = vunpack.c.l.b16 %v186
      %v481 = vunpack.c.l.b16 %v187
      %v482 = vunpack.c.l.b16 %v188
      %v483 = vunpack.c.l.b16 %v189
      %v484 = vunpack.c.l.b16 %v190
      %v485 = vunpack.c.l.b16 %v191
      %v486 = vunpack.c.l.b16 %v192
      %v487 = vunpack.c.l.b16 %v193
      %v488 = vunpack.c.l.b16 %v194
      %v489 = vunpack.c.l.b16 %v195
      %v490 = vunpack.c.l.b16 %v196
      %v491 = vunpack.c.l.b16 %v197
      %v492 = vunpack.c.l.b16 %v198
      %v493 = vunpack.c.l.b16 %v199
      %v494 = vunpack.c.l.b16 %v200
      %v495 = vunpack.c.l.b16 %v201
      %v496 = vunpack.c.l.b16 %v202
      %v497 = vunpack.c.l.b16 %v203
      %v498 = vunpack.c.l.b16 %v204
      %v499 = vunpack.c.l.b16 %v205
      %v500 = vunpack.c.l.b16 %v206
      %v501 = vunpack.c.l.b16 %v207
      %v502 = vunpack.c.l.b16 %v208
      %v503 = vunpack.c.l.b16 %v209
      %v504 = vunpack.c.l.b16 %v210
      %v505 = vunpack.c.l.b16 %v211
      %v506 = vunpack.c.l.b16 %v212
      %v507 = vunpack.c.l.b16 %v213
      %v508 = vunpack.c.l.b16 %v214
      %v509 = vunpack.c.l.b16 %v215
      %v510 = vunpack.c.l.b16 %v216
      %v511 = vunpack.c.l.b16 %v217
      %v512 = vunpack.c.l.b16 %v218
      %v513 = vunpack.c.l.b16 %v219
      %v514 = vunpack.c.l.b16 %v220
      %v515 = vunpack.c.l.b16 %v221
      %v516 = vunpack.c.l.b16 %v222
      %v517 = vunpack.c.l.b16 %v223
      %v518 = vunpack.c.l.b16 %v224
      %v519 = vunpack.c.l.b16 %v225
      %v520 = vunpack.c.l.b16 %v226
      %v521 = vunpack.c.l.b16 %v227
      %v522 = vunpack.c.l.b16 %v228
      %v523 = vunpack.c.l.b16 %v229
      %v524 = vunpack.c.l.b16 %v230
      %v525 = vunpack.c.l.b16 %v231
      %v526 = vunpack.c.l.b16 %v232
      %v527 = vunpack.c.l.b16 %v233
      %v528 = vunpack.c.l.b16 %v234
      %v529 = vunpack.c.l.b16 %v235
      %v530 = vunpack.c.l.b16 %v236
      %v531 = vunpack.c.l.b16 %v237
      %v532 = vunpack.c.l.b16 %v238
      %v533 = vunpack.c.l.b16 %v239
      %v534 = vunpack.c.l.b16 %v240
      %v535 = vunpack.c.l.b16 %v241
      %v536 = vunpack.c.l.b16 %v242
      %v537 = vunpack.c.l.b16 %v243
      %v538 = vunpack.c.l.b16 %v244
      %v539 = vunpack.c.l.b16 %v245
      %v540 = vunpack.c.l.b16 %v246
      %v541 = vunpack.c.l.b16 %v247
      %v542 = vunpack.c.l.b16 %v248
      %v543 = vunpack.c.l.b16 %v249
      %v544 = vunpack.c.l.b16 %v250
      %v545 = vunpack.c.l.b16 %v251
      %v546 = vunpack.c.l.b16 %v252
      %v547 = vunpack.c.l.b16 %v253
      %v548 = vunpack.c.l.b16 %v254
      %v549 = vunpack.c.l.b16 %v255
      %v550 = vunpack.c.l.b16 %v256
      %v551 = vunpack.c.l.b16 %v257
      %v552 = vunpack.c.l.b16 %v258
      %v553 = vunpack.c.l.b16 %v259
      %v554 = vunpack.c.l.b16 %v260
      %v555 = vunpack.c.l.b16 %v261
      %v556 = vunpack.c.l.b16 %v262
      %v557 = vunpack.c.l.b16 %v263
      %v558 = vunpack.c.l.b16 %v264
      %v559 = vunpack.c.l.b16 %v265
      %v560 = vunpack.c.l.b16 %v266
      %v561 = vunpack.c.l.b16 %v267
      %v562 = vunpack.c.l.b16 %v268
      %v563 = vunpack.c.l.b16 %v269
      %v564 = vunpack.c.l.b16 %v270
      %v565 = vunpack.c.l.b16 %v271
      %v566 = vunpack.c.l.b16 %v272
      %v567 = vunpack.c.l.b16 %v273
      %v568 = vunpack.c.l.b16 %v274
      %v569 = vunpack.c.l.b16 %v275
      %v570 = vunpack.c.l.b16 %v276
      %v571 = vunpack.c.l.b16 %v277
      %v572 = vunpack.c.l.b16 %v278
      %v573 = vunpack.c.l.b16 %v279
      %v574 = vunpack.c.l.b16 %v280
      %v575 = vunpack.c.l.b16 %v281
      %v576 = vunpack.c.l.b16 %v282
      %v577 = vunpack.c.l.b16 %v283
      %v578 = vunpack.c.l.b16 %v284
      %v579 = vunpack.c.l.b16 %v285
      %v580 = vunpack.c.l.b16 %v286
      %v581 = vunpack.c.l.b16 %v287
      %v582 = vunpack.c.l.b16 %v288
      %v583 = vunpack.c.l.b16 %v289
      %v584 = vunpack.c.l.b16 %v290
      %v585 = vunpack.c.l.b16 %v291
      %v586 = vunpack.c.l.b16 %v292
      %v587 = vunpack.c.l.b16 %v293
      %v588 = vunpack.c.l.b16 %v294
      %v589 = vunpack.c.l.b16 %v295
      %v590 = vunpack.c.l.b16 %v296
      %v591 = vunpack.c.l.b16 %v297
      %v592 = vunpack.c.l.b16 %v298
      %v593 = vunpack.c.l.b16 %v299
      %v594 = vunpack.c.l.b16 %v300
      %v595 = vunpack.c.l.b16 %v301
      %v596 = vunpack.c.l.b16 %v302
      %v597 = vunpack.c.l.b16 %v303
      %v598 = vunpack.c.l.b16 %v304
      %v599 = vunpack.c.l.b16 %v305
      %v600 = vunpack.c.l.b16 %v306
      %v601 = vunpack.c.l.b16 %v307
      %v602 = vunpack.c.l.b16 %v308
      %v603 = vunpack.c.l.b16 %v309
      %v604 = vunpack.c.l.b16 %v310
      %v605 = vunpack.c.l.b16 %v311
      %v606 = vunpack.c.l.b16 %v312
      %v607 = vunpack.c.l.b16 %v313
      %v608 = vunpack.c.l.b16 %v314
      %v609 = vunpack.c.l.b16 %v315
      %v610 = vunpack.c.l.b16 %v318
      %v611 = vpack.c.b16 %v467, %v466
      %v612 = vpack.c.b16 %v469, %v468
      %v613 = vpack.c.b16 %v471, %v470
      %v614 = vpack.c.b16 %v473, %v472
      %v615 = vpack.c.b16 %v475, %v474
      %v616 = vpack.c.b16 %v477, %v476
      %v617 = vpack.c.b16 %v479, %v478
      %v618 = vpack.c.b16 %v481, %v480
      %v619 = vpack.c.b16 %v483, %v482
      %v620 = vpack.c.b16 %v485, %v484
      %v621 = vpack.c.b16 %v487, %v486
      %v622 = vpack.c.b16 %v489, %v488
      %v623 = vpack.c.b16 %v491, %v490
      %v624 = vpack.c.b16 %v493, %v492
      %v625 = vpack.c.b16 %v495, %v494
      %v626 = vpack.c.b16 %v497, %v496
      %v627 = vpack.c.b16 %v499, %v498
      %v628 = vpack.c.b16 %v501, %v500
      %v629 = vpack.c.b16 %v503, %v502
      %v630 = vpack.c.b16 %v505, %v504
      %v631 = vpack.c.b16 %v507, %v506
      %v632 = vpack.c.b16 %v509, %v508
      %v633 = vpack.c.b16 %v511, %v510
      %v634 = vpack.c.b16 %v513, %v512
      %v635 = vpack.c.b16 %v515, %v514
      %v636 = vpack.c.b16 %v517, %v516
      %v637 = vpack.c.b16 %v519, %v518
      %v638 = vpack.c.b16 %v521, %v520
      %v639 = vpack.c.b16 %v523, %v522
      %v640 = vpack.c.b16 %v525, %v524
      %v641 = vpack.c.b16 %v527, %v526
      %v642 = vpack.c.b16 %v529, %v528
      %v643 = vpack.c.b16 %v531, %v530
      %v644 = vpack.c.b16 %v533, %v532
      %v645 = vpack.c.b16 %v535, %v534
      %v646 = vpack.c.b16 %v537, %v536
      %v647 = vpack.c.b16 %v539, %v538
      %v648 = vpack.c.b16 %v541, %v540
      %v649 = vpack.c.b16 %v543, %v542
      %v650 = vpack.c.b16 %v545, %v544
      %v651 = vpack.c.b16 %v547, %v546
      %v652 = vpack.c.b16 %v549, %v548
      %v653 = vpack.c.b16 %v551, %v550
      %v654 = vpack.c.b16 %v553, %v552
      %v655 = vpack.c.b16 %v555, %v554
      %v656 = vpack.c.b16 %v557, %v556
      %v657 = vpack.c.b16 %v559, %v558
      %v658 = vpack.c.b16 %v561, %v560
      %v659 = vpack.c.b16 %v563, %v562
      %v660 = vpack.c.b16 %v565, %v564
      %v661 = vpack.c.b16 %v567, %v566
      %v662 = vpack.c.b16 %v569, %v568
      %v663 = vpack.c.b16 %v571, %v570
      %v664 = vpack.c.b16 %v573, %v572
      %v665 = vpack.c.b16 %v575, %v574
      %v666 = vpack.c.b16 %v577, %v576
      %v667 = vpack.c.b16 %v579, %v578
      %v668 = vpack.c.b16 %v581, %v580
      %v669 = vpack.c.b16 %v583, %v582
      %v670 = vpack.c.b16 %v585, %v584
      %v671 = vpack.c.b16 %v587, %v586
      %v672 = vpack.c.b16 %v589, %v588
      %v673 = vpack.c.b16 %v591, %v590
      %v674 = vpack.c.b16 %v593, %v592
      %v675 = vpack.c.b16 %v595, %v594
      %v676 = vpack.c.b16 %v597, %v596
      %v677 = vpack.c.b16 %v599, %v598
      %v678 = vpack.c.b16 %v601, %v600
      %v679 = vpack.c.b16 %v603, %v602
      %v680 = vpack.c.b16 %v605, %v604
      %v681 = vpack.c.b16 %v607, %v606
      %v682 = vpack.c.b16 %v609, %v608
      %v683 = vpack.c.b16 %v610, %v610
      %vm684 = vsmask.f32 7424
      %v686 = vshrl.u32 %v611, 16
      %v688 = vshll.u32 %v611, 16
      %v690 = vrot.slane %v688, 1
      %v691 = vor.u32 %v686, %v690
      %v693 = vshll.u32 %v612, 16
      %v695 = vrot.slane %v693, 1
      %v696 = vsel %vm684, %v691, %v695
      %v697 = vshrl.u32 %v612, 16
      %v699 = vor.u32 %v697, %v695
      %v701 = vshll.u32 %v613, 16
      %v703 = vrot.slane %v701, 1
      %v704 = vsel %vm684, %v699, %v703
      %v705 = vshrl.u32 %v613, 16
      %v707 = vor.u32 %v705, %v703
      %v709 = vshll.u32 %v614, 16
      %v711 = vrot.slane %v709, 1
      %v712 = vsel %vm684, %v707, %v711
      %v713 = vshrl.u32 %v614, 16
      %v715 = vor.u32 %v713, %v711
      %v717 = vshll.u32 %v615, 16
      %v719 = vrot.slane %v717, 1
      %v720 = vsel %vm684, %v715, %v719
      %v721 = vshrl.u32 %v615, 16
      %v723 = vor.u32 %v721, %v719
      %v725 = vshll.u32 %v616, 16
      %v727 = vrot.slane %v725, 1
      %v728 = vsel %vm684, %v723, %v727
      %v729 = vshrl.u32 %v616, 16
      %v731 = vor.u32 %v729, %v727
      %v733 = vshll.u32 %v617, 16
      %v735 = vrot.slane %v733, 1
      %v736 = vsel %vm684, %v731, %v735
      %v737 = vshrl.u32 %v617, 16
      %v739 = vor.u32 %v737, %v735
      %v741 = vshll.u32 %v618, 16
      %v743 = vrot.slane %v741, 1
      %v744 = vsel %vm684, %v739, %v743
      %v745 = vshrl.u32 %v618, 16
      %v747 = vor.u32 %v745, %v743
      %v749 = vshll.u32 %v619, 16
      %v751 = vrot.slane %v749, 1
      %v752 = vsel %vm684, %v747, %v751
      %v753 = vshrl.u32 %v619, 16
      %v755 = vor.u32 %v753, %v751
      %v757 = vshll.u32 %v620, 16
      %v759 = vrot.slane %v757, 1
      %v760 = vsel %vm684, %v755, %v759
      %v761 = vshrl.u32 %v620, 16
      %v763 = vor.u32 %v761, %v759
      %v765 = vshll.u32 %v621, 16
      %v767 = vrot.slane %v765, 1
      %v768 = vsel %vm684, %v763, %v767
      %v769 = vshrl.u32 %v621, 16
      %v771 = vor.u32 %v769, %v767
      %v773 = vshll.u32 %v622, 16
      %v775 = vrot.slane %v773, 1
      %v776 = vsel %vm684, %v771, %v775
      %v777 = vshrl.u32 %v622, 16
      %v779 = vor.u32 %v777, %v775
      %v781 = vshll.u32 %v623, 16
      %v783 = vrot.slane %v781, 1
      %v784 = vsel %vm684, %v779, %v783
      %v785 = vshrl.u32 %v623, 16
      %v787 = vor.u32 %v785, %v783
      %v789 = vshll.u32 %v624, 16
      %v791 = vrot.slane %v789, 1
      %v792 = vsel %vm684, %v787, %v791
      %v793 = vshrl.u32 %v624, 16
      %v795 = vor.u32 %v793, %v791
      %v797 = vshll.u32 %v625, 16
      %v799 = vrot.slane %v797, 1
      %v800 = vsel %vm684, %v795, %v799
      %v801 = vshrl.u32 %v625, 16
      %v803 = vor.u32 %v801, %v799
      %v805 = vshll.u32 %v626, 16
      %v807 = vrot.slane %v805, 1
      %v808 = vsel %vm684, %v803, %v807
      %v809 = vshrl.u32 %v626, 16
      %v811 = vor.u32 %v809, %v807
      %v813 = vshll.u32 %v627, 16
      %v815 = vrot.slane %v813, 1
      %v816 = vsel %vm684, %v811, %v815
      %v817 = vshrl.u32 %v627, 16
      %v819 = vor.u32 %v817, %v815
      %v821 = vshll.u32 %v628, 16
      %v823 = vrot.slane %v821, 1
      %v824 = vsel %vm684, %v819, %v823
      %v825 = vshrl.u32 %v628, 16
      %v827 = vor.u32 %v825, %v823
      %v829 = vshll.u32 %v629, 16
      %v831 = vrot.slane %v829, 1
      %v832 = vsel %vm684, %v827, %v831
      %v833 = vshrl.u32 %v629, 16
      %v835 = vor.u32 %v833, %v831
      %v837 = vshll.u32 %v630, 16
      %v839 = vrot.slane %v837, 1
      %v840 = vsel %vm684, %v835, %v839
      %v841 = vshrl.u32 %v630, 16
      %v843 = vor.u32 %v841, %v839
      %v845 = vshll.u32 %v631, 16
      %v847 = vrot.slane %v845, 1
      %v848 = vsel %vm684, %v843, %v847
      %v849 = vshrl.u32 %v631, 16
      %v851 = vor.u32 %v849, %v847
      %v853 = vshll.u32 %v632, 16
      %v855 = vrot.slane %v853, 1
      %v856 = vsel %vm684, %v851, %v855
      %v857 = vshrl.u32 %v632, 16
      %v859 = vor.u32 %v857, %v855
      %v861 = vshll.u32 %v633, 16
      %v863 = vrot.slane %v861, 1
      %v864 = vsel %vm684, %v859, %v863
      %v865 = vshrl.u32 %v633, 16
      %v867 = vor.u32 %v865, %v863
      %v869 = vshll.u32 %v634, 16
      %v871 = vrot.slane %v869, 1
      %v872 = vsel %vm684, %v867, %v871
      %v873 = vshrl.u32 %v634, 16
      %v875 = vor.u32 %v873, %v871
      %v877 = vshll.u32 %v635, 16
      %v879 = vrot.slane %v877, 1
      %v880 = vsel %vm684, %v875, %v879
      %v881 = vshrl.u32 %v635, 16
      %v883 = vor.u32 %v881, %v879
      %v885 = vshll.u32 %v636, 16
      %v887 = vrot.slane %v885, 1
      %v888 = vsel %vm684, %v883, %v887
      %v889 = vshrl.u32 %v636, 16
      %v891 = vor.u32 %v889, %v887
      %v893 = vshll.u32 %v637, 16
      %v895 = vrot.slane %v893, 1
      %v896 = vsel %vm684, %v891, %v895
      %v897 = vshrl.u32 %v637, 16
      %v899 = vor.u32 %v897, %v895
      %v901 = vshll.u32 %v638, 16
      %v903 = vrot.slane %v901, 1
      %v904 = vsel %vm684, %v899, %v903
      %v905 = vshrl.u32 %v638, 16
      %v907 = vor.u32 %v905, %v903
      %v909 = vshll.u32 %v639, 16
      %v911 = vrot.slane %v909, 1
      %v912 = vsel %vm684, %v907, %v911
      %v913 = vshrl.u32 %v639, 16
      %v915 = vor.u32 %v913, %v911
      %v917 = vshll.u32 %v640, 16
      %v919 = vrot.slane %v917, 1
      %v920 = vsel %vm684, %v915, %v919
      %v921 = vshrl.u32 %v640, 16
      %v923 = vor.u32 %v921, %v919
      %v925 = vshll.u32 %v641, 16
      %v927 = vrot.slane %v925, 1
      %v928 = vsel %vm684, %v923, %v927
      %v929 = vshrl.u32 %v641, 16
      %v931 = vor.u32 %v929, %v927
      %v933 = vshll.u32 %v642, 16
      %v935 = vrot.slane %v933, 1
      %v936 = vsel %vm684, %v931, %v935
      %v937 = vshrl.u32 %v642, 16
      %v939 = vor.u32 %v937, %v935
      %v941 = vshll.u32 %v643, 16
      %v943 = vrot.slane %v941, 1
      %v944 = vsel %vm684, %v939, %v943
      %v945 = vshrl.u32 %v643, 16
      %v947 = vor.u32 %v945, %v943
      %v949 = vshll.u32 %v644, 16
      %v951 = vrot.slane %v949, 1
      %v952 = vsel %vm684, %v947, %v951
      %v953 = vshrl.u32 %v644, 16
      %v955 = vor.u32 %v953, %v951
      %v957 = vshll.u32 %v645, 16
      %v959 = vrot.slane %v957, 1
      %v960 = vsel %vm684, %v955, %v959
      %v961 = vshrl.u32 %v645, 16
      %v963 = vor.u32 %v961, %v959
      %v965 = vshll.u32 %v646, 16
      %v967 = vrot.slane %v965, 1
      %v968 = vsel %vm684, %v963, %v967
      %v969 = vshrl.u32 %v646, 16
      %v971 = vor.u32 %v969, %v967
      %v973 = vshll.u32 %v647, 16
      %v975 = vrot.slane %v973, 1
      %v976 = vsel %vm684, %v971, %v975
      %v977 = vshrl.u32 %v647, 16
      %v979 = vor.u32 %v977, %v975
      %v981 = vshll.u32 %v648, 16
      %v983 = vrot.slane %v981, 1
      %v984 = vsel %vm684, %v979, %v983
      %v985 = vshrl.u32 %v648, 16
      %v987 = vor.u32 %v985, %v983
      %v989 = vshll.u32 %v649, 16
      %v991 = vrot.slane %v989, 1
      %v992 = vsel %vm684, %v987, %v991
      %v993 = vshrl.u32 %v649, 16
      %v995 = vor.u32 %v993, %v991
      %v997 = vshll.u32 %v650, 16
      %v999 = vrot.slane %v997, 1
      %v1000 = vsel %vm684, %v995, %v999
      %v1001 = vshrl.u32 %v650, 16
      %v1003 = vor.u32 %v1001, %v999
      %v1005 = vshll.u32 %v651, 16
      %v1007 = vrot.slane %v1005, 1
      %v1008 = vsel %vm684, %v1003, %v1007
      %v1009 = vshrl.u32 %v651, 16
      %v1011 = vor.u32 %v1009, %v1007
      %v1013 = vshll.u32 %v652, 16
      %v1015 = vrot.slane %v1013, 1
      %v1016 = vsel %vm684, %v1011, %v1015
      %v1017 = vshrl.u32 %v652, 16
      %v1019 = vor.u32 %v1017, %v1015
      %v1021 = vshll.u32 %v653, 16
      %v1023 = vrot.slane %v1021, 1
      %v1024 = vsel %vm684, %v1019, %v1023
      %v1025 = vshrl.u32 %v653, 16
      %v1027 = vor.u32 %v1025, %v1023
      %v1029 = vshll.u32 %v654, 16
      %v1031 = vrot.slane %v1029, 1
      %v1032 = vsel %vm684, %v1027, %v1031
      %v1033 = vshrl.u32 %v654, 16
      %v1035 = vor.u32 %v1033, %v1031
      %v1037 = vshll.u32 %v655, 16
      %v1039 = vrot.slane %v1037, 1
      %v1040 = vsel %vm684, %v1035, %v1039
      %v1041 = vshrl.u32 %v655, 16
      %v1043 = vor.u32 %v1041, %v1039
      %v1045 = vshll.u32 %v656, 16
      %v1047 = vrot.slane %v1045, 1
      %v1048 = vsel %vm684, %v1043, %v1047
      %v1049 = vshrl.u32 %v656, 16
      %v1051 = vor.u32 %v1049, %v1047
      %v1053 = vshll.u32 %v657, 16
      %v1055 = vrot.slane %v1053, 1
      %v1056 = vsel %vm684, %v1051, %v1055
      %v1057 = vshrl.u32 %v657, 16
      %v1059 = vor.u32 %v1057, %v1055
      %v1061 = vshll.u32 %v658, 16
      %v1063 = vrot.slane %v1061, 1
      %v1064 = vsel %vm684, %v1059, %v1063
      %v1065 = vshrl.u32 %v658, 16
      %v1067 = vor.u32 %v1065, %v1063
      %v1069 = vshll.u32 %v659, 16
      %v1071 = vrot.slane %v1069, 1
      %v1072 = vsel %vm684, %v1067, %v1071
      %v1073 = vshrl.u32 %v659, 16
      %v1075 = vor.u32 %v1073, %v1071
      %v1077 = vshll.u32 %v660, 16
      %v1079 = vrot.slane %v1077, 1
      %v1080 = vsel %vm684, %v1075, %v1079
      %v1081 = vshrl.u32 %v660, 16
      %v1083 = vor.u32 %v1081, %v1079
      %v1085 = vshll.u32 %v661, 16
      %v1087 = vrot.slane %v1085, 1
      %v1088 = vsel %vm684, %v1083, %v1087
      %v1089 = vshrl.u32 %v661, 16
      %v1091 = vor.u32 %v1089, %v1087
      %v1093 = vshll.u32 %v662, 16
      %v1095 = vrot.slane %v1093, 1
      %v1096 = vsel %vm684, %v1091, %v1095
      %v1097 = vshrl.u32 %v662, 16
      %v1099 = vor.u32 %v1097, %v1095
      %v1101 = vshll.u32 %v663, 16
      %v1103 = vrot.slane %v1101, 1
      %v1104 = vsel %vm684, %v1099, %v1103
      %v1105 = vshrl.u32 %v663, 16
      %v1107 = vor.u32 %v1105, %v1103
      %v1109 = vshll.u32 %v664, 16
      %v1111 = vrot.slane %v1109, 1
      %v1112 = vsel %vm684, %v1107, %v1111
      %v1113 = vshrl.u32 %v664, 16
      %v1115 = vor.u32 %v1113, %v1111
      %v1117 = vshll.u32 %v665, 16
      %v1119 = vrot.slane %v1117, 1
      %v1120 = vsel %vm684, %v1115, %v1119
      %v1121 = vshrl.u32 %v665, 16
      %v1123 = vor.u32 %v1121, %v1119
      %v1125 = vshll.u32 %v666, 16
      %v1127 = vrot.slane %v1125, 1
      %v1128 = vsel %vm684, %v1123, %v1127
      %v1129 = vshrl.u32 %v666, 16
      %v1131 = vor.u32 %v1129, %v1127
      %v1133 = vshll.u32 %v667, 16
      %v1135 = vrot.slane %v1133, 1
      %v1136 = vsel %vm684, %v1131, %v1135
      %v1137 = vshrl.u32 %v667, 16
      %v1139 = vor.u32 %v1137, %v1135
      %v1141 = vshll.u32 %v668, 16
      %v1143 = vrot.slane %v1141, 1
      %v1144 = vsel %vm684, %v1139, %v1143
      %v1145 = vshrl.u32 %v668, 16
      %v1147 = vor.u32 %v1145, %v1143
      %v1149 = vshll.u32 %v669, 16
      %v1151 = vrot.slane %v1149, 1
      %v1152 = vsel %vm684, %v1147, %v1151
      %v1153 = vshrl.u32 %v669, 16
      %v1155 = vor.u32 %v1153, %v1151
      %v1157 = vshll.u32 %v670, 16
      %v1159 = vrot.slane %v1157, 1
      %v1160 = vsel %vm684, %v1155, %v1159
      %v1161 = vshrl.u32 %v670, 16
      %v1163 = vor.u32 %v1161, %v1159
      %v1165 = vshll.u32 %v671, 16
      %v1167 = vrot.slane %v1165, 1
      %v1168 = vsel %vm684, %v1163, %v1167
      %v1169 = vshrl.u32 %v671, 16
      %v1171 = vor.u32 %v1169, %v1167
      %v1173 = vshll.u32 %v672, 16
      %v1175 = vrot.slane %v1173, 1
      %v1176 = vsel %vm684, %v1171, %v1175
      %v1177 = vshrl.u32 %v672, 16
      %v1179 = vor.u32 %v1177, %v1175
      %v1181 = vshll.u32 %v673, 16
      %v1183 = vrot.slane %v1181, 1
      %v1184 = vsel %vm684, %v1179, %v1183
      %v1185 = vshrl.u32 %v673, 16
      %v1187 = vor.u32 %v1185, %v1183
      %v1189 = vshll.u32 %v674, 16
      %v1191 = vrot.slane %v1189, 1
      %v1192 = vsel %vm684, %v1187, %v1191
      %v1193 = vshrl.u32 %v674, 16
      %v1195 = vor.u32 %v1193, %v1191
      %v1197 = vshll.u32 %v675, 16
      %v1199 = vrot.slane %v1197, 1
      %v1200 = vsel %vm684, %v1195, %v1199
      %v1201 = vshrl.u32 %v675, 16
      %v1203 = vor.u32 %v1201, %v1199
      %v1205 = vshll.u32 %v676, 16
      %v1207 = vrot.slane %v1205, 1
      %v1208 = vsel %vm684, %v1203, %v1207
      %v1209 = vshrl.u32 %v676, 16
      %v1211 = vor.u32 %v1209, %v1207
      %v1213 = vshll.u32 %v677, 16
      %v1215 = vrot.slane %v1213, 1
      %v1216 = vsel %vm684, %v1211, %v1215
      %v1217 = vshrl.u32 %v677, 16
      %v1219 = vor.u32 %v1217, %v1215
      %v1221 = vshll.u32 %v678, 16
      %v1223 = vrot.slane %v1221, 1
      %v1224 = vsel %vm684, %v1219, %v1223
      %v1225 = vshrl.u32 %v678, 16
      %v1227 = vor.u32 %v1225, %v1223
      %v1229 = vshll.u32 %v679, 16
      %v1231 = vrot.slane %v1229, 1
      %v1232 = vsel %vm684, %v1227, %v1231
      %v1233 = vshrl.u32 %v679, 16
      %v1235 = vor.u32 %v1233, %v1231
      %v1237 = vshll.u32 %v680, 16
      %v1239 = vrot.slane %v1237, 1
      %v1240 = vsel %vm684, %v1235, %v1239
      %v1241 = vshrl.u32 %v680, 16
      %v1243 = vor.u32 %v1241, %v1239
      %v1245 = vshll.u32 %v681, 16
      %v1247 = vrot.slane %v1245, 1
      %v1248 = vsel %vm684, %v1243, %v1247
      %v1249 = vshrl.u32 %v681, 16
      %v1251 = vor.u32 %v1249, %v1247
      %v1253 = vshll.u32 %v682, 16
      %v1255 = vrot.slane %v1253, 1
      %v1256 = vsel %vm684, %v1251, %v1255
      %v1257 = vshrl.u32 %v682, 16
      %v1259 = vor.u32 %v1257, %v1255
      %v1261 = vshll.u32 %v683, 16
      %v1263 = vrot.slane %v1261, 1
      %v1264 = vsel %vm684, %v1259, %v1263
      %v1265 = vshrl.u32 %v683, 16
      %v1267 = vor.u32 %v1265, %v1263
      %vm1268 = vcmask 23552
      %v1270 = vsel %vm1268, %v696, 0
      %v1273 = vsel %vm1268, %v704, 0
      %v1276 = vsel %vm1268, %v712, 0
      %v1279 = vsel %vm1268, %v720, 0
      %v1282 = vsel %vm1268, %v728, 0
      %v1285 = vsel %vm1268, %v736, 0
      %v1288 = vsel %vm1268, %v744, 0
      %v1291 = vsel %vm1268, %v752, 0
      %v1294 = vsel %vm1268, %v760, 0
      %v1297 = vsel %vm1268, %v768, 0
      %v1300 = vsel %vm1268, %v776, 0
      %v1303 = vsel %vm1268, %v784, 0
      %v1306 = vsel %vm1268, %v792, 0
      %v1309 = vsel %vm1268, %v800, 0
      %v1312 = vsel %vm1268, %v808, 0
      %v1315 = vsel %vm1268, %v816, 0
      %v1318 = vsel %vm1268, %v824, 0
      %v1321 = vsel %vm1268, %v832, 0
      %v1324 = vsel %vm1268, %v840, 0
      %v1327 = vsel %vm1268, %v848, 0
      %v1330 = vsel %vm1268, %v856, 0
      %v1333 = vsel %vm1268, %v864, 0
      %v1336 = vsel %vm1268, %v872, 0
      %v1339 = vsel %vm1268, %v880, 0
      %v1342 = vsel %vm1268, %v888, 0
      %v1345 = vsel %vm1268, %v896, 0
      %v1348 = vsel %vm1268, %v904, 0
      %v1351 = vsel %vm1268, %v912, 0
      %v1354 = vsel %vm1268, %v920, 0
      %v1357 = vsel %vm1268, %v928, 0
      %v1360 = vsel %vm1268, %v936, 0
      %v1363 = vsel %vm1268, %v944, 0
      %v1366 = vsel %vm1268, %v952, 0
      %v1369 = vsel %vm1268, %v960, 0
      %v1372 = vsel %vm1268, %v968, 0
      %v1375 = vsel %vm1268, %v976, 0
      %v1378 = vsel %vm1268, %v984, 0
      %v1381 = vsel %vm1268, %v992, 0
      %v1384 = vsel %vm1268, %v1000, 0
      %v1387 = vsel %vm1268, %v1008, 0
      %v1390 = vsel %vm1268, %v1016, 0
      %v1393 = vsel %vm1268, %v1024, 0
      %v1396 = vsel %vm1268, %v1032, 0
      %v1399 = vsel %vm1268, %v1040, 0
      %v1402 = vsel %vm1268, %v1048, 0
      %v1405 = vsel %vm1268, %v1056, 0
      %v1408 = vsel %vm1268, %v1064, 0
      %v1411 = vsel %vm1268, %v1072, 0
      %v1414 = vsel %vm1268, %v1080, 0
      %v1417 = vsel %vm1268, %v1088, 0
      %v1420 = vsel %vm1268, %v1096, 0
      %v1423 = vsel %vm1268, %v1104, 0
      %v1426 = vsel %vm1268, %v1112, 0
      %v1429 = vsel %vm1268, %v1120, 0
      %v1432 = vsel %vm1268, %v1128, 0
      %v1435 = vsel %vm1268, %v1136, 0
      %v1438 = vsel %vm1268, %v1144, 0
      %v1441 = vsel %vm1268, %v1152, 0
      %v1444 = vsel %vm1268, %v1160, 0
      %v1447 = vsel %vm1268, %v1168, 0
      %v1450 = vsel %vm1268, %v1176, 0
      %v1453 = vsel %vm1268, %v1184, 0
      %v1456 = vsel %vm1268, %v1192, 0
      %v1459 = vsel %vm1268, %v1200, 0
      %v1462 = vsel %vm1268, %v1208, 0
      %v1465 = vsel %vm1268, %v1216, 0
      %v1468 = vsel %vm1268, %v1224, 0
      %v1471 = vsel %vm1268, %v1232, 0
      %v1474 = vsel %vm1268, %v1240, 0
      %v1477 = vsel %vm1268, %v1248, 0
      %v1480 = vsel %vm1268, %v1256, 0
      %v1483 = vsel %vm1268, %v1264, 0
      %v1486 = vsel %vm1268, %v1267, 0
      %vm1488 = vcmask 1040384
      %vm1489 = vcmask 1041408
      %v1490 = vsel %vm1488, 4294967295, 65535
      %v1491 = vsel %vm1489, %v1490, 0
      %v1493 = vand.u32 %v320, %v1491
      %1495 = vmatprep.subr.bf16.mxu0 0
      %1496 = vmatpush1.bf16.msra.mxu0 0
      %1497 = vmatprep.subr.bf16.mxu0 0
      %1498 = vmatpush1.bf16.msra.mxu0 0
      %1499 = vmatprep.subr.bf16.mxu0 0
      %1500 = vmatpush1.bf16.msra.mxu0 0
      %1501 = vmatprep.subr.bf16.mxu0 0
      %1502 = vmatpush1.bf16.msra.mxu0 0
      %1503 = vmatprep.subr.bf16.mxu0 0
      %1504 = vmatpush1.bf16.msra.mxu0 0
      %1505 = vmatprep.subr.bf16.mxu0 0
      %1506 = vmatpush1.bf16.msra.mxu0 0
      %1507 = vmatprep.subr.bf16.mxu0 0
      %1508 = vmatpush1.bf16.msra.mxu0 0
      %1509 = vmatprep.subr.bf16.mxu0 0
      %1510 = vmatpush1.bf16.msra.mxu0 %v1493
      %1511 = vmatprep.subr.bf16.mxu0 0
      %1512 = vmatpush2.bf16.msra.mxu0 0
      %1513 = vmatprep.subr.bf16.mxu0 0
      %1514 = vmatpush2.bf16.msra.mxu0 0
      %1515 = vmatprep.subr.bf16.mxu0 0
      %1516 = vmatpush2.bf16.msra.mxu0 0
      %1517 = vmatprep.subr.bf16.mxu0 0
      %1518 = vmatpush2.bf16.msra.mxu0 0
      %1519 = vmatprep.subr.bf16.mxu0 0
      %1520 = vmatpush2.bf16.msra.mxu0 0
      %1521 = vmatprep.subr.bf16.mxu0 0
      %1522 = vmatpush2.bf16.msra.mxu0 0
      %1523 = vmatprep.subr.bf16.mxu0 0
      %1524 = vmatpush2.bf16.msra.mxu0 0
      %1525 = vmatprep.subr.bf16.mxu0 0
      %1526 = vmatpush2.bf16.msra.mxu0 0
      %1527 = vmatprep.mubr.bf16.mxu0 0
      %1528 = vmatmul.mubr.bf16.gmra.mxu0 %v1270
      %v1529 = vpop.f32.mrf.mxu0
      %v1530 = vadd.f32 0.0, %v1529
      %v1531 = vpop.f32.mrf.mxu0
      %v1532 = vpop.f32.mrf.mxu0
      %v1533 = vadd.f32 0.0, %v1532
      %v1534 = vpop.f32.mrf.mxu0
      %1535 = vmatprep.mubr.bf16.mxu0 0
      %1536 = vmatmul.mubr.bf16.gmra.mxu0 %v1273
      %v1537 = vpop.f32.mrf.mxu0
      %v1538 = vadd.f32 0.0, %v1537
      %v1539 = vpop.f32.mrf.mxu0
      %v1540 = vpop.f32.mrf.mxu0
      %v1541 = vadd.f32 0.0, %v1540
      %v1542 = vpop.f32.mrf.mxu0
      %1543 = vmatprep.mubr.bf16.mxu0 0
      %1544 = vmatmul.mubr.bf16.gmra.mxu0 %v1276
      %v1545 = vpop.f32.mrf.mxu0
      %v1546 = vadd.f32 0.0, %v1545
      %v1547 = vpop.f32.mrf.mxu0
      %v1548 = vpop.f32.mrf.mxu0
      %v1549 = vadd.f32 0.0, %v1548
      %v1550 = vpop.f32.mrf.mxu0
      %1551 = vmatprep.mubr.bf16.mxu0 0
      %1552 = vmatmul.mubr.bf16.gmra.mxu0 %v1279
      %v1553 = vpop.f32.mrf.mxu0
      %v1554 = vadd.f32 0.0, %v1553
      %v1555 = vpop.f32.mrf.mxu0
      %v1556 = vpop.f32.mrf.mxu0
      %v1557 = vadd.f32 0.0, %v1556
      %v1558 = vpop.f32.mrf.mxu0
      %1559 = vmatprep.mubr.bf16.mxu0 0
      %1560 = vmatmul.mubr.bf16.gmra.mxu0 %v1282
      %v1561 = vpop.f32.mrf.mxu0
      %v1562 = vadd.f32 0.0, %v1561
      %v1563 = vpop.f32.mrf.mxu0
      %v1564 = vpop.f32.mrf.mxu0
      %v1565 = vadd.f32 0.0, %v1564
      %v1566 = vpop.f32.mrf.mxu0
      %1567 = vmatprep.mubr.bf16.mxu0 0
      %1568 = vmatmul.mubr.bf16.gmra.mxu0 %v1285
      %v1569 = vpop.f32.mrf.mxu0
      %v1570 = vadd.f32 0.0, %v1569
      %v1571 = vpop.f32.mrf.mxu0
      %v1572 = vpop.f32.mrf.mxu0
      %v1573 = vadd.f32 0.0, %v1572
      %v1574 = vpop.f32.mrf.mxu0
      %1575 = vmatprep.mubr.bf16.mxu0 0
      %1576 = vmatmul.mubr.bf16.gmra.mxu0 %v1288
      %v1577 = vpop.f32.mrf.mxu0
      %v1578 = vadd.f32 0.0, %v1577
      %v1579 = vpop.f32.mrf.mxu0
      %v1580 = vpop.f32.mrf.mxu0
      %v1581 = vadd.f32 0.0, %v1580
      %v1582 = vpop.f32.mrf.mxu0
      %1583 = vmatprep.mubr.bf16.mxu0 0
      %1584 = vmatmul.mubr.bf16.gmra.mxu0 %v1291
      %v1585 = vpop.f32.mrf.mxu0
      %v1586 = vadd.f32 0.0, %v1585
      %v1587 = vpop.f32.mrf.mxu0
      %v1588 = vpop.f32.mrf.mxu0
      %v1589 = vadd.f32 0.0, %v1588
      %v1590 = vpop.f32.mrf.mxu0
      %1591 = vmatprep.mubr.bf16.mxu0 0
      %1592 = vmatmul.mubr.bf16.gmra.mxu0 %v1294
      %v1593 = vpop.f32.mrf.mxu0
      %v1594 = vadd.f32 0.0, %v1593
      %v1595 = vpop.f32.mrf.mxu0
      %v1596 = vpop.f32.mrf.mxu0
      %v1597 = vadd.f32 0.0, %v1596
      %v1598 = vpop.f32.mrf.mxu0
      %1599 = vmatprep.mubr.bf16.mxu0 0
      %1600 = vmatmul.mubr.bf16.gmra.mxu0 %v1297
      %v1601 = vpop.f32.mrf.mxu0
      %v1602 = vadd.f32 0.0, %v1601
      %v1603 = vpop.f32.mrf.mxu0
      %v1604 = vpop.f32.mrf.mxu0
      %v1605 = vadd.f32 0.0, %v1604
      %v1606 = vpop.f32.mrf.mxu0
      %1607 = vmatprep.mubr.bf16.mxu0 0
      %1608 = vmatmul.mubr.bf16.gmra.mxu0 %v1300
      %v1609 = vpop.f32.mrf.mxu0
      %v1610 = vadd.f32 0.0, %v1609
      %v1611 = vpop.f32.mrf.mxu0
      %v1612 = vpop.f32.mrf.mxu0
      %v1613 = vadd.f32 0.0, %v1612
      %v1614 = vpop.f32.mrf.mxu0
      %1615 = vmatprep.mubr.bf16.mxu0 0
      %1616 = vmatmul.mubr.bf16.gmra.mxu0 %v1303
      %v1617 = vpop.f32.mrf.mxu0
      %v1618 = vadd.f32 0.0, %v1617
      %v1619 = vpop.f32.mrf.mxu0
      %v1620 = vpop.f32.mrf.mxu0
      %v1621 = vadd.f32 0.0, %v1620
      %v1622 = vpop.f32.mrf.mxu0
      %1623 = vmatprep.mubr.bf16.mxu0 0
      %1624 = vmatmul.mubr.bf16.gmra.mxu0 %v1306
      %v1625 = vpop.f32.mrf.mxu0
      %v1626 = vadd.f32 0.0, %v1625
      %v1627 = vpop.f32.mrf.mxu0
      %v1628 = vpop.f32.mrf.mxu0
      %v1629 = vadd.f32 0.0, %v1628
      %v1630 = vpop.f32.mrf.mxu0
      %1631 = vmatprep.mubr.bf16.mxu0 0
      %1632 = vmatmul.mubr.bf16.gmra.mxu0 %v1309
      %v1633 = vpop.f32.mrf.mxu0
      %v1634 = vadd.f32 0.0, %v1633
      %v1635 = vpop.f32.mrf.mxu0
      %v1636 = vpop.f32.mrf.mxu0
      %v1637 = vadd.f32 0.0, %v1636
      %v1638 = vpop.f32.mrf.mxu0
      %1639 = vmatprep.mubr.bf16.mxu0 0
      %1640 = vmatmul.mubr.bf16.gmra.mxu0 %v1312
      %v1641 = vpop.f32.mrf.mxu0
      %v1642 = vadd.f32 0.0, %v1641
      %v1643 = vpop.f32.mrf.mxu0
      %v1644 = vpop.f32.mrf.mxu0
      %v1645 = vadd.f32 0.0, %v1644
      %v1646 = vpop.f32.mrf.mxu0
      %1647 = vmatprep.mubr.bf16.mxu0 0
      %1648 = vmatmul.mubr.bf16.gmra.mxu0 %v1315
      %v1649 = vpop.f32.mrf.mxu0
      %v1650 = vadd.f32 0.0, %v1649
      %v1651 = vpop.f32.mrf.mxu0
      %v1652 = vpop.f32.mrf.mxu0
      %v1653 = vadd.f32 0.0, %v1652
      %v1654 = vpop.f32.mrf.mxu0
      %1655 = vmatprep.mubr.bf16.mxu0 0
      %1656 = vmatmul.mubr.bf16.gmra.mxu0 %v1318
      %v1657 = vpop.f32.mrf.mxu0
      %v1658 = vadd.f32 0.0, %v1657
      %v1659 = vpop.f32.mrf.mxu0
      %v1660 = vpop.f32.mrf.mxu0
      %v1661 = vadd.f32 0.0, %v1660
      %v1662 = vpop.f32.mrf.mxu0
      %1663 = vmatprep.mubr.bf16.mxu0 0
      %1664 = vmatmul.mubr.bf16.gmra.mxu0 %v1321
      %v1665 = vpop.f32.mrf.mxu0
      %v1666 = vadd.f32 0.0, %v1665
      %v1667 = vpop.f32.mrf.mxu0
      %v1668 = vpop.f32.mrf.mxu0
      %v1669 = vadd.f32 0.0, %v1668
      %v1670 = vpop.f32.mrf.mxu0
      %1671 = vmatprep.mubr.bf16.mxu0 0
      %1672 = vmatmul.mubr.bf16.gmra.mxu0 %v1324
      %v1673 = vpop.f32.mrf.mxu0
      %v1674 = vadd.f32 0.0, %v1673
      %v1675 = vpop.f32.mrf.mxu0
      %v1676 = vpop.f32.mrf.mxu0
      %v1677 = vadd.f32 0.0, %v1676
      %v1678 = vpop.f32.mrf.mxu0
      %1679 = vmatprep.mubr.bf16.mxu0 0
      %1680 = vmatmul.mubr.bf16.gmra.mxu0 %v1327
      %v1681 = vpop.f32.mrf.mxu0
      %v1682 = vadd.f32 0.0, %v1681
      %v1683 = vpop.f32.mrf.mxu0
      %v1684 = vpop.f32.mrf.mxu0
      %v1685 = vadd.f32 0.0, %v1684
      %v1686 = vpop.f32.mrf.mxu0
      %1687 = vmatprep.mubr.bf16.mxu0 0
      %1688 = vmatmul.mubr.bf16.gmra.mxu0 %v1330
      %v1689 = vpop.f32.mrf.mxu0
      %v1690 = vadd.f32 0.0, %v1689
      %v1691 = vpop.f32.mrf.mxu0
      %v1692 = vpop.f32.mrf.mxu0
      %v1693 = vadd.f32 0.0, %v1692
      %v1694 = vpop.f32.mrf.mxu0
      %1695 = vmatprep.mubr.bf16.mxu0 0
      %1696 = vmatmul.mubr.bf16.gmra.mxu0 %v1333
      %v1697 = vpop.f32.mrf.mxu0
      %v1698 = vadd.f32 0.0, %v1697
      %v1699 = vpop.f32.mrf.mxu0
      %v1700 = vpop.f32.mrf.mxu0
      %v1701 = vadd.f32 0.0, %v1700
      %v1702 = vpop.f32.mrf.mxu0
      %1703 = vmatprep.mubr.bf16.mxu0 0
      %1704 = vmatmul.mubr.bf16.gmra.mxu0 %v1336
      %v1705 = vpop.f32.mrf.mxu0
      %v1706 = vadd.f32 0.0, %v1705
      %v1707 = vpop.f32.mrf.mxu0
      %v1708 = vpop.f32.mrf.mxu0
      %v1709 = vadd.f32 0.0, %v1708
      %v1710 = vpop.f32.mrf.mxu0
      %1711 = vmatprep.mubr.bf16.mxu0 0
      %1712 = vmatmul.mubr.bf16.gmra.mxu0 %v1339
      %v1713 = vpop.f32.mrf.mxu0
      %v1714 = vadd.f32 0.0, %v1713
      %v1715 = vpop.f32.mrf.mxu0
      %v1716 = vpop.f32.mrf.mxu0
      %v1717 = vadd.f32 0.0, %v1716
      %v1718 = vpop.f32.mrf.mxu0
      %1719 = vmatprep.mubr.bf16.mxu0 0
      %1720 = vmatmul.mubr.bf16.gmra.mxu0 %v1342
      %v1721 = vpop.f32.mrf.mxu0
      %v1722 = vadd.f32 0.0, %v1721
      %v1723 = vpop.f32.mrf.mxu0
      %v1724 = vpop.f32.mrf.mxu0
      %v1725 = vadd.f32 0.0, %v1724
      %v1726 = vpop.f32.mrf.mxu0
      %1727 = vmatprep.mubr.bf16.mxu0 0
      %1728 = vmatmul.mubr.bf16.gmra.mxu0 %v1345
      %v1729 = vpop.f32.mrf.mxu0
      %v1730 = vadd.f32 0.0, %v1729
      %v1731 = vpop.f32.mrf.mxu0
      %v1732 = vpop.f32.mrf.mxu0
      %v1733 = vadd.f32 0.0, %v1732
      %v1734 = vpop.f32.mrf.mxu0
      %1735 = vmatprep.mubr.bf16.mxu0 0
      %1736 = vmatmul.mubr.bf16.gmra.mxu0 %v1348
      %v1737 = vpop.f32.mrf.mxu0
      %v1738 = vadd.f32 0.0, %v1737
      %v1739 = vpop.f32.mrf.mxu0
      %v1740 = vpop.f32.mrf.mxu0
      %v1741 = vadd.f32 0.0, %v1740
      %v1742 = vpop.f32.mrf.mxu0
      %1743 = vmatprep.mubr.bf16.mxu0 0
      %1744 = vmatmul.mubr.bf16.gmra.mxu0 %v1351
      %v1745 = vpop.f32.mrf.mxu0
      %v1746 = vadd.f32 0.0, %v1745
      %v1747 = vpop.f32.mrf.mxu0
      %v1748 = vpop.f32.mrf.mxu0
      %v1749 = vadd.f32 0.0, %v1748
      %v1750 = vpop.f32.mrf.mxu0
      %1751 = vmatprep.mubr.bf16.mxu0 0
      %1752 = vmatmul.mubr.bf16.gmra.mxu0 %v1354
      %v1753 = vpop.f32.mrf.mxu0
      %v1754 = vadd.f32 0.0, %v1753
      %v1755 = vpop.f32.mrf.mxu0
      %v1756 = vpop.f32.mrf.mxu0
      %v1757 = vadd.f32 0.0, %v1756
      %v1758 = vpop.f32.mrf.mxu0
      %1759 = vmatprep.mubr.bf16.mxu0 0
      %1760 = vmatmul.mubr.bf16.gmra.mxu0 %v1357
      %v1761 = vpop.f32.mrf.mxu0
      %v1762 = vadd.f32 0.0, %v1761
      %v1763 = vpop.f32.mrf.mxu0
      %v1764 = vpop.f32.mrf.mxu0
      %v1765 = vadd.f32 0.0, %v1764
      %v1766 = vpop.f32.mrf.mxu0
      %1767 = vmatprep.mubr.bf16.mxu0 0
      %1768 = vmatmul.mubr.bf16.gmra.mxu0 %v1360
      %v1769 = vpop.f32.mrf.mxu0
      %v1770 = vadd.f32 0.0, %v1769
      %v1771 = vpop.f32.mrf.mxu0
      %v1772 = vpop.f32.mrf.mxu0
      %v1773 = vadd.f32 0.0, %v1772
      %v1774 = vpop.f32.mrf.mxu0
      %1775 = vmatprep.mubr.bf16.mxu0 0
      %1776 = vmatmul.mubr.bf16.gmra.mxu0 %v1363
      %v1777 = vpop.f32.mrf.mxu0
      %v1778 = vadd.f32 0.0, %v1777
      %v1779 = vpop.f32.mrf.mxu0
      %v1780 = vpop.f32.mrf.mxu0
      %v1781 = vadd.f32 0.0, %v1780
      %v1782 = vpop.f32.mrf.mxu0
      %1783 = vmatprep.mubr.bf16.mxu0 0
      %1784 = vmatmul.mubr.bf16.gmra.mxu0 %v1366
      %v1785 = vpop.f32.mrf.mxu0
      %v1786 = vadd.f32 0.0, %v1785
      %v1787 = vpop.f32.mrf.mxu0
      %v1788 = vpop.f32.mrf.mxu0
      %v1789 = vadd.f32 0.0, %v1788
      %v1790 = vpop.f32.mrf.mxu0
      %1791 = vmatprep.mubr.bf16.mxu0 0
      %1792 = vmatmul.mubr.bf16.gmra.mxu0 %v1369
      %v1793 = vpop.f32.mrf.mxu0
      %v1794 = vadd.f32 0.0, %v1793
      %v1795 = vpop.f32.mrf.mxu0
      %v1796 = vpop.f32.mrf.mxu0
      %v1797 = vadd.f32 0.0, %v1796
      %v1798 = vpop.f32.mrf.mxu0
      %1799 = vmatprep.mubr.bf16.mxu0 0
      %1800 = vmatmul.mubr.bf16.gmra.mxu0 %v1372
      %v1801 = vpop.f32.mrf.mxu0
      %v1802 = vadd.f32 0.0, %v1801
      %v1803 = vpop.f32.mrf.mxu0
      %v1804 = vpop.f32.mrf.mxu0
      %v1805 = vadd.f32 0.0, %v1804
      %v1806 = vpop.f32.mrf.mxu0
      %1807 = vmatprep.mubr.bf16.mxu0 0
      %1808 = vmatmul.mubr.bf16.gmra.mxu0 %v1375
      %v1809 = vpop.f32.mrf.mxu0
      %v1810 = vadd.f32 0.0, %v1809
      %v1811 = vpop.f32.mrf.mxu0
      %v1812 = vpop.f32.mrf.mxu0
      %v1813 = vadd.f32 0.0, %v1812
      %v1814 = vpop.f32.mrf.mxu0
      %1815 = vmatprep.mubr.bf16.mxu0 0
      %1816 = vmatmul.mubr.bf16.gmra.mxu0 %v1378
      %v1817 = vpop.f32.mrf.mxu0
      %v1818 = vadd.f32 0.0, %v1817
      %v1819 = vpop.f32.mrf.mxu0
      %v1820 = vpop.f32.mrf.mxu0
      %v1821 = vadd.f32 0.0, %v1820
      %v1822 = vpop.f32.mrf.mxu0
      %1823 = vmatprep.mubr.bf16.mxu0 0
      %1824 = vmatmul.mubr.bf16.gmra.mxu0 %v1381
      %v1825 = vpop.f32.mrf.mxu0
      %v1826 = vadd.f32 0.0, %v1825
      %v1827 = vpop.f32.mrf.mxu0
      %v1828 = vpop.f32.mrf.mxu0
      %v1829 = vadd.f32 0.0, %v1828
      %v1830 = vpop.f32.mrf.mxu0
      %1831 = vmatprep.mubr.bf16.mxu0 0
      %1832 = vmatmul.mubr.bf16.gmra.mxu0 %v1384
      %v1833 = vpop.f32.mrf.mxu0
      %v1834 = vadd.f32 0.0, %v1833
      %v1835 = vpop.f32.mrf.mxu0
      %v1836 = vpop.f32.mrf.mxu0
      %v1837 = vadd.f32 0.0, %v1836
      %v1838 = vpop.f32.mrf.mxu0
      %1839 = vmatprep.mubr.bf16.mxu0 0
      %1840 = vmatmul.mubr.bf16.gmra.mxu0 %v1387
      %v1841 = vpop.f32.mrf.mxu0
      %v1842 = vadd.f32 0.0, %v1841
      %v1843 = vpop.f32.mrf.mxu0
      %v1844 = vpop.f32.mrf.mxu0
      %v1845 = vadd.f32 0.0, %v1844
      %v1846 = vpop.f32.mrf.mxu0
      %1847 = vmatprep.mubr.bf16.mxu0 0
      %1848 = vmatmul.mubr.bf16.gmra.mxu0 %v1390
      %v1849 = vpop.f32.mrf.mxu0
      %v1850 = vadd.f32 0.0, %v1849
      %v1851 = vpop.f32.mrf.mxu0
      %v1852 = vpop.f32.mrf.mxu0
      %v1853 = vadd.f32 0.0, %v1852
      %v1854 = vpop.f32.mrf.mxu0
      %1855 = vmatprep.mubr.bf16.mxu0 0
      %1856 = vmatmul.mubr.bf16.gmra.mxu0 %v1393
      %v1857 = vpop.f32.mrf.mxu0
      %v1858 = vadd.f32 0.0, %v1857
      %v1859 = vpop.f32.mrf.mxu0
      %v1860 = vpop.f32.mrf.mxu0
      %v1861 = vadd.f32 0.0, %v1860
      %v1862 = vpop.f32.mrf.mxu0
      %1863 = vmatprep.mubr.bf16.mxu0 0
      %1864 = vmatmul.mubr.bf16.gmra.mxu0 %v1396
      %v1865 = vpop.f32.mrf.mxu0
      %v1866 = vadd.f32 0.0, %v1865
      %v1867 = vpop.f32.mrf.mxu0
      %v1868 = vpop.f32.mrf.mxu0
      %v1869 = vadd.f32 0.0, %v1868
      %v1870 = vpop.f32.mrf.mxu0
      %1871 = vmatprep.mubr.bf16.mxu0 0
      %1872 = vmatmul.mubr.bf16.gmra.mxu0 %v1399
      %v1873 = vpop.f32.mrf.mxu0
      %v1874 = vadd.f32 0.0, %v1873
      %v1875 = vpop.f32.mrf.mxu0
      %v1876 = vpop.f32.mrf.mxu0
      %v1877 = vadd.f32 0.0, %v1876
      %v1878 = vpop.f32.mrf.mxu0
      %1879 = vmatprep.mubr.bf16.mxu0 0
      %1880 = vmatmul.mubr.bf16.gmra.mxu0 %v1402
      %v1881 = vpop.f32.mrf.mxu0
      %v1882 = vadd.f32 0.0, %v1881
      %v1883 = vpop.f32.mrf.mxu0
      %v1884 = vpop.f32.mrf.mxu0
      %v1885 = vadd.f32 0.0, %v1884
      %v1886 = vpop.f32.mrf.mxu0
      %1887 = vmatprep.mubr.bf16.mxu0 0
      %1888 = vmatmul.mubr.bf16.gmra.mxu0 %v1405
      %v1889 = vpop.f32.mrf.mxu0
      %v1890 = vadd.f32 0.0, %v1889
      %v1891 = vpop.f32.mrf.mxu0
      %v1892 = vpop.f32.mrf.mxu0
      %v1893 = vadd.f32 0.0, %v1892
      %v1894 = vpop.f32.mrf.mxu0
      %1895 = vmatprep.mubr.bf16.mxu0 0
      %1896 = vmatmul.mubr.bf16.gmra.mxu0 %v1408
      %v1897 = vpop.f32.mrf.mxu0
      %v1898 = vadd.f32 0.0, %v1897
      %v1899 = vpop.f32.mrf.mxu0
      %v1900 = vpop.f32.mrf.mxu0
      %v1901 = vadd.f32 0.0, %v1900
      %v1902 = vpop.f32.mrf.mxu0
      %1903 = vmatprep.mubr.bf16.mxu0 0
      %1904 = vmatmul.mubr.bf16.gmra.mxu0 %v1411
      %v1905 = vpop.f32.mrf.mxu0
      %v1906 = vadd.f32 0.0, %v1905
      %v1907 = vpop.f32.mrf.mxu0
      %v1908 = vpop.f32.mrf.mxu0
      %v1909 = vadd.f32 0.0, %v1908
      %v1910 = vpop.f32.mrf.mxu0
      %1911 = vmatprep.mubr.bf16.mxu0 0
      %1912 = vmatmul.mubr.bf16.gmra.mxu0 %v1414
      %v1913 = vpop.f32.mrf.mxu0
      %v1914 = vadd.f32 0.0, %v1913
      %v1915 = vpop.f32.mrf.mxu0
      %v1916 = vpop.f32.mrf.mxu0
      %v1917 = vadd.f32 0.0, %v1916
      %v1918 = vpop.f32.mrf.mxu0
      %1919 = vmatprep.mubr.bf16.mxu0 0
      %1920 = vmatmul.mubr.bf16.gmra.mxu0 %v1417
      %v1921 = vpop.f32.mrf.mxu0
      %v1922 = vadd.f32 0.0, %v1921
      %v1923 = vpop.f32.mrf.mxu0
      %v1924 = vpop.f32.mrf.mxu0
      %v1925 = vadd.f32 0.0, %v1924
      %v1926 = vpop.f32.mrf.mxu0
      %1927 = vmatprep.mubr.bf16.mxu0 0
      %1928 = vmatmul.mubr.bf16.gmra.mxu0 %v1420
      %v1929 = vpop.f32.mrf.mxu0
      %v1930 = vadd.f32 0.0, %v1929
      %v1931 = vpop.f32.mrf.mxu0
      %v1932 = vpop.f32.mrf.mxu0
      %v1933 = vadd.f32 0.0, %v1932
      %v1934 = vpop.f32.mrf.mxu0
      %1935 = vmatprep.mubr.bf16.mxu0 0
      %1936 = vmatmul.mubr.bf16.gmra.mxu0 %v1423
      %v1937 = vpop.f32.mrf.mxu0
      %v1938 = vadd.f32 0.0, %v1937
      %v1939 = vpop.f32.mrf.mxu0
      %v1940 = vpop.f32.mrf.mxu0
      %v1941 = vadd.f32 0.0, %v1940
      %v1942 = vpop.f32.mrf.mxu0
      %1943 = vmatprep.mubr.bf16.mxu0 0
      %1944 = vmatmul.mubr.bf16.gmra.mxu0 %v1426
      %v1945 = vpop.f32.mrf.mxu0
      %v1946 = vadd.f32 0.0, %v1945
      %v1947 = vpop.f32.mrf.mxu0
      %v1948 = vpop.f32.mrf.mxu0
      %v1949 = vadd.f32 0.0, %v1948
      %v1950 = vpop.f32.mrf.mxu0
      %1951 = vmatprep.mubr.bf16.mxu0 0
      %1952 = vmatmul.mubr.bf16.gmra.mxu0 %v1429
      %v1953 = vpop.f32.mrf.mxu0
      %v1954 = vadd.f32 0.0, %v1953
      %v1955 = vpop.f32.mrf.mxu0
      %v1956 = vpop.f32.mrf.mxu0
      %v1957 = vadd.f32 0.0, %v1956
      %v1958 = vpop.f32.mrf.mxu0
      %1959 = vmatprep.mubr.bf16.mxu0 0
      %1960 = vmatmul.mubr.bf16.gmra.mxu0 %v1432
      %v1961 = vpop.f32.mrf.mxu0
      %v1962 = vadd.f32 0.0, %v1961
      %v1963 = vpop.f32.mrf.mxu0
      %v1964 = vpop.f32.mrf.mxu0
      %v1965 = vadd.f32 0.0, %v1964
      %v1966 = vpop.f32.mrf.mxu0
      %1967 = vmatprep.mubr.bf16.mxu0 0
      %1968 = vmatmul.mubr.bf16.gmra.mxu0 %v1435
      %v1969 = vpop.f32.mrf.mxu0
      %v1970 = vadd.f32 0.0, %v1969
      %v1971 = vpop.f32.mrf.mxu0
      %v1972 = vpop.f32.mrf.mxu0
      %v1973 = vadd.f32 0.0, %v1972
      %v1974 = vpop.f32.mrf.mxu0
      %1975 = vmatprep.mubr.bf16.mxu0 0
      %1976 = vmatmul.mubr.bf16.gmra.mxu0 %v1438
      %v1977 = vpop.f32.mrf.mxu0
      %v1978 = vadd.f32 0.0, %v1977
      %v1979 = vpop.f32.mrf.mxu0
      %v1980 = vpop.f32.mrf.mxu0
      %v1981 = vadd.f32 0.0, %v1980
      %v1982 = vpop.f32.mrf.mxu0
      %1983 = vmatprep.mubr.bf16.mxu0 0
      %1984 = vmatmul.mubr.bf16.gmra.mxu0 %v1441
      %v1985 = vpop.f32.mrf.mxu0
      %v1986 = vadd.f32 0.0, %v1985
      %v1987 = vpop.f32.mrf.mxu0
      %v1988 = vpop.f32.mrf.mxu0
      %v1989 = vadd.f32 0.0, %v1988
      %v1990 = vpop.f32.mrf.mxu0
      %1991 = vmatprep.mubr.bf16.mxu0 0
      %1992 = vmatmul.mubr.bf16.gmra.mxu0 %v1444
      %v1993 = vpop.f32.mrf.mxu0
      %v1994 = vadd.f32 0.0, %v1993
      %v1995 = vpop.f32.mrf.mxu0
      %v1996 = vpop.f32.mrf.mxu0
      %v1997 = vadd.f32 0.0, %v1996
      %v1998 = vpop.f32.mrf.mxu0
      %1999 = vmatprep.mubr.bf16.mxu0 0
      %2000 = vmatmul.mubr.bf16.gmra.mxu0 %v1447
      %v2001 = vpop.f32.mrf.mxu0
      %v2002 = vadd.f32 0.0, %v2001
      %v2003 = vpop.f32.mrf.mxu0
      %v2004 = vpop.f32.mrf.mxu0
      %v2005 = vadd.f32 0.0, %v2004
      %v2006 = vpop.f32.mrf.mxu0
      %2007 = vmatprep.mubr.bf16.mxu0 0
      %2008 = vmatmul.mubr.bf16.gmra.mxu0 %v1450
      %v2009 = vpop.f32.mrf.mxu0
      %v2010 = vadd.f32 0.0, %v2009
      %v2011 = vpop.f32.mrf.mxu0
      %v2012 = vpop.f32.mrf.mxu0
      %v2013 = vadd.f32 0.0, %v2012
      %v2014 = vpop.f32.mrf.mxu0
      %2015 = vmatprep.mubr.bf16.mxu0 0
      %2016 = vmatmul.mubr.bf16.gmra.mxu0 %v1453
      %v2017 = vpop.f32.mrf.mxu0
      %v2018 = vadd.f32 0.0, %v2017
      %v2019 = vpop.f32.mrf.mxu0
      %v2020 = vpop.f32.mrf.mxu0
      %v2021 = vadd.f32 0.0, %v2020
      %v2022 = vpop.f32.mrf.mxu0
      %2023 = vmatprep.mubr.bf16.mxu0 0
      %2024 = vmatmul.mubr.bf16.gmra.mxu0 %v1456
      %v2025 = vpop.f32.mrf.mxu0
      %v2026 = vadd.f32 0.0, %v2025
      %v2027 = vpop.f32.mrf.mxu0
      %v2028 = vpop.f32.mrf.mxu0
      %v2029 = vadd.f32 0.0, %v2028
      %v2030 = vpop.f32.mrf.mxu0
      %2031 = vmatprep.mubr.bf16.mxu0 0
      %2032 = vmatmul.mubr.bf16.gmra.mxu0 %v1459
      %v2033 = vpop.f32.mrf.mxu0
      %v2034 = vadd.f32 0.0, %v2033
      %v2035 = vpop.f32.mrf.mxu0
      %v2036 = vpop.f32.mrf.mxu0
      %v2037 = vadd.f32 0.0, %v2036
      %v2038 = vpop.f32.mrf.mxu0
      %2039 = vmatprep.mubr.bf16.mxu0 0
      %2040 = vmatmul.mubr.bf16.gmra.mxu0 %v1462
      %v2041 = vpop.f32.mrf.mxu0
      %v2042 = vadd.f32 0.0, %v2041
      %v2043 = vpop.f32.mrf.mxu0
      %v2044 = vpop.f32.mrf.mxu0
      %v2045 = vadd.f32 0.0, %v2044
      %v2046 = vpop.f32.mrf.mxu0
      %2047 = vmatprep.mubr.bf16.mxu0 0
      %2048 = vmatmul.mubr.bf16.gmra.mxu0 %v1465
      %v2049 = vpop.f32.mrf.mxu0
      %v2050 = vadd.f32 0.0, %v2049
      %v2051 = vpop.f32.mrf.mxu0
      %v2052 = vpop.f32.mrf.mxu0
      %v2053 = vadd.f32 0.0, %v2052
      %v2054 = vpop.f32.mrf.mxu0
      %2055 = vmatprep.mubr.bf16.mxu0 0
      %2056 = vmatmul.mubr.bf16.gmra.mxu0 %v1468
      %v2057 = vpop.f32.mrf.mxu0
      %v2058 = vadd.f32 0.0, %v2057
      %v2059 = vpop.f32.mrf.mxu0
      %v2060 = vpop.f32.mrf.mxu0
      %v2061 = vadd.f32 0.0, %v2060
      %v2062 = vpop.f32.mrf.mxu0
      %2063 = vmatprep.mubr.bf16.mxu0 0
      %2064 = vmatmul.mubr.bf16.gmra.mxu0 %v1471
      %v2065 = vpop.f32.mrf.mxu0
      %v2066 = vadd.f32 0.0, %v2065
      %v2067 = vpop.f32.mrf.mxu0
      %v2068 = vpop.f32.mrf.mxu0
      %v2069 = vadd.f32 0.0, %v2068
      %v2070 = vpop.f32.mrf.mxu0
      %2071 = vmatprep.mubr.bf16.mxu0 0
      %2072 = vmatmul.mubr.bf16.gmra.mxu0 %v1474
      %v2073 = vpop.f32.mrf.mxu0
      %v2074 = vadd.f32 0.0, %v2073
      %v2075 = vpop.f32.mrf.mxu0
      %v2076 = vpop.f32.mrf.mxu0
      %v2077 = vadd.f32 0.0, %v2076
      %v2078 = vpop.f32.mrf.mxu0
      %2079 = vmatprep.mubr.bf16.mxu0 0
      %2080 = vmatmul.mubr.bf16.gmra.mxu0 %v1477
      %v2081 = vpop.f32.mrf.mxu0
      %v2082 = vadd.f32 0.0, %v2081
      %v2083 = vpop.f32.mrf.mxu0
      %v2084 = vpop.f32.mrf.mxu0
      %v2085 = vadd.f32 0.0, %v2084
      %v2086 = vpop.f32.mrf.mxu0
      %2087 = vmatprep.mubr.bf16.mxu0 0
      %2088 = vmatmul.mubr.bf16.gmra.mxu0 %v1480
      %v2089 = vpop.f32.mrf.mxu0
      %v2090 = vadd.f32 0.0, %v2089
      %v2091 = vpop.f32.mrf.mxu0
      %v2092 = vpop.f32.mrf.mxu0
      %v2093 = vadd.f32 0.0, %v2092
      %v2094 = vpop.f32.mrf.mxu0
      %2095 = vmatprep.mubr.bf16.mxu0 0
      %2096 = vmatmul.mubr.bf16.gmra.mxu0 %v1483
      %v2097 = vpop.f32.mrf.mxu0
      %v2098 = vadd.f32 0.0, %v2097
      %v2099 = vpop.f32.mrf.mxu0
      %v2100 = vpop.f32.mrf.mxu0
      %v2101 = vadd.f32 0.0, %v2100
      %v2102 = vpop.f32.mrf.mxu0
      %2103 = vmatprep.mubr.bf16.mxu0 0
      %2104 = vmatmul.mubr.bf16.gmra.mxu0 %v1486
      %v2105 = vpop.f32.mrf.mxu0
      %v2106 = vadd.f32 0.0, %v2105
      %v2107 = vpop.f32.mrf.mxu0
      %v2108 = vpop.f32.mrf.mxu0
      %v2109 = vpop.f32.mrf.mxu0
      %2110 = vdwg.mxu0
      %v2112 = vunpack.c.l.b16 %v316
      %v2113 = vpack.c.b16 %v2112, %v2112
      %v2114 = vsel %vm1268, %v611, 0
      %v2116 = vsel %vm1268, %v612, 0
      %v2118 = vsel %vm1268, %v613, 0
      %v2120 = vsel %vm1268, %v614, 0
      %v2122 = vsel %vm1268, %v615, 0
      %v2124 = vsel %vm1268, %v616, 0
      %v2126 = vsel %vm1268, %v617, 0
      %v2128 = vsel %vm1268, %v618, 0
      %v2130 = vsel %vm1268, %v619, 0
      %v2132 = vsel %vm1268, %v620, 0
      %v2134 = vsel %vm1268, %v621, 0
      %v2136 = vsel %vm1268, %v622, 0
      %v2138 = vsel %vm1268, %v623, 0
      %v2140 = vsel %vm1268, %v624, 0
      %v2142 = vsel %vm1268, %v625, 0
      %v2144 = vsel %vm1268, %v626, 0
      %v2146 = vsel %vm1268, %v627, 0
      %v2148 = vsel %vm1268, %v628, 0
      %v2150 = vsel %vm1268, %v629, 0
      %v2152 = vsel %vm1268, %v630, 0
      %v2154 = vsel %vm1268, %v631, 0
      %v2156 = vsel %vm1268, %v632, 0
      %v2158 = vsel %vm1268, %v633, 0
      %v2160 = vsel %vm1268, %v634, 0
      %v2162 = vsel %vm1268, %v635, 0
      %v2164 = vsel %vm1268, %v636, 0
      %v2166 = vsel %vm1268, %v637, 0
      %v2168 = vsel %vm1268, %v638, 0
      %v2170 = vsel %vm1268, %v639, 0
      %v2172 = vsel %vm1268, %v640, 0
      %v2174 = vsel %vm1268, %v641, 0
      %v2176 = vsel %vm1268, %v642, 0
      %v2178 = vsel %vm1268, %v643, 0
      %v2180 = vsel %vm1268, %v644, 0
      %v2182 = vsel %vm1268, %v645, 0
      %v2184 = vsel %vm1268, %v646, 0
      %v2186 = vsel %vm1268, %v647, 0
      %v2188 = vsel %vm1268, %v648, 0
      %v2190 = vsel %vm1268, %v649, 0
      %v2192 = vsel %vm1268, %v650, 0
      %v2194 = vsel %vm1268, %v651, 0
      %v2196 = vsel %vm1268, %v652, 0
      %v2198 = vsel %vm1268, %v653, 0
      %v2200 = vsel %vm1268, %v654, 0
      %v2202 = vsel %vm1268, %v655, 0
      %v2204 = vsel %vm1268, %v656, 0
      %v2206 = vsel %vm1268, %v657, 0
      %v2208 = vsel %vm1268, %v658, 0
      %v2210 = vsel %vm1268, %v659, 0
      %v2212 = vsel %vm1268, %v660, 0
      %v2214 = vsel %vm1268, %v661, 0
      %v2216 = vsel %vm1268, %v662, 0
      %v2218 = vsel %vm1268, %v663, 0
      %v2220 = vsel %vm1268, %v664, 0
      %v2222 = vsel %vm1268, %v665, 0
      %v2224 = vsel %vm1268, %v666, 0
      %v2226 = vsel %vm1268, %v667, 0
      %v2228 = vsel %vm1268, %v668, 0
      %v2230 = vsel %vm1268, %v669, 0
      %v2232 = vsel %vm1268, %v670, 0
      %v2234 = vsel %vm1268, %v671, 0
      %v2236 = vsel %vm1268, %v672, 0
      %v2238 = vsel %vm1268, %v673, 0
      %v2240 = vsel %vm1268, %v674, 0
      %v2242 = vsel %vm1268, %v675, 0
      %v2244 = vsel %vm1268, %v676, 0
      %v2246 = vsel %vm1268, %v677, 0
      %v2248 = vsel %vm1268, %v678, 0
      %v2250 = vsel %vm1268, %v679, 0
      %v2252 = vsel %vm1268, %v680, 0
      %v2254 = vsel %vm1268, %v681, 0
      %v2256 = vsel %vm1268, %v682, 0
      %v2259 = vsel %vm1268, %v2113, 0
      %v2262 = vand.u32 %v317, %v1491
      %2264 = vmatprep.subr.bf16.mxu0 0
      %2265 = vmatpush1.bf16.msra.mxu0 0
      %2266 = vmatprep.subr.bf16.mxu0 0
      %2267 = vmatpush1.bf16.msra.mxu0 0
      %2268 = vmatprep.subr.bf16.mxu0 0
      %2269 = vmatpush1.bf16.msra.mxu0 0
      %2270 = vmatprep.subr.bf16.mxu0 0
      %2271 = vmatpush1.bf16.msra.mxu0 0
      %2272 = vmatprep.subr.bf16.mxu0 0
      %2273 = vmatpush1.bf16.msra.mxu0 0
      %2274 = vmatprep.subr.bf16.mxu0 0
      %2275 = vmatpush1.bf16.msra.mxu0 0
      %2276 = vmatprep.subr.bf16.mxu0 0
      %2277 = vmatpush1.bf16.msra.mxu0 0
      %2278 = vmatprep.subr.bf16.mxu0 0
      %2279 = vmatpush1.bf16.msra.mxu0 %v2262
      %2280 = vmatprep.subr.bf16.mxu0 0
      %2281 = vmatpush2.bf16.msra.mxu0 0
      %2282 = vmatprep.subr.bf16.mxu0 0
      %2283 = vmatpush2.bf16.msra.mxu0 0
      %2284 = vmatprep.subr.bf16.mxu0 0
      %2285 = vmatpush2.bf16.msra.mxu0 0
      %2286 = vmatprep.subr.bf16.mxu0 0
      %2287 = vmatpush2.bf16.msra.mxu0 0
      %2288 = vmatprep.subr.bf16.mxu0 0
      %2289 = vmatpush2.bf16.msra.mxu0 0
      %2290 = vmatprep.subr.bf16.mxu0 0
      %2291 = vmatpush2.bf16.msra.mxu0 0
      %2292 = vmatprep.subr.bf16.mxu0 0
      %2293 = vmatpush2.bf16.msra.mxu0 0
      %2294 = vmatprep.subr.bf16.mxu0 0
      %2295 = vmatpush2.bf16.msra.mxu0 0
      %2296 = vmatprep.mubr.bf16.mxu0 0
      %2297 = vmatmul.mubr.bf16.gmra.mxu0 %v2114
      %v2298 = vpop.f32.mrf.mxu0
      %v2299 = vadd.f32 %v1530, %v2298
      %v2300 = vpop.f32.mrf.mxu0
      %v2301 = vpop.f32.mrf.mxu0
      %v2302 = vadd.f32 %v1533, %v2301
      %v2303 = vpop.f32.mrf.mxu0
      %2304 = vmatprep.mubr.bf16.mxu0 0
      %2305 = vmatmul.mubr.bf16.gmra.mxu0 %v2116
      %v2306 = vpop.f32.mrf.mxu0
      %v2307 = vadd.f32 %v1538, %v2306
      %v2308 = vpop.f32.mrf.mxu0
      %v2309 = vpop.f32.mrf.mxu0
      %v2310 = vadd.f32 %v1541, %v2309
      %v2311 = vpop.f32.mrf.mxu0
      %2312 = vmatprep.mubr.bf16.mxu0 0
      %2313 = vmatmul.mubr.bf16.gmra.mxu0 %v2118
      %v2314 = vpop.f32.mrf.mxu0
      %v2315 = vadd.f32 %v1546, %v2314
      %v2316 = vpop.f32.mrf.mxu0
      %v2317 = vpop.f32.mrf.mxu0
      %v2318 = vadd.f32 %v1549, %v2317
      %v2319 = vpop.f32.mrf.mxu0
      %2320 = vmatprep.mubr.bf16.mxu0 0
      %2321 = vmatmul.mubr.bf16.gmra.mxu0 %v2120
      %v2322 = vpop.f32.mrf.mxu0
      %v2323 = vadd.f32 %v1554, %v2322
      %v2324 = vpop.f32.mrf.mxu0
      %v2325 = vpop.f32.mrf.mxu0
      %v2326 = vadd.f32 %v1557, %v2325
      %v2327 = vpop.f32.mrf.mxu0
      %2328 = vmatprep.mubr.bf16.mxu0 0
      %2329 = vmatmul.mubr.bf16.gmra.mxu0 %v2122
      %v2330 = vpop.f32.mrf.mxu0
      %v2331 = vadd.f32 %v1562, %v2330
      %v2332 = vpop.f32.mrf.mxu0
      %v2333 = vpop.f32.mrf.mxu0
      %v2334 = vadd.f32 %v1565, %v2333
      %v2335 = vpop.f32.mrf.mxu0
      %2336 = vmatprep.mubr.bf16.mxu0 0
      %2337 = vmatmul.mubr.bf16.gmra.mxu0 %v2124
      %v2338 = vpop.f32.mrf.mxu0
      %v2339 = vadd.f32 %v1570, %v2338
      %v2340 = vpop.f32.mrf.mxu0
      %v2341 = vpop.f32.mrf.mxu0
      %v2342 = vadd.f32 %v1573, %v2341
      %v2343 = vpop.f32.mrf.mxu0
      %2344 = vmatprep.mubr.bf16.mxu0 0
      %2345 = vmatmul.mubr.bf16.gmra.mxu0 %v2126
      %v2346 = vpop.f32.mrf.mxu0
      %v2347 = vadd.f32 %v1578, %v2346
      %v2348 = vpop.f32.mrf.mxu0
      %v2349 = vpop.f32.mrf.mxu0
      %v2350 = vadd.f32 %v1581, %v2349
      %v2351 = vpop.f32.mrf.mxu0
      %2352 = vmatprep.mubr.bf16.mxu0 0
      %2353 = vmatmul.mubr.bf16.gmra.mxu0 %v2128
      %v2354 = vpop.f32.mrf.mxu0
      %v2355 = vadd.f32 %v1586, %v2354
      %v2356 = vpop.f32.mrf.mxu0
      %v2357 = vpop.f32.mrf.mxu0
      %v2358 = vadd.f32 %v1589, %v2357
      %v2359 = vpop.f32.mrf.mxu0
      %2360 = vmatprep.mubr.bf16.mxu0 0
      %2361 = vmatmul.mubr.bf16.gmra.mxu0 %v2130
      %v2362 = vpop.f32.mrf.mxu0
      %v2363 = vadd.f32 %v1594, %v2362
      %v2364 = vpop.f32.mrf.mxu0
      %v2365 = vpop.f32.mrf.mxu0
      %v2366 = vadd.f32 %v1597, %v2365
      %v2367 = vpop.f32.mrf.mxu0
      %2368 = vmatprep.mubr.bf16.mxu0 0
      %2369 = vmatmul.mubr.bf16.gmra.mxu0 %v2132
      %v2370 = vpop.f32.mrf.mxu0
      %v2371 = vadd.f32 %v1602, %v2370
      %v2372 = vpop.f32.mrf.mxu0
      %v2373 = vpop.f32.mrf.mxu0
      %v2374 = vadd.f32 %v1605, %v2373
      %v2375 = vpop.f32.mrf.mxu0
      %2376 = vmatprep.mubr.bf16.mxu0 0
      %2377 = vmatmul.mubr.bf16.gmra.mxu0 %v2134
      %v2378 = vpop.f32.mrf.mxu0
      %v2379 = vadd.f32 %v1610, %v2378
      %v2380 = vpop.f32.mrf.mxu0
      %v2381 = vpop.f32.mrf.mxu0
      %v2382 = vadd.f32 %v1613, %v2381
      %v2383 = vpop.f32.mrf.mxu0
      %2384 = vmatprep.mubr.bf16.mxu0 0
      %2385 = vmatmul.mubr.bf16.gmra.mxu0 %v2136
      %v2386 = vpop.f32.mrf.mxu0
      %v2387 = vadd.f32 %v1618, %v2386
      %v2388 = vpop.f32.mrf.mxu0
      %v2389 = vpop.f32.mrf.mxu0
      %v2390 = vadd.f32 %v1621, %v2389
      %v2391 = vpop.f32.mrf.mxu0
      %2392 = vmatprep.mubr.bf16.mxu0 0
      %2393 = vmatmul.mubr.bf16.gmra.mxu0 %v2138
      %v2394 = vpop.f32.mrf.mxu0
      %v2395 = vadd.f32 %v1626, %v2394
      %v2396 = vpop.f32.mrf.mxu0
      %v2397 = vpop.f32.mrf.mxu0
      %v2398 = vadd.f32 %v1629, %v2397
      %v2399 = vpop.f32.mrf.mxu0
      %2400 = vmatprep.mubr.bf16.mxu0 0
      %2401 = vmatmul.mubr.bf16.gmra.mxu0 %v2140
      %v2402 = vpop.f32.mrf.mxu0
      %v2403 = vadd.f32 %v1634, %v2402
      %v2404 = vpop.f32.mrf.mxu0
      %v2405 = vpop.f32.mrf.mxu0
      %v2406 = vadd.f32 %v1637, %v2405
      %v2407 = vpop.f32.mrf.mxu0
      %2408 = vmatprep.mubr.bf16.mxu0 0
      %2409 = vmatmul.mubr.bf16.gmra.mxu0 %v2142
      %v2410 = vpop.f32.mrf.mxu0
      %v2411 = vadd.f32 %v1642, %v2410
      %v2412 = vpop.f32.mrf.mxu0
      %v2413 = vpop.f32.mrf.mxu0
      %v2414 = vadd.f32 %v1645, %v2413
      %v2415 = vpop.f32.mrf.mxu0
      %2416 = vmatprep.mubr.bf16.mxu0 0
      %2417 = vmatmul.mubr.bf16.gmra.mxu0 %v2144
      %v2418 = vpop.f32.mrf.mxu0
      %v2419 = vadd.f32 %v1650, %v2418
      %v2420 = vpop.f32.mrf.mxu0
      %v2421 = vpop.f32.mrf.mxu0
      %v2422 = vadd.f32 %v1653, %v2421
      %v2423 = vpop.f32.mrf.mxu0
      %2424 = vmatprep.mubr.bf16.mxu0 0
      %2425 = vmatmul.mubr.bf16.gmra.mxu0 %v2146
      %v2426 = vpop.f32.mrf.mxu0
      %v2427 = vadd.f32 %v1658, %v2426
      %v2428 = vpop.f32.mrf.mxu0
      %v2429 = vpop.f32.mrf.mxu0
      %v2430 = vadd.f32 %v1661, %v2429
      %v2431 = vpop.f32.mrf.mxu0
      %2432 = vmatprep.mubr.bf16.mxu0 0
      %2433 = vmatmul.mubr.bf16.gmra.mxu0 %v2148
      %v2434 = vpop.f32.mrf.mxu0
      %v2435 = vadd.f32 %v1666, %v2434
      %v2436 = vpop.f32.mrf.mxu0
      %v2437 = vpop.f32.mrf.mxu0
      %v2438 = vadd.f32 %v1669, %v2437
      %v2439 = vpop.f32.mrf.mxu0
      %2440 = vmatprep.mubr.bf16.mxu0 0
      %2441 = vmatmul.mubr.bf16.gmra.mxu0 %v2150
      %v2442 = vpop.f32.mrf.mxu0
      %v2443 = vadd.f32 %v1674, %v2442
      %v2444 = vpop.f32.mrf.mxu0
      %v2445 = vpop.f32.mrf.mxu0
      %v2446 = vadd.f32 %v1677, %v2445
      %v2447 = vpop.f32.mrf.mxu0
      %2448 = vmatprep.mubr.bf16.mxu0 0
      %2449 = vmatmul.mubr.bf16.gmra.mxu0 %v2152
      %v2450 = vpop.f32.mrf.mxu0
      %v2451 = vadd.f32 %v1682, %v2450
      %v2452 = vpop.f32.mrf.mxu0
      %v2453 = vpop.f32.mrf.mxu0
      %v2454 = vadd.f32 %v1685, %v2453
      %v2455 = vpop.f32.mrf.mxu0
      %2456 = vmatprep.mubr.bf16.mxu0 0
      %2457 = vmatmul.mubr.bf16.gmra.mxu0 %v2154
      %v2458 = vpop.f32.mrf.mxu0
      %v2459 = vadd.f32 %v1690, %v2458
      %v2460 = vpop.f32.mrf.mxu0
      %v2461 = vpop.f32.mrf.mxu0
      %v2462 = vadd.f32 %v1693, %v2461
      %v2463 = vpop.f32.mrf.mxu0
      %2464 = vmatprep.mubr.bf16.mxu0 0
      %2465 = vmatmul.mubr.bf16.gmra.mxu0 %v2156
      %v2466 = vpop.f32.mrf.mxu0
      %v2467 = vadd.f32 %v1698, %v2466
      %v2468 = vpop.f32.mrf.mxu0
      %v2469 = vpop.f32.mrf.mxu0
      %v2470 = vadd.f32 %v1701, %v2469
      %v2471 = vpop.f32.mrf.mxu0
      %2472 = vmatprep.mubr.bf16.mxu0 0
      %2473 = vmatmul.mubr.bf16.gmra.mxu0 %v2158
      %v2474 = vpop.f32.mrf.mxu0
      %v2475 = vadd.f32 %v1706, %v2474
      %v2476 = vpop.f32.mrf.mxu0
      %v2477 = vpop.f32.mrf.mxu0
      %v2478 = vadd.f32 %v1709, %v2477
      %v2479 = vpop.f32.mrf.mxu0
      %2480 = vmatprep.mubr.bf16.mxu0 0
      %2481 = vmatmul.mubr.bf16.gmra.mxu0 %v2160
      %v2482 = vpop.f32.mrf.mxu0
      %v2483 = vadd.f32 %v1714, %v2482
      %v2484 = vpop.f32.mrf.mxu0
      %v2485 = vpop.f32.mrf.mxu0
      %v2486 = vadd.f32 %v1717, %v2485
      %v2487 = vpop.f32.mrf.mxu0
      %2488 = vmatprep.mubr.bf16.mxu0 0
      %2489 = vmatmul.mubr.bf16.gmra.mxu0 %v2162
      %v2490 = vpop.f32.mrf.mxu0
      %v2491 = vadd.f32 %v1722, %v2490
      %v2492 = vpop.f32.mrf.mxu0
      %v2493 = vpop.f32.mrf.mxu0
      %v2494 = vadd.f32 %v1725, %v2493
      %v2495 = vpop.f32.mrf.mxu0
      %2496 = vmatprep.mubr.bf16.mxu0 0
      %2497 = vmatmul.mubr.bf16.gmra.mxu0 %v2164
      %v2498 = vpop.f32.mrf.mxu0
      %v2499 = vadd.f32 %v1730, %v2498
      %v2500 = vpop.f32.mrf.mxu0
      %v2501 = vpop.f32.mrf.mxu0
      %v2502 = vadd.f32 %v1733, %v2501
      %v2503 = vpop.f32.mrf.mxu0
      %2504 = vmatprep.mubr.bf16.mxu0 0
      %2505 = vmatmul.mubr.bf16.gmra.mxu0 %v2166
      %v2506 = vpop.f32.mrf.mxu0
      %v2507 = vadd.f32 %v1738, %v2506
      %v2508 = vpop.f32.mrf.mxu0
      %v2509 = vpop.f32.mrf.mxu0
      %v2510 = vadd.f32 %v1741, %v2509
      %v2511 = vpop.f32.mrf.mxu0
      %2512 = vmatprep.mubr.bf16.mxu0 0
      %2513 = vmatmul.mubr.bf16.gmra.mxu0 %v2168
      %v2514 = vpop.f32.mrf.mxu0
      %v2515 = vadd.f32 %v1746, %v2514
      %v2516 = vpop.f32.mrf.mxu0
      %v2517 = vpop.f32.mrf.mxu0
      %v2518 = vadd.f32 %v1749, %v2517
      %v2519 = vpop.f32.mrf.mxu0
      %2520 = vmatprep.mubr.bf16.mxu0 0
      %2521 = vmatmul.mubr.bf16.gmra.mxu0 %v2170
      %v2522 = vpop.f32.mrf.mxu0
      %v2523 = vadd.f32 %v1754, %v2522
      %v2524 = vpop.f32.mrf.mxu0
      %v2525 = vpop.f32.mrf.mxu0
      %v2526 = vadd.f32 %v1757, %v2525
      %v2527 = vpop.f32.mrf.mxu0
      %2528 = vmatprep.mubr.bf16.mxu0 0
      %2529 = vmatmul.mubr.bf16.gmra.mxu0 %v2172
      %v2530 = vpop.f32.mrf.mxu0
      %v2531 = vadd.f32 %v1762, %v2530
      %v2532 = vpop.f32.mrf.mxu0
      %v2533 = vpop.f32.mrf.mxu0
      %v2534 = vadd.f32 %v1765, %v2533
      %v2535 = vpop.f32.mrf.mxu0
      %2536 = vmatprep.mubr.bf16.mxu0 0
      %2537 = vmatmul.mubr.bf16.gmra.mxu0 %v2174
      %v2538 = vpop.f32.mrf.mxu0
      %v2539 = vadd.f32 %v1770, %v2538
      %v2540 = vpop.f32.mrf.mxu0
      %v2541 = vpop.f32.mrf.mxu0
      %v2542 = vadd.f32 %v1773, %v2541
      %v2543 = vpop.f32.mrf.mxu0
      %2544 = vmatprep.mubr.bf16.mxu0 0
      %2545 = vmatmul.mubr.bf16.gmra.mxu0 %v2176
      %v2546 = vpop.f32.mrf.mxu0
      %v2547 = vadd.f32 %v1778, %v2546
      %v2548 = vpop.f32.mrf.mxu0
      %v2549 = vpop.f32.mrf.mxu0
      %v2550 = vadd.f32 %v1781, %v2549
      %v2551 = vpop.f32.mrf.mxu0
      %2552 = vmatprep.mubr.bf16.mxu0 0
      %2553 = vmatmul.mubr.bf16.gmra.mxu0 %v2178
      %v2554 = vpop.f32.mrf.mxu0
      %v2555 = vadd.f32 %v1786, %v2554
      %v2556 = vpop.f32.mrf.mxu0
      %v2557 = vpop.f32.mrf.mxu0
      %v2558 = vadd.f32 %v1789, %v2557
      %v2559 = vpop.f32.mrf.mxu0
      %2560 = vmatprep.mubr.bf16.mxu0 0
      %2561 = vmatmul.mubr.bf16.gmra.mxu0 %v2180
      %v2562 = vpop.f32.mrf.mxu0
      %v2563 = vadd.f32 %v1794, %v2562
      %v2564 = vpop.f32.mrf.mxu0
      %v2565 = vpop.f32.mrf.mxu0
      %v2566 = vadd.f32 %v1797, %v2565
      %v2567 = vpop.f32.mrf.mxu0
      %2568 = vmatprep.mubr.bf16.mxu0 0
      %2569 = vmatmul.mubr.bf16.gmra.mxu0 %v2182
      %v2570 = vpop.f32.mrf.mxu0
      %v2571 = vadd.f32 %v1802, %v2570
      %v2572 = vpop.f32.mrf.mxu0
      %v2573 = vpop.f32.mrf.mxu0
      %v2574 = vadd.f32 %v1805, %v2573
      %v2575 = vpop.f32.mrf.mxu0
      %2576 = vmatprep.mubr.bf16.mxu0 0
      %2577 = vmatmul.mubr.bf16.gmra.mxu0 %v2184
      %v2578 = vpop.f32.mrf.mxu0
      %v2579 = vadd.f32 %v1810, %v2578
      %v2580 = vpop.f32.mrf.mxu0
      %v2581 = vpop.f32.mrf.mxu0
      %v2582 = vadd.f32 %v1813, %v2581
      %v2583 = vpop.f32.mrf.mxu0
      %2584 = vmatprep.mubr.bf16.mxu0 0
      %2585 = vmatmul.mubr.bf16.gmra.mxu0 %v2186
      %v2586 = vpop.f32.mrf.mxu0
      %v2587 = vadd.f32 %v1818, %v2586
      %v2588 = vpop.f32.mrf.mxu0
      %v2589 = vpop.f32.mrf.mxu0
      %v2590 = vadd.f32 %v1821, %v2589
      %v2591 = vpop.f32.mrf.mxu0
      %2592 = vmatprep.mubr.bf16.mxu0 0
      %2593 = vmatmul.mubr.bf16.gmra.mxu0 %v2188
      %v2594 = vpop.f32.mrf.mxu0
      %v2595 = vadd.f32 %v1826, %v2594
      %v2596 = vpop.f32.mrf.mxu0
      %v2597 = vpop.f32.mrf.mxu0
      %v2598 = vadd.f32 %v1829, %v2597
      %v2599 = vpop.f32.mrf.mxu0
      %2600 = vmatprep.mubr.bf16.mxu0 0
      %2601 = vmatmul.mubr.bf16.gmra.mxu0 %v2190
      %v2602 = vpop.f32.mrf.mxu0
      %v2603 = vadd.f32 %v1834, %v2602
      %v2604 = vpop.f32.mrf.mxu0
      %v2605 = vpop.f32.mrf.mxu0
      %v2606 = vadd.f32 %v1837, %v2605
      %v2607 = vpop.f32.mrf.mxu0
      %2608 = vmatprep.mubr.bf16.mxu0 0
      %2609 = vmatmul.mubr.bf16.gmra.mxu0 %v2192
      %v2610 = vpop.f32.mrf.mxu0
      %v2611 = vadd.f32 %v1842, %v2610
      %v2612 = vpop.f32.mrf.mxu0
      %v2613 = vpop.f32.mrf.mxu0
      %v2614 = vadd.f32 %v1845, %v2613
      %v2615 = vpop.f32.mrf.mxu0
      %2616 = vmatprep.mubr.bf16.mxu0 0
      %2617 = vmatmul.mubr.bf16.gmra.mxu0 %v2194
      %v2618 = vpop.f32.mrf.mxu0
      %v2619 = vadd.f32 %v1850, %v2618
      %v2620 = vpop.f32.mrf.mxu0
      %v2621 = vpop.f32.mrf.mxu0
      %v2622 = vadd.f32 %v1853, %v2621
      %v2623 = vpop.f32.mrf.mxu0
      %2624 = vmatprep.mubr.bf16.mxu0 0
      %2625 = vmatmul.mubr.bf16.gmra.mxu0 %v2196
      %v2626 = vpop.f32.mrf.mxu0
      %v2627 = vadd.f32 %v1858, %v2626
      %v2628 = vpop.f32.mrf.mxu0
      %v2629 = vpop.f32.mrf.mxu0
      %v2630 = vadd.f32 %v1861, %v2629
      %v2631 = vpop.f32.mrf.mxu0
      %2632 = vmatprep.mubr.bf16.mxu0 0
      %2633 = vmatmul.mubr.bf16.gmra.mxu0 %v2198
      %v2634 = vpop.f32.mrf.mxu0
      %v2635 = vadd.f32 %v1866, %v2634
      %v2636 = vpop.f32.mrf.mxu0
      %v2637 = vpop.f32.mrf.mxu0
      %v2638 = vadd.f32 %v1869, %v2637
      %v2639 = vpop.f32.mrf.mxu0
      %2640 = vmatprep.mubr.bf16.mxu0 0
      %2641 = vmatmul.mubr.bf16.gmra.mxu0 %v2200
      %v2642 = vpop.f32.mrf.mxu0
      %v2643 = vadd.f32 %v1874, %v2642
      %v2644 = vpop.f32.mrf.mxu0
      %v2645 = vpop.f32.mrf.mxu0
      %v2646 = vadd.f32 %v1877, %v2645
      %v2647 = vpop.f32.mrf.mxu0
      %2648 = vmatprep.mubr.bf16.mxu0 0
      %2649 = vmatmul.mubr.bf16.gmra.mxu0 %v2202
      %v2650 = vpop.f32.mrf.mxu0
      %v2651 = vadd.f32 %v1882, %v2650
      %v2652 = vpop.f32.mrf.mxu0
      %v2653 = vpop.f32.mrf.mxu0
      %v2654 = vadd.f32 %v1885, %v2653
      %v2655 = vpop.f32.mrf.mxu0
      %2656 = vmatprep.mubr.bf16.mxu0 0
      %2657 = vmatmul.mubr.bf16.gmra.mxu0 %v2204
      %v2658 = vpop.f32.mrf.mxu0
      %v2659 = vadd.f32 %v1890, %v2658
      %v2660 = vpop.f32.mrf.mxu0
      %v2661 = vpop.f32.mrf.mxu0
      %v2662 = vadd.f32 %v1893, %v2661
      %v2663 = vpop.f32.mrf.mxu0
      %2664 = vmatprep.mubr.bf16.mxu0 0
      %2665 = vmatmul.mubr.bf16.gmra.mxu0 %v2206
      %v2666 = vpop.f32.mrf.mxu0
      %v2667 = vadd.f32 %v1898, %v2666
      %v2668 = vpop.f32.mrf.mxu0
      %v2669 = vpop.f32.mrf.mxu0
      %v2670 = vadd.f32 %v1901, %v2669
      %v2671 = vpop.f32.mrf.mxu0
      %2672 = vmatprep.mubr.bf16.mxu0 0
      %2673 = vmatmul.mubr.bf16.gmra.mxu0 %v2208
      %v2674 = vpop.f32.mrf.mxu0
      %v2675 = vadd.f32 %v1906, %v2674
      %v2676 = vpop.f32.mrf.mxu0
      %v2677 = vpop.f32.mrf.mxu0
      %v2678 = vadd.f32 %v1909, %v2677
      %v2679 = vpop.f32.mrf.mxu0
      %2680 = vmatprep.mubr.bf16.mxu0 0
      %2681 = vmatmul.mubr.bf16.gmra.mxu0 %v2210
      %v2682 = vpop.f32.mrf.mxu0
      %v2683 = vadd.f32 %v1914, %v2682
      %v2684 = vpop.f32.mrf.mxu0
      %v2685 = vpop.f32.mrf.mxu0
      %v2686 = vadd.f32 %v1917, %v2685
      %v2687 = vpop.f32.mrf.mxu0
      %2688 = vmatprep.mubr.bf16.mxu0 0
      %2689 = vmatmul.mubr.bf16.gmra.mxu0 %v2212
      %v2690 = vpop.f32.mrf.mxu0
      %v2691 = vadd.f32 %v1922, %v2690
      %v2692 = vpop.f32.mrf.mxu0
      %v2693 = vpop.f32.mrf.mxu0
      %v2694 = vadd.f32 %v1925, %v2693
      %v2695 = vpop.f32.mrf.mxu0
      %2696 = vmatprep.mubr.bf16.mxu0 0
      %2697 = vmatmul.mubr.bf16.gmra.mxu0 %v2214
      %v2698 = vpop.f32.mrf.mxu0
      %v2699 = vadd.f32 %v1930, %v2698
      %v2700 = vpop.f32.mrf.mxu0
      %v2701 = vpop.f32.mrf.mxu0
      %v2702 = vadd.f32 %v1933, %v2701
      %v2703 = vpop.f32.mrf.mxu0
      %2704 = vmatprep.mubr.bf16.mxu0 0
      %2705 = vmatmul.mubr.bf16.gmra.mxu0 %v2216
      %v2706 = vpop.f32.mrf.mxu0
      %v2707 = vadd.f32 %v1938, %v2706
      %v2708 = vpop.f32.mrf.mxu0
      %v2709 = vpop.f32.mrf.mxu0
      %v2710 = vadd.f32 %v1941, %v2709
      %v2711 = vpop.f32.mrf.mxu0
      %2712 = vmatprep.mubr.bf16.mxu0 0
      %2713 = vmatmul.mubr.bf16.gmra.mxu0 %v2218
      %v2714 = vpop.f32.mrf.mxu0
      %v2715 = vadd.f32 %v1946, %v2714
      %v2716 = vpop.f32.mrf.mxu0
      %v2717 = vpop.f32.mrf.mxu0
      %v2718 = vadd.f32 %v1949, %v2717
      %v2719 = vpop.f32.mrf.mxu0
      %2720 = vmatprep.mubr.bf16.mxu0 0
      %2721 = vmatmul.mubr.bf16.gmra.mxu0 %v2220
      %v2722 = vpop.f32.mrf.mxu0
      %v2723 = vadd.f32 %v1954, %v2722
      %v2724 = vpop.f32.mrf.mxu0
      %v2725 = vpop.f32.mrf.mxu0
      %v2726 = vadd.f32 %v1957, %v2725
      %v2727 = vpop.f32.mrf.mxu0
      %2728 = vmatprep.mubr.bf16.mxu0 0
      %2729 = vmatmul.mubr.bf16.gmra.mxu0 %v2222
      %v2730 = vpop.f32.mrf.mxu0
      %v2731 = vadd.f32 %v1962, %v2730
      %v2732 = vpop.f32.mrf.mxu0
      %v2733 = vpop.f32.mrf.mxu0
      %v2734 = vadd.f32 %v1965, %v2733
      %v2735 = vpop.f32.mrf.mxu0
      %2736 = vmatprep.mubr.bf16.mxu0 0
      %2737 = vmatmul.mubr.bf16.gmra.mxu0 %v2224
      %v2738 = vpop.f32.mrf.mxu0
      %v2739 = vadd.f32 %v1970, %v2738
      %v2740 = vpop.f32.mrf.mxu0
      %v2741 = vpop.f32.mrf.mxu0
      %v2742 = vadd.f32 %v1973, %v2741
      %v2743 = vpop.f32.mrf.mxu0
      %2744 = vmatprep.mubr.bf16.mxu0 0
      %2745 = vmatmul.mubr.bf16.gmra.mxu0 %v2226
      %v2746 = vpop.f32.mrf.mxu0
      %v2747 = vadd.f32 %v1978, %v2746
      %v2748 = vpop.f32.mrf.mxu0
      %v2749 = vpop.f32.mrf.mxu0
      %v2750 = vadd.f32 %v1981, %v2749
      %v2751 = vpop.f32.mrf.mxu0
      %2752 = vmatprep.mubr.bf16.mxu0 0
      %2753 = vmatmul.mubr.bf16.gmra.mxu0 %v2228
      %v2754 = vpop.f32.mrf.mxu0
      %v2755 = vadd.f32 %v1986, %v2754
      %v2756 = vpop.f32.mrf.mxu0
      %v2757 = vpop.f32.mrf.mxu0
      %v2758 = vadd.f32 %v1989, %v2757
      %v2759 = vpop.f32.mrf.mxu0
      %2760 = vmatprep.mubr.bf16.mxu0 0
      %2761 = vmatmul.mubr.bf16.gmra.mxu0 %v2230
      %v2762 = vpop.f32.mrf.mxu0
      %v2763 = vadd.f32 %v1994, %v2762
      %v2764 = vpop.f32.mrf.mxu0
      %v2765 = vpop.f32.mrf.mxu0
      %v2766 = vadd.f32 %v1997, %v2765
      %v2767 = vpop.f32.mrf.mxu0
      %2768 = vmatprep.mubr.bf16.mxu0 0
      %2769 = vmatmul.mubr.bf16.gmra.mxu0 %v2232
      %v2770 = vpop.f32.mrf.mxu0
      %v2771 = vadd.f32 %v2002, %v2770
      %v2772 = vpop.f32.mrf.mxu0
      %v2773 = vpop.f32.mrf.mxu0
      %v2774 = vadd.f32 %v2005, %v2773
      %v2775 = vpop.f32.mrf.mxu0
      %2776 = vmatprep.mubr.bf16.mxu0 0
      %2777 = vmatmul.mubr.bf16.gmra.mxu0 %v2234
      %v2778 = vpop.f32.mrf.mxu0
      %v2779 = vadd.f32 %v2010, %v2778
      %v2780 = vpop.f32.mrf.mxu0
      %v2781 = vpop.f32.mrf.mxu0
      %v2782 = vadd.f32 %v2013, %v2781
      %v2783 = vpop.f32.mrf.mxu0
      %2784 = vmatprep.mubr.bf16.mxu0 0
      %2785 = vmatmul.mubr.bf16.gmra.mxu0 %v2236
      %v2786 = vpop.f32.mrf.mxu0
      %v2787 = vadd.f32 %v2018, %v2786
      %v2788 = vpop.f32.mrf.mxu0
      %v2789 = vpop.f32.mrf.mxu0
      %v2790 = vadd.f32 %v2021, %v2789
      %v2791 = vpop.f32.mrf.mxu0
      %2792 = vmatprep.mubr.bf16.mxu0 0
      %2793 = vmatmul.mubr.bf16.gmra.mxu0 %v2238
      %v2794 = vpop.f32.mrf.mxu0
      %v2795 = vadd.f32 %v2026, %v2794
      %v2796 = vpop.f32.mrf.mxu0
      %v2797 = vpop.f32.mrf.mxu0
      %v2798 = vadd.f32 %v2029, %v2797
      %v2799 = vpop.f32.mrf.mxu0
      %2800 = vmatprep.mubr.bf16.mxu0 0
      %2801 = vmatmul.mubr.bf16.gmra.mxu0 %v2240
      %v2802 = vpop.f32.mrf.mxu0
      %v2803 = vadd.f32 %v2034, %v2802
      %v2804 = vpop.f32.mrf.mxu0
      %v2805 = vpop.f32.mrf.mxu0
      %v2806 = vadd.f32 %v2037, %v2805
      %v2807 = vpop.f32.mrf.mxu0
      %2808 = vmatprep.mubr.bf16.mxu0 0
      %2809 = vmatmul.mubr.bf16.gmra.mxu0 %v2242
      %v2810 = vpop.f32.mrf.mxu0
      %v2811 = vadd.f32 %v2042, %v2810
      %v2812 = vpop.f32.mrf.mxu0
      %v2813 = vpop.f32.mrf.mxu0
      %v2814 = vadd.f32 %v2045, %v2813
      %v2815 = vpop.f32.mrf.mxu0
      %2816 = vmatprep.mubr.bf16.mxu0 0
      %2817 = vmatmul.mubr.bf16.gmra.mxu0 %v2244
      %v2818 = vpop.f32.mrf.mxu0
      %v2819 = vadd.f32 %v2050, %v2818
      %v2820 = vpop.f32.mrf.mxu0
      %v2821 = vpop.f32.mrf.mxu0
      %v2822 = vadd.f32 %v2053, %v2821
      %v2823 = vpop.f32.mrf.mxu0
      %2824 = vmatprep.mubr.bf16.mxu0 0
      %2825 = vmatmul.mubr.bf16.gmra.mxu0 %v2246
      %v2826 = vpop.f32.mrf.mxu0
      %v2827 = vadd.f32 %v2058, %v2826
      %v2828 = vpop.f32.mrf.mxu0
      %v2829 = vpop.f32.mrf.mxu0
      %v2830 = vadd.f32 %v2061, %v2829
      %v2831 = vpop.f32.mrf.mxu0
      %2832 = vmatprep.mubr.bf16.mxu0 0
      %2833 = vmatmul.mubr.bf16.gmra.mxu0 %v2248
      %v2834 = vpop.f32.mrf.mxu0
      %v2835 = vadd.f32 %v2066, %v2834
      %v2836 = vpop.f32.mrf.mxu0
      %v2837 = vpop.f32.mrf.mxu0
      %v2838 = vadd.f32 %v2069, %v2837
      %v2839 = vpop.f32.mrf.mxu0
      %2840 = vmatprep.mubr.bf16.mxu0 0
      %2841 = vmatmul.mubr.bf16.gmra.mxu0 %v2250
      %v2842 = vpop.f32.mrf.mxu0
      %v2843 = vadd.f32 %v2074, %v2842
      %v2844 = vpop.f32.mrf.mxu0
      %v2845 = vpop.f32.mrf.mxu0
      %v2846 = vadd.f32 %v2077, %v2845
      %v2847 = vpop.f32.mrf.mxu0
      %2848 = vmatprep.mubr.bf16.mxu0 0
      %2849 = vmatmul.mubr.bf16.gmra.mxu0 %v2252
      %v2850 = vpop.f32.mrf.mxu0
      %v2851 = vadd.f32 %v2082, %v2850
      %v2852 = vpop.f32.mrf.mxu0
      %v2853 = vpop.f32.mrf.mxu0
      %v2854 = vadd.f32 %v2085, %v2853
      %v2855 = vpop.f32.mrf.mxu0
      %2856 = vmatprep.mubr.bf16.mxu0 0
      %2857 = vmatmul.mubr.bf16.gmra.mxu0 %v2254
      %v2858 = vpop.f32.mrf.mxu0
      %v2859 = vadd.f32 %v2090, %v2858
      %v2860 = vpop.f32.mrf.mxu0
      %v2861 = vpop.f32.mrf.mxu0
      %v2862 = vadd.f32 %v2093, %v2861
      %v2863 = vpop.f32.mrf.mxu0
      %2864 = vmatprep.mubr.bf16.mxu0 0
      %2865 = vmatmul.mubr.bf16.gmra.mxu0 %v2256
      %v2866 = vpop.f32.mrf.mxu0
      %v2867 = vadd.f32 %v2098, %v2866
      %v2868 = vpop.f32.mrf.mxu0
      %v2869 = vpop.f32.mrf.mxu0
      %v2870 = vadd.f32 %v2101, %v2869
      %v2871 = vpop.f32.mrf.mxu0
      %2872 = vmatprep.mubr.bf16.mxu0 0
      %2873 = vmatmul.mubr.bf16.gmra.mxu0 %v2259
      %v2874 = vpop.f32.mrf.mxu0
      %v2875 = vadd.f32 %v2106, %v2874
      %v2876 = vpop.f32.mrf.mxu0
      %v2877 = vpop.f32.mrf.mxu0
      %v2878 = vpop.f32.mrf.mxu0
      %2879 = vdwg.mxu0
      %v2880 = vld [vmem:[%s165] sm:$0xe]
      %s2881 = scalar_lea.vmem %s1, 4
      %v2882 = vld [vmem:[%s2881] sm:$0x3]
      %v2884 = vunpack.c.l.b16 %v2880
      %v2885 = vpack.c.b16 %v467, %v2884
      %vm2886 = vcmask 1046528
      %v2887 = vrot.slane %v2885, 1
      %v2888 = vrot.slane %v612, 1
      %v2889 = vsel %vm2886, %v2887, %v2888
      %v2890 = vrot.slane %v613, 1
      %v2891 = vsel %vm2886, %v2888, %v2890
      %v2892 = vrot.slane %v614, 1
      %v2893 = vsel %vm2886, %v2890, %v2892
      %v2894 = vrot.slane %v615, 1
      %v2895 = vsel %vm2886, %v2892, %v2894
      %v2896 = vrot.slane %v616, 1
      %v2897 = vsel %vm2886, %v2894, %v2896
      %v2898 = vrot.slane %v617, 1
      %v2899 = vsel %vm2886, %v2896, %v2898
      %v2900 = vrot.slane %v618, 1
      %v2901 = vsel %vm2886, %v2898, %v2900
      %v2902 = vrot.slane %v619, 1
      %v2903 = vsel %vm2886, %v2900, %v2902
      %v2904 = vrot.slane %v620, 1
      %v2905 = vsel %vm2886, %v2902, %v2904
      %v2906 = vrot.slane %v621, 1
      %v2907 = vsel %vm2886, %v2904, %v2906
      %v2908 = vrot.slane %v622, 1
      %v2909 = vsel %vm2886, %v2906, %v2908
      %v2910 = vrot.slane %v623, 1
      %v2911 = vsel %vm2886, %v2908, %v2910
      %v2912 = vrot.slane %v624, 1
      %v2913 = vsel %vm2886, %v2910, %v2912
      %v2914 = vrot.slane %v625, 1
      %v2915 = vsel %vm2886, %v2912, %v2914
      %v2916 = vrot.slane %v626, 1
      %v2917 = vsel %vm2886, %v2914, %v2916
      %v2918 = vrot.slane %v627, 1
      %v2919 = vsel %vm2886, %v2916, %v2918
      %v2920 = vrot.slane %v628, 1
      %v2921 = vsel %vm2886, %v2918, %v2920
      %v2922 = vrot.slane %v629, 1
      %v2923 = vsel %vm2886, %v2920, %v2922
      %v2924 = vrot.slane %v630, 1
      %v2925 = vsel %vm2886, %v2922, %v2924
      %v2926 = vrot.slane %v631, 1
      %v2927 = vsel %vm2886, %v2924, %v2926
      %v2928 = vrot.slane %v632, 1
      %v2929 = vsel %vm2886, %v2926, %v2928
      %v2930 = vrot.slane %v633, 1
      %v2931 = vsel %vm2886, %v2928, %v2930
      %v2932 = vrot.slane %v634, 1
      %v2933 = vsel %vm2886, %v2930, %v2932
      %v2934 = vrot.slane %v635, 1
      %v2935 = vsel %vm2886, %v2932, %v2934
      %v2936 = vrot.slane %v636, 1
      %v2937 = vsel %vm2886, %v2934, %v2936
      %v2938 = vrot.slane %v637, 1
      %v2939 = vsel %vm2886, %v2936, %v2938
      %v2940 = vrot.slane %v638, 1
      %v2941 = vsel %vm2886, %v2938, %v2940
      %v2942 = vrot.slane %v639, 1
      %v2943 = vsel %vm2886, %v2940, %v2942
      %v2944 = vrot.slane %v640, 1
      %v2945 = vsel %vm2886, %v2942, %v2944
      %v2946 = vrot.slane %v641, 1
      %v2947 = vsel %vm2886, %v2944, %v2946
      %v2948 = vrot.slane %v642, 1
      %v2949 = vsel %vm2886, %v2946, %v2948
      %v2950 = vrot.slane %v643, 1
      %v2951 = vsel %vm2886, %v2948, %v2950
      %v2952 = vrot.slane %v644, 1
      %v2953 = vsel %vm2886, %v2950, %v2952
      %v2954 = vrot.slane %v645, 1
      %v2955 = vsel %vm2886, %v2952, %v2954
      %v2956 = vrot.slane %v646, 1
      %v2957 = vsel %vm2886, %v2954, %v2956
      %v2958 = vrot.slane %v647, 1
      %v2959 = vsel %vm2886, %v2956, %v2958
      %v2960 = vrot.slane %v648, 1
      %v2961 = vsel %vm2886, %v2958, %v2960
      %v2962 = vrot.slane %v649, 1
      %v2963 = vsel %vm2886, %v2960, %v2962
      %v2964 = vrot.slane %v650, 1
      %v2965 = vsel %vm2886, %v2962, %v2964
      %v2966 = vrot.slane %v651, 1
      %v2967 = vsel %vm2886, %v2964, %v2966
      %v2968 = vrot.slane %v652, 1
      %v2969 = vsel %vm2886, %v2966, %v2968
      %v2970 = vrot.slane %v653, 1
      %v2971 = vsel %vm2886, %v2968, %v2970
      %v2972 = vrot.slane %v654, 1
      %v2973 = vsel %vm2886, %v2970, %v2972
      %v2974 = vrot.slane %v655, 1
      %v2975 = vsel %vm2886, %v2972, %v2974
      %v2976 = vrot.slane %v656, 1
      %v2977 = vsel %vm2886, %v2974, %v2976
      %v2978 = vrot.slane %v657, 1
      %v2979 = vsel %vm2886, %v2976, %v2978
      %v2980 = vrot.slane %v658, 1
      %v2981 = vsel %vm2886, %v2978, %v2980
      %v2982 = vrot.slane %v659, 1
      %v2983 = vsel %vm2886, %v2980, %v2982
      %v2984 = vrot.slane %v660, 1
      %v2985 = vsel %vm2886, %v2982, %v2984
      %v2986 = vrot.slane %v661, 1
      %v2987 = vsel %vm2886, %v2984, %v2986
      %v2988 = vrot.slane %v662, 1
      %v2989 = vsel %vm2886, %v2986, %v2988
      %v2990 = vrot.slane %v663, 1
      %v2991 = vsel %vm2886, %v2988, %v2990
      %v2992 = vrot.slane %v664, 1
      %v2993 = vsel %vm2886, %v2990, %v2992
      %v2994 = vrot.slane %v665, 1
      %v2995 = vsel %vm2886, %v2992, %v2994
      %v2996 = vrot.slane %v666, 1
      %v2997 = vsel %vm2886, %v2994, %v2996
      %v2998 = vrot.slane %v667, 1
      %v2999 = vsel %vm2886, %v2996, %v2998
      %v3000 = vrot.slane %v668, 1
      %v3001 = vsel %vm2886, %v2998, %v3000
      %v3002 = vrot.slane %v669, 1
      %v3003 = vsel %vm2886, %v3000, %v3002
      %v3004 = vrot.slane %v670, 1
      %v3005 = vsel %vm2886, %v3002, %v3004
      %v3006 = vrot.slane %v671, 1
      %v3007 = vsel %vm2886, %v3004, %v3006
      %v3008 = vrot.slane %v672, 1
      %v3009 = vsel %vm2886, %v3006, %v3008
      %v3010 = vrot.slane %v673, 1
      %v3011 = vsel %vm2886, %v3008, %v3010
      %v3012 = vrot.slane %v674, 1
      %v3013 = vsel %vm2886, %v3010, %v3012
      %v3014 = vrot.slane %v675, 1
      %v3015 = vsel %vm2886, %v3012, %v3014
      %v3016 = vrot.slane %v676, 1
      %v3017 = vsel %vm2886, %v3014, %v3016
      %v3018 = vrot.slane %v677, 1
      %v3019 = vsel %vm2886, %v3016, %v3018
      %v3020 = vrot.slane %v678, 1
      %v3021 = vsel %vm2886, %v3018, %v3020
      %v3022 = vrot.slane %v679, 1
      %v3023 = vsel %vm2886, %v3020, %v3022
      %v3024 = vrot.slane %v680, 1
      %v3025 = vsel %vm2886, %v3022, %v3024
      %v3026 = vrot.slane %v681, 1
      %v3027 = vsel %vm2886, %v3024, %v3026
      %v3028 = vrot.slane %v682, 1
      %v3029 = vsel %vm2886, %v3026, %v3028
      %v3030 = vrot.slane %v683, 1
      %v3031 = vsel %vm2886, %v3028, %v3030
      %v3033 = vsel %vm1268, %v2889, 0
      %v3036 = vsel %vm1268, %v2891, 0
      %v3039 = vsel %vm1268, %v2893, 0
      %v3042 = vsel %vm1268, %v2895, 0
      %v3045 = vsel %vm1268, %v2897, 0
      %v3048 = vsel %vm1268, %v2899, 0
      %v3051 = vsel %vm1268, %v2901, 0
      %v3054 = vsel %vm1268, %v2903, 0
      %v3057 = vsel %vm1268, %v2905, 0
      %v3060 = vsel %vm1268, %v2907, 0
      %v3063 = vsel %vm1268, %v2909, 0
      %v3066 = vsel %vm1268, %v2911, 0
      %v3069 = vsel %vm1268, %v2913, 0
      %v3072 = vsel %vm1268, %v2915, 0
      %v3075 = vsel %vm1268, %v2917, 0
      %v3078 = vsel %vm1268, %v2919, 0
      %v3081 = vsel %vm1268, %v2921, 0
      %v3084 = vsel %vm1268, %v2923, 0
      %v3087 = vsel %vm1268, %v2925, 0
      %v3090 = vsel %vm1268, %v2927, 0
      %v3093 = vsel %vm1268, %v2929, 0
      %v3096 = vsel %vm1268, %v2931, 0
      %v3099 = vsel %vm1268, %v2933, 0
      %v3102 = vsel %vm1268, %v2935, 0
      %v3105 = vsel %vm1268, %v2937, 0
      %v3108 = vsel %vm1268, %v2939, 0
      %v3111 = vsel %vm1268, %v2941, 0
      %v3114 = vsel %vm1268, %v2943, 0
      %v3117 = vsel %vm1268, %v2945, 0
      %v3120 = vsel %vm1268, %v2947, 0
      %v3123 = vsel %vm1268, %v2949, 0
      %v3126 = vsel %vm1268, %v2951, 0
      %v3129 = vsel %vm1268, %v2953, 0
      %v3132 = vsel %vm1268, %v2955, 0
      %v3135 = vsel %vm1268, %v2957, 0
      %v3138 = vsel %vm1268, %v2959, 0
      %v3141 = vsel %vm1268, %v2961, 0
      %v3144 = vsel %vm1268, %v2963, 0
      %v3147 = vsel %vm1268, %v2965, 0
      %v3150 = vsel %vm1268, %v2967, 0
      %v3153 = vsel %vm1268, %v2969, 0
      %v3156 = vsel %vm1268, %v2971, 0
      %v3159 = vsel %vm1268, %v2973, 0
      %v3162 = vsel %vm1268, %v2975, 0
      %v3165 = vsel %vm1268, %v2977, 0
      %v3168 = vsel %vm1268, %v2979, 0
      %v3171 = vsel %vm1268, %v2981, 0
      %v3174 = vsel %vm1268, %v2983, 0
      %v3177 = vsel %vm1268, %v2985, 0
      %v3180 = vsel %vm1268, %v2987, 0
      %v3183 = vsel %vm1268, %v2989, 0
      %v3186 = vsel %vm1268, %v2991, 0
      %v3189 = vsel %vm1268, %v2993, 0
      %v3192 = vsel %vm1268, %v2995, 0
      %v3195 = vsel %vm1268, %v2997, 0
      %v3198 = vsel %vm1268, %v2999, 0
      %v3201 = vsel %vm1268, %v3001, 0
      %v3204 = vsel %vm1268, %v3003, 0
      %v3207 = vsel %vm1268, %v3005, 0
      %v3210 = vsel %vm1268, %v3007, 0
      %v3213 = vsel %vm1268, %v3009, 0
      %v3216 = vsel %vm1268, %v3011, 0
      %v3219 = vsel %vm1268, %v3013, 0
      %v3222 = vsel %vm1268, %v3015, 0
      %v3225 = vsel %vm1268, %v3017, 0
      %v3228 = vsel %vm1268, %v3019, 0
      %v3231 = vsel %vm1268, %v3021, 0
      %v3234 = vsel %vm1268, %v3023, 0
      %v3237 = vsel %vm1268, %v3025, 0
      %v3240 = vsel %vm1268, %v3027, 0
      %v3243 = vsel %vm1268, %v3029, 0
      %v3246 = vsel %vm1268, %v3031, 0
      %v3249 = vsel %vm1268, %v3030, 0
      %v3252 = vand.u32 %v2882, %v1491
      %3254 = vmatprep.subr.bf16.mxu0 0
      %3255 = vmatpush1.bf16.msra.mxu0 0
      %3256 = vmatprep.subr.bf16.mxu0 0
      %3257 = vmatpush1.bf16.msra.mxu0 0
      %3258 = vmatprep.subr.bf16.mxu0 0
      %3259 = vmatpush1.bf16.msra.mxu0 0
      %3260 = vmatprep.subr.bf16.mxu0 0
      %3261 = vmatpush1.bf16.msra.mxu0 0
      %3262 = vmatprep.subr.bf16.mxu0 0
      %3263 = vmatpush1.bf16.msra.mxu0 0
      %3264 = vmatprep.subr.bf16.mxu0 0
      %3265 = vmatpush1.bf16.msra.mxu0 0
      %3266 = vmatprep.subr.bf16.mxu0 0
      %3267 = vmatpush1.bf16.msra.mxu0 0
      %3268 = vmatprep.subr.bf16.mxu0 0
      %3269 = vmatpush1.bf16.msra.mxu0 %v3252
      %3270 = vmatprep.subr.bf16.mxu0 0
      %3271 = vmatpush2.bf16.msra.mxu0 0
      %3272 = vmatprep.subr.bf16.mxu0 0
      %3273 = vmatpush2.bf16.msra.mxu0 0
      %3274 = vmatprep.subr.bf16.mxu0 0
      %3275 = vmatpush2.bf16.msra.mxu0 0
      %3276 = vmatprep.subr.bf16.mxu0 0
      %3277 = vmatpush2.bf16.msra.mxu0 0
      %3278 = vmatprep.subr.bf16.mxu0 0
      %3279 = vmatpush2.bf16.msra.mxu0 0
      %3280 = vmatprep.subr.bf16.mxu0 0
      %3281 = vmatpush2.bf16.msra.mxu0 0
      %3282 = vmatprep.subr.bf16.mxu0 0
      %3283 = vmatpush2.bf16.msra.mxu0 0
      %3284 = vmatprep.subr.bf16.mxu0 0
      %3285 = vmatpush2.bf16.msra.mxu0 0
      %3286 = vmatprep.mubr.bf16.mxu0 0
      %3287 = vmatmul.mubr.bf16.gmra.mxu0 %v3033
      %v3288 = vpop.f32.mrf.mxu0
      %v3289 = vadd.f32 0.0, %v3288
      %v3290 = vpop.f32.mrf.mxu0
      %v3291 = vpop.f32.mrf.mxu0
      %v3292 = vadd.f32 0.0, %v3291
      %v3293 = vpop.f32.mrf.mxu0
      %3294 = vmatprep.mubr.bf16.mxu0 0
      %3295 = vmatmul.mubr.bf16.gmra.mxu0 %v3036
      %v3296 = vpop.f32.mrf.mxu0
      %v3297 = vadd.f32 0.0, %v3296
      %v3298 = vpop.f32.mrf.mxu0
      %v3299 = vpop.f32.mrf.mxu0
      %v3300 = vadd.f32 0.0, %v3299
      %v3301 = vpop.f32.mrf.mxu0
      %3302 = vmatprep.mubr.bf16.mxu0 0
      %3303 = vmatmul.mubr.bf16.gmra.mxu0 %v3039
      %v3304 = vpop.f32.mrf.mxu0
      %v3305 = vadd.f32 0.0, %v3304
      %v3306 = vpop.f32.mrf.mxu0
      %v3307 = vpop.f32.mrf.mxu0
      %v3308 = vadd.f32 0.0, %v3307
      %v3309 = vpop.f32.mrf.mxu0
      %3310 = vmatprep.mubr.bf16.mxu0 0
      %3311 = vmatmul.mubr.bf16.gmra.mxu0 %v3042
      %v3312 = vpop.f32.mrf.mxu0
      %v3313 = vadd.f32 0.0, %v3312
      %v3314 = vpop.f32.mrf.mxu0
      %v3315 = vpop.f32.mrf.mxu0
      %v3316 = vadd.f32 0.0, %v3315
      %v3317 = vpop.f32.mrf.mxu0
      %3318 = vmatprep.mubr.bf16.mxu0 0
      %3319 = vmatmul.mubr.bf16.gmra.mxu0 %v3045
      %v3320 = vpop.f32.mrf.mxu0
      %v3321 = vadd.f32 0.0, %v3320
      %v3322 = vpop.f32.mrf.mxu0
      %v3323 = vpop.f32.mrf.mxu0
      %v3324 = vadd.f32 0.0, %v3323
      %v3325 = vpop.f32.mrf.mxu0
      %3326 = vmatprep.mubr.bf16.mxu0 0
      %3327 = vmatmul.mubr.bf16.gmra.mxu0 %v3048
      %v3328 = vpop.f32.mrf.mxu0
      %v3329 = vadd.f32 0.0, %v3328
      %v3330 = vpop.f32.mrf.mxu0
      %v3331 = vpop.f32.mrf.mxu0
      %v3332 = vadd.f32 0.0, %v3331
      %v3333 = vpop.f32.mrf.mxu0
      %3334 = vmatprep.mubr.bf16.mxu0 0
      %3335 = vmatmul.mubr.bf16.gmra.mxu0 %v3051
      %v3336 = vpop.f32.mrf.mxu0
      %v3337 = vadd.f32 0.0, %v3336
      %v3338 = vpop.f32.mrf.mxu0
      %v3339 = vpop.f32.mrf.mxu0
      %v3340 = vadd.f32 0.0, %v3339
      %v3341 = vpop.f32.mrf.mxu0
      %3342 = vmatprep.mubr.bf16.mxu0 0
      %3343 = vmatmul.mubr.bf16.gmra.mxu0 %v3054
      %v3344 = vpop.f32.mrf.mxu0
      %v3345 = vadd.f32 0.0, %v3344
      %v3346 = vpop.f32.mrf.mxu0
      %v3347 = vpop.f32.mrf.mxu0
      %v3348 = vadd.f32 0.0, %v3347
      %v3349 = vpop.f32.mrf.mxu0
      %3350 = vmatprep.mubr.bf16.mxu0 0
      %3351 = vmatmul.mubr.bf16.gmra.mxu0 %v3057
      %v3352 = vpop.f32.mrf.mxu0
      %v3353 = vadd.f32 0.0, %v3352
      %v3354 = vpop.f32.mrf.mxu0
      %v3355 = vpop.f32.mrf.mxu0
      %v3356 = vadd.f32 0.0, %v3355
      %v3357 = vpop.f32.mrf.mxu0
      %3358 = vmatprep.mubr.bf16.mxu0 0
      %3359 = vmatmul.mubr.bf16.gmra.mxu0 %v3060
      %v3360 = vpop.f32.mrf.mxu0
      %v3361 = vadd.f32 0.0, %v3360
      %v3362 = vpop.f32.mrf.mxu0
      %v3363 = vpop.f32.mrf.mxu0
      %v3364 = vadd.f32 0.0, %v3363
      %v3365 = vpop.f32.mrf.mxu0
      %3366 = vmatprep.mubr.bf16.mxu0 0
      %3367 = vmatmul.mubr.bf16.gmra.mxu0 %v3063
      %v3368 = vpop.f32.mrf.mxu0
      %v3369 = vadd.f32 0.0, %v3368
      %v3370 = vpop.f32.mrf.mxu0
      %v3371 = vpop.f32.mrf.mxu0
      %v3372 = vadd.f32 0.0, %v3371
      %v3373 = vpop.f32.mrf.mxu0
      %3374 = vmatprep.mubr.bf16.mxu0 0
      %3375 = vmatmul.mubr.bf16.gmra.mxu0 %v3066
      %v3376 = vpop.f32.mrf.mxu0
      %v3377 = vadd.f32 0.0, %v3376
      %v3378 = vpop.f32.mrf.mxu0
      %v3379 = vpop.f32.mrf.mxu0
      %v3380 = vadd.f32 0.0, %v3379
      %v3381 = vpop.f32.mrf.mxu0
      %3382 = vmatprep.mubr.bf16.mxu0 0
      %3383 = vmatmul.mubr.bf16.gmra.mxu0 %v3069
      %v3384 = vpop.f32.mrf.mxu0
      %v3385 = vadd.f32 0.0, %v3384
      %v3386 = vpop.f32.mrf.mxu0
      %v3387 = vpop.f32.mrf.mxu0
      %v3388 = vadd.f32 0.0, %v3387
      %v3389 = vpop.f32.mrf.mxu0
      %3390 = vmatprep.mubr.bf16.mxu0 0
      %3391 = vmatmul.mubr.bf16.gmra.mxu0 %v3072
      %v3392 = vpop.f32.mrf.mxu0
      %v3393 = vadd.f32 0.0, %v3392
      %v3394 = vpop.f32.mrf.mxu0
      %v3395 = vpop.f32.mrf.mxu0
      %v3396 = vadd.f32 0.0, %v3395
      %v3397 = vpop.f32.mrf.mxu0
      %3398 = vmatprep.mubr.bf16.mxu0 0
      %3399 = vmatmul.mubr.bf16.gmra.mxu0 %v3075
      %v3400 = vpop.f32.mrf.mxu0
      %v3401 = vadd.f32 0.0, %v3400
      %v3402 = vpop.f32.mrf.mxu0
      %v3403 = vpop.f32.mrf.mxu0
      %v3404 = vadd.f32 0.0, %v3403
      %v3405 = vpop.f32.mrf.mxu0
      %3406 = vmatprep.mubr.bf16.mxu0 0
      %3407 = vmatmul.mubr.bf16.gmra.mxu0 %v3078
      %v3408 = vpop.f32.mrf.mxu0
      %v3409 = vadd.f32 0.0, %v3408
      %v3410 = vpop.f32.mrf.mxu0
      %v3411 = vpop.f32.mrf.mxu0
      %v3412 = vadd.f32 0.0, %v3411
      %v3413 = vpop.f32.mrf.mxu0
      %3414 = vmatprep.mubr.bf16.mxu0 0
      %3415 = vmatmul.mubr.bf16.gmra.mxu0 %v3081
      %v3416 = vpop.f32.mrf.mxu0
      %v3417 = vadd.f32 0.0, %v3416
      %v3418 = vpop.f32.mrf.mxu0
      %v3419 = vpop.f32.mrf.mxu0
      %v3420 = vadd.f32 0.0, %v3419
      %v3421 = vpop.f32.mrf.mxu0
      %3422 = vmatprep.mubr.bf16.mxu0 0
      %3423 = vmatmul.mubr.bf16.gmra.mxu0 %v3084
      %v3424 = vpop.f32.mrf.mxu0
      %v3425 = vadd.f32 0.0, %v3424
      %v3426 = vpop.f32.mrf.mxu0
      %v3427 = vpop.f32.mrf.mxu0
      %v3428 = vadd.f32 0.0, %v3427
      %v3429 = vpop.f32.mrf.mxu0
      %3430 = vmatprep.mubr.bf16.mxu0 0
      %3431 = vmatmul.mubr.bf16.gmra.mxu0 %v3087
      %v3432 = vpop.f32.mrf.mxu0
      %v3433 = vadd.f32 0.0, %v3432
      %v3434 = vpop.f32.mrf.mxu0
      %v3435 = vpop.f32.mrf.mxu0
      %v3436 = vadd.f32 0.0, %v3435
      %v3437 = vpop.f32.mrf.mxu0
      %3438 = vmatprep.mubr.bf16.mxu0 0
      %3439 = vmatmul.mubr.bf16.gmra.mxu0 %v3090
      %v3440 = vpop.f32.mrf.mxu0
      %v3441 = vadd.f32 0.0, %v3440
      %v3442 = vpop.f32.mrf.mxu0
      %v3443 = vpop.f32.mrf.mxu0
      %v3444 = vadd.f32 0.0, %v3443
      %v3445 = vpop.f32.mrf.mxu0
      %3446 = vmatprep.mubr.bf16.mxu0 0
      %3447 = vmatmul.mubr.bf16.gmra.mxu0 %v3093
      %v3448 = vpop.f32.mrf.mxu0
      %v3449 = vadd.f32 0.0, %v3448
      %v3450 = vpop.f32.mrf.mxu0
      %v3451 = vpop.f32.mrf.mxu0
      %v3452 = vadd.f32 0.0, %v3451
      %v3453 = vpop.f32.mrf.mxu0
      %3454 = vmatprep.mubr.bf16.mxu0 0
      %3455 = vmatmul.mubr.bf16.gmra.mxu0 %v3096
      %v3456 = vpop.f32.mrf.mxu0
      %v3457 = vadd.f32 0.0, %v3456
      %v3458 = vpop.f32.mrf.mxu0
      %v3459 = vpop.f32.mrf.mxu0
      %v3460 = vadd.f32 0.0, %v3459
      %v3461 = vpop.f32.mrf.mxu0
      %3462 = vmatprep.mubr.bf16.mxu0 0
      %3463 = vmatmul.mubr.bf16.gmra.mxu0 %v3099
      %v3464 = vpop.f32.mrf.mxu0
      %v3465 = vadd.f32 0.0, %v3464
      %v3466 = vpop.f32.mrf.mxu0
      %v3467 = vpop.f32.mrf.mxu0
      %v3468 = vadd.f32 0.0, %v3467
      %v3469 = vpop.f32.mrf.mxu0
      %3470 = vmatprep.mubr.bf16.mxu0 0
      %3471 = vmatmul.mubr.bf16.gmra.mxu0 %v3102
      %v3472 = vpop.f32.mrf.mxu0
      %v3473 = vadd.f32 0.0, %v3472
      %v3474 = vpop.f32.mrf.mxu0
      %v3475 = vpop.f32.mrf.mxu0
      %v3476 = vadd.f32 0.0, %v3475
      %v3477 = vpop.f32.mrf.mxu0
      %3478 = vmatprep.mubr.bf16.mxu0 0
      %3479 = vmatmul.mubr.bf16.gmra.mxu0 %v3105
      %v3480 = vpop.f32.mrf.mxu0
      %v3481 = vadd.f32 0.0, %v3480
      %v3482 = vpop.f32.mrf.mxu0
      %v3483 = vpop.f32.mrf.mxu0
      %v3484 = vadd.f32 0.0, %v3483
      %v3485 = vpop.f32.mrf.mxu0
      %3486 = vmatprep.mubr.bf16.mxu0 0
      %3487 = vmatmul.mubr.bf16.gmra.mxu0 %v3108
      %v3488 = vpop.f32.mrf.mxu0
      %v3489 = vadd.f32 0.0, %v3488
      %v3490 = vpop.f32.mrf.mxu0
      %v3491 = vpop.f32.mrf.mxu0
      %v3492 = vadd.f32 0.0, %v3491
      %v3493 = vpop.f32.mrf.mxu0
      %3494 = vmatprep.mubr.bf16.mxu0 0
      %3495 = vmatmul.mubr.bf16.gmra.mxu0 %v3111
      %v3496 = vpop.f32.mrf.mxu0
      %v3497 = vadd.f32 0.0, %v3496
      %v3498 = vpop.f32.mrf.mxu0
      %v3499 = vpop.f32.mrf.mxu0
      %v3500 = vadd.f32 0.0, %v3499
      %v3501 = vpop.f32.mrf.mxu0
      %3502 = vmatprep.mubr.bf16.mxu0 0
      %3503 = vmatmul.mubr.bf16.gmra.mxu0 %v3114
      %v3504 = vpop.f32.mrf.mxu0
      %v3505 = vadd.f32 0.0, %v3504
      %v3506 = vpop.f32.mrf.mxu0
      %v3507 = vpop.f32.mrf.mxu0
      %v3508 = vadd.f32 0.0, %v3507
      %v3509 = vpop.f32.mrf.mxu0
      %3510 = vmatprep.mubr.bf16.mxu0 0
      %3511 = vmatmul.mubr.bf16.gmra.mxu0 %v3117
      %v3512 = vpop.f32.mrf.mxu0
      %v3513 = vadd.f32 0.0, %v3512
      %v3514 = vpop.f32.mrf.mxu0
      %v3515 = vpop.f32.mrf.mxu0
      %v3516 = vadd.f32 0.0, %v3515
      %v3517 = vpop.f32.mrf.mxu0
      %3518 = vmatprep.mubr.bf16.mxu0 0
      %3519 = vmatmul.mubr.bf16.gmra.mxu0 %v3120
      %v3520 = vpop.f32.mrf.mxu0
      %v3521 = vadd.f32 0.0, %v3520
      %v3522 = vpop.f32.mrf.mxu0
      %v3523 = vpop.f32.mrf.mxu0
      %v3524 = vadd.f32 0.0, %v3523
      %v3525 = vpop.f32.mrf.mxu0
      %3526 = vmatprep.mubr.bf16.mxu0 0
      %3527 = vmatmul.mubr.bf16.gmra.mxu0 %v3123
      %v3528 = vpop.f32.mrf.mxu0
      %v3529 = vadd.f32 0.0, %v3528
      %v3530 = vpop.f32.mrf.mxu0
      %v3531 = vpop.f32.mrf.mxu0
      %v3532 = vadd.f32 0.0, %v3531
      %v3533 = vpop.f32.mrf.mxu0
      %3534 = vmatprep.mubr.bf16.mxu0 0
      %3535 = vmatmul.mubr.bf16.gmra.mxu0 %v3126
      %v3536 = vpop.f32.mrf.mxu0
      %v3537 = vadd.f32 0.0, %v3536
      %v3538 = vpop.f32.mrf.mxu0
      %v3539 = vpop.f32.mrf.mxu0
      %v3540 = vadd.f32 0.0, %v3539
      %v3541 = vpop.f32.mrf.mxu0
      %3542 = vmatprep.mubr.bf16.mxu0 0
      %3543 = vmatmul.mubr.bf16.gmra.mxu0 %v3129
      %v3544 = vpop.f32.mrf.mxu0
      %v3545 = vadd.f32 0.0, %v3544
      %v3546 = vpop.f32.mrf.mxu0
      %v3547 = vpop.f32.mrf.mxu0
      %v3548 = vadd.f32 0.0, %v3547
      %v3549 = vpop.f32.mrf.mxu0
      %3550 = vmatprep.mubr.bf16.mxu0 0
      %3551 = vmatmul.mubr.bf16.gmra.mxu0 %v3132
      %v3552 = vpop.f32.mrf.mxu0
      %v3553 = vadd.f32 0.0, %v3552
      %v3554 = vpop.f32.mrf.mxu0
      %v3555 = vpop.f32.mrf.mxu0
      %v3556 = vadd.f32 0.0, %v3555
      %v3557 = vpop.f32.mrf.mxu0
      %3558 = vmatprep.mubr.bf16.mxu0 0
      %3559 = vmatmul.mubr.bf16.gmra.mxu0 %v3135
      %v3560 = vpop.f32.mrf.mxu0
      %v3561 = vadd.f32 0.0, %v3560
      %v3562 = vpop.f32.mrf.mxu0
      %v3563 = vpop.f32.mrf.mxu0
      %v3564 = vadd.f32 0.0, %v3563
      %v3565 = vpop.f32.mrf.mxu0
      %3566 = vmatprep.mubr.bf16.mxu0 0
      %3567 = vmatmul.mubr.bf16.gmra.mxu0 %v3138
      %v3568 = vpop.f32.mrf.mxu0
      %v3569 = vadd.f32 0.0, %v3568
      %v3570 = vpop.f32.mrf.mxu0
      %v3571 = vpop.f32.mrf.mxu0
      %v3572 = vadd.f32 0.0, %v3571
      %v3573 = vpop.f32.mrf.mxu0
      %3574 = vmatprep.mubr.bf16.mxu0 0
      %3575 = vmatmul.mubr.bf16.gmra.mxu0 %v3141
      %v3576 = vpop.f32.mrf.mxu0
      %v3577 = vadd.f32 0.0, %v3576
      %v3578 = vpop.f32.mrf.mxu0
      %v3579 = vpop.f32.mrf.mxu0
      %v3580 = vadd.f32 0.0, %v3579
      %v3581 = vpop.f32.mrf.mxu0
      %3582 = vmatprep.mubr.bf16.mxu0 0
      %3583 = vmatmul.mubr.bf16.gmra.mxu0 %v3144
      %v3584 = vpop.f32.mrf.mxu0
      %v3585 = vadd.f32 0.0, %v3584
      %v3586 = vpop.f32.mrf.mxu0
      %v3587 = vpop.f32.mrf.mxu0
      %v3588 = vadd.f32 0.0, %v3587
      %v3589 = vpop.f32.mrf.mxu0
      %3590 = vmatprep.mubr.bf16.mxu0 0
      %3591 = vmatmul.mubr.bf16.gmra.mxu0 %v3147
      %v3592 = vpop.f32.mrf.mxu0
      %v3593 = vadd.f32 0.0, %v3592
      %v3594 = vpop.f32.mrf.mxu0
      %v3595 = vpop.f32.mrf.mxu0
      %v3596 = vadd.f32 0.0, %v3595
      %v3597 = vpop.f32.mrf.mxu0
      %3598 = vmatprep.mubr.bf16.mxu0 0
      %3599 = vmatmul.mubr.bf16.gmra.mxu0 %v3150
      %v3600 = vpop.f32.mrf.mxu0
      %v3601 = vadd.f32 0.0, %v3600
      %v3602 = vpop.f32.mrf.mxu0
      %v3603 = vpop.f32.mrf.mxu0
      %v3604 = vadd.f32 0.0, %v3603
      %v3605 = vpop.f32.mrf.mxu0
      %3606 = vmatprep.mubr.bf16.mxu0 0
      %3607 = vmatmul.mubr.bf16.gmra.mxu0 %v3153
      %v3608 = vpop.f32.mrf.mxu0
      %v3609 = vadd.f32 0.0, %v3608
      %v3610 = vpop.f32.mrf.mxu0
      %v3611 = vpop.f32.mrf.mxu0
      %v3612 = vadd.f32 0.0, %v3611
      %v3613 = vpop.f32.mrf.mxu0
      %3614 = vmatprep.mubr.bf16.mxu0 0
      %3615 = vmatmul.mubr.bf16.gmra.mxu0 %v3156
      %v3616 = vpop.f32.mrf.mxu0
      %v3617 = vadd.f32 0.0, %v3616
      %v3618 = vpop.f32.mrf.mxu0
      %v3619 = vpop.f32.mrf.mxu0
      %v3620 = vadd.f32 0.0, %v3619
      %v3621 = vpop.f32.mrf.mxu0
      %3622 = vmatprep.mubr.bf16.mxu0 0
      %3623 = vmatmul.mubr.bf16.gmra.mxu0 %v3159
      %v3624 = vpop.f32.mrf.mxu0
      %v3625 = vadd.f32 0.0, %v3624
      %v3626 = vpop.f32.mrf.mxu0
      %v3627 = vpop.f32.mrf.mxu0
      %v3628 = vadd.f32 0.0, %v3627
      %v3629 = vpop.f32.mrf.mxu0
      %3630 = vmatprep.mubr.bf16.mxu0 0
      %3631 = vmatmul.mubr.bf16.gmra.mxu0 %v3162
      %v3632 = vpop.f32.mrf.mxu0
      %v3633 = vadd.f32 0.0, %v3632
      %v3634 = vpop.f32.mrf.mxu0
      %v3635 = vpop.f32.mrf.mxu0
      %v3636 = vadd.f32 0.0, %v3635
      %v3637 = vpop.f32.mrf.mxu0
      %3638 = vmatprep.mubr.bf16.mxu0 0
      %3639 = vmatmul.mubr.bf16.gmra.mxu0 %v3165
      %v3640 = vpop.f32.mrf.mxu0
      %v3641 = vadd.f32 0.0, %v3640
      %v3642 = vpop.f32.mrf.mxu0
      %v3643 = vpop.f32.mrf.mxu0
      %v3644 = vadd.f32 0.0, %v3643
      %v3645 = vpop.f32.mrf.mxu0
      %3646 = vmatprep.mubr.bf16.mxu0 0
      %3647 = vmatmul.mubr.bf16.gmra.mxu0 %v3168
      %v3648 = vpop.f32.mrf.mxu0
      %v3649 = vadd.f32 0.0, %v3648
      %v3650 = vpop.f32.mrf.mxu0
      %v3651 = vpop.f32.mrf.mxu0
      %v3652 = vadd.f32 0.0, %v3651
      %v3653 = vpop.f32.mrf.mxu0
      %3654 = vmatprep.mubr.bf16.mxu0 0
      %3655 = vmatmul.mubr.bf16.gmra.mxu0 %v3171
      %v3656 = vpop.f32.mrf.mxu0
      %v3657 = vadd.f32 0.0, %v3656
      %v3658 = vpop.f32.mrf.mxu0
      %v3659 = vpop.f32.mrf.mxu0
      %v3660 = vadd.f32 0.0, %v3659
      %v3661 = vpop.f32.mrf.mxu0
      %3662 = vmatprep.mubr.bf16.mxu0 0
      %3663 = vmatmul.mubr.bf16.gmra.mxu0 %v3174
      %v3664 = vpop.f32.mrf.mxu0
      %v3665 = vadd.f32 0.0, %v3664
      %v3666 = vpop.f32.mrf.mxu0
      %v3667 = vpop.f32.mrf.mxu0
      %v3668 = vadd.f32 0.0, %v3667
      %v3669 = vpop.f32.mrf.mxu0
      %3670 = vmatprep.mubr.bf16.mxu0 0
      %3671 = vmatmul.mubr.bf16.gmra.mxu0 %v3177
      %v3672 = vpop.f32.mrf.mxu0
      %v3673 = vadd.f32 0.0, %v3672
      %v3674 = vpop.f32.mrf.mxu0
      %v3675 = vpop.f32.mrf.mxu0
      %v3676 = vadd.f32 0.0, %v3675
      %v3677 = vpop.f32.mrf.mxu0
      %3678 = vmatprep.mubr.bf16.mxu0 0
      %3679 = vmatmul.mubr.bf16.gmra.mxu0 %v3180
      %v3680 = vpop.f32.mrf.mxu0
      %v3681 = vadd.f32 0.0, %v3680
      %v3682 = vpop.f32.mrf.mxu0
      %v3683 = vpop.f32.mrf.mxu0
      %v3684 = vadd.f32 0.0, %v3683
      %v3685 = vpop.f32.mrf.mxu0
      %3686 = vmatprep.mubr.bf16.mxu0 0
      %3687 = vmatmul.mubr.bf16.gmra.mxu0 %v3183
      %v3688 = vpop.f32.mrf.mxu0
      %v3689 = vadd.f32 0.0, %v3688
      %v3690 = vpop.f32.mrf.mxu0
      %v3691 = vpop.f32.mrf.mxu0
      %v3692 = vadd.f32 0.0, %v3691
      %v3693 = vpop.f32.mrf.mxu0
      %3694 = vmatprep.mubr.bf16.mxu0 0
      %3695 = vmatmul.mubr.bf16.gmra.mxu0 %v3186
      %v3696 = vpop.f32.mrf.mxu0
      %v3697 = vadd.f32 0.0, %v3696
      %v3698 = vpop.f32.mrf.mxu0
      %v3699 = vpop.f32.mrf.mxu0
      %v3700 = vadd.f32 0.0, %v3699
      %v3701 = vpop.f32.mrf.mxu0
      %3702 = vmatprep.mubr.bf16.mxu0 0
      %3703 = vmatmul.mubr.bf16.gmra.mxu0 %v3189
      %v3704 = vpop.f32.mrf.mxu0
      %v3705 = vadd.f32 0.0, %v3704
      %v3706 = vpop.f32.mrf.mxu0
      %v3707 = vpop.f32.mrf.mxu0
      %v3708 = vadd.f32 0.0, %v3707
      %v3709 = vpop.f32.mrf.mxu0
      %3710 = vmatprep.mubr.bf16.mxu0 0
      %3711 = vmatmul.mubr.bf16.gmra.mxu0 %v3192
      %v3712 = vpop.f32.mrf.mxu0
      %v3713 = vadd.f32 0.0, %v3712
      %v3714 = vpop.f32.mrf.mxu0
      %v3715 = vpop.f32.mrf.mxu0
      %v3716 = vadd.f32 0.0, %v3715
      %v3717 = vpop.f32.mrf.mxu0
      %3718 = vmatprep.mubr.bf16.mxu0 0
      %3719 = vmatmul.mubr.bf16.gmra.mxu0 %v3195
      %v3720 = vpop.f32.mrf.mxu0
      %v3721 = vadd.f32 0.0, %v3720
      %v3722 = vpop.f32.mrf.mxu0
      %v3723 = vpop.f32.mrf.mxu0
      %v3724 = vadd.f32 0.0, %v3723
      %v3725 = vpop.f32.mrf.mxu0
      %3726 = vmatprep.mubr.bf16.mxu0 0
      %3727 = vmatmul.mubr.bf16.gmra.mxu0 %v3198
      %v3728 = vpop.f32.mrf.mxu0
      %v3729 = vadd.f32 0.0, %v3728
      %v3730 = vpop.f32.mrf.mxu0
      %v3731 = vpop.f32.mrf.mxu0
      %v3732 = vadd.f32 0.0, %v3731
      %v3733 = vpop.f32.mrf.mxu0
      %3734 = vmatprep.mubr.bf16.mxu0 0
      %3735 = vmatmul.mubr.bf16.gmra.mxu0 %v3201
      %v3736 = vpop.f32.mrf.mxu0
      %v3737 = vadd.f32 0.0, %v3736
      %v3738 = vpop.f32.mrf.mxu0
      %v3739 = vpop.f32.mrf.mxu0
      %v3740 = vadd.f32 0.0, %v3739
      %v3741 = vpop.f32.mrf.mxu0
      %3742 = vmatprep.mubr.bf16.mxu0 0
      %3743 = vmatmul.mubr.bf16.gmra.mxu0 %v3204
      %v3744 = vpop.f32.mrf.mxu0
      %v3745 = vadd.f32 0.0, %v3744
      %v3746 = vpop.f32.mrf.mxu0
      %v3747 = vpop.f32.mrf.mxu0
      %v3748 = vadd.f32 0.0, %v3747
      %v3749 = vpop.f32.mrf.mxu0
      %3750 = vmatprep.mubr.bf16.mxu0 0
      %3751 = vmatmul.mubr.bf16.gmra.mxu0 %v3207
      %v3752 = vpop.f32.mrf.mxu0
      %v3753 = vadd.f32 0.0, %v3752
      %v3754 = vpop.f32.mrf.mxu0
      %v3755 = vpop.f32.mrf.mxu0
      %v3756 = vadd.f32 0.0, %v3755
      %v3757 = vpop.f32.mrf.mxu0
      %3758 = vmatprep.mubr.bf16.mxu0 0
      %3759 = vmatmul.mubr.bf16.gmra.mxu0 %v3210
      %v3760 = vpop.f32.mrf.mxu0
      %v3761 = vadd.f32 0.0, %v3760
      %v3762 = vpop.f32.mrf.mxu0
      %v3763 = vpop.f32.mrf.mxu0
      %v3764 = vadd.f32 0.0, %v3763
      %v3765 = vpop.f32.mrf.mxu0
      %3766 = vmatprep.mubr.bf16.mxu0 0
      %3767 = vmatmul.mubr.bf16.gmra.mxu0 %v3213
      %v3768 = vpop.f32.mrf.mxu0
      %v3769 = vadd.f32 0.0, %v3768
      %v3770 = vpop.f32.mrf.mxu0
      %v3771 = vpop.f32.mrf.mxu0
      %v3772 = vadd.f32 0.0, %v3771
      %v3773 = vpop.f32.mrf.mxu0
      %3774 = vmatprep.mubr.bf16.mxu0 0
      %3775 = vmatmul.mubr.bf16.gmra.mxu0 %v3216
      %v3776 = vpop.f32.mrf.mxu0
      %v3777 = vadd.f32 0.0, %v3776
      %v3778 = vpop.f32.mrf.mxu0
      %v3779 = vpop.f32.mrf.mxu0
      %v3780 = vadd.f32 0.0, %v3779
      %v3781 = vpop.f32.mrf.mxu0
      %3782 = vmatprep.mubr.bf16.mxu0 0
      %3783 = vmatmul.mubr.bf16.gmra.mxu0 %v3219
      %v3784 = vpop.f32.mrf.mxu0
      %v3785 = vadd.f32 0.0, %v3784
      %v3786 = vpop.f32.mrf.mxu0
      %v3787 = vpop.f32.mrf.mxu0
      %v3788 = vadd.f32 0.0, %v3787
      %v3789 = vpop.f32.mrf.mxu0
      %3790 = vmatprep.mubr.bf16.mxu0 0
      %3791 = vmatmul.mubr.bf16.gmra.mxu0 %v3222
      %v3792 = vpop.f32.mrf.mxu0
      %v3793 = vadd.f32 0.0, %v3792
      %v3794 = vpop.f32.mrf.mxu0
      %v3795 = vpop.f32.mrf.mxu0
      %v3796 = vadd.f32 0.0, %v3795
      %v3797 = vpop.f32.mrf.mxu0
      %3798 = vmatprep.mubr.bf16.mxu0 0
      %3799 = vmatmul.mubr.bf16.gmra.mxu0 %v3225
      %v3800 = vpop.f32.mrf.mxu0
      %v3801 = vadd.f32 0.0, %v3800
      %v3802 = vpop.f32.mrf.mxu0
      %v3803 = vpop.f32.mrf.mxu0
      %v3804 = vadd.f32 0.0, %v3803
      %v3805 = vpop.f32.mrf.mxu0
      %3806 = vmatprep.mubr.bf16.mxu0 0
      %3807 = vmatmul.mubr.bf16.gmra.mxu0 %v3228
      %v3808 = vpop.f32.mrf.mxu0
      %v3809 = vadd.f32 0.0, %v3808
      %v3810 = vpop.f32.mrf.mxu0
      %v3811 = vpop.f32.mrf.mxu0
      %v3812 = vadd.f32 0.0, %v3811
      %v3813 = vpop.f32.mrf.mxu0
      %3814 = vmatprep.mubr.bf16.mxu0 0
      %3815 = vmatmul.mubr.bf16.gmra.mxu0 %v3231
      %v3816 = vpop.f32.mrf.mxu0
      %v3817 = vadd.f32 0.0, %v3816
      %v3818 = vpop.f32.mrf.mxu0
      %v3819 = vpop.f32.mrf.mxu0
      %v3820 = vadd.f32 0.0, %v3819
      %v3821 = vpop.f32.mrf.mxu0
      %3822 = vmatprep.mubr.bf16.mxu0 0
      %3823 = vmatmul.mubr.bf16.gmra.mxu0 %v3234
      %v3824 = vpop.f32.mrf.mxu0
      %v3825 = vadd.f32 0.0, %v3824
      %v3826 = vpop.f32.mrf.mxu0
      %v3827 = vpop.f32.mrf.mxu0
      %v3828 = vadd.f32 0.0, %v3827
      %v3829 = vpop.f32.mrf.mxu0
      %3830 = vmatprep.mubr.bf16.mxu0 0
      %3831 = vmatmul.mubr.bf16.gmra.mxu0 %v3237
      %v3832 = vpop.f32.mrf.mxu0
      %v3833 = vadd.f32 0.0, %v3832
      %v3834 = vpop.f32.mrf.mxu0
      %v3835 = vpop.f32.mrf.mxu0
      %v3836 = vadd.f32 0.0, %v3835
      %v3837 = vpop.f32.mrf.mxu0
      %3838 = vmatprep.mubr.bf16.mxu0 0
      %3839 = vmatmul.mubr.bf16.gmra.mxu0 %v3240
      %v3840 = vpop.f32.mrf.mxu0
      %v3841 = vadd.f32 0.0, %v3840
      %v3842 = vpop.f32.mrf.mxu0
      %v3843 = vpop.f32.mrf.mxu0
      %v3844 = vadd.f32 0.0, %v3843
      %v3845 = vpop.f32.mrf.mxu0
      %3846 = vmatprep.mubr.bf16.mxu0 0
      %3847 = vmatmul.mubr.bf16.gmra.mxu0 %v3243
      %v3848 = vpop.f32.mrf.mxu0
      %v3849 = vadd.f32 0.0, %v3848
      %v3850 = vpop.f32.mrf.mxu0
      %v3851 = vpop.f32.mrf.mxu0
      %v3852 = vadd.f32 0.0, %v3851
      %v3853 = vpop.f32.mrf.mxu0
      %3854 = vmatprep.mubr.bf16.mxu0 0
      %3855 = vmatmul.mubr.bf16.gmra.mxu0 %v3246
      %v3856 = vpop.f32.mrf.mxu0
      %v3857 = vadd.f32 0.0, %v3856
      %v3858 = vpop.f32.mrf.mxu0
      %v3859 = vpop.f32.mrf.mxu0
      %v3860 = vadd.f32 0.0, %v3859
      %v3861 = vpop.f32.mrf.mxu0
      %3862 = vmatprep.mubr.bf16.mxu0 0
      %3863 = vmatmul.mubr.bf16.gmra.mxu0 %v3249
      %v3864 = vpop.f32.mrf.mxu0
      %v3865 = vadd.f32 0.0, %v3864
      %v3866 = vpop.f32.mrf.mxu0
      %v3867 = vpop.f32.mrf.mxu0
      %v3868 = vpop.f32.mrf.mxu0
      %3869 = vdwg.mxu0
      %v3870 = vadd.f32 %v2299, %v3289
      %v3871 = vadd.f32 %v2302, %v3292
      %v3872 = vadd.f32 %v2307, %v3297
      %v3873 = vadd.f32 %v2310, %v3300
      %v3874 = vadd.f32 %v2315, %v3305
      %v3875 = vadd.f32 %v2318, %v3308
      %v3876 = vadd.f32 %v2323, %v3313
      %v3877 = vadd.f32 %v2326, %v3316
      %v3878 = vadd.f32 %v2331, %v3321
      %v3879 = vadd.f32 %v2334, %v3324
      %v3880 = vadd.f32 %v2339, %v3329
      %v3881 = vadd.f32 %v2342, %v3332
      %v3882 = vadd.f32 %v2347, %v3337
      %v3883 = vadd.f32 %v2350, %v3340
      %v3884 = vadd.f32 %v2355, %v3345
      %v3885 = vadd.f32 %v2358, %v3348
      %v3886 = vadd.f32 %v2363, %v3353
      %v3887 = vadd.f32 %v2366, %v3356
      %v3888 = vadd.f32 %v2371, %v3361
      %v3889 = vadd.f32 %v2374, %v3364
      %v3890 = vadd.f32 %v2379, %v3369
      %v3891 = vadd.f32 %v2382, %v3372
      %v3892 = vadd.f32 %v2387, %v3377
      %v3893 = vadd.f32 %v2390, %v3380
      %v3894 = vadd.f32 %v2395, %v3385
      %v3895 = vadd.f32 %v2398, %v3388
      %v3896 = vadd.f32 %v2403, %v3393
      %v3897 = vadd.f32 %v2406, %v3396
      %v3898 = vadd.f32 %v2411, %v3401
      %v3899 = vadd.f32 %v2414, %v3404
      %v3900 = vadd.f32 %v2419, %v3409
      %v3901 = vadd.f32 %v2422, %v3412
      %v3902 = vadd.f32 %v2427, %v3417
      %v3903 = vadd.f32 %v2430, %v3420
      %v3904 = vadd.f32 %v2435, %v3425
      %v3905 = vadd.f32 %v2438, %v3428
      %v3906 = vadd.f32 %v2443, %v3433
      %v3907 = vadd.f32 %v2446, %v3436
      %v3908 = vadd.f32 %v2451, %v3441
      %v3909 = vadd.f32 %v2454, %v3444
      %v3910 = vadd.f32 %v2459, %v3449
      %v3911 = vadd.f32 %v2462, %v3452
      %v3912 = vadd.f32 %v2467, %v3457
      %v3913 = vadd.f32 %v2470, %v3460
      %v3914 = vadd.f32 %v2475, %v3465
      %v3915 = vadd.f32 %v2478, %v3468
      %v3916 = vadd.f32 %v2483, %v3473
      %v3917 = vadd.f32 %v2486, %v3476
      %v3918 = vadd.f32 %v2491, %v3481
      %v3919 = vadd.f32 %v2494, %v3484
      %v3920 = vadd.f32 %v2499, %v3489
      %v3921 = vadd.f32 %v2502, %v3492
      %v3922 = vadd.f32 %v2507, %v3497
      %v3923 = vadd.f32 %v2510, %v3500
      %v3924 = vadd.f32 %v2515, %v3505
      %v3925 = vadd.f32 %v2518, %v3508
      %v3926 = vadd.f32 %v2523, %v3513
      %v3927 = vadd.f32 %v2526, %v3516
      %v3928 = vadd.f32 %v2531, %v3521
      %v3929 = vadd.f32 %v2534, %v3524
      %v3930 = vadd.f32 %v2539, %v3529
      %v3931 = vadd.f32 %v2542, %v3532
      %v3932 = vadd.f32 %v2547, %v3537
      %v3933 = vadd.f32 %v2550, %v3540
      %v3934 = vadd.f32 %v2555, %v3545
      %v3935 = vadd.f32 %v2558, %v3548
      %v3936 = vadd.f32 %v2563, %v3553
      %v3937 = vadd.f32 %v2566, %v3556
      %v3938 = vadd.f32 %v2571, %v3561
      %v3939 = vadd.f32 %v2574, %v3564
      %v3940 = vadd.f32 %v2579, %v3569
      %v3941 = vadd.f32 %v2582, %v3572
      %v3942 = vadd.f32 %v2587, %v3577
      %v3943 = vadd.f32 %v2590, %v3580
      %v3944 = vadd.f32 %v2595, %v3585
      %v3945 = vadd.f32 %v2598, %v3588
      %v3946 = vadd.f32 %v2603, %v3593
      %v3947 = vadd.f32 %v2606, %v3596
      %v3948 = vadd.f32 %v2611, %v3601
      %v3949 = vadd.f32 %v2614, %v3604
      %v3950 = vadd.f32 %v2619, %v3609
      %v3951 = vadd.f32 %v2622, %v3612
      %v3952 = vadd.f32 %v2627, %v3617
      %v3953 = vadd.f32 %v2630, %v3620
      %v3954 = vadd.f32 %v2635, %v3625
      %v3955 = vadd.f32 %v2638, %v3628
      %v3956 = vadd.f32 %v2643, %v3633
      %v3957 = vadd.f32 %v2646, %v3636
      %v3958 = vadd.f32 %v2651, %v3641
      %v3959 = vadd.f32 %v2654, %v3644
      %v3960 = vadd.f32 %v2659, %v3649
      %v3961 = vadd.f32 %v2662, %v3652
      %v3962 = vadd.f32 %v2667, %v3657
      %v3963 = vadd.f32 %v2670, %v3660
      %v3964 = vadd.f32 %v2675, %v3665
      %v3965 = vadd.f32 %v2678, %v3668
      %v3966 = vadd.f32 %v2683, %v3673
      %v3967 = vadd.f32 %v2686, %v3676
      %v3968 = vadd.f32 %v2691, %v3681
      %v3969 = vadd.f32 %v2694, %v3684
      %v3970 = vadd.f32 %v2699, %v3689
      %v3971 = vadd.f32 %v2702, %v3692
      %v3972 = vadd.f32 %v2707, %v3697
      %v3973 = vadd.f32 %v2710, %v3700
      %v3974 = vadd.f32 %v2715, %v3705
      %v3975 = vadd.f32 %v2718, %v3708
      %v3976 = vadd.f32 %v2723, %v3713
      %v3977 = vadd.f32 %v2726, %v3716
      %v3978 = vadd.f32 %v2731, %v3721
      %v3979 = vadd.f32 %v2734, %v3724
      %v3980 = vadd.f32 %v2739, %v3729
      %v3981 = vadd.f32 %v2742, %v3732
      %v3982 = vadd.f32 %v2747, %v3737
      %v3983 = vadd.f32 %v2750, %v3740
      %v3984 = vadd.f32 %v2755, %v3745
      %v3985 = vadd.f32 %v2758, %v3748
      %v3986 = vadd.f32 %v2763, %v3753
      %v3987 = vadd.f32 %v2766, %v3756
      %v3988 = vadd.f32 %v2771, %v3761
      %v3989 = vadd.f32 %v2774, %v3764
      %v3990 = vadd.f32 %v2779, %v3769
      %v3991 = vadd.f32 %v2782, %v3772
      %v3992 = vadd.f32 %v2787, %v3777
      %v3993 = vadd.f32 %v2790, %v3780
      %v3994 = vadd.f32 %v2795, %v3785
      %v3995 = vadd.f32 %v2798, %v3788
      %v3996 = vadd.f32 %v2803, %v3793
      %v3997 = vadd.f32 %v2806, %v3796
      %v3998 = vadd.f32 %v2811, %v3801
      %v3999 = vadd.f32 %v2814, %v3804
      %v4000 = vadd.f32 %v2819, %v3809
      %v4001 = vadd.f32 %v2822, %v3812
      %v4002 = vadd.f32 %v2827, %v3817
      %v4003 = vadd.f32 %v2830, %v3820
      %v4004 = vadd.f32 %v2835, %v3825
      %v4005 = vadd.f32 %v2838, %v3828
      %v4006 = vadd.f32 %v2843, %v3833
      %v4007 = vadd.f32 %v2846, %v3836
      %v4008 = vadd.f32 %v2851, %v3841
      %v4009 = vadd.f32 %v2854, %v3844
      %v4010 = vadd.f32 %v2859, %v3849
      %v4011 = vadd.f32 %v2862, %v3852
      %v4012 = vadd.f32 %v2867, %v3857
      %v4013 = vadd.f32 %v2870, %v3860
      %v4014 = vadd.f32 %v2875, %v3865
      %v4015 = vld [vmem:[%s165 + $0x10] sm:$0xe]
      %v4016 = vld [vmem:[%s165 + $0x14] sm:$0xf]
      %v4017 = vld [vmem:[%s165 + $0x18] sm:$0xf]
      %v4018 = vld [vmem:[%s165 + $0x1c] sm:$0xf]
      %v4019 = vld [vmem:[%s165 + $0x20] sm:$0xf]
      %v4020 = vld [vmem:[%s165 + $0x24] sm:$0xf]
      %v4021 = vld [vmem:[%s165 + $0x28] sm:$0xf]
      %v4022 = vld [vmem:[%s165 + $0x2c] sm:$0xf]
      %v4023 = vld [vmem:[%s165 + $0x30] sm:$0xf]
      %v4024 = vld [vmem:[%s165 + $0x34] sm:$0xf]
      %v4025 = vld [vmem:[%s165 + $0x38] sm:$0xf]
      %v4026 = vld [vmem:[%s165 + $0x3c] sm:$0xf]
      %v4027 = vld [vmem:[%s165 + $0x40] sm:$0xf]
      %v4028 = vld [vmem:[%s165 + $0x44] sm:$0xf]
      %v4029 = vld [vmem:[%s165 + $0x48] sm:$0xf]
      %v4030 = vld [vmem:[%s165 + $0x4c] sm:$0xf]
      %v4031 = vld [vmem:[%s165 + $0x50] sm:$0xf]
      %v4032 = vld [vmem:[%s165 + $0x54] sm:$0xf]
      %v4033 = vld [vmem:[%s165 + $0x58] sm:$0xf]
      %v4034 = vld [vmem:[%s165 + $0x5c] sm:$0xf]
      %v4035 = vld [vmem:[%s165 + $0x60] sm:$0xf]
      %v4036 = vld [vmem:[%s165 + $0x64] sm:$0xf]
      %v4037 = vld [vmem:[%s165 + $0x68] sm:$0xf]
      %v4038 = vld [vmem:[%s165 + $0x6c] sm:$0xf]
      %v4039 = vld [vmem:[%s165 + $0x70] sm:$0xf]
      %v4040 = vld [vmem:[%s165 + $0x74] sm:$0xf]
      %v4041 = vld [vmem:[%s165 + $0x78] sm:$0xf]
      %v4042 = vld [vmem:[%s165 + $0x7c] sm:$0xf]
      %v4043 = vld [vmem:[%s165 + $0x80] sm:$0xf]
      %v4044 = vld [vmem:[%s165 + $0x84] sm:$0xf]
      %v4045 = vld [vmem:[%s165 + $0x88] sm:$0xf]
      %v4046 = vld [vmem:[%s165 + $0x8c] sm:$0xf]
      %v4047 = vld [vmem:[%s165 + $0x90] sm:$0xf]
      %v4048 = vld [vmem:[%s165 + $0x94] sm:$0xf]
      %v4049 = vld [vmem:[%s165 + $0x98] sm:$0xf]
      %v4050 = vld [vmem:[%s165 + $0x9c] sm:$0xf]
      %v4051 = vld [vmem:[%s165 + $0xa0] sm:$0xf]
      %v4052 = vld [vmem:[%s165 + $0xa4] sm:$0xf]
      %v4053 = vld [vmem:[%s165 + $0xa8] sm:$0xf]
      %v4054 = vld [vmem:[%s165 + $0xac] sm:$0xf]
      %v4055 = vld [vmem:[%s165 + $0xb0] sm:$0xf]
      %v4056 = vld [vmem:[%s165 + $0xb4] sm:$0xf]
      %v4057 = vld [vmem:[%s165 + $0xb8] sm:$0xf]
      %v4058 = vld [vmem:[%s165 + $0xbc] sm:$0xf]
      %v4059 = vld [vmem:[%s165 + $0xc0] sm:$0xf]
      %v4060 = vld [vmem:[%s165 + $0xc4] sm:$0xf]
      %v4061 = vld [vmem:[%s165 + $0xc8] sm:$0xf]
      %v4062 = vld [vmem:[%s165 + $0xcc] sm:$0xf]
      %v4063 = vld [vmem:[%s165 + $0xd0] sm:$0xf]
      %v4064 = vld [vmem:[%s165 + $0xd4] sm:$0xf]
      %v4065 = vld [vmem:[%s165 + $0xd8] sm:$0xf]
      %v4066 = vld [vmem:[%s165 + $0xdc] sm:$0xf]
      %v4067 = vld [vmem:[%s165 + $0xe0] sm:$0xf]
      %v4068 = vld [vmem:[%s165 + $0xe4] sm:$0xf]
      %v4069 = vld [vmem:[%s165 + $0xe8] sm:$0xf]
      %v4070 = vld [vmem:[%s165 + $0xec] sm:$0xf]
      %v4071 = vld [vmem:[%s165 + $0xf0] sm:$0xf]
      %v4072 = vld [vmem:[%s165 + $0xf4] sm:$0xf]
      %v4073 = vld [vmem:[%s165 + $0xf8] sm:$0xf]
      %v4074 = vld [vmem:[%s165 + $0xfc] sm:$0xf]
      %v4075 = vld [vmem:[%s165 + $0x100] sm:$0xf]
      %v4076 = vld [vmem:[%s165 + $0x104] sm:$0xf]
      %v4077 = vld [vmem:[%s165 + $0x108] sm:$0xf]
      %v4078 = vld [vmem:[%s165 + $0x10c] sm:$0xf]
      %v4079 = vld [vmem:[%s165 + $0x110] sm:$0xf]
      %v4080 = vld [vmem:[%s165 + $0x114] sm:$0xf]
      %v4081 = vld [vmem:[%s165 + $0x118] sm:$0xf]
      %v4082 = vld [vmem:[%s165 + $0x11c] sm:$0xf]
      %v4083 = vld [vmem:[%s165 + $0x120] sm:$0xf]
      %v4084 = vld [vmem:[%s165 + $0x124] sm:$0xf]
      %v4085 = vld [vmem:[%s165 + $0x128] sm:$0xf]
      %v4086 = vld [vmem:[%s165 + $0x12c] sm:$0xf]
      %v4087 = vld [vmem:[%s165 + $0x130] sm:$0xf]
      %v4088 = vld [vmem:[%s165 + $0x134] sm:$0xf]
      %v4089 = vld [vmem:[%s165 + $0x138] sm:$0xf]
      %v4090 = vld [vmem:[%s165 + $0x13c] sm:$0xf]
      %v4091 = vld [vmem:[%s165 + $0x140] sm:$0xf]
      %v4092 = vld [vmem:[%s165 + $0x144] sm:$0xf]
      %v4093 = vld [vmem:[%s165 + $0x148] sm:$0xf]
      %v4094 = vld [vmem:[%s165 + $0x14c] sm:$0xf]
      %v4095 = vld [vmem:[%s165 + $0x150] sm:$0xf]
      %v4096 = vld [vmem:[%s165 + $0x154] sm:$0xf]
      %v4097 = vld [vmem:[%s165 + $0x158] sm:$0xf]
      %v4098 = vld [vmem:[%s165 + $0x15c] sm:$0xf]
      %v4099 = vld [vmem:[%s165 + $0x160] sm:$0xf]
      %v4100 = vld [vmem:[%s165 + $0x164] sm:$0xf]
      %v4101 = vld [vmem:[%s165 + $0x168] sm:$0xf]
      %v4102 = vld [vmem:[%s165 + $0x16c] sm:$0xf]
      %v4103 = vld [vmem:[%s165 + $0x170] sm:$0xf]
      %v4104 = vld [vmem:[%s165 + $0x174] sm:$0xf]
      %v4105 = vld [vmem:[%s165 + $0x178] sm:$0xf]
      %v4106 = vld [vmem:[%s165 + $0x17c] sm:$0xf]
      %v4107 = vld [vmem:[%s165 + $0x180] sm:$0xf]
      %v4108 = vld [vmem:[%s165 + $0x184] sm:$0xf]
      %v4109 = vld [vmem:[%s165 + $0x188] sm:$0xf]
      %v4110 = vld [vmem:[%s165 + $0x18c] sm:$0xf]
      %v4111 = vld [vmem:[%s165 + $0x190] sm:$0xf]
      %v4112 = vld [vmem:[%s165 + $0x194] sm:$0xf]
      %v4113 = vld [vmem:[%s165 + $0x198] sm:$0xf]
      %v4114 = vld [vmem:[%s165 + $0x19c] sm:$0xf]
      %v4115 = vld [vmem:[%s165 + $0x1a0] sm:$0xf]
      %v4116 = vld [vmem:[%s165 + $0x1a4] sm:$0xf]
      %v4117 = vld [vmem:[%s165 + $0x1a8] sm:$0xf]
      %v4118 = vld [vmem:[%s165 + $0x1ac] sm:$0xf]
      %v4119 = vld [vmem:[%s165 + $0x1b0] sm:$0xf]
      %v4120 = vld [vmem:[%s165 + $0x1b4] sm:$0xf]
      %v4121 = vld [vmem:[%s165 + $0x1b8] sm:$0xf]
      %v4122 = vld [vmem:[%s165 + $0x1bc] sm:$0xf]
      %v4123 = vld [vmem:[%s165 + $0x1c0] sm:$0xf]
      %v4124 = vld [vmem:[%s165 + $0x1c4] sm:$0xf]
      %v4125 = vld [vmem:[%s165 + $0x1c8] sm:$0xf]
      %v4126 = vld [vmem:[%s165 + $0x1cc] sm:$0xf]
      %v4127 = vld [vmem:[%s165 + $0x1d0] sm:$0xf]
      %v4128 = vld [vmem:[%s165 + $0x1d4] sm:$0xf]
      %v4129 = vld [vmem:[%s165 + $0x1d8] sm:$0xf]
      %v4130 = vld [vmem:[%s165 + $0x1dc] sm:$0xf]
      %v4131 = vld [vmem:[%s165 + $0x1e0] sm:$0xf]
      %v4132 = vld [vmem:[%s165 + $0x1e4] sm:$0xf]
      %v4133 = vld [vmem:[%s165 + $0x1e8] sm:$0xf]
      %v4134 = vld [vmem:[%s165 + $0x1ec] sm:$0xf]
      %v4135 = vld [vmem:[%s165 + $0x1f0] sm:$0xf]
      %v4136 = vld [vmem:[%s165 + $0x1f4] sm:$0xf]
      %v4137 = vld [vmem:[%s165 + $0x1f8] sm:$0xf]
      %v4138 = vld [vmem:[%s165 + $0x1fc] sm:$0xf]
      %v4139 = vld [vmem:[%s165 + $0x200] sm:$0xf]
      %v4140 = vld [vmem:[%s165 + $0x204] sm:$0xf]
      %v4141 = vld [vmem:[%s165 + $0x208] sm:$0xf]
      %v4142 = vld [vmem:[%s165 + $0x20c] sm:$0xf]
      %v4143 = vld [vmem:[%s165 + $0x210] sm:$0xf]
      %v4144 = vld [vmem:[%s165 + $0x214] sm:$0xf]
      %v4145 = vld [vmem:[%s165 + $0x218] sm:$0xf]
      %v4146 = vld [vmem:[%s165 + $0x21c] sm:$0xf]
      %v4147 = vld [vmem:[%s165 + $0x220] sm:$0xf]
      %v4148 = vld [vmem:[%s165 + $0x224] sm:$0xf]
      %v4149 = vld [vmem:[%s165 + $0x228] sm:$0xf]
      %v4150 = vld [vmem:[%s165 + $0x22c] sm:$0xf]
      %v4151 = vld [vmem:[%s165 + $0x230] sm:$0xf]
      %v4152 = vld [vmem:[%s165 + $0x234] sm:$0xf]
      %v4153 = vld [vmem:[%s165 + $0x238] sm:$0xf]
      %v4154 = vld [vmem:[%s165 + $0x23c] sm:$0xf]
      %v4155 = vld [vmem:[%s165 + $0x240] sm:$0xf]
      %v4156 = vld [vmem:[%s165 + $0x244] sm:$0xf]
      %v4157 = vld [vmem:[%s165 + $0x248] sm:$0xf]
      %v4158 = vld [vmem:[%s165 + $0x24c] sm:$0xf]
      %v4159 = vld [vmem:[%s165 + $0x250] sm:$0x7]
      %s4160 = scalar_lea.vmem %s1, 6
      %v4161 = vld [vmem:[%s4160] sm:$0x3]
      %v4307 = vunpack.c.l.b16 %v4015
      %v4308 = vunpack.c.l.b16 %v4016
      %v4309 = vunpack.c.l.b16 %v4017
      %v4310 = vunpack.c.l.b16 %v4018
      %v4311 = vunpack.c.l.b16 %v4019
      %v4312 = vunpack.c.l.b16 %v4020
      %v4313 = vunpack.c.l.b16 %v4021
      %v4314 = vunpack.c.l.b16 %v4022
      %v4315 = vunpack.c.l.b16 %v4023
      %v4316 = vunpack.c.l.b16 %v4024
      %v4317 = vunpack.c.l.b16 %v4025
      %v4318 = vunpack.c.l.b16 %v4026
      %v4319 = vunpack.c.l.b16 %v4027
      %v4320 = vunpack.c.l.b16 %v4028
      %v4321 = vunpack.c.l.b16 %v4029
      %v4322 = vunpack.c.l.b16 %v4030
      %v4323 = vunpack.c.l.b16 %v4031
      %v4324 = vunpack.c.l.b16 %v4032
      %v4325 = vunpack.c.l.b16 %v4033
      %v4326 = vunpack.c.l.b16 %v4034
      %v4327 = vunpack.c.l.b16 %v4035
      %v4328 = vunpack.c.l.b16 %v4036
      %v4329 = vunpack.c.l.b16 %v4037
      %v4330 = vunpack.c.l.b16 %v4038
      %v4331 = vunpack.c.l.b16 %v4039
      %v4332 = vunpack.c.l.b16 %v4040
      %v4333 = vunpack.c.l.b16 %v4041
      %v4334 = vunpack.c.l.b16 %v4042
      %v4335 = vunpack.c.l.b16 %v4043
      %v4336 = vunpack.c.l.b16 %v4044
      %v4337 = vunpack.c.l.b16 %v4045
      %v4338 = vunpack.c.l.b16 %v4046
      %v4339 = vunpack.c.l.b16 %v4047
      %v4340 = vunpack.c.l.b16 %v4048
      %v4341 = vunpack.c.l.b16 %v4049
      %v4342 = vunpack.c.l.b16 %v4050
      %v4343 = vunpack.c.l.b16 %v4051
      %v4344 = vunpack.c.l.b16 %v4052
      %v4345 = vunpack.c.l.b16 %v4053
      %v4346 = vunpack.c.l.b16 %v4054
      %v4347 = vunpack.c.l.b16 %v4055
      %v4348 = vunpack.c.l.b16 %v4056
      %v4349 = vunpack.c.l.b16 %v4057
      %v4350 = vunpack.c.l.b16 %v4058
      %v4351 = vunpack.c.l.b16 %v4059
      %v4352 = vunpack.c.l.b16 %v4060
      %v4353 = vunpack.c.l.b16 %v4061
      %v4354 = vunpack.c.l.b16 %v4062
      %v4355 = vunpack.c.l.b16 %v4063
      %v4356 = vunpack.c.l.b16 %v4064
      %v4357 = vunpack.c.l.b16 %v4065
      %v4358 = vunpack.c.l.b16 %v4066
      %v4359 = vunpack.c.l.b16 %v4067
      %v4360 = vunpack.c.l.b16 %v4068
      %v4361 = vunpack.c.l.b16 %v4069
      %v4362 = vunpack.c.l.b16 %v4070
      %v4363 = vunpack.c.l.b16 %v4071
      %v4364 = vunpack.c.l.b16 %v4072
      %v4365 = vunpack.c.l.b16 %v4073
      %v4366 = vunpack.c.l.b16 %v4074
      %v4367 = vunpack.c.l.b16 %v4075
      %v4368 = vunpack.c.l.b16 %v4076
      %v4369 = vunpack.c.l.b16 %v4077
      %v4370 = vunpack.c.l.b16 %v4078
      %v4371 = vunpack.c.l.b16 %v4079
      %v4372 = vunpack.c.l.b16 %v4080
      %v4373 = vunpack.c.l.b16 %v4081
      %v4374 = vunpack.c.l.b16 %v4082
      %v4375 = vunpack.c.l.b16 %v4083
      %v4376 = vunpack.c.l.b16 %v4084
      %v4377 = vunpack.c.l.b16 %v4085
      %v4378 = vunpack.c.l.b16 %v4086
      %v4379 = vunpack.c.l.b16 %v4087
      %v4380 = vunpack.c.l.b16 %v4088
      %v4381 = vunpack.c.l.b16 %v4089
      %v4382 = vunpack.c.l.b16 %v4090
      %v4383 = vunpack.c.l.b16 %v4091
      %v4384 = vunpack.c.l.b16 %v4092
      %v4385 = vunpack.c.l.b16 %v4093
      %v4386 = vunpack.c.l.b16 %v4094
      %v4387 = vunpack.c.l.b16 %v4095
      %v4388 = vunpack.c.l.b16 %v4096
      %v4389 = vunpack.c.l.b16 %v4097
      %v4390 = vunpack.c.l.b16 %v4098
      %v4391 = vunpack.c.l.b16 %v4099
      %v4392 = vunpack.c.l.b16 %v4100
      %v4393 = vunpack.c.l.b16 %v4101
      %v4394 = vunpack.c.l.b16 %v4102
      %v4395 = vunpack.c.l.b16 %v4103
      %v4396 = vunpack.c.l.b16 %v4104
      %v4397 = vunpack.c.l.b16 %v4105
      %v4398 = vunpack.c.l.b16 %v4106
      %v4399 = vunpack.c.l.b16 %v4107
      %v4400 = vunpack.c.l.b16 %v4108
      %v4401 = vunpack.c.l.b16 %v4109
      %v4402 = vunpack.c.l.b16 %v4110
      %v4403 = vunpack.c.l.b16 %v4111
      %v4404 = vunpack.c.l.b16 %v4112
      %v4405 = vunpack.c.l.b16 %v4113
      %v4406 = vunpack.c.l.b16 %v4114
      %v4407 = vunpack.c.l.b16 %v4115
      %v4408 = vunpack.c.l.b16 %v4116
      %v4409 = vunpack.c.l.b16 %v4117
      %v4410 = vunpack.c.l.b16 %v4118
      %v4411 = vunpack.c.l.b16 %v4119
      %v4412 = vunpack.c.l.b16 %v4120
      %v4413 = vunpack.c.l.b16 %v4121
      %v4414 = vunpack.c.l.b16 %v4122
      %v4415 = vunpack.c.l.b16 %v4123
      %v4416 = vunpack.c.l.b16 %v4124
      %v4417 = vunpack.c.l.b16 %v4125
      %v4418 = vunpack.c.l.b16 %v4126
      %v4419 = vunpack.c.l.b16 %v4127
      %v4420 = vunpack.c.l.b16 %v4128
      %v4421 = vunpack.c.l.b16 %v4129
      %v4422 = vunpack.c.l.b16 %v4130
      %v4423 = vunpack.c.l.b16 %v4131
      %v4424 = vunpack.c.l.b16 %v4132
      %v4425 = vunpack.c.l.b16 %v4133
      %v4426 = vunpack.c.l.b16 %v4134
      %v4427 = vunpack.c.l.b16 %v4135
      %v4428 = vunpack.c.l.b16 %v4136
      %v4429 = vunpack.c.l.b16 %v4137
      %v4430 = vunpack.c.l.b16 %v4138
      %v4431 = vunpack.c.l.b16 %v4139
      %v4432 = vunpack.c.l.b16 %v4140
      %v4433 = vunpack.c.l.b16 %v4141
      %v4434 = vunpack.c.l.b16 %v4142
      %v4435 = vunpack.c.l.b16 %v4143
      %v4436 = vunpack.c.l.b16 %v4144
      %v4437 = vunpack.c.l.b16 %v4145
      %v4438 = vunpack.c.l.b16 %v4146
      %v4439 = vunpack.c.l.b16 %v4147
      %v4440 = vunpack.c.l.b16 %v4148
      %v4441 = vunpack.c.l.b16 %v4149
      %v4442 = vunpack.c.l.b16 %v4150
      %v4443 = vunpack.c.l.b16 %v4151
      %v4444 = vunpack.c.l.b16 %v4152
      %v4445 = vunpack.c.l.b16 %v4153
      %v4446 = vunpack.c.l.b16 %v4154
      %v4447 = vunpack.c.l.b16 %v4155
      %v4448 = vunpack.c.l.b16 %v4156
      %v4449 = vunpack.c.l.b16 %v4157
      %v4450 = vunpack.c.l.b16 %v4158
      %v4451 = vunpack.c.l.b16 %v4159
      %v4452 = vpack.c.b16 %v4308, %v4307
      %v4453 = vpack.c.b16 %v4310, %v4309
      %v4454 = vpack.c.b16 %v4312, %v4311
      %v4455 = vpack.c.b16 %v4314, %v4313
      %v4456 = vpack.c.b16 %v4316, %v4315
      %v4457 = vpack.c.b16 %v4318, %v4317
      %v4458 = vpack.c.b16 %v4320, %v4319
      %v4459 = vpack.c.b16 %v4322, %v4321
      %v4460 = vpack.c.b16 %v4324, %v4323
      %v4461 = vpack.c.b16 %v4326, %v4325
      %v4462 = vpack.c.b16 %v4328, %v4327
      %v4463 = vpack.c.b16 %v4330, %v4329
      %v4464 = vpack.c.b16 %v4332, %v4331
      %v4465 = vpack.c.b16 %v4334, %v4333
      %v4466 = vpack.c.b16 %v4336, %v4335
      %v4467 = vpack.c.b16 %v4338, %v4337
      %v4468 = vpack.c.b16 %v4340, %v4339
      %v4469 = vpack.c.b16 %v4342, %v4341
      %v4470 = vpack.c.b16 %v4344, %v4343
      %v4471 = vpack.c.b16 %v4346, %v4345
      %v4472 = vpack.c.b16 %v4348, %v4347
      %v4473 = vpack.c.b16 %v4350, %v4349
      %v4474 = vpack.c.b16 %v4352, %v4351
      %v4475 = vpack.c.b16 %v4354, %v4353
      %v4476 = vpack.c.b16 %v4356, %v4355
      %v4477 = vpack.c.b16 %v4358, %v4357
      %v4478 = vpack.c.b16 %v4360, %v4359
      %v4479 = vpack.c.b16 %v4362, %v4361
      %v4480 = vpack.c.b16 %v4364, %v4363
      %v4481 = vpack.c.b16 %v4366, %v4365
      %v4482 = vpack.c.b16 %v4368, %v4367
      %v4483 = vpack.c.b16 %v4370, %v4369
      %v4484 = vpack.c.b16 %v4372, %v4371
      %v4485 = vpack.c.b16 %v4374, %v4373
      %v4486 = vpack.c.b16 %v4376, %v4375
      %v4487 = vpack.c.b16 %v4378, %v4377
      %v4488 = vpack.c.b16 %v4380, %v4379
      %v4489 = vpack.c.b16 %v4382, %v4381
      %v4490 = vpack.c.b16 %v4384, %v4383
      %v4491 = vpack.c.b16 %v4386, %v4385
      %v4492 = vpack.c.b16 %v4388, %v4387
      %v4493 = vpack.c.b16 %v4390, %v4389
      %v4494 = vpack.c.b16 %v4392, %v4391
      %v4495 = vpack.c.b16 %v4394, %v4393
      %v4496 = vpack.c.b16 %v4396, %v4395
      %v4497 = vpack.c.b16 %v4398, %v4397
      %v4498 = vpack.c.b16 %v4400, %v4399
      %v4499 = vpack.c.b16 %v4402, %v4401
      %v4500 = vpack.c.b16 %v4404, %v4403
      %v4501 = vpack.c.b16 %v4406, %v4405
      %v4502 = vpack.c.b16 %v4408, %v4407
      %v4503 = vpack.c.b16 %v4410, %v4409
      %v4504 = vpack.c.b16 %v4412, %v4411
      %v4505 = vpack.c.b16 %v4414, %v4413
      %v4506 = vpack.c.b16 %v4416, %v4415
      %v4507 = vpack.c.b16 %v4418, %v4417
      %v4508 = vpack.c.b16 %v4420, %v4419
      %v4509 = vpack.c.b16 %v4422, %v4421
      %v4510 = vpack.c.b16 %v4424, %v4423
      %v4511 = vpack.c.b16 %v4426, %v4425
      %v4512 = vpack.c.b16 %v4428, %v4427
      %v4513 = vpack.c.b16 %v4430, %v4429
      %v4514 = vpack.c.b16 %v4432, %v4431
      %v4515 = vpack.c.b16 %v4434, %v4433
      %v4516 = vpack.c.b16 %v4436, %v4435
      %v4517 = vpack.c.b16 %v4438, %v4437
      %v4518 = vpack.c.b16 %v4440, %v4439
      %v4519 = vpack.c.b16 %v4442, %v4441
      %v4520 = vpack.c.b16 %v4444, %v4443
      %v4521 = vpack.c.b16 %v4446, %v4445
      %v4522 = vpack.c.b16 %v4448, %v4447
      %v4523 = vpack.c.b16 %v4450, %v4449
      %v4524 = vpack.c.b16 %v4451, %v4451
      %v4525 = vrot.slane %v4452, 1
      %v4526 = vrot.slane %v4453, 1
      %v4527 = vsel %vm2886, %v4525, %v4526
      %v4528 = vrot.slane %v4454, 1
      %v4529 = vsel %vm2886, %v4526, %v4528
      %v4530 = vrot.slane %v4455, 1
      %v4531 = vsel %vm2886, %v4528, %v4530
      %v4532 = vrot.slane %v4456, 1
      %v4533 = vsel %vm2886, %v4530, %v4532
      %v4534 = vrot.slane %v4457, 1
      %v4535 = vsel %vm2886, %v4532, %v4534
      %v4536 = vrot.slane %v4458, 1
      %v4537 = vsel %vm2886, %v4534, %v4536
      %v4538 = vrot.slane %v4459, 1
      %v4539 = vsel %vm2886, %v4536, %v4538
      %v4540 = vrot.slane %v4460, 1
      %v4541 = vsel %vm2886, %v4538, %v4540
      %v4542 = vrot.slane %v4461, 1
      %v4543 = vsel %vm2886, %v4540, %v4542
      %v4544 = vrot.slane %v4462, 1
      %v4545 = vsel %vm2886, %v4542, %v4544
      %v4546 = vrot.slane %v4463, 1
      %v4547 = vsel %vm2886, %v4544, %v4546
      %v4548 = vrot.slane %v4464, 1
      %v4549 = vsel %vm2886, %v4546, %v4548
      %v4550 = vrot.slane %v4465, 1
      %v4551 = vsel %vm2886, %v4548, %v4550
      %v4552 = vrot.slane %v4466, 1
      %v4553 = vsel %vm2886, %v4550, %v4552
      %v4554 = vrot.slane %v4467, 1
      %v4555 = vsel %vm2886, %v4552, %v4554
      %v4556 = vrot.slane %v4468, 1
      %v4557 = vsel %vm2886, %v4554, %v4556
      %v4558 = vrot.slane %v4469, 1
      %v4559 = vsel %vm2886, %v4556, %v4558
      %v4560 = vrot.slane %v4470, 1
      %v4561 = vsel %vm2886, %v4558, %v4560
      %v4562 = vrot.slane %v4471, 1
      %v4563 = vsel %vm2886, %v4560, %v4562
      %v4564 = vrot.slane %v4472, 1
      %v4565 = vsel %vm2886, %v4562, %v4564
      %v4566 = vrot.slane %v4473, 1
      %v4567 = vsel %vm2886, %v4564, %v4566
      %v4568 = vrot.slane %v4474, 1
      %v4569 = vsel %vm2886, %v4566, %v4568
      %v4570 = vrot.slane %v4475, 1
      %v4571 = vsel %vm2886, %v4568, %v4570
      %v4572 = vrot.slane %v4476, 1
      %v4573 = vsel %vm2886, %v4570, %v4572
      %v4574 = vrot.slane %v4477, 1
      %v4575 = vsel %vm2886, %v4572, %v4574
      %v4576 = vrot.slane %v4478, 1
      %v4577 = vsel %vm2886, %v4574, %v4576
      %v4578 = vrot.slane %v4479, 1
      %v4579 = vsel %vm2886, %v4576, %v4578
      %v4580 = vrot.slane %v4480, 1
      %v4581 = vsel %vm2886, %v4578, %v4580
      %v4582 = vrot.slane %v4481, 1
      %v4583 = vsel %vm2886, %v4580, %v4582
      %v4584 = vrot.slane %v4482, 1
      %v4585 = vsel %vm2886, %v4582, %v4584
      %v4586 = vrot.slane %v4483, 1
      %v4587 = vsel %vm2886, %v4584, %v4586
      %v4588 = vrot.slane %v4484, 1
      %v4589 = vsel %vm2886, %v4586, %v4588
      %v4590 = vrot.slane %v4485, 1
      %v4591 = vsel %vm2886, %v4588, %v4590
      %v4592 = vrot.slane %v4486, 1
      %v4593 = vsel %vm2886, %v4590, %v4592
      %v4594 = vrot.slane %v4487, 1
      %v4595 = vsel %vm2886, %v4592, %v4594
      %v4596 = vrot.slane %v4488, 1
      %v4597 = vsel %vm2886, %v4594, %v4596
      %v4598 = vrot.slane %v4489, 1
      %v4599 = vsel %vm2886, %v4596, %v4598
      %v4600 = vrot.slane %v4490, 1
      %v4601 = vsel %vm2886, %v4598, %v4600
      %v4602 = vrot.slane %v4491, 1
      %v4603 = vsel %vm2886, %v4600, %v4602
      %v4604 = vrot.slane %v4492, 1
      %v4605 = vsel %vm2886, %v4602, %v4604
      %v4606 = vrot.slane %v4493, 1
      %v4607 = vsel %vm2886, %v4604, %v4606
      %v4608 = vrot.slane %v4494, 1
      %v4609 = vsel %vm2886, %v4606, %v4608
      %v4610 = vrot.slane %v4495, 1
      %v4611 = vsel %vm2886, %v4608, %v4610
      %v4612 = vrot.slane %v4496, 1
      %v4613 = vsel %vm2886, %v4610, %v4612
      %v4614 = vrot.slane %v4497, 1
      %v4615 = vsel %vm2886, %v4612, %v4614
      %v4616 = vrot.slane %v4498, 1
      %v4617 = vsel %vm2886, %v4614, %v4616
      %v4618 = vrot.slane %v4499, 1
      %v4619 = vsel %vm2886, %v4616, %v4618
      %v4620 = vrot.slane %v4500, 1
      %v4621 = vsel %vm2886, %v4618, %v4620
      %v4622 = vrot.slane %v4501, 1
      %v4623 = vsel %vm2886, %v4620, %v4622
      %v4624 = vrot.slane %v4502, 1
      %v4625 = vsel %vm2886, %v4622, %v4624
      %v4626 = vrot.slane %v4503, 1
      %v4627 = vsel %vm2886, %v4624, %v4626
      %v4628 = vrot.slane %v4504, 1
      %v4629 = vsel %vm2886, %v4626, %v4628
      %v4630 = vrot.slane %v4505, 1
      %v4631 = vsel %vm2886, %v4628, %v4630
      %v4632 = vrot.slane %v4506, 1
      %v4633 = vsel %vm2886, %v4630, %v4632
      %v4634 = vrot.slane %v4507, 1
      %v4635 = vsel %vm2886, %v4632, %v4634
      %v4636 = vrot.slane %v4508, 1
      %v4637 = vsel %vm2886, %v4634, %v4636
      %v4638 = vrot.slane %v4509, 1
      %v4639 = vsel %vm2886, %v4636, %v4638
      %v4640 = vrot.slane %v4510, 1
      %v4641 = vsel %vm2886, %v4638, %v4640
      %v4642 = vrot.slane %v4511, 1
      %v4643 = vsel %vm2886, %v4640, %v4642
      %v4644 = vrot.slane %v4512, 1
      %v4645 = vsel %vm2886, %v4642, %v4644
      %v4646 = vrot.slane %v4513, 1
      %v4647 = vsel %vm2886, %v4644, %v4646
      %v4648 = vrot.slane %v4514, 1
      %v4649 = vsel %vm2886, %v4646, %v4648
      %v4650 = vrot.slane %v4515, 1
      %v4651 = vsel %vm2886, %v4648, %v4650
      %v4652 = vrot.slane %v4516, 1
      %v4653 = vsel %vm2886, %v4650, %v4652
      %v4654 = vrot.slane %v4517, 1
      %v4655 = vsel %vm2886, %v4652, %v4654
      %v4656 = vrot.slane %v4518, 1
      %v4657 = vsel %vm2886, %v4654, %v4656
      %v4658 = vrot.slane %v4519, 1
      %v4659 = vsel %vm2886, %v4656, %v4658
      %v4660 = vrot.slane %v4520, 1
      %v4661 = vsel %vm2886, %v4658, %v4660
      %v4662 = vrot.slane %v4521, 1
      %v4663 = vsel %vm2886, %v4660, %v4662
      %v4664 = vrot.slane %v4522, 1
      %v4665 = vsel %vm2886, %v4662, %v4664
      %v4666 = vrot.slane %v4523, 1
      %v4667 = vsel %vm2886, %v4664, %v4666
      %v4668 = vrot.slane %v4524, 1
      %v4669 = vsel %vm2886, %v4666, %v4668
      %v4671 = vsel %vm1268, %v4527, 0
      %v4674 = vsel %vm1268, %v4529, 0
      %v4677 = vsel %vm1268, %v4531, 0
      %v4680 = vsel %vm1268, %v4533, 0
      %v4683 = vsel %vm1268, %v4535, 0
      %v4686 = vsel %vm1268, %v4537, 0
      %v4689 = vsel %vm1268, %v4539, 0
      %v4692 = vsel %vm1268, %v4541, 0
      %v4695 = vsel %vm1268, %v4543, 0
      %v4698 = vsel %vm1268, %v4545, 0
      %v4701 = vsel %vm1268, %v4547, 0
      %v4704 = vsel %vm1268, %v4549, 0
      %v4707 = vsel %vm1268, %v4551, 0
      %v4710 = vsel %vm1268, %v4553, 0
      %v4713 = vsel %vm1268, %v4555, 0
      %v4716 = vsel %vm1268, %v4557, 0
      %v4719 = vsel %vm1268, %v4559, 0
      %v4722 = vsel %vm1268, %v4561, 0
      %v4725 = vsel %vm1268, %v4563, 0
      %v4728 = vsel %vm1268, %v4565, 0
      %v4731 = vsel %vm1268, %v4567, 0
      %v4734 = vsel %vm1268, %v4569, 0
      %v4737 = vsel %vm1268, %v4571, 0
      %v4740 = vsel %vm1268, %v4573, 0
      %v4743 = vsel %vm1268, %v4575, 0
      %v4746 = vsel %vm1268, %v4577, 0
      %v4749 = vsel %vm1268, %v4579, 0
      %v4752 = vsel %vm1268, %v4581, 0
      %v4755 = vsel %vm1268, %v4583, 0
      %v4758 = vsel %vm1268, %v4585, 0
      %v4761 = vsel %vm1268, %v4587, 0
      %v4764 = vsel %vm1268, %v4589, 0
      %v4767 = vsel %vm1268, %v4591, 0
      %v4770 = vsel %vm1268, %v4593, 0
      %v4773 = vsel %vm1268, %v4595, 0
      %v4776 = vsel %vm1268, %v4597, 0
      %v4779 = vsel %vm1268, %v4599, 0
      %v4782 = vsel %vm1268, %v4601, 0
      %v4785 = vsel %vm1268, %v4603, 0
      %v4788 = vsel %vm1268, %v4605, 0
      %v4791 = vsel %vm1268, %v4607, 0
      %v4794 = vsel %vm1268, %v4609, 0
      %v4797 = vsel %vm1268, %v4611, 0
      %v4800 = vsel %vm1268, %v4613, 0
      %v4803 = vsel %vm1268, %v4615, 0
      %v4806 = vsel %vm1268, %v4617, 0
      %v4809 = vsel %vm1268, %v4619, 0
      %v4812 = vsel %vm1268, %v4621, 0
      %v4815 = vsel %vm1268, %v4623, 0
      %v4818 = vsel %vm1268, %v4625, 0
      %v4821 = vsel %vm1268, %v4627, 0
      %v4824 = vsel %vm1268, %v4629, 0
      %v4827 = vsel %vm1268, %v4631, 0
      %v4830 = vsel %vm1268, %v4633, 0
      %v4833 = vsel %vm1268, %v4635, 0
      %v4836 = vsel %vm1268, %v4637, 0
      %v4839 = vsel %vm1268, %v4639, 0
      %v4842 = vsel %vm1268, %v4641, 0
      %v4845 = vsel %vm1268, %v4643, 0
      %v4848 = vsel %vm1268, %v4645, 0
      %v4851 = vsel %vm1268, %v4647, 0
      %v4854 = vsel %vm1268, %v4649, 0
      %v4857 = vsel %vm1268, %v4651, 0
      %v4860 = vsel %vm1268, %v4653, 0
      %v4863 = vsel %vm1268, %v4655, 0
      %v4866 = vsel %vm1268, %v4657, 0
      %v4869 = vsel %vm1268, %v4659, 0
      %v4872 = vsel %vm1268, %v4661, 0
      %v4875 = vsel %vm1268, %v4663, 0
      %v4878 = vsel %vm1268, %v4665, 0
      %v4881 = vsel %vm1268, %v4667, 0
      %v4884 = vsel %vm1268, %v4669, 0
      %v4887 = vsel %vm1268, %v4668, 0
      %v4890 = vand.u32 %v4161, %v1491
      %4892 = vmatprep.subr.bf16.mxu0 0
      %4893 = vmatpush1.bf16.msra.mxu0 0
      %4894 = vmatprep.subr.bf16.mxu0 0
      %4895 = vmatpush1.bf16.msra.mxu0 0
      %4896 = vmatprep.subr.bf16.mxu0 0
      %4897 = vmatpush1.bf16.msra.mxu0 0
      %4898 = vmatprep.subr.bf16.mxu0 0
      %4899 = vmatpush1.bf16.msra.mxu0 0
      %4900 = vmatprep.subr.bf16.mxu0 0
      %4901 = vmatpush1.bf16.msra.mxu0 0
      %4902 = vmatprep.subr.bf16.mxu0 0
      %4903 = vmatpush1.bf16.msra.mxu0 0
      %4904 = vmatprep.subr.bf16.mxu0 0
      %4905 = vmatpush1.bf16.msra.mxu0 0
      %4906 = vmatprep.subr.bf16.mxu0 0
      %4907 = vmatpush1.bf16.msra.mxu0 %v4890
      %4908 = vmatprep.subr.bf16.mxu0 0
      %4909 = vmatpush2.bf16.msra.mxu0 0
      %4910 = vmatprep.subr.bf16.mxu0 0
      %4911 = vmatpush2.bf16.msra.mxu0 0
      %4912 = vmatprep.subr.bf16.mxu0 0
      %4913 = vmatpush2.bf16.msra.mxu0 0
      %4914 = vmatprep.subr.bf16.mxu0 0
      %4915 = vmatpush2.bf16.msra.mxu0 0
      %4916 = vmatprep.subr.bf16.mxu0 0
      %4917 = vmatpush2.bf16.msra.mxu0 0
      %4918 = vmatprep.subr.bf16.mxu0 0
      %4919 = vmatpush2.bf16.msra.mxu0 0
      %4920 = vmatprep.subr.bf16.mxu0 0
      %4921 = vmatpush2.bf16.msra.mxu0 0
      %4922 = vmatprep.subr.bf16.mxu0 0
      %4923 = vmatpush2.bf16.msra.mxu0 0
      %4924 = vmatprep.mubr.bf16.mxu0 0
      %4925 = vmatmul.mubr.bf16.gmra.mxu0 %v4671
      %v4926 = vpop.f32.mrf.mxu0
      %v4927 = vadd.f32 0.0, %v4926
      %v4928 = vpop.f32.mrf.mxu0
      %v4929 = vpop.f32.mrf.mxu0
      %v4930 = vadd.f32 0.0, %v4929
      %v4931 = vpop.f32.mrf.mxu0
      %4932 = vmatprep.mubr.bf16.mxu0 0
      %4933 = vmatmul.mubr.bf16.gmra.mxu0 %v4674
      %v4934 = vpop.f32.mrf.mxu0
      %v4935 = vadd.f32 0.0, %v4934
      %v4936 = vpop.f32.mrf.mxu0
      %v4937 = vpop.f32.mrf.mxu0
      %v4938 = vadd.f32 0.0, %v4937
      %v4939 = vpop.f32.mrf.mxu0
      %4940 = vmatprep.mubr.bf16.mxu0 0
      %4941 = vmatmul.mubr.bf16.gmra.mxu0 %v4677
      %v4942 = vpop.f32.mrf.mxu0
      %v4943 = vadd.f32 0.0, %v4942
      %v4944 = vpop.f32.mrf.mxu0
      %v4945 = vpop.f32.mrf.mxu0
      %v4946 = vadd.f32 0.0, %v4945
      %v4947 = vpop.f32.mrf.mxu0
      %4948 = vmatprep.mubr.bf16.mxu0 0
      %4949 = vmatmul.mubr.bf16.gmra.mxu0 %v4680
      %v4950 = vpop.f32.mrf.mxu0
      %v4951 = vadd.f32 0.0, %v4950
      %v4952 = vpop.f32.mrf.mxu0
      %v4953 = vpop.f32.mrf.mxu0
      %v4954 = vadd.f32 0.0, %v4953
      %v4955 = vpop.f32.mrf.mxu0
      %4956 = vmatprep.mubr.bf16.mxu0 0
      %4957 = vmatmul.mubr.bf16.gmra.mxu0 %v4683
      %v4958 = vpop.f32.mrf.mxu0
      %v4959 = vadd.f32 0.0, %v4958
      %v4960 = vpop.f32.mrf.mxu0
      %v4961 = vpop.f32.mrf.mxu0
      %v4962 = vadd.f32 0.0, %v4961
      %v4963 = vpop.f32.mrf.mxu0
      %4964 = vmatprep.mubr.bf16.mxu0 0
      %4965 = vmatmul.mubr.bf16.gmra.mxu0 %v4686
      %v4966 = vpop.f32.mrf.mxu0
      %v4967 = vadd.f32 0.0, %v4966
      %v4968 = vpop.f32.mrf.mxu0
      %v4969 = vpop.f32.mrf.mxu0
      %v4970 = vadd.f32 0.0, %v4969
      %v4971 = vpop.f32.mrf.mxu0
      %4972 = vmatprep.mubr.bf16.mxu0 0
      %4973 = vmatmul.mubr.bf16.gmra.mxu0 %v4689
      %v4974 = vpop.f32.mrf.mxu0
      %v4975 = vadd.f32 0.0, %v4974
      %v4976 = vpop.f32.mrf.mxu0
      %v4977 = vpop.f32.mrf.mxu0
      %v4978 = vadd.f32 0.0, %v4977
      %v4979 = vpop.f32.mrf.mxu0
      %4980 = vmatprep.mubr.bf16.mxu0 0
      %4981 = vmatmul.mubr.bf16.gmra.mxu0 %v4692
      %v4982 = vpop.f32.mrf.mxu0
      %v4983 = vadd.f32 0.0, %v4982
      %v4984 = vpop.f32.mrf.mxu0
      %v4985 = vpop.f32.mrf.mxu0
      %v4986 = vadd.f32 0.0, %v4985
      %v4987 = vpop.f32.mrf.mxu0
      %4988 = vmatprep.mubr.bf16.mxu0 0
      %4989 = vmatmul.mubr.bf16.gmra.mxu0 %v4695
      %v4990 = vpop.f32.mrf.mxu0
      %v4991 = vadd.f32 0.0, %v4990
      %v4992 = vpop.f32.mrf.mxu0
      %v4993 = vpop.f32.mrf.mxu0
      %v4994 = vadd.f32 0.0, %v4993
      %v4995 = vpop.f32.mrf.mxu0
      %4996 = vmatprep.mubr.bf16.mxu0 0
      %4997 = vmatmul.mubr.bf16.gmra.mxu0 %v4698
      %v4998 = vpop.f32.mrf.mxu0
      %v4999 = vadd.f32 0.0, %v4998
      %v5000 = vpop.f32.mrf.mxu0
      %v5001 = vpop.f32.mrf.mxu0
      %v5002 = vadd.f32 0.0, %v5001
      %v5003 = vpop.f32.mrf.mxu0
      %5004 = vmatprep.mubr.bf16.mxu0 0
      %5005 = vmatmul.mubr.bf16.gmra.mxu0 %v4701
      %v5006 = vpop.f32.mrf.mxu0
      %v5007 = vadd.f32 0.0, %v5006
      %v5008 = vpop.f32.mrf.mxu0
      %v5009 = vpop.f32.mrf.mxu0
      %v5010 = vadd.f32 0.0, %v5009
      %v5011 = vpop.f32.mrf.mxu0
      %5012 = vmatprep.mubr.bf16.mxu0 0
      %5013 = vmatmul.mubr.bf16.gmra.mxu0 %v4704
      %v5014 = vpop.f32.mrf.mxu0
      %v5015 = vadd.f32 0.0, %v5014
      %v5016 = vpop.f32.mrf.mxu0
      %v5017 = vpop.f32.mrf.mxu0
      %v5018 = vadd.f32 0.0, %v5017
      %v5019 = vpop.f32.mrf.mxu0
      %5020 = vmatprep.mubr.bf16.mxu0 0
      %5021 = vmatmul.mubr.bf16.gmra.mxu0 %v4707
      %v5022 = vpop.f32.mrf.mxu0
      %v5023 = vadd.f32 0.0, %v5022
      %v5024 = vpop.f32.mrf.mxu0
      %v5025 = vpop.f32.mrf.mxu0
      %v5026 = vadd.f32 0.0, %v5025
      %v5027 = vpop.f32.mrf.mxu0
      %5028 = vmatprep.mubr.bf16.mxu0 0
      %5029 = vmatmul.mubr.bf16.gmra.mxu0 %v4710
      %v5030 = vpop.f32.mrf.mxu0
      %v5031 = vadd.f32 0.0, %v5030
      %v5032 = vpop.f32.mrf.mxu0
      %v5033 = vpop.f32.mrf.mxu0
      %v5034 = vadd.f32 0.0, %v5033
      %v5035 = vpop.f32.mrf.mxu0
      %5036 = vmatprep.mubr.bf16.mxu0 0
      %5037 = vmatmul.mubr.bf16.gmra.mxu0 %v4713
      %v5038 = vpop.f32.mrf.mxu0
      %v5039 = vadd.f32 0.0, %v5038
      %v5040 = vpop.f32.mrf.mxu0
      %v5041 = vpop.f32.mrf.mxu0
      %v5042 = vadd.f32 0.0, %v5041
      %v5043 = vpop.f32.mrf.mxu0
      %5044 = vmatprep.mubr.bf16.mxu0 0
      %5045 = vmatmul.mubr.bf16.gmra.mxu0 %v4716
      %v5046 = vpop.f32.mrf.mxu0
      %v5047 = vadd.f32 0.0, %v5046
      %v5048 = vpop.f32.mrf.mxu0
      %v5049 = vpop.f32.mrf.mxu0
      %v5050 = vadd.f32 0.0, %v5049
      %v5051 = vpop.f32.mrf.mxu0
      %5052 = vmatprep.mubr.bf16.mxu0 0
      %5053 = vmatmul.mubr.bf16.gmra.mxu0 %v4719
      %v5054 = vpop.f32.mrf.mxu0
      %v5055 = vadd.f32 0.0, %v5054
      %v5056 = vpop.f32.mrf.mxu0
      %v5057 = vpop.f32.mrf.mxu0
      %v5058 = vadd.f32 0.0, %v5057
      %v5059 = vpop.f32.mrf.mxu0
      %5060 = vmatprep.mubr.bf16.mxu0 0
      %5061 = vmatmul.mubr.bf16.gmra.mxu0 %v4722
      %v5062 = vpop.f32.mrf.mxu0
      %v5063 = vadd.f32 0.0, %v5062
      %v5064 = vpop.f32.mrf.mxu0
      %v5065 = vpop.f32.mrf.mxu0
      %v5066 = vadd.f32 0.0, %v5065
      %v5067 = vpop.f32.mrf.mxu0
      %5068 = vmatprep.mubr.bf16.mxu0 0
      %5069 = vmatmul.mubr.bf16.gmra.mxu0 %v4725
      %v5070 = vpop.f32.mrf.mxu0
      %v5071 = vadd.f32 0.0, %v5070
      %v5072 = vpop.f32.mrf.mxu0
      %v5073 = vpop.f32.mrf.mxu0
      %v5074 = vadd.f32 0.0, %v5073
      %v5075 = vpop.f32.mrf.mxu0
      %5076 = vmatprep.mubr.bf16.mxu0 0
      %5077 = vmatmul.mubr.bf16.gmra.mxu0 %v4728
      %v5078 = vpop.f32.mrf.mxu0
      %v5079 = vadd.f32 0.0, %v5078
      %v5080 = vpop.f32.mrf.mxu0
      %v5081 = vpop.f32.mrf.mxu0
      %v5082 = vadd.f32 0.0, %v5081
      %v5083 = vpop.f32.mrf.mxu0
      %5084 = vmatprep.mubr.bf16.mxu0 0
      %5085 = vmatmul.mubr.bf16.gmra.mxu0 %v4731
      %v5086 = vpop.f32.mrf.mxu0
      %v5087 = vadd.f32 0.0, %v5086
      %v5088 = vpop.f32.mrf.mxu0
      %v5089 = vpop.f32.mrf.mxu0
      %v5090 = vadd.f32 0.0, %v5089
      %v5091 = vpop.f32.mrf.mxu0
      %5092 = vmatprep.mubr.bf16.mxu0 0
      %5093 = vmatmul.mubr.bf16.gmra.mxu0 %v4734
      %v5094 = vpop.f32.mrf.mxu0
      %v5095 = vadd.f32 0.0, %v5094
      %v5096 = vpop.f32.mrf.mxu0
      %v5097 = vpop.f32.mrf.mxu0
      %v5098 = vadd.f32 0.0, %v5097
      %v5099 = vpop.f32.mrf.mxu0
      %5100 = vmatprep.mubr.bf16.mxu0 0
      %5101 = vmatmul.mubr.bf16.gmra.mxu0 %v4737
      %v5102 = vpop.f32.mrf.mxu0
      %v5103 = vadd.f32 0.0, %v5102
      %v5104 = vpop.f32.mrf.mxu0
      %v5105 = vpop.f32.mrf.mxu0
      %v5106 = vadd.f32 0.0, %v5105
      %v5107 = vpop.f32.mrf.mxu0
      %5108 = vmatprep.mubr.bf16.mxu0 0
      %5109 = vmatmul.mubr.bf16.gmra.mxu0 %v4740
      %v5110 = vpop.f32.mrf.mxu0
      %v5111 = vadd.f32 0.0, %v5110
      %v5112 = vpop.f32.mrf.mxu0
      %v5113 = vpop.f32.mrf.mxu0
      %v5114 = vadd.f32 0.0, %v5113
      %v5115 = vpop.f32.mrf.mxu0
      %5116 = vmatprep.mubr.bf16.mxu0 0
      %5117 = vmatmul.mubr.bf16.gmra.mxu0 %v4743
      %v5118 = vpop.f32.mrf.mxu0
      %v5119 = vadd.f32 0.0, %v5118
      %v5120 = vpop.f32.mrf.mxu0
      %v5121 = vpop.f32.mrf.mxu0
      %v5122 = vadd.f32 0.0, %v5121
      %v5123 = vpop.f32.mrf.mxu0
      %5124 = vmatprep.mubr.bf16.mxu0 0
      %5125 = vmatmul.mubr.bf16.gmra.mxu0 %v4746
      %v5126 = vpop.f32.mrf.mxu0
      %v5127 = vadd.f32 0.0, %v5126
      %v5128 = vpop.f32.mrf.mxu0
      %v5129 = vpop.f32.mrf.mxu0
      %v5130 = vadd.f32 0.0, %v5129
      %v5131 = vpop.f32.mrf.mxu0
      %5132 = vmatprep.mubr.bf16.mxu0 0
      %5133 = vmatmul.mubr.bf16.gmra.mxu0 %v4749
      %v5134 = vpop.f32.mrf.mxu0
      %v5135 = vadd.f32 0.0, %v5134
      %v5136 = vpop.f32.mrf.mxu0
      %v5137 = vpop.f32.mrf.mxu0
      %v5138 = vadd.f32 0.0, %v5137
      %v5139 = vpop.f32.mrf.mxu0
      %5140 = vmatprep.mubr.bf16.mxu0 0
      %5141 = vmatmul.mubr.bf16.gmra.mxu0 %v4752
      %v5142 = vpop.f32.mrf.mxu0
      %v5143 = vadd.f32 0.0, %v5142
      %v5144 = vpop.f32.mrf.mxu0
      %v5145 = vpop.f32.mrf.mxu0
      %v5146 = vadd.f32 0.0, %v5145
      %v5147 = vpop.f32.mrf.mxu0
      %5148 = vmatprep.mubr.bf16.mxu0 0
      %5149 = vmatmul.mubr.bf16.gmra.mxu0 %v4755
      %v5150 = vpop.f32.mrf.mxu0
      %v5151 = vadd.f32 0.0, %v5150
      %v5152 = vpop.f32.mrf.mxu0
      %v5153 = vpop.f32.mrf.mxu0
      %v5154 = vadd.f32 0.0, %v5153
      %v5155 = vpop.f32.mrf.mxu0
      %5156 = vmatprep.mubr.bf16.mxu0 0
      %5157 = vmatmul.mubr.bf16.gmra.mxu0 %v4758
      %v5158 = vpop.f32.mrf.mxu0
      %v5159 = vadd.f32 0.0, %v5158
      %v5160 = vpop.f32.mrf.mxu0
      %v5161 = vpop.f32.mrf.mxu0
      %v5162 = vadd.f32 0.0, %v5161
      %v5163 = vpop.f32.mrf.mxu0
      %5164 = vmatprep.mubr.bf16.mxu0 0
      %5165 = vmatmul.mubr.bf16.gmra.mxu0 %v4761
      %v5166 = vpop.f32.mrf.mxu0
      %v5167 = vadd.f32 0.0, %v5166
      %v5168 = vpop.f32.mrf.mxu0
      %v5169 = vpop.f32.mrf.mxu0
      %v5170 = vadd.f32 0.0, %v5169
      %v5171 = vpop.f32.mrf.mxu0
      %5172 = vmatprep.mubr.bf16.mxu0 0
      %5173 = vmatmul.mubr.bf16.gmra.mxu0 %v4764
      %v5174 = vpop.f32.mrf.mxu0
      %v5175 = vadd.f32 0.0, %v5174
      %v5176 = vpop.f32.mrf.mxu0
      %v5177 = vpop.f32.mrf.mxu0
      %v5178 = vadd.f32 0.0, %v5177
      %v5179 = vpop.f32.mrf.mxu0
      %5180 = vmatprep.mubr.bf16.mxu0 0
      %5181 = vmatmul.mubr.bf16.gmra.mxu0 %v4767
      %v5182 = vpop.f32.mrf.mxu0
      %v5183 = vadd.f32 0.0, %v5182
      %v5184 = vpop.f32.mrf.mxu0
      %v5185 = vpop.f32.mrf.mxu0
      %v5186 = vadd.f32 0.0, %v5185
      %v5187 = vpop.f32.mrf.mxu0
      %5188 = vmatprep.mubr.bf16.mxu0 0
      %5189 = vmatmul.mubr.bf16.gmra.mxu0 %v4770
      %v5190 = vpop.f32.mrf.mxu0
      %v5191 = vadd.f32 0.0, %v5190
      %v5192 = vpop.f32.mrf.mxu0
      %v5193 = vpop.f32.mrf.mxu0
      %v5194 = vadd.f32 0.0, %v5193
      %v5195 = vpop.f32.mrf.mxu0
      %5196 = vmatprep.mubr.bf16.mxu0 0
      %5197 = vmatmul.mubr.bf16.gmra.mxu0 %v4773
      %v5198 = vpop.f32.mrf.mxu0
      %v5199 = vadd.f32 0.0, %v5198
      %v5200 = vpop.f32.mrf.mxu0
      %v5201 = vpop.f32.mrf.mxu0
      %v5202 = vadd.f32 0.0, %v5201
      %v5203 = vpop.f32.mrf.mxu0
      %5204 = vmatprep.mubr.bf16.mxu0 0
      %5205 = vmatmul.mubr.bf16.gmra.mxu0 %v4776
      %v5206 = vpop.f32.mrf.mxu0
      %v5207 = vadd.f32 0.0, %v5206
      %v5208 = vpop.f32.mrf.mxu0
      %v5209 = vpop.f32.mrf.mxu0
      %v5210 = vadd.f32 0.0, %v5209
      %v5211 = vpop.f32.mrf.mxu0
      %5212 = vmatprep.mubr.bf16.mxu0 0
      %5213 = vmatmul.mubr.bf16.gmra.mxu0 %v4779
      %v5214 = vpop.f32.mrf.mxu0
      %v5215 = vadd.f32 0.0, %v5214
      %v5216 = vpop.f32.mrf.mxu0
      %v5217 = vpop.f32.mrf.mxu0
      %v5218 = vadd.f32 0.0, %v5217
      %v5219 = vpop.f32.mrf.mxu0
      %5220 = vmatprep.mubr.bf16.mxu0 0
      %5221 = vmatmul.mubr.bf16.gmra.mxu0 %v4782
      %v5222 = vpop.f32.mrf.mxu0
      %v5223 = vadd.f32 0.0, %v5222
      %v5224 = vpop.f32.mrf.mxu0
      %v5225 = vpop.f32.mrf.mxu0
      %v5226 = vadd.f32 0.0, %v5225
      %v5227 = vpop.f32.mrf.mxu0
      %5228 = vmatprep.mubr.bf16.mxu0 0
      %5229 = vmatmul.mubr.bf16.gmra.mxu0 %v4785
      %v5230 = vpop.f32.mrf.mxu0
      %v5231 = vadd.f32 0.0, %v5230
      %v5232 = vpop.f32.mrf.mxu0
      %v5233 = vpop.f32.mrf.mxu0
      %v5234 = vadd.f32 0.0, %v5233
      %v5235 = vpop.f32.mrf.mxu0
      %5236 = vmatprep.mubr.bf16.mxu0 0
      %5237 = vmatmul.mubr.bf16.gmra.mxu0 %v4788
      %v5238 = vpop.f32.mrf.mxu0
      %v5239 = vadd.f32 0.0, %v5238
      %v5240 = vpop.f32.mrf.mxu0
      %v5241 = vpop.f32.mrf.mxu0
      %v5242 = vadd.f32 0.0, %v5241
      %v5243 = vpop.f32.mrf.mxu0
      %5244 = vmatprep.mubr.bf16.mxu0 0
      %5245 = vmatmul.mubr.bf16.gmra.mxu0 %v4791
      %v5246 = vpop.f32.mrf.mxu0
      %v5247 = vadd.f32 0.0, %v5246
      %v5248 = vpop.f32.mrf.mxu0
      %v5249 = vpop.f32.mrf.mxu0
      %v5250 = vadd.f32 0.0, %v5249
      %v5251 = vpop.f32.mrf.mxu0
      %5252 = vmatprep.mubr.bf16.mxu0 0
      %5253 = vmatmul.mubr.bf16.gmra.mxu0 %v4794
      %v5254 = vpop.f32.mrf.mxu0
      %v5255 = vadd.f32 0.0, %v5254
      %v5256 = vpop.f32.mrf.mxu0
      %v5257 = vpop.f32.mrf.mxu0
      %v5258 = vadd.f32 0.0, %v5257
      %v5259 = vpop.f32.mrf.mxu0
      %5260 = vmatprep.mubr.bf16.mxu0 0
      %5261 = vmatmul.mubr.bf16.gmra.mxu0 %v4797
      %v5262 = vpop.f32.mrf.mxu0
      %v5263 = vadd.f32 0.0, %v5262
      %v5264 = vpop.f32.mrf.mxu0
      %v5265 = vpop.f32.mrf.mxu0
      %v5266 = vadd.f32 0.0, %v5265
      %v5267 = vpop.f32.mrf.mxu0
      %5268 = vmatprep.mubr.bf16.mxu0 0
      %5269 = vmatmul.mubr.bf16.gmra.mxu0 %v4800
      %v5270 = vpop.f32.mrf.mxu0
      %v5271 = vadd.f32 0.0, %v5270
      %v5272 = vpop.f32.mrf.mxu0
      %v5273 = vpop.f32.mrf.mxu0
      %v5274 = vadd.f32 0.0, %v5273
      %v5275 = vpop.f32.mrf.mxu0
      %5276 = vmatprep.mubr.bf16.mxu0 0
      %5277 = vmatmul.mubr.bf16.gmra.mxu0 %v4803
      %v5278 = vpop.f32.mrf.mxu0
      %v5279 = vadd.f32 0.0, %v5278
      %v5280 = vpop.f32.mrf.mxu0
      %v5281 = vpop.f32.mrf.mxu0
      %v5282 = vadd.f32 0.0, %v5281
      %v5283 = vpop.f32.mrf.mxu0
      %5284 = vmatprep.mubr.bf16.mxu0 0
      %5285 = vmatmul.mubr.bf16.gmra.mxu0 %v4806
      %v5286 = vpop.f32.mrf.mxu0
      %v5287 = vadd.f32 0.0, %v5286
      %v5288 = vpop.f32.mrf.mxu0
      %v5289 = vpop.f32.mrf.mxu0
      %v5290 = vadd.f32 0.0, %v5289
      %v5291 = vpop.f32.mrf.mxu0
      %5292 = vmatprep.mubr.bf16.mxu0 0
      %5293 = vmatmul.mubr.bf16.gmra.mxu0 %v4809
      %v5294 = vpop.f32.mrf.mxu0
      %v5295 = vadd.f32 0.0, %v5294
      %v5296 = vpop.f32.mrf.mxu0
      %v5297 = vpop.f32.mrf.mxu0
      %v5298 = vadd.f32 0.0, %v5297
      %v5299 = vpop.f32.mrf.mxu0
      %5300 = vmatprep.mubr.bf16.mxu0 0
      %5301 = vmatmul.mubr.bf16.gmra.mxu0 %v4812
      %v5302 = vpop.f32.mrf.mxu0
      %v5303 = vadd.f32 0.0, %v5302
      %v5304 = vpop.f32.mrf.mxu0
      %v5305 = vpop.f32.mrf.mxu0
      %v5306 = vadd.f32 0.0, %v5305
      %v5307 = vpop.f32.mrf.mxu0
      %5308 = vmatprep.mubr.bf16.mxu0 0
      %5309 = vmatmul.mubr.bf16.gmra.mxu0 %v4815
      %v5310 = vpop.f32.mrf.mxu0
      %v5311 = vadd.f32 0.0, %v5310
      %v5312 = vpop.f32.mrf.mxu0
      %v5313 = vpop.f32.mrf.mxu0
      %v5314 = vadd.f32 0.0, %v5313
      %v5315 = vpop.f32.mrf.mxu0
      %5316 = vmatprep.mubr.bf16.mxu0 0
      %5317 = vmatmul.mubr.bf16.gmra.mxu0 %v4818
      %v5318 = vpop.f32.mrf.mxu0
      %v5319 = vadd.f32 0.0, %v5318
      %v5320 = vpop.f32.mrf.mxu0
      %v5321 = vpop.f32.mrf.mxu0
      %v5322 = vadd.f32 0.0, %v5321
      %v5323 = vpop.f32.mrf.mxu0
      %5324 = vmatprep.mubr.bf16.mxu0 0
      %5325 = vmatmul.mubr.bf16.gmra.mxu0 %v4821
      %v5326 = vpop.f32.mrf.mxu0
      %v5327 = vadd.f32 0.0, %v5326
      %v5328 = vpop.f32.mrf.mxu0
      %v5329 = vpop.f32.mrf.mxu0
      %v5330 = vadd.f32 0.0, %v5329
      %v5331 = vpop.f32.mrf.mxu0
      %5332 = vmatprep.mubr.bf16.mxu0 0
      %5333 = vmatmul.mubr.bf16.gmra.mxu0 %v4824
      %v5334 = vpop.f32.mrf.mxu0
      %v5335 = vadd.f32 0.0, %v5334
      %v5336 = vpop.f32.mrf.mxu0
      %v5337 = vpop.f32.mrf.mxu0
      %v5338 = vadd.f32 0.0, %v5337
      %v5339 = vpop.f32.mrf.mxu0
      %5340 = vmatprep.mubr.bf16.mxu0 0
      %5341 = vmatmul.mubr.bf16.gmra.mxu0 %v4827
      %v5342 = vpop.f32.mrf.mxu0
      %v5343 = vadd.f32 0.0, %v5342
      %v5344 = vpop.f32.mrf.mxu0
      %v5345 = vpop.f32.mrf.mxu0
      %v5346 = vadd.f32 0.0, %v5345
      %v5347 = vpop.f32.mrf.mxu0
      %5348 = vmatprep.mubr.bf16.mxu0 0
      %5349 = vmatmul.mubr.bf16.gmra.mxu0 %v4830
      %v5350 = vpop.f32.mrf.mxu0
      %v5351 = vadd.f32 0.0, %v5350
      %v5352 = vpop.f32.mrf.mxu0
      %v5353 = vpop.f32.mrf.mxu0
      %v5354 = vadd.f32 0.0, %v5353
      %v5355 = vpop.f32.mrf.mxu0
      %5356 = vmatprep.mubr.bf16.mxu0 0
      %5357 = vmatmul.mubr.bf16.gmra.mxu0 %v4833
      %v5358 = vpop.f32.mrf.mxu0
      %v5359 = vadd.f32 0.0, %v5358
      %v5360 = vpop.f32.mrf.mxu0
      %v5361 = vpop.f32.mrf.mxu0
      %v5362 = vadd.f32 0.0, %v5361
      %v5363 = vpop.f32.mrf.mxu0
      %5364 = vmatprep.mubr.bf16.mxu0 0
      %5365 = vmatmul.mubr.bf16.gmra.mxu0 %v4836
      %v5366 = vpop.f32.mrf.mxu0
      %v5367 = vadd.f32 0.0, %v5366
      %v5368 = vpop.f32.mrf.mxu0
      %v5369 = vpop.f32.mrf.mxu0
      %v5370 = vadd.f32 0.0, %v5369
      %v5371 = vpop.f32.mrf.mxu0
      %5372 = vmatprep.mubr.bf16.mxu0 0
      %5373 = vmatmul.mubr.bf16.gmra.mxu0 %v4839
      %v5374 = vpop.f32.mrf.mxu0
      %v5375 = vadd.f32 0.0, %v5374
      %v5376 = vpop.f32.mrf.mxu0
      %v5377 = vpop.f32.mrf.mxu0
      %v5378 = vadd.f32 0.0, %v5377
      %v5379 = vpop.f32.mrf.mxu0
      %5380 = vmatprep.mubr.bf16.mxu0 0
      %5381 = vmatmul.mubr.bf16.gmra.mxu0 %v4842
      %v5382 = vpop.f32.mrf.mxu0
      %v5383 = vadd.f32 0.0, %v5382
      %v5384 = vpop.f32.mrf.mxu0
      %v5385 = vpop.f32.mrf.mxu0
      %v5386 = vadd.f32 0.0, %v5385
      %v5387 = vpop.f32.mrf.mxu0
      %5388 = vmatprep.mubr.bf16.mxu0 0
      %5389 = vmatmul.mubr.bf16.gmra.mxu0 %v4845
      %v5390 = vpop.f32.mrf.mxu0
      %v5391 = vadd.f32 0.0, %v5390
      %v5392 = vpop.f32.mrf.mxu0
      %v5393 = vpop.f32.mrf.mxu0
      %v5394 = vadd.f32 0.0, %v5393
      %v5395 = vpop.f32.mrf.mxu0
      %5396 = vmatprep.mubr.bf16.mxu0 0
      %5397 = vmatmul.mubr.bf16.gmra.mxu0 %v4848
      %v5398 = vpop.f32.mrf.mxu0
      %v5399 = vadd.f32 0.0, %v5398
      %v5400 = vpop.f32.mrf.mxu0
      %v5401 = vpop.f32.mrf.mxu0
      %v5402 = vadd.f32 0.0, %v5401
      %v5403 = vpop.f32.mrf.mxu0
      %5404 = vmatprep.mubr.bf16.mxu0 0
      %5405 = vmatmul.mubr.bf16.gmra.mxu0 %v4851
      %v5406 = vpop.f32.mrf.mxu0
      %v5407 = vadd.f32 0.0, %v5406
      %v5408 = vpop.f32.mrf.mxu0
      %v5409 = vpop.f32.mrf.mxu0
      %v5410 = vadd.f32 0.0, %v5409
      %v5411 = vpop.f32.mrf.mxu0
      %5412 = vmatprep.mubr.bf16.mxu0 0
      %5413 = vmatmul.mubr.bf16.gmra.mxu0 %v4854
      %v5414 = vpop.f32.mrf.mxu0
      %v5415 = vadd.f32 0.0, %v5414
      %v5416 = vpop.f32.mrf.mxu0
      %v5417 = vpop.f32.mrf.mxu0
      %v5418 = vadd.f32 0.0, %v5417
      %v5419 = vpop.f32.mrf.mxu0
      %5420 = vmatprep.mubr.bf16.mxu0 0
      %5421 = vmatmul.mubr.bf16.gmra.mxu0 %v4857
      %v5422 = vpop.f32.mrf.mxu0
      %v5423 = vadd.f32 0.0, %v5422
      %v5424 = vpop.f32.mrf.mxu0
      %v5425 = vpop.f32.mrf.mxu0
      %v5426 = vadd.f32 0.0, %v5425
      %v5427 = vpop.f32.mrf.mxu0
      %5428 = vmatprep.mubr.bf16.mxu0 0
      %5429 = vmatmul.mubr.bf16.gmra.mxu0 %v4860
      %v5430 = vpop.f32.mrf.mxu0
      %v5431 = vadd.f32 0.0, %v5430
      %v5432 = vpop.f32.mrf.mxu0
      %v5433 = vpop.f32.mrf.mxu0
      %v5434 = vadd.f32 0.0, %v5433
      %v5435 = vpop.f32.mrf.mxu0
      %5436 = vmatprep.mubr.bf16.mxu0 0
      %5437 = vmatmul.mubr.bf16.gmra.mxu0 %v4863
      %v5438 = vpop.f32.mrf.mxu0
      %v5439 = vadd.f32 0.0, %v5438
      %v5440 = vpop.f32.mrf.mxu0
      %v5441 = vpop.f32.mrf.mxu0
      %v5442 = vadd.f32 0.0, %v5441
      %v5443 = vpop.f32.mrf.mxu0
      %5444 = vmatprep.mubr.bf16.mxu0 0
      %5445 = vmatmul.mubr.bf16.gmra.mxu0 %v4866
      %v5446 = vpop.f32.mrf.mxu0
      %v5447 = vadd.f32 0.0, %v5446
      %v5448 = vpop.f32.mrf.mxu0
      %v5449 = vpop.f32.mrf.mxu0
      %v5450 = vadd.f32 0.0, %v5449
      %v5451 = vpop.f32.mrf.mxu0
      %5452 = vmatprep.mubr.bf16.mxu0 0
      %5453 = vmatmul.mubr.bf16.gmra.mxu0 %v4869
      %v5454 = vpop.f32.mrf.mxu0
      %v5455 = vadd.f32 0.0, %v5454
      %v5456 = vpop.f32.mrf.mxu0
      %v5457 = vpop.f32.mrf.mxu0
      %v5458 = vadd.f32 0.0, %v5457
      %v5459 = vpop.f32.mrf.mxu0
      %5460 = vmatprep.mubr.bf16.mxu0 0
      %5461 = vmatmul.mubr.bf16.gmra.mxu0 %v4872
      %v5462 = vpop.f32.mrf.mxu0
      %v5463 = vadd.f32 0.0, %v5462
      %v5464 = vpop.f32.mrf.mxu0
      %v5465 = vpop.f32.mrf.mxu0
      %v5466 = vadd.f32 0.0, %v5465
      %v5467 = vpop.f32.mrf.mxu0
      %5468 = vmatprep.mubr.bf16.mxu0 0
      %5469 = vmatmul.mubr.bf16.gmra.mxu0 %v4875
      %v5470 = vpop.f32.mrf.mxu0
      %v5471 = vadd.f32 0.0, %v5470
      %v5472 = vpop.f32.mrf.mxu0
      %v5473 = vpop.f32.mrf.mxu0
      %v5474 = vadd.f32 0.0, %v5473
      %v5475 = vpop.f32.mrf.mxu0
      %5476 = vmatprep.mubr.bf16.mxu0 0
      %5477 = vmatmul.mubr.bf16.gmra.mxu0 %v4878
      %v5478 = vpop.f32.mrf.mxu0
      %v5479 = vadd.f32 0.0, %v5478
      %v5480 = vpop.f32.mrf.mxu0
      %v5481 = vpop.f32.mrf.mxu0
      %v5482 = vadd.f32 0.0, %v5481
      %v5483 = vpop.f32.mrf.mxu0
      %5484 = vmatprep.mubr.bf16.mxu0 0
      %5485 = vmatmul.mubr.bf16.gmra.mxu0 %v4881
      %v5486 = vpop.f32.mrf.mxu0
      %v5487 = vadd.f32 0.0, %v5486
      %v5488 = vpop.f32.mrf.mxu0
      %v5489 = vpop.f32.mrf.mxu0
      %v5490 = vadd.f32 0.0, %v5489
      %v5491 = vpop.f32.mrf.mxu0
      %5492 = vmatprep.mubr.bf16.mxu0 0
      %5493 = vmatmul.mubr.bf16.gmra.mxu0 %v4884
      %v5494 = vpop.f32.mrf.mxu0
      %v5495 = vadd.f32 0.0, %v5494
      %v5496 = vpop.f32.mrf.mxu0
      %v5497 = vpop.f32.mrf.mxu0
      %v5498 = vadd.f32 0.0, %v5497
      %v5499 = vpop.f32.mrf.mxu0
      %5500 = vmatprep.mubr.bf16.mxu0 0
      %5501 = vmatmul.mubr.bf16.gmra.mxu0 %v4887
      %v5502 = vpop.f32.mrf.mxu0
      %v5503 = vadd.f32 0.0, %v5502
      %v5504 = vpop.f32.mrf.mxu0
      %v5505 = vpop.f32.mrf.mxu0
      %v5506 = vpop.f32.mrf.mxu0
      %5507 = vdwg.mxu0
      %v5508 = vadd.f32 %v3870, %v4927
      %v5509 = vadd.f32 %v3871, %v4930
      %v5510 = vadd.f32 %v3872, %v4935
      %v5511 = vadd.f32 %v3873, %v4938
      %v5512 = vadd.f32 %v3874, %v4943
      %v5513 = vadd.f32 %v3875, %v4946
      %v5514 = vadd.f32 %v3876, %v4951
      %v5515 = vadd.f32 %v3877, %v4954
      %v5516 = vadd.f32 %v3878, %v4959
      %v5517 = vadd.f32 %v3879, %v4962
      %v5518 = vadd.f32 %v3880, %v4967
      %v5519 = vadd.f32 %v3881, %v4970
      %v5520 = vadd.f32 %v3882, %v4975
      %v5521 = vadd.f32 %v3883, %v4978
      %v5522 = vadd.f32 %v3884, %v4983
      %v5523 = vadd.f32 %v3885, %v4986
      %v5524 = vadd.f32 %v3886, %v4991
      %v5525 = vadd.f32 %v3887, %v4994
      %v5526 = vadd.f32 %v3888, %v4999
      %v5527 = vadd.f32 %v3889, %v5002
      %v5528 = vadd.f32 %v3890, %v5007
      %v5529 = vadd.f32 %v3891, %v5010
      %v5530 = vadd.f32 %v3892, %v5015
      %v5531 = vadd.f32 %v3893, %v5018
      %v5532 = vadd.f32 %v3894, %v5023
      %v5533 = vadd.f32 %v3895, %v5026
      %v5534 = vadd.f32 %v3896, %v5031
      %v5535 = vadd.f32 %v3897, %v5034
      %v5536 = vadd.f32 %v3898, %v5039
      %v5537 = vadd.f32 %v3899, %v5042
      %v5538 = vadd.f32 %v3900, %v5047
      %v5539 = vadd.f32 %v3901, %v5050
      %v5540 = vadd.f32 %v3902, %v5055
      %v5541 = vadd.f32 %v3903, %v5058
      %v5542 = vadd.f32 %v3904, %v5063
      %v5543 = vadd.f32 %v3905, %v5066
      %v5544 = vadd.f32 %v3906, %v5071
      %v5545 = vadd.f32 %v3907, %v5074
      %v5546 = vadd.f32 %v3908, %v5079
      %v5547 = vadd.f32 %v3909, %v5082
      %v5548 = vadd.f32 %v3910, %v5087
      %v5549 = vadd.f32 %v3911, %v5090
      %v5550 = vadd.f32 %v3912, %v5095
      %v5551 = vadd.f32 %v3913, %v5098
      %v5552 = vadd.f32 %v3914, %v5103
      %v5553 = vadd.f32 %v3915, %v5106
      %v5554 = vadd.f32 %v3916, %v5111
      %v5555 = vadd.f32 %v3917, %v5114
      %v5556 = vadd.f32 %v3918, %v5119
      %v5557 = vadd.f32 %v3919, %v5122
      %v5558 = vadd.f32 %v3920, %v5127
      %v5559 = vadd.f32 %v3921, %v5130
      %v5560 = vadd.f32 %v3922, %v5135
      %v5561 = vadd.f32 %v3923, %v5138
      %v5562 = vadd.f32 %v3924, %v5143
      %v5563 = vadd.f32 %v3925, %v5146
      %v5564 = vadd.f32 %v3926, %v5151
      %v5565 = vadd.f32 %v3927, %v5154
      %v5566 = vadd.f32 %v3928, %v5159
      %v5567 = vadd.f32 %v3929, %v5162
      %v5568 = vadd.f32 %v3930, %v5167
      %v5569 = vadd.f32 %v3931, %v5170
      %v5570 = vadd.f32 %v3932, %v5175
      %v5571 = vadd.f32 %v3933, %v5178
      %v5572 = vadd.f32 %v3934, %v5183
      %v5573 = vadd.f32 %v3935, %v5186
      %v5574 = vadd.f32 %v3936, %v5191
      %v5575 = vadd.f32 %v3937, %v5194
      %v5576 = vadd.f32 %v3938, %v5199
      %v5577 = vadd.f32 %v3939, %v5202
      %v5578 = vadd.f32 %v3940, %v5207
      %v5579 = vadd.f32 %v3941, %v5210
      %v5580 = vadd.f32 %v3942, %v5215
      %v5581 = vadd.f32 %v3943, %v5218
      %v5582 = vadd.f32 %v3944, %v5223
      %v5583 = vadd.f32 %v3945, %v5226
      %v5584 = vadd.f32 %v3946, %v5231
      %v5585 = vadd.f32 %v3947, %v5234
      %v5586 = vadd.f32 %v3948, %v5239
      %v5587 = vadd.f32 %v3949, %v5242
      %v5588 = vadd.f32 %v3950, %v5247
      %v5589 = vadd.f32 %v3951, %v5250
      %v5590 = vadd.f32 %v3952, %v5255
      %v5591 = vadd.f32 %v3953, %v5258
      %v5592 = vadd.f32 %v3954, %v5263
      %v5593 = vadd.f32 %v3955, %v5266
      %v5594 = vadd.f32 %v3956, %v5271
      %v5595 = vadd.f32 %v3957, %v5274
      %v5596 = vadd.f32 %v3958, %v5279
      %v5597 = vadd.f32 %v3959, %v5282
      %v5598 = vadd.f32 %v3960, %v5287
      %v5599 = vadd.f32 %v3961, %v5290
      %v5600 = vadd.f32 %v3962, %v5295
      %v5601 = vadd.f32 %v3963, %v5298
      %v5602 = vadd.f32 %v3964, %v5303
      %v5603 = vadd.f32 %v3965, %v5306
      %v5604 = vadd.f32 %v3966, %v5311
      %v5605 = vadd.f32 %v3967, %v5314
      %v5606 = vadd.f32 %v3968, %v5319
      %v5607 = vadd.f32 %v3969, %v5322
      %v5608 = vadd.f32 %v3970, %v5327
      %v5609 = vadd.f32 %v3971, %v5330
      %v5610 = vadd.f32 %v3972, %v5335
      %v5611 = vadd.f32 %v3973, %v5338
      %v5612 = vadd.f32 %v3974, %v5343
      %v5613 = vadd.f32 %v3975, %v5346
      %v5614 = vadd.f32 %v3976, %v5351
      %v5615 = vadd.f32 %v3977, %v5354
      %v5616 = vadd.f32 %v3978, %v5359
      %v5617 = vadd.f32 %v3979, %v5362
      %v5618 = vadd.f32 %v3980, %v5367
      %v5619 = vadd.f32 %v3981, %v5370
      %v5620 = vadd.f32 %v3982, %v5375
      %v5621 = vadd.f32 %v3983, %v5378
      %v5622 = vadd.f32 %v3984, %v5383
      %v5623 = vadd.f32 %v3985, %v5386
      %v5624 = vadd.f32 %v3986, %v5391
      %v5625 = vadd.f32 %v3987, %v5394
      %v5626 = vadd.f32 %v3988, %v5399
      %v5627 = vadd.f32 %v3989, %v5402
      %v5628 = vadd.f32 %v3990, %v5407
      %v5629 = vadd.f32 %v3991, %v5410
      %v5630 = vadd.f32 %v3992, %v5415
      %v5631 = vadd.f32 %v3993, %v5418
      %v5632 = vadd.f32 %v3994, %v5423
      %v5633 = vadd.f32 %v3995, %v5426
      %v5634 = vadd.f32 %v3996, %v5431
      %v5635 = vadd.f32 %v3997, %v5434
      %v5636 = vadd.f32 %v3998, %v5439
      %v5637 = vadd.f32 %v3999, %v5442
      %v5638 = vadd.f32 %v4000, %v5447
      %v5639 = vadd.f32 %v4001, %v5450
      %v5640 = vadd.f32 %v4002, %v5455
      %v5641 = vadd.f32 %v4003, %v5458
      %v5642 = vadd.f32 %v4004, %v5463
      %v5643 = vadd.f32 %v4005, %v5466
      %v5644 = vadd.f32 %v4006, %v5471
      %v5645 = vadd.f32 %v4007, %v5474
      %v5646 = vadd.f32 %v4008, %v5479
      %v5647 = vadd.f32 %v4009, %v5482
      %v5648 = vadd.f32 %v4010, %v5487
      %v5649 = vadd.f32 %v4011, %v5490
      %v5650 = vadd.f32 %v4012, %v5495
      %v5651 = vadd.f32 %v4013, %v5498
      %v5652 = vadd.f32 %v4014, %v5503
      %v5653 = vld [vmem:[%s165 + $0x250] sm:$0xf]
      %s5654 = scalar_lea.vmem %s1, 8
      %v5655 = vld [vmem:[%s5654] sm:$0x3]
      %v5657 = vunpack.c.l.b16 %v5653
      %v5658 = vpack.c.b16 %v5657, %v5657
      %vm5659 = vsmask.f32 6400
      %v5661 = vshrl.u32 %v4452, 16
      %v5663 = vrot.slane %v5661, 1
      %v5664 = vshll.u32 %v4452, 16
      %v5666 = vrot.slane %v5664, 2
      %v5667 = vor.u32 %v5663, %v5666
      %v5669 = vshrl.u32 %v4453, 16
      %v5671 = vrot.slane %v5669, 1
      %v5672 = vshll.u32 %v4453, 16
      %v5674 = vrot.slane %v5672, 2
      %v5675 = vor.u32 %v5671, %v5674
      %v5676 = vsel %vm5659, %v5667, %v5675
      %v5678 = vshrl.u32 %v4454, 16
      %v5680 = vrot.slane %v5678, 1
      %v5681 = vshll.u32 %v4454, 16
      %v5683 = vrot.slane %v5681, 2
      %v5684 = vor.u32 %v5680, %v5683
      %v5685 = vsel %vm5659, %v5675, %v5684
      %v5687 = vshrl.u32 %v4455, 16
      %v5689 = vrot.slane %v5687, 1
      %v5690 = vshll.u32 %v4455, 16
      %v5692 = vrot.slane %v5690, 2
      %v5693 = vor.u32 %v5689, %v5692
      %v5694 = vsel %vm5659, %v5684, %v5693
      %v5696 = vshrl.u32 %v4456, 16
      %v5698 = vrot.slane %v5696, 1
      %v5699 = vshll.u32 %v4456, 16
      %v5701 = vrot.slane %v5699, 2
      %v5702 = vor.u32 %v5698, %v5701
      %v5703 = vsel %vm5659, %v5693, %v5702
      %v5705 = vshrl.u32 %v4457, 16
      %v5707 = vrot.slane %v5705, 1
      %v5708 = vshll.u32 %v4457, 16
      %v5710 = vrot.slane %v5708, 2
      %v5711 = vor.u32 %v5707, %v5710
      %v5712 = vsel %vm5659, %v5702, %v5711
      %v5714 = vshrl.u32 %v4458, 16
      %v5716 = vrot.slane %v5714, 1
      %v5717 = vshll.u32 %v4458, 16
      %v5719 = vrot.slane %v5717, 2
      %v5720 = vor.u32 %v5716, %v5719
      %v5721 = vsel %vm5659, %v5711, %v5720
      %v5723 = vshrl.u32 %v4459, 16
      %v5725 = vrot.slane %v5723, 1
      %v5726 = vshll.u32 %v4459, 16
      %v5728 = vrot.slane %v5726, 2
      %v5729 = vor.u32 %v5725, %v5728
      %v5730 = vsel %vm5659, %v5720, %v5729
      %v5732 = vshrl.u32 %v4460, 16
      %v5734 = vrot.slane %v5732, 1
      %v5735 = vshll.u32 %v4460, 16
      %v5737 = vrot.slane %v5735, 2
      %v5738 = vor.u32 %v5734, %v5737
      %v5739 = vsel %vm5659, %v5729, %v5738
      %v5741 = vshrl.u32 %v4461, 16
      %v5743 = vrot.slane %v5741, 1
      %v5744 = vshll.u32 %v4461, 16
      %v5746 = vrot.slane %v5744, 2
      %v5747 = vor.u32 %v5743, %v5746
      %v5748 = vsel %vm5659, %v5738, %v5747
      %v5750 = vshrl.u32 %v4462, 16
      %v5752 = vrot.slane %v5750, 1
      %v5753 = vshll.u32 %v4462, 16
      %v5755 = vrot.slane %v5753, 2
      %v5756 = vor.u32 %v5752, %v5755
      %v5757 = vsel %vm5659, %v5747, %v5756
      %v5759 = vshrl.u32 %v4463, 16
      %v5761 = vrot.slane %v5759, 1
      %v5762 = vshll.u32 %v4463, 16
      %v5764 = vrot.slane %v5762, 2
      %v5765 = vor.u32 %v5761, %v5764
      %v5766 = vsel %vm5659, %v5756, %v5765
      %v5768 = vshrl.u32 %v4464, 16
      %v5770 = vrot.slane %v5768, 1
      %v5771 = vshll.u32 %v4464, 16
      %v5773 = vrot.slane %v5771, 2
      %v5774 = vor.u32 %v5770, %v5773
      %v5775 = vsel %vm5659, %v5765, %v5774
      %v5777 = vshrl.u32 %v4465, 16
      %v5779 = vrot.slane %v5777, 1
      %v5780 = vshll.u32 %v4465, 16
      %v5782 = vrot.slane %v5780, 2
      %v5783 = vor.u32 %v5779, %v5782
      %v5784 = vsel %vm5659, %v5774, %v5783
      %v5786 = vshrl.u32 %v4466, 16
      %v5788 = vrot.slane %v5786, 1
      %v5789 = vshll.u32 %v4466, 16
      %v5791 = vrot.slane %v5789, 2
      %v5792 = vor.u32 %v5788, %v5791
      %v5793 = vsel %vm5659, %v5783, %v5792
      %v5795 = vshrl.u32 %v4467, 16
      %v5797 = vrot.slane %v5795, 1
      %v5798 = vshll.u32 %v4467, 16
      %v5800 = vrot.slane %v5798, 2
      %v5801 = vor.u32 %v5797, %v5800
      %v5802 = vsel %vm5659, %v5792, %v5801
      %v5804 = vshrl.u32 %v4468, 16
      %v5806 = vrot.slane %v5804, 1
      %v5807 = vshll.u32 %v4468, 16
      %v5809 = vrot.slane %v5807, 2
      %v5810 = vor.u32 %v5806, %v5809
      %v5811 = vsel %vm5659, %v5801, %v5810
      %v5813 = vshrl.u32 %v4469, 16
      %v5815 = vrot.slane %v5813, 1
      %v5816 = vshll.u32 %v4469, 16
      %v5818 = vrot.slane %v5816, 2
      %v5819 = vor.u32 %v5815, %v5818
      %v5820 = vsel %vm5659, %v5810, %v5819
      %v5822 = vshrl.u32 %v4470, 16
      %v5824 = vrot.slane %v5822, 1
      %v5825 = vshll.u32 %v4470, 16
      %v5827 = vrot.slane %v5825, 2
      %v5828 = vor.u32 %v5824, %v5827
      %v5829 = vsel %vm5659, %v5819, %v5828
      %v5831 = vshrl.u32 %v4471, 16
      %v5833 = vrot.slane %v5831, 1
      %v5834 = vshll.u32 %v4471, 16
      %v5836 = vrot.slane %v5834, 2
      %v5837 = vor.u32 %v5833, %v5836
      %v5838 = vsel %vm5659, %v5828, %v5837
      %v5840 = vshrl.u32 %v4472, 16
      %v5842 = vrot.slane %v5840, 1
      %v5843 = vshll.u32 %v4472, 16
      %v5845 = vrot.slane %v5843, 2
      %v5846 = vor.u32 %v5842, %v5845
      %v5847 = vsel %vm5659, %v5837, %v5846
      %v5849 = vshrl.u32 %v4473, 16
      %v5851 = vrot.slane %v5849, 1
      %v5852 = vshll.u32 %v4473, 16
      %v5854 = vrot.slane %v5852, 2
      %v5855 = vor.u32 %v5851, %v5854
      %v5856 = vsel %vm5659, %v5846, %v5855
      %v5858 = vshrl.u32 %v4474, 16
      %v5860 = vrot.slane %v5858, 1
      %v5861 = vshll.u32 %v4474, 16
      %v5863 = vrot.slane %v5861, 2
      %v5864 = vor.u32 %v5860, %v5863
      %v5865 = vsel %vm5659, %v5855, %v5864
      %v5867 = vshrl.u32 %v4475, 16
      %v5869 = vrot.slane %v5867, 1
      %v5870 = vshll.u32 %v4475, 16
      %v5872 = vrot.slane %v5870, 2
      %v5873 = vor.u32 %v5869, %v5872
      %v5874 = vsel %vm5659, %v5864, %v5873
      %v5876 = vshrl.u32 %v4476, 16
      %v5878 = vrot.slane %v5876, 1
      %v5879 = vshll.u32 %v4476, 16
      %v5881 = vrot.slane %v5879, 2
      %v5882 = vor.u32 %v5878, %v5881
      %v5883 = vsel %vm5659, %v5873, %v5882
      %v5885 = vshrl.u32 %v4477, 16
      %v5887 = vrot.slane %v5885, 1
      %v5888 = vshll.u32 %v4477, 16
      %v5890 = vrot.slane %v5888, 2
      %v5891 = vor.u32 %v5887, %v5890
      %v5892 = vsel %vm5659, %v5882, %v5891
      %v5894 = vshrl.u32 %v4478, 16
      %v5896 = vrot.slane %v5894, 1
      %v5897 = vshll.u32 %v4478, 16
      %v5899 = vrot.slane %v5897, 2
      %v5900 = vor.u32 %v5896, %v5899
      %v5901 = vsel %vm5659, %v5891, %v5900
      %v5903 = vshrl.u32 %v4479, 16
      %v5905 = vrot.slane %v5903, 1
      %v5906 = vshll.u32 %v4479, 16
      %v5908 = vrot.slane %v5906, 2
      %v5909 = vor.u32 %v5905, %v5908
      %v5910 = vsel %vm5659, %v5900, %v5909
      %v5912 = vshrl.u32 %v4480, 16
      %v5914 = vrot.slane %v5912, 1
      %v5915 = vshll.u32 %v4480, 16
      %v5917 = vrot.slane %v5915, 2
      %v5918 = vor.u32 %v5914, %v5917
      %v5919 = vsel %vm5659, %v5909, %v5918
      %v5921 = vshrl.u32 %v4481, 16
      %v5923 = vrot.slane %v5921, 1
      %v5924 = vshll.u32 %v4481, 16
      %v5926 = vrot.slane %v5924, 2
      %v5927 = vor.u32 %v5923, %v5926
      %v5928 = vsel %vm5659, %v5918, %v5927
      %v5930 = vshrl.u32 %v4482, 16
      %v5932 = vrot.slane %v5930, 1
      %v5933 = vshll.u32 %v4482, 16
      %v5935 = vrot.slane %v5933, 2
      %v5936 = vor.u32 %v5932, %v5935
      %v5937 = vsel %vm5659, %v5927, %v5936
      %v5939 = vshrl.u32 %v4483, 16
      %v5941 = vrot.slane %v5939, 1
      %v5942 = vshll.u32 %v4483, 16
      %v5944 = vrot.slane %v5942, 2
      %v5945 = vor.u32 %v5941, %v5944
      %v5946 = vsel %vm5659, %v5936, %v5945
      %v5948 = vshrl.u32 %v4484, 16
      %v5950 = vrot.slane %v5948, 1
      %v5951 = vshll.u32 %v4484, 16
      %v5953 = vrot.slane %v5951, 2
      %v5954 = vor.u32 %v5950, %v5953
      %v5955 = vsel %vm5659, %v5945, %v5954
      %v5957 = vshrl.u32 %v4485, 16
      %v5959 = vrot.slane %v5957, 1
      %v5960 = vshll.u32 %v4485, 16
      %v5962 = vrot.slane %v5960, 2
      %v5963 = vor.u32 %v5959, %v5962
      %v5964 = vsel %vm5659, %v5954, %v5963
      %v5966 = vshrl.u32 %v4486, 16
      %v5968 = vrot.slane %v5966, 1
      %v5969 = vshll.u32 %v4486, 16
      %v5971 = vrot.slane %v5969, 2
      %v5972 = vor.u32 %v5968, %v5971
      %v5973 = vsel %vm5659, %v5963, %v5972
      %v5975 = vshrl.u32 %v4487, 16
      %v5977 = vrot.slane %v5975, 1
      %v5978 = vshll.u32 %v4487, 16
      %v5980 = vrot.slane %v5978, 2
      %v5981 = vor.u32 %v5977, %v5980
      %v5982 = vsel %vm5659, %v5972, %v5981
      %v5984 = vshrl.u32 %v4488, 16
      %v5986 = vrot.slane %v5984, 1
      %v5987 = vshll.u32 %v4488, 16
      %v5989 = vrot.slane %v5987, 2
      %v5990 = vor.u32 %v5986, %v5989
      %v5991 = vsel %vm5659, %v5981, %v5990
      %v5993 = vshrl.u32 %v4489, 16
      %v5995 = vrot.slane %v5993, 1
      %v5996 = vshll.u32 %v4489, 16
      %v5998 = vrot.slane %v5996, 2
      %v5999 = vor.u32 %v5995, %v5998
      %v6000 = vsel %vm5659, %v5990, %v5999
      %v6002 = vshrl.u32 %v4490, 16
      %v6004 = vrot.slane %v6002, 1
      %v6005 = vshll.u32 %v4490, 16
      %v6007 = vrot.slane %v6005, 2
      %v6008 = vor.u32 %v6004, %v6007
      %v6009 = vsel %vm5659, %v5999, %v6008
      %v6011 = vshrl.u32 %v4491, 16
      %v6013 = vrot.slane %v6011, 1
      %v6014 = vshll.u32 %v4491, 16
      %v6016 = vrot.slane %v6014, 2
      %v6017 = vor.u32 %v6013, %v6016
      %v6018 = vsel %vm5659, %v6008, %v6017
      %v6020 = vshrl.u32 %v4492, 16
      %v6022 = vrot.slane %v6020, 1
      %v6023 = vshll.u32 %v4492, 16
      %v6025 = vrot.slane %v6023, 2
      %v6026 = vor.u32 %v6022, %v6025
      %v6027 = vsel %vm5659, %v6017, %v6026
      %v6029 = vshrl.u32 %v4493, 16
      %v6031 = vrot.slane %v6029, 1
      %v6032 = vshll.u32 %v4493, 16
      %v6034 = vrot.slane %v6032, 2
      %v6035 = vor.u32 %v6031, %v6034
      %v6036 = vsel %vm5659, %v6026, %v6035
      %v6038 = vshrl.u32 %v4494, 16
      %v6040 = vrot.slane %v6038, 1
      %v6041 = vshll.u32 %v4494, 16
      %v6043 = vrot.slane %v6041, 2
      %v6044 = vor.u32 %v6040, %v6043
      %v6045 = vsel %vm5659, %v6035, %v6044
      %v6047 = vshrl.u32 %v4495, 16
      %v6049 = vrot.slane %v6047, 1
      %v6050 = vshll.u32 %v4495, 16
      %v6052 = vrot.slane %v6050, 2
      %v6053 = vor.u32 %v6049, %v6052
      %v6054 = vsel %vm5659, %v6044, %v6053
      %v6056 = vshrl.u32 %v4496, 16
      %v6058 = vrot.slane %v6056, 1
      %v6059 = vshll.u32 %v4496, 16
      %v6061 = vrot.slane %v6059, 2
      %v6062 = vor.u32 %v6058, %v6061
      %v6063 = vsel %vm5659, %v6053, %v6062
      %v6065 = vshrl.u32 %v4497, 16
      %v6067 = vrot.slane %v6065, 1
      %v6068 = vshll.u32 %v4497, 16
      %v6070 = vrot.slane %v6068, 2
      %v6071 = vor.u32 %v6067, %v6070
      %v6072 = vsel %vm5659, %v6062, %v6071
      %v6074 = vshrl.u32 %v4498, 16
      %v6076 = vrot.slane %v6074, 1
      %v6077 = vshll.u32 %v4498, 16
      %v6079 = vrot.slane %v6077, 2
      %v6080 = vor.u32 %v6076, %v6079
      %v6081 = vsel %vm5659, %v6071, %v6080
      %v6083 = vshrl.u32 %v4499, 16
      %v6085 = vrot.slane %v6083, 1
      %v6086 = vshll.u32 %v4499, 16
      %v6088 = vrot.slane %v6086, 2
      %v6089 = vor.u32 %v6085, %v6088
      %v6090 = vsel %vm5659, %v6080, %v6089
      %v6092 = vshrl.u32 %v4500, 16
      %v6094 = vrot.slane %v6092, 1
      %v6095 = vshll.u32 %v4500, 16
      %v6097 = vrot.slane %v6095, 2
      %v6098 = vor.u32 %v6094, %v6097
      %v6099 = vsel %vm5659, %v6089, %v6098
      %v6101 = vshrl.u32 %v4501, 16
      %v6103 = vrot.slane %v6101, 1
      %v6104 = vshll.u32 %v4501, 16
      %v6106 = vrot.slane %v6104, 2
      %v6107 = vor.u32 %v6103, %v6106
      %v6108 = vsel %vm5659, %v6098, %v6107
      %v6110 = vshrl.u32 %v4502, 16
      %v6112 = vrot.slane %v6110, 1
      %v6113 = vshll.u32 %v4502, 16
      %v6115 = vrot.slane %v6113, 2
      %v6116 = vor.u32 %v6112, %v6115
      %v6117 = vsel %vm5659, %v6107, %v6116
      %v6119 = vshrl.u32 %v4503, 16
      %v6121 = vrot.slane %v6119, 1
      %v6122 = vshll.u32 %v4503, 16
      %v6124 = vrot.slane %v6122, 2
      %v6125 = vor.u32 %v6121, %v6124
      %v6126 = vsel %vm5659, %v6116, %v6125
      %v6128 = vshrl.u32 %v4504, 16
      %v6130 = vrot.slane %v6128, 1
      %v6131 = vshll.u32 %v4504, 16
      %v6133 = vrot.slane %v6131, 2
      %v6134 = vor.u32 %v6130, %v6133
      %v6135 = vsel %vm5659, %v6125, %v6134
      %v6137 = vshrl.u32 %v4505, 16
      %v6139 = vrot.slane %v6137, 1
      %v6140 = vshll.u32 %v4505, 16
      %v6142 = vrot.slane %v6140, 2
      %v6143 = vor.u32 %v6139, %v6142
      %v6144 = vsel %vm5659, %v6134, %v6143
      %v6146 = vshrl.u32 %v4506, 16
      %v6148 = vrot.slane %v6146, 1
      %v6149 = vshll.u32 %v4506, 16
      %v6151 = vrot.slane %v6149, 2
      %v6152 = vor.u32 %v6148, %v6151
      %v6153 = vsel %vm5659, %v6143, %v6152
      %v6155 = vshrl.u32 %v4507, 16
      %v6157 = vrot.slane %v6155, 1
      %v6158 = vshll.u32 %v4507, 16
      %v6160 = vrot.slane %v6158, 2
      %v6161 = vor.u32 %v6157, %v6160
      %v6162 = vsel %vm5659, %v6152, %v6161
      %v6164 = vshrl.u32 %v4508, 16
      %v6166 = vrot.slane %v6164, 1
      %v6167 = vshll.u32 %v4508, 16
      %v6169 = vrot.slane %v6167, 2
      %v6170 = vor.u32 %v6166, %v6169
      %v6171 = vsel %vm5659, %v6161, %v6170
      %v6173 = vshrl.u32 %v4509, 16
      %v6175 = vrot.slane %v6173, 1
      %v6176 = vshll.u32 %v4509, 16
      %v6178 = vrot.slane %v6176, 2
      %v6179 = vor.u32 %v6175, %v6178
      %v6180 = vsel %vm5659, %v6170, %v6179
      %v6182 = vshrl.u32 %v4510, 16
      %v6184 = vrot.slane %v6182, 1
      %v6185 = vshll.u32 %v4510, 16
      %v6187 = vrot.slane %v6185, 2
      %v6188 = vor.u32 %v6184, %v6187
      %v6189 = vsel %vm5659, %v6179, %v6188
      %v6191 = vshrl.u32 %v4511, 16
      %v6193 = vrot.slane %v6191, 1
      %v6194 = vshll.u32 %v4511, 16
      %v6196 = vrot.slane %v6194, 2
      %v6197 = vor.u32 %v6193, %v6196
      %v6198 = vsel %vm5659, %v6188, %v6197
      %v6200 = vshrl.u32 %v4512, 16
      %v6202 = vrot.slane %v6200, 1
      %v6203 = vshll.u32 %v4512, 16
      %v6205 = vrot.slane %v6203, 2
      %v6206 = vor.u32 %v6202, %v6205
      %v6207 = vsel %vm5659, %v6197, %v6206
      %v6209 = vshrl.u32 %v4513, 16
      %v6211 = vrot.slane %v6209, 1
      %v6212 = vshll.u32 %v4513, 16
      %v6214 = vrot.slane %v6212, 2
      %v6215 = vor.u32 %v6211, %v6214
      %v6216 = vsel %vm5659, %v6206, %v6215
      %v6218 = vshrl.u32 %v4514, 16
      %v6220 = vrot.slane %v6218, 1
      %v6221 = vshll.u32 %v4514, 16
      %v6223 = vrot.slane %v6221, 2
      %v6224 = vor.u32 %v6220, %v6223
      %v6225 = vsel %vm5659, %v6215, %v6224
      %v6227 = vshrl.u32 %v4515, 16
      %v6229 = vrot.slane %v6227, 1
      %v6230 = vshll.u32 %v4515, 16
      %v6232 = vrot.slane %v6230, 2
      %v6233 = vor.u32 %v6229, %v6232
      %v6234 = vsel %vm5659, %v6224, %v6233
      %v6236 = vshrl.u32 %v4516, 16
      %v6238 = vrot.slane %v6236, 1
      %v6239 = vshll.u32 %v4516, 16
      %v6241 = vrot.slane %v6239, 2
      %v6242 = vor.u32 %v6238, %v6241
      %v6243 = vsel %vm5659, %v6233, %v6242
      %v6245 = vshrl.u32 %v4517, 16
      %v6247 = vrot.slane %v6245, 1
      %v6248 = vshll.u32 %v4517, 16
      %v6250 = vrot.slane %v6248, 2
      %v6251 = vor.u32 %v6247, %v6250
      %v6252 = vsel %vm5659, %v6242, %v6251
      %v6254 = vshrl.u32 %v4518, 16
      %v6256 = vrot.slane %v6254, 1
      %v6257 = vshll.u32 %v4518, 16
      %v6259 = vrot.slane %v6257, 2
      %v6260 = vor.u32 %v6256, %v6259
      %v6261 = vsel %vm5659, %v6251, %v6260
      %v6263 = vshrl.u32 %v4519, 16
      %v6265 = vrot.slane %v6263, 1
      %v6266 = vshll.u32 %v4519, 16
      %v6268 = vrot.slane %v6266, 2
      %v6269 = vor.u32 %v6265, %v6268
      %v6270 = vsel %vm5659, %v6260, %v6269
      %v6272 = vshrl.u32 %v4520, 16
      %v6274 = vrot.slane %v6272, 1
      %v6275 = vshll.u32 %v4520, 16
      %v6277 = vrot.slane %v6275, 2
      %v6278 = vor.u32 %v6274, %v6277
      %v6279 = vsel %vm5659, %v6269, %v6278
      %v6281 = vshrl.u32 %v4521, 16
      %v6283 = vrot.slane %v6281, 1
      %v6284 = vshll.u32 %v4521, 16
      %v6286 = vrot.slane %v6284, 2
      %v6287 = vor.u32 %v6283, %v6286
      %v6288 = vsel %vm5659, %v6278, %v6287
      %v6290 = vshrl.u32 %v4522, 16
      %v6292 = vrot.slane %v6290, 1
      %v6293 = vshll.u32 %v4522, 16
      %v6295 = vrot.slane %v6293, 2
      %v6296 = vor.u32 %v6292, %v6295
      %v6297 = vsel %vm5659, %v6287, %v6296
      %v6299 = vshrl.u32 %v4523, 16
      %v6301 = vrot.slane %v6299, 1
      %v6302 = vshll.u32 %v4523, 16
      %v6304 = vrot.slane %v6302, 2
      %v6305 = vor.u32 %v6301, %v6304
      %v6306 = vsel %vm5659, %v6296, %v6305
      %v6308 = vshrl.u32 %v5658, 16
      %v6310 = vrot.slane %v6308, 1
      %v6311 = vshll.u32 %v5658, 16
      %v6313 = vrot.slane %v6311, 2
      %v6314 = vor.u32 %v6310, %v6313
      %v6315 = vsel %vm5659, %v6305, %v6314
      %v6317 = vsel %vm1268, %v5676, 0
      %v6320 = vsel %vm1268, %v5685, 0
      %v6323 = vsel %vm1268, %v5694, 0
      %v6326 = vsel %vm1268, %v5703, 0
      %v6329 = vsel %vm1268, %v5712, 0
      %v6332 = vsel %vm1268, %v5721, 0
      %v6335 = vsel %vm1268, %v5730, 0
      %v6338 = vsel %vm1268, %v5739, 0
      %v6341 = vsel %vm1268, %v5748, 0
      %v6344 = vsel %vm1268, %v5757, 0
      %v6347 = vsel %vm1268, %v5766, 0
      %v6350 = vsel %vm1268, %v5775, 0
      %v6353 = vsel %vm1268, %v5784, 0
      %v6356 = vsel %vm1268, %v5793, 0
      %v6359 = vsel %vm1268, %v5802, 0
      %v6362 = vsel %vm1268, %v5811, 0
      %v6365 = vsel %vm1268, %v5820, 0
      %v6368 = vsel %vm1268, %v5829, 0
      %v6371 = vsel %vm1268, %v5838, 0
      %v6374 = vsel %vm1268, %v5847, 0
      %v6377 = vsel %vm1268, %v5856, 0
      %v6380 = vsel %vm1268, %v5865, 0
      %v6383 = vsel %vm1268, %v5874, 0
      %v6386 = vsel %vm1268, %v5883, 0
      %v6389 = vsel %vm1268, %v5892, 0
      %v6392 = vsel %vm1268, %v5901, 0
      %v6395 = vsel %vm1268, %v5910, 0
      %v6398 = vsel %vm1268, %v5919, 0
      %v6401 = vsel %vm1268, %v5928, 0
      %v6404 = vsel %vm1268, %v5937, 0
      %v6407 = vsel %vm1268, %v5946, 0
      %v6410 = vsel %vm1268, %v5955, 0
      %v6413 = vsel %vm1268, %v5964, 0
      %v6416 = vsel %vm1268, %v5973, 0
      %v6419 = vsel %vm1268, %v5982, 0
      %v6422 = vsel %vm1268, %v5991, 0
      %v6425 = vsel %vm1268, %v6000, 0
      %v6428 = vsel %vm1268, %v6009, 0
      %v6431 = vsel %vm1268, %v6018, 0
      %v6434 = vsel %vm1268, %v6027, 0
      %v6437 = vsel %vm1268, %v6036, 0
      %v6440 = vsel %vm1268, %v6045, 0
      %v6443 = vsel %vm1268, %v6054, 0
      %v6446 = vsel %vm1268, %v6063, 0
      %v6449 = vsel %vm1268, %v6072, 0
      %v6452 = vsel %vm1268, %v6081, 0
      %v6455 = vsel %vm1268, %v6090, 0
      %v6458 = vsel %vm1268, %v6099, 0
      %v6461 = vsel %vm1268, %v6108, 0
      %v6464 = vsel %vm1268, %v6117, 0
      %v6467 = vsel %vm1268, %v6126, 0
      %v6470 = vsel %vm1268, %v6135, 0
      %v6473 = vsel %vm1268, %v6144, 0
      %v6476 = vsel %vm1268, %v6153, 0
      %v6479 = vsel %vm1268, %v6162, 0
      %v6482 = vsel %vm1268, %v6171, 0
      %v6485 = vsel %vm1268, %v6180, 0
      %v6488 = vsel %vm1268, %v6189, 0
      %v6491 = vsel %vm1268, %v6198, 0
      %v6494 = vsel %vm1268, %v6207, 0
      %v6497 = vsel %vm1268, %v6216, 0
      %v6500 = vsel %vm1268, %v6225, 0
      %v6503 = vsel %vm1268, %v6234, 0
      %v6506 = vsel %vm1268, %v6243, 0
      %v6509 = vsel %vm1268, %v6252, 0
      %v6512 = vsel %vm1268, %v6261, 0
      %v6515 = vsel %vm1268, %v6270, 0
      %v6518 = vsel %vm1268, %v6279, 0
      %v6521 = vsel %vm1268, %v6288, 0
      %v6524 = vsel %vm1268, %v6297, 0
      %v6527 = vsel %vm1268, %v6306, 0
      %v6530 = vsel %vm1268, %v6315, 0
      %v6533 = vsel %vm1268, %v6314, 0
      %v6536 = vand.u32 %v5655, %v1491
      %6538 = vmatprep.subr.bf16.mxu0 0
      %6539 = vmatpush1.bf16.msra.mxu0 0
      %6540 = vmatprep.subr.bf16.mxu0 0
      %6541 = vmatpush1.bf16.msra.mxu0 0
      %6542 = vmatprep.subr.bf16.mxu0 0
      %6543 = vmatpush1.bf16.msra.mxu0 0
      %6544 = vmatprep.subr.bf16.mxu0 0
      %6545 = vmatpush1.bf16.msra.mxu0 0
      %6546 = vmatprep.subr.bf16.mxu0 0
      %6547 = vmatpush1.bf16.msra.mxu0 0
      %6548 = vmatprep.subr.bf16.mxu0 0
      %6549 = vmatpush1.bf16.msra.mxu0 0
      %6550 = vmatprep.subr.bf16.mxu0 0
      %6551 = vmatpush1.bf16.msra.mxu0 0
      %6552 = vmatprep.subr.bf16.mxu0 0
      %6553 = vmatpush1.bf16.msra.mxu0 %v6536
      %6554 = vmatprep.subr.bf16.mxu0 0
      %6555 = vmatpush2.bf16.msra.mxu0 0
      %6556 = vmatprep.subr.bf16.mxu0 0
      %6557 = vmatpush2.bf16.msra.mxu0 0
      %6558 = vmatprep.subr.bf16.mxu0 0
      %6559 = vmatpush2.bf16.msra.mxu0 0
      %6560 = vmatprep.subr.bf16.mxu0 0
      %6561 = vmatpush2.bf16.msra.mxu0 0
      %6562 = vmatprep.subr.bf16.mxu0 0
      %6563 = vmatpush2.bf16.msra.mxu0 0
      %6564 = vmatprep.subr.bf16.mxu0 0
      %6565 = vmatpush2.bf16.msra.mxu0 0
      %6566 = vmatprep.subr.bf16.mxu0 0
      %6567 = vmatpush2.bf16.msra.mxu0 0
      %6568 = vmatprep.subr.bf16.mxu0 0
      %6569 = vmatpush2.bf16.msra.mxu0 0
      %6570 = vmatprep.mubr.bf16.mxu0 0
      %6571 = vmatmul.mubr.bf16.gmra.mxu0 %v6317
      %v6572 = vpop.f32.mrf.mxu0
      %v6573 = vadd.f32 0.0, %v6572
      %v6574 = vpop.f32.mrf.mxu0
      %v6575 = vpop.f32.mrf.mxu0
      %v6576 = vadd.f32 0.0, %v6575
      %v6577 = vpop.f32.mrf.mxu0
      %6578 = vmatprep.mubr.bf16.mxu0 0
      %6579 = vmatmul.mubr.bf16.gmra.mxu0 %v6320
      %v6580 = vpop.f32.mrf.mxu0
      %v6581 = vadd.f32 0.0, %v6580
      %v6582 = vpop.f32.mrf.mxu0
      %v6583 = vpop.f32.mrf.mxu0
      %v6584 = vadd.f32 0.0, %v6583
      %v6585 = vpop.f32.mrf.mxu0
      %6586 = vmatprep.mubr.bf16.mxu0 0
      %6587 = vmatmul.mubr.bf16.gmra.mxu0 %v6323
      %v6588 = vpop.f32.mrf.mxu0
      %v6589 = vadd.f32 0.0, %v6588
      %v6590 = vpop.f32.mrf.mxu0
      %v6591 = vpop.f32.mrf.mxu0
      %v6592 = vadd.f32 0.0, %v6591
      %v6593 = vpop.f32.mrf.mxu0
      %6594 = vmatprep.mubr.bf16.mxu0 0
      %6595 = vmatmul.mubr.bf16.gmra.mxu0 %v6326
      %v6596 = vpop.f32.mrf.mxu0
      %v6597 = vadd.f32 0.0, %v6596
      %v6598 = vpop.f32.mrf.mxu0
      %v6599 = vpop.f32.mrf.mxu0
      %v6600 = vadd.f32 0.0, %v6599
      %v6601 = vpop.f32.mrf.mxu0
      %6602 = vmatprep.mubr.bf16.mxu0 0
      %6603 = vmatmul.mubr.bf16.gmra.mxu0 %v6329
      %v6604 = vpop.f32.mrf.mxu0
      %v6605 = vadd.f32 0.0, %v6604
      %v6606 = vpop.f32.mrf.mxu0
      %v6607 = vpop.f32.mrf.mxu0
      %v6608 = vadd.f32 0.0, %v6607
      %v6609 = vpop.f32.mrf.mxu0
      %6610 = vmatprep.mubr.bf16.mxu0 0
      %6611 = vmatmul.mubr.bf16.gmra.mxu0 %v6332
      %v6612 = vpop.f32.mrf.mxu0
      %v6613 = vadd.f32 0.0, %v6612
      %v6614 = vpop.f32.mrf.mxu0
      %v6615 = vpop.f32.mrf.mxu0
      %v6616 = vadd.f32 0.0, %v6615
      %v6617 = vpop.f32.mrf.mxu0
      %6618 = vmatprep.mubr.bf16.mxu0 0
      %6619 = vmatmul.mubr.bf16.gmra.mxu0 %v6335
      %v6620 = vpop.f32.mrf.mxu0
      %v6621 = vadd.f32 0.0, %v6620
      %v6622 = vpop.f32.mrf.mxu0
      %v6623 = vpop.f32.mrf.mxu0
      %v6624 = vadd.f32 0.0, %v6623
      %v6625 = vpop.f32.mrf.mxu0
      %6626 = vmatprep.mubr.bf16.mxu0 0
      %6627 = vmatmul.mubr.bf16.gmra.mxu0 %v6338
      %v6628 = vpop.f32.mrf.mxu0
      %v6629 = vadd.f32 0.0, %v6628
      %v6630 = vpop.f32.mrf.mxu0
      %v6631 = vpop.f32.mrf.mxu0
      %v6632 = vadd.f32 0.0, %v6631
      %v6633 = vpop.f32.mrf.mxu0
      %6634 = vmatprep.mubr.bf16.mxu0 0
      %6635 = vmatmul.mubr.bf16.gmra.mxu0 %v6341
      %v6636 = vpop.f32.mrf.mxu0
      %v6637 = vadd.f32 0.0, %v6636
      %v6638 = vpop.f32.mrf.mxu0
      %v6639 = vpop.f32.mrf.mxu0
      %v6640 = vadd.f32 0.0, %v6639
      %v6641 = vpop.f32.mrf.mxu0
      %6642 = vmatprep.mubr.bf16.mxu0 0
      %6643 = vmatmul.mubr.bf16.gmra.mxu0 %v6344
      %v6644 = vpop.f32.mrf.mxu0
      %v6645 = vadd.f32 0.0, %v6644
      %v6646 = vpop.f32.mrf.mxu0
      %v6647 = vpop.f32.mrf.mxu0
      %v6648 = vadd.f32 0.0, %v6647
      %v6649 = vpop.f32.mrf.mxu0
      %6650 = vmatprep.mubr.bf16.mxu0 0
      %6651 = vmatmul.mubr.bf16.gmra.mxu0 %v6347
      %v6652 = vpop.f32.mrf.mxu0
      %v6653 = vadd.f32 0.0, %v6652
      %v6654 = vpop.f32.mrf.mxu0
      %v6655 = vpop.f32.mrf.mxu0
      %v6656 = vadd.f32 0.0, %v6655
      %v6657 = vpop.f32.mrf.mxu0
      %6658 = vmatprep.mubr.bf16.mxu0 0
      %6659 = vmatmul.mubr.bf16.gmra.mxu0 %v6350
      %v6660 = vpop.f32.mrf.mxu0
      %v6661 = vadd.f32 0.0, %v6660
      %v6662 = vpop.f32.mrf.mxu0
      %v6663 = vpop.f32.mrf.mxu0
      %v6664 = vadd.f32 0.0, %v6663
      %v6665 = vpop.f32.mrf.mxu0
      %6666 = vmatprep.mubr.bf16.mxu0 0
      %6667 = vmatmul.mubr.bf16.gmra.mxu0 %v6353
      %v6668 = vpop.f32.mrf.mxu0
      %v6669 = vadd.f32 0.0, %v6668
      %v6670 = vpop.f32.mrf.mxu0
      %v6671 = vpop.f32.mrf.mxu0
      %v6672 = vadd.f32 0.0, %v6671
      %v6673 = vpop.f32.mrf.mxu0
      %6674 = vmatprep.mubr.bf16.mxu0 0
      %6675 = vmatmul.mubr.bf16.gmra.mxu0 %v6356
      %v6676 = vpop.f32.mrf.mxu0
      %v6677 = vadd.f32 0.0, %v6676
      %v6678 = vpop.f32.mrf.mxu0
      %v6679 = vpop.f32.mrf.mxu0
      %v6680 = vadd.f32 0.0, %v6679
      %v6681 = vpop.f32.mrf.mxu0
      %6682 = vmatprep.mubr.bf16.mxu0 0
      %6683 = vmatmul.mubr.bf16.gmra.mxu0 %v6359
      %v6684 = vpop.f32.mrf.mxu0
      %v6685 = vadd.f32 0.0, %v6684
      %v6686 = vpop.f32.mrf.mxu0
      %v6687 = vpop.f32.mrf.mxu0
      %v6688 = vadd.f32 0.0, %v6687
      %v6689 = vpop.f32.mrf.mxu0
      %6690 = vmatprep.mubr.bf16.mxu0 0
      %6691 = vmatmul.mubr.bf16.gmra.mxu0 %v6362
      %v6692 = vpop.f32.mrf.mxu0
      %v6693 = vadd.f32 0.0, %v6692
      %v6694 = vpop.f32.mrf.mxu0
      %v6695 = vpop.f32.mrf.mxu0
      %v6696 = vadd.f32 0.0, %v6695
      %v6697 = vpop.f32.mrf.mxu0
      %6698 = vmatprep.mubr.bf16.mxu0 0
      %6699 = vmatmul.mubr.bf16.gmra.mxu0 %v6365
      %v6700 = vpop.f32.mrf.mxu0
      %v6701 = vadd.f32 0.0, %v6700
      %v6702 = vpop.f32.mrf.mxu0
      %v6703 = vpop.f32.mrf.mxu0
      %v6704 = vadd.f32 0.0, %v6703
      %v6705 = vpop.f32.mrf.mxu0
      %6706 = vmatprep.mubr.bf16.mxu0 0
      %6707 = vmatmul.mubr.bf16.gmra.mxu0 %v6368
      %v6708 = vpop.f32.mrf.mxu0
      %v6709 = vadd.f32 0.0, %v6708
      %v6710 = vpop.f32.mrf.mxu0
      %v6711 = vpop.f32.mrf.mxu0
      %v6712 = vadd.f32 0.0, %v6711
      %v6713 = vpop.f32.mrf.mxu0
      %6714 = vmatprep.mubr.bf16.mxu0 0
      %6715 = vmatmul.mubr.bf16.gmra.mxu0 %v6371
      %v6716 = vpop.f32.mrf.mxu0
      %v6717 = vadd.f32 0.0, %v6716
      %v6718 = vpop.f32.mrf.mxu0
      %v6719 = vpop.f32.mrf.mxu0
      %v6720 = vadd.f32 0.0, %v6719
      %v6721 = vpop.f32.mrf.mxu0
      %6722 = vmatprep.mubr.bf16.mxu0 0
      %6723 = vmatmul.mubr.bf16.gmra.mxu0 %v6374
      %v6724 = vpop.f32.mrf.mxu0
      %v6725 = vadd.f32 0.0, %v6724
      %v6726 = vpop.f32.mrf.mxu0
      %v6727 = vpop.f32.mrf.mxu0
      %v6728 = vadd.f32 0.0, %v6727
      %v6729 = vpop.f32.mrf.mxu0
      %6730 = vmatprep.mubr.bf16.mxu0 0
      %6731 = vmatmul.mubr.bf16.gmra.mxu0 %v6377
      %v6732 = vpop.f32.mrf.mxu0
      %v6733 = vadd.f32 0.0, %v6732
      %v6734 = vpop.f32.mrf.mxu0
      %v6735 = vpop.f32.mrf.mxu0
      %v6736 = vadd.f32 0.0, %v6735
      %v6737 = vpop.f32.mrf.mxu0
      %6738 = vmatprep.mubr.bf16.mxu0 0
      %6739 = vmatmul.mubr.bf16.gmra.mxu0 %v6380
      %v6740 = vpop.f32.mrf.mxu0
      %v6741 = vadd.f32 0.0, %v6740
      %v6742 = vpop.f32.mrf.mxu0
      %v6743 = vpop.f32.mrf.mxu0
      %v6744 = vadd.f32 0.0, %v6743
      %v6745 = vpop.f32.mrf.mxu0
      %6746 = vmatprep.mubr.bf16.mxu0 0
      %6747 = vmatmul.mubr.bf16.gmra.mxu0 %v6383
      %v6748 = vpop.f32.mrf.mxu0
      %v6749 = vadd.f32 0.0, %v6748
      %v6750 = vpop.f32.mrf.mxu0
      %v6751 = vpop.f32.mrf.mxu0
      %v6752 = vadd.f32 0.0, %v6751
      %v6753 = vpop.f32.mrf.mxu0
      %6754 = vmatprep.mubr.bf16.mxu0 0
      %6755 = vmatmul.mubr.bf16.gmra.mxu0 %v6386
      %v6756 = vpop.f32.mrf.mxu0
      %v6757 = vadd.f32 0.0, %v6756
      %v6758 = vpop.f32.mrf.mxu0
      %v6759 = vpop.f32.mrf.mxu0
      %v6760 = vadd.f32 0.0, %v6759
      %v6761 = vpop.f32.mrf.mxu0
      %6762 = vmatprep.mubr.bf16.mxu0 0
      %6763 = vmatmul.mubr.bf16.gmra.mxu0 %v6389
      %v6764 = vpop.f32.mrf.mxu0
      %v6765 = vadd.f32 0.0, %v6764
      %v6766 = vpop.f32.mrf.mxu0
      %v6767 = vpop.f32.mrf.mxu0
      %v6768 = vadd.f32 0.0, %v6767
      %v6769 = vpop.f32.mrf.mxu0
      %6770 = vmatprep.mubr.bf16.mxu0 0
      %6771 = vmatmul.mubr.bf16.gmra.mxu0 %v6392
      %v6772 = vpop.f32.mrf.mxu0
      %v6773 = vadd.f32 0.0, %v6772
      %v6774 = vpop.f32.mrf.mxu0
      %v6775 = vpop.f32.mrf.mxu0
      %v6776 = vadd.f32 0.0, %v6775
      %v6777 = vpop.f32.mrf.mxu0
      %6778 = vmatprep.mubr.bf16.mxu0 0
      %6779 = vmatmul.mubr.bf16.gmra.mxu0 %v6395
      %v6780 = vpop.f32.mrf.mxu0
      %v6781 = vadd.f32 0.0, %v6780
      %v6782 = vpop.f32.mrf.mxu0
      %v6783 = vpop.f32.mrf.mxu0
      %v6784 = vadd.f32 0.0, %v6783
      %v6785 = vpop.f32.mrf.mxu0
      %6786 = vmatprep.mubr.bf16.mxu0 0
      %6787 = vmatmul.mubr.bf16.gmra.mxu0 %v6398
      %v6788 = vpop.f32.mrf.mxu0
      %v6789 = vadd.f32 0.0, %v6788
      %v6790 = vpop.f32.mrf.mxu0
      %v6791 = vpop.f32.mrf.mxu0
      %v6792 = vadd.f32 0.0, %v6791
      %v6793 = vpop.f32.mrf.mxu0
      %6794 = vmatprep.mubr.bf16.mxu0 0
      %6795 = vmatmul.mubr.bf16.gmra.mxu0 %v6401
      %v6796 = vpop.f32.mrf.mxu0
      %v6797 = vadd.f32 0.0, %v6796
      %v6798 = vpop.f32.mrf.mxu0
      %v6799 = vpop.f32.mrf.mxu0
      %v6800 = vadd.f32 0.0, %v6799
      %v6801 = vpop.f32.mrf.mxu0
      %6802 = vmatprep.mubr.bf16.mxu0 0
      %6803 = vmatmul.mubr.bf16.gmra.mxu0 %v6404
      %v6804 = vpop.f32.mrf.mxu0
      %v6805 = vadd.f32 0.0, %v6804
      %v6806 = vpop.f32.mrf.mxu0
      %v6807 = vpop.f32.mrf.mxu0
      %v6808 = vadd.f32 0.0, %v6807
      %v6809 = vpop.f32.mrf.mxu0
      %6810 = vmatprep.mubr.bf16.mxu0 0
      %6811 = vmatmul.mubr.bf16.gmra.mxu0 %v6407
      %v6812 = vpop.f32.mrf.mxu0
      %v6813 = vadd.f32 0.0, %v6812
      %v6814 = vpop.f32.mrf.mxu0
      %v6815 = vpop.f32.mrf.mxu0
      %v6816 = vadd.f32 0.0, %v6815
      %v6817 = vpop.f32.mrf.mxu0
      %6818 = vmatprep.mubr.bf16.mxu0 0
      %6819 = vmatmul.mubr.bf16.gmra.mxu0 %v6410
      %v6820 = vpop.f32.mrf.mxu0
      %v6821 = vadd.f32 0.0, %v6820
      %v6822 = vpop.f32.mrf.mxu0
      %v6823 = vpop.f32.mrf.mxu0
      %v6824 = vadd.f32 0.0, %v6823
      %v6825 = vpop.f32.mrf.mxu0
      %6826 = vmatprep.mubr.bf16.mxu0 0
      %6827 = vmatmul.mubr.bf16.gmra.mxu0 %v6413
      %v6828 = vpop.f32.mrf.mxu0
      %v6829 = vadd.f32 0.0, %v6828
      %v6830 = vpop.f32.mrf.mxu0
      %v6831 = vpop.f32.mrf.mxu0
      %v6832 = vadd.f32 0.0, %v6831
      %v6833 = vpop.f32.mrf.mxu0
      %6834 = vmatprep.mubr.bf16.mxu0 0
      %6835 = vmatmul.mubr.bf16.gmra.mxu0 %v6416
      %v6836 = vpop.f32.mrf.mxu0
      %v6837 = vadd.f32 0.0, %v6836
      %v6838 = vpop.f32.mrf.mxu0
      %v6839 = vpop.f32.mrf.mxu0
      %v6840 = vadd.f32 0.0, %v6839
      %v6841 = vpop.f32.mrf.mxu0
      %6842 = vmatprep.mubr.bf16.mxu0 0
      %6843 = vmatmul.mubr.bf16.gmra.mxu0 %v6419
      %v6844 = vpop.f32.mrf.mxu0
      %v6845 = vadd.f32 0.0, %v6844
      %v6846 = vpop.f32.mrf.mxu0
      %v6847 = vpop.f32.mrf.mxu0
      %v6848 = vadd.f32 0.0, %v6847
      %v6849 = vpop.f32.mrf.mxu0
      %6850 = vmatprep.mubr.bf16.mxu0 0
      %6851 = vmatmul.mubr.bf16.gmra.mxu0 %v6422
      %v6852 = vpop.f32.mrf.mxu0
      %v6853 = vadd.f32 0.0, %v6852
      %v6854 = vpop.f32.mrf.mxu0
      %v6855 = vpop.f32.mrf.mxu0
      %v6856 = vadd.f32 0.0, %v6855
      %v6857 = vpop.f32.mrf.mxu0
      %6858 = vmatprep.mubr.bf16.mxu0 0
      %6859 = vmatmul.mubr.bf16.gmra.mxu0 %v6425
      %v6860 = vpop.f32.mrf.mxu0
      %v6861 = vadd.f32 0.0, %v6860
      %v6862 = vpop.f32.mrf.mxu0
      %v6863 = vpop.f32.mrf.mxu0
      %v6864 = vadd.f32 0.0, %v6863
      %v6865 = vpop.f32.mrf.mxu0
      %6866 = vmatprep.mubr.bf16.mxu0 0
      %6867 = vmatmul.mubr.bf16.gmra.mxu0 %v6428
      %v6868 = vpop.f32.mrf.mxu0
      %v6869 = vadd.f32 0.0, %v6868
      %v6870 = vpop.f32.mrf.mxu0
      %v6871 = vpop.f32.mrf.mxu0
      %v6872 = vadd.f32 0.0, %v6871
      %v6873 = vpop.f32.mrf.mxu0
      %6874 = vmatprep.mubr.bf16.mxu0 0
      %6875 = vmatmul.mubr.bf16.gmra.mxu0 %v6431
      %v6876 = vpop.f32.mrf.mxu0
      %v6877 = vadd.f32 0.0, %v6876
      %v6878 = vpop.f32.mrf.mxu0
      %v6879 = vpop.f32.mrf.mxu0
      %v6880 = vadd.f32 0.0, %v6879
      %v6881 = vpop.f32.mrf.mxu0
      %6882 = vmatprep.mubr.bf16.mxu0 0
      %6883 = vmatmul.mubr.bf16.gmra.mxu0 %v6434
      %v6884 = vpop.f32.mrf.mxu0
      %v6885 = vadd.f32 0.0, %v6884
      %v6886 = vpop.f32.mrf.mxu0
      %v6887 = vpop.f32.mrf.mxu0
      %v6888 = vadd.f32 0.0, %v6887
      %v6889 = vpop.f32.mrf.mxu0
      %6890 = vmatprep.mubr.bf16.mxu0 0
      %6891 = vmatmul.mubr.bf16.gmra.mxu0 %v6437
      %v6892 = vpop.f32.mrf.mxu0
      %v6893 = vadd.f32 0.0, %v6892
      %v6894 = vpop.f32.mrf.mxu0
      %v6895 = vpop.f32.mrf.mxu0
      %v6896 = vadd.f32 0.0, %v6895
      %v6897 = vpop.f32.mrf.mxu0
      %6898 = vmatprep.mubr.bf16.mxu0 0
      %6899 = vmatmul.mubr.bf16.gmra.mxu0 %v6440
      %v6900 = vpop.f32.mrf.mxu0
      %v6901 = vadd.f32 0.0, %v6900
      %v6902 = vpop.f32.mrf.mxu0
      %v6903 = vpop.f32.mrf.mxu0
      %v6904 = vadd.f32 0.0, %v6903
      %v6905 = vpop.f32.mrf.mxu0
      %6906 = vmatprep.mubr.bf16.mxu0 0
      %6907 = vmatmul.mubr.bf16.gmra.mxu0 %v6443
      %v6908 = vpop.f32.mrf.mxu0
      %v6909 = vadd.f32 0.0, %v6908
      %v6910 = vpop.f32.mrf.mxu0
      %v6911 = vpop.f32.mrf.mxu0
      %v6912 = vadd.f32 0.0, %v6911
      %v6913 = vpop.f32.mrf.mxu0
      %6914 = vmatprep.mubr.bf16.mxu0 0
      %6915 = vmatmul.mubr.bf16.gmra.mxu0 %v6446
      %v6916 = vpop.f32.mrf.mxu0
      %v6917 = vadd.f32 0.0, %v6916
      %v6918 = vpop.f32.mrf.mxu0
      %v6919 = vpop.f32.mrf.mxu0
      %v6920 = vadd.f32 0.0, %v6919
      %v6921 = vpop.f32.mrf.mxu0
      %6922 = vmatprep.mubr.bf16.mxu0 0
      %6923 = vmatmul.mubr.bf16.gmra.mxu0 %v6449
      %v6924 = vpop.f32.mrf.mxu0
      %v6925 = vadd.f32 0.0, %v6924
      %v6926 = vpop.f32.mrf.mxu0
      %v6927 = vpop.f32.mrf.mxu0
      %v6928 = vadd.f32 0.0, %v6927
      %v6929 = vpop.f32.mrf.mxu0
      %6930 = vmatprep.mubr.bf16.mxu0 0
      %6931 = vmatmul.mubr.bf16.gmra.mxu0 %v6452
      %v6932 = vpop.f32.mrf.mxu0
      %v6933 = vadd.f32 0.0, %v6932
      %v6934 = vpop.f32.mrf.mxu0
      %v6935 = vpop.f32.mrf.mxu0
      %v6936 = vadd.f32 0.0, %v6935
      %v6937 = vpop.f32.mrf.mxu0
      %6938 = vmatprep.mubr.bf16.mxu0 0
      %6939 = vmatmul.mubr.bf16.gmra.mxu0 %v6455
      %v6940 = vpop.f32.mrf.mxu0
      %v6941 = vadd.f32 0.0, %v6940
      %v6942 = vpop.f32.mrf.mxu0
      %v6943 = vpop.f32.mrf.mxu0
      %v6944 = vadd.f32 0.0, %v6943
      %v6945 = vpop.f32.mrf.mxu0
      %6946 = vmatprep.mubr.bf16.mxu0 0
      %6947 = vmatmul.mubr.bf16.gmra.mxu0 %v6458
      %v6948 = vpop.f32.mrf.mxu0
      %v6949 = vadd.f32 0.0, %v6948
      %v6950 = vpop.f32.mrf.mxu0
      %v6951 = vpop.f32.mrf.mxu0
      %v6952 = vadd.f32 0.0, %v6951
      %v6953 = vpop.f32.mrf.mxu0
      %6954 = vmatprep.mubr.bf16.mxu0 0
      %6955 = vmatmul.mubr.bf16.gmra.mxu0 %v6461
      %v6956 = vpop.f32.mrf.mxu0
      %v6957 = vadd.f32 0.0, %v6956
      %v6958 = vpop.f32.mrf.mxu0
      %v6959 = vpop.f32.mrf.mxu0
      %v6960 = vadd.f32 0.0, %v6959
      %v6961 = vpop.f32.mrf.mxu0
      %6962 = vmatprep.mubr.bf16.mxu0 0
      %6963 = vmatmul.mubr.bf16.gmra.mxu0 %v6464
      %v6964 = vpop.f32.mrf.mxu0
      %v6965 = vadd.f32 0.0, %v6964
      %v6966 = vpop.f32.mrf.mxu0
      %v6967 = vpop.f32.mrf.mxu0
      %v6968 = vadd.f32 0.0, %v6967
      %v6969 = vpop.f32.mrf.mxu0
      %6970 = vmatprep.mubr.bf16.mxu0 0
      %6971 = vmatmul.mubr.bf16.gmra.mxu0 %v6467
      %v6972 = vpop.f32.mrf.mxu0
      %v6973 = vadd.f32 0.0, %v6972
      %v6974 = vpop.f32.mrf.mxu0
      %v6975 = vpop.f32.mrf.mxu0
      %v6976 = vadd.f32 0.0, %v6975
      %v6977 = vpop.f32.mrf.mxu0
      %6978 = vmatprep.mubr.bf16.mxu0 0
      %6979 = vmatmul.mubr.bf16.gmra.mxu0 %v6470
      %v6980 = vpop.f32.mrf.mxu0
      %v6981 = vadd.f32 0.0, %v6980
      %v6982 = vpop.f32.mrf.mxu0
      %v6983 = vpop.f32.mrf.mxu0
      %v6984 = vadd.f32 0.0, %v6983
      %v6985 = vpop.f32.mrf.mxu0
      %6986 = vmatprep.mubr.bf16.mxu0 0
      %6987 = vmatmul.mubr.bf16.gmra.mxu0 %v6473
      %v6988 = vpop.f32.mrf.mxu0
      %v6989 = vadd.f32 0.0, %v6988
      %v6990 = vpop.f32.mrf.mxu0
      %v6991 = vpop.f32.mrf.mxu0
      %v6992 = vadd.f32 0.0, %v6991
      %v6993 = vpop.f32.mrf.mxu0
      %6994 = vmatprep.mubr.bf16.mxu0 0
      %6995 = vmatmul.mubr.bf16.gmra.mxu0 %v6476
      %v6996 = vpop.f32.mrf.mxu0
      %v6997 = vadd.f32 0.0, %v6996
      %v6998 = vpop.f32.mrf.mxu0
      %v6999 = vpop.f32.mrf.mxu0
      %v7000 = vadd.f32 0.0, %v6999
      %v7001 = vpop.f32.mrf.mxu0
      %7002 = vmatprep.mubr.bf16.mxu0 0
      %7003 = vmatmul.mubr.bf16.gmra.mxu0 %v6479
      %v7004 = vpop.f32.mrf.mxu0
      %v7005 = vadd.f32 0.0, %v7004
      %v7006 = vpop.f32.mrf.mxu0
      %v7007 = vpop.f32.mrf.mxu0
      %v7008 = vadd.f32 0.0, %v7007
      %v7009 = vpop.f32.mrf.mxu0
      %7010 = vmatprep.mubr.bf16.mxu0 0
      %7011 = vmatmul.mubr.bf16.gmra.mxu0 %v6482
      %v7012 = vpop.f32.mrf.mxu0
      %v7013 = vadd.f32 0.0, %v7012
      %v7014 = vpop.f32.mrf.mxu0
      %v7015 = vpop.f32.mrf.mxu0
      %v7016 = vadd.f32 0.0, %v7015
      %v7017 = vpop.f32.mrf.mxu0
      %7018 = vmatprep.mubr.bf16.mxu0 0
      %7019 = vmatmul.mubr.bf16.gmra.mxu0 %v6485
      %v7020 = vpop.f32.mrf.mxu0
      %v7021 = vadd.f32 0.0, %v7020
      %v7022 = vpop.f32.mrf.mxu0
      %v7023 = vpop.f32.mrf.mxu0
      %v7024 = vadd.f32 0.0, %v7023
      %v7025 = vpop.f32.mrf.mxu0
      %7026 = vmatprep.mubr.bf16.mxu0 0
      %7027 = vmatmul.mubr.bf16.gmra.mxu0 %v6488
      %v7028 = vpop.f32.mrf.mxu0
      %v7029 = vadd.f32 0.0, %v7028
      %v7030 = vpop.f32.mrf.mxu0
      %v7031 = vpop.f32.mrf.mxu0
      %v7032 = vadd.f32 0.0, %v7031
      %v7033 = vpop.f32.mrf.mxu0
      %7034 = vmatprep.mubr.bf16.mxu0 0
      %7035 = vmatmul.mubr.bf16.gmra.mxu0 %v6491
      %v7036 = vpop.f32.mrf.mxu0
      %v7037 = vadd.f32 0.0, %v7036
      %v7038 = vpop.f32.mrf.mxu0
      %v7039 = vpop.f32.mrf.mxu0
      %v7040 = vadd.f32 0.0, %v7039
      %v7041 = vpop.f32.mrf.mxu0
      %7042 = vmatprep.mubr.bf16.mxu0 0
      %7043 = vmatmul.mubr.bf16.gmra.mxu0 %v6494
      %v7044 = vpop.f32.mrf.mxu0
      %v7045 = vadd.f32 0.0, %v7044
      %v7046 = vpop.f32.mrf.mxu0
      %v7047 = vpop.f32.mrf.mxu0
      %v7048 = vadd.f32 0.0, %v7047
      %v7049 = vpop.f32.mrf.mxu0
      %7050 = vmatprep.mubr.bf16.mxu0 0
      %7051 = vmatmul.mubr.bf16.gmra.mxu0 %v6497
      %v7052 = vpop.f32.mrf.mxu0
      %v7053 = vadd.f32 0.0, %v7052
      %v7054 = vpop.f32.mrf.mxu0
      %v7055 = vpop.f32.mrf.mxu0
      %v7056 = vadd.f32 0.0, %v7055
      %v7057 = vpop.f32.mrf.mxu0
      %7058 = vmatprep.mubr.bf16.mxu0 0
      %7059 = vmatmul.mubr.bf16.gmra.mxu0 %v6500
      %v7060 = vpop.f32.mrf.mxu0
      %v7061 = vadd.f32 0.0, %v7060
      %v7062 = vpop.f32.mrf.mxu0
      %v7063 = vpop.f32.mrf.mxu0
      %v7064 = vadd.f32 0.0, %v7063
      %v7065 = vpop.f32.mrf.mxu0
      %7066 = vmatprep.mubr.bf16.mxu0 0
      %7067 = vmatmul.mubr.bf16.gmra.mxu0 %v6503
      %v7068 = vpop.f32.mrf.mxu0
      %v7069 = vadd.f32 0.0, %v7068
      %v7070 = vpop.f32.mrf.mxu0
      %v7071 = vpop.f32.mrf.mxu0
      %v7072 = vadd.f32 0.0, %v7071
      %v7073 = vpop.f32.mrf.mxu0
      %7074 = vmatprep.mubr.bf16.mxu0 0
      %7075 = vmatmul.mubr.bf16.gmra.mxu0 %v6506
      %v7076 = vpop.f32.mrf.mxu0
      %v7077 = vadd.f32 0.0, %v7076
      %v7078 = vpop.f32.mrf.mxu0
      %v7079 = vpop.f32.mrf.mxu0
      %v7080 = vadd.f32 0.0, %v7079
      %v7081 = vpop.f32.mrf.mxu0
      %7082 = vmatprep.mubr.bf16.mxu0 0
      %7083 = vmatmul.mubr.bf16.gmra.mxu0 %v6509
      %v7084 = vpop.f32.mrf.mxu0
      %v7085 = vadd.f32 0.0, %v7084
      %v7086 = vpop.f32.mrf.mxu0
      %v7087 = vpop.f32.mrf.mxu0
      %v7088 = vadd.f32 0.0, %v7087
      %v7089 = vpop.f32.mrf.mxu0
      %7090 = vmatprep.mubr.bf16.mxu0 0
      %7091 = vmatmul.mubr.bf16.gmra.mxu0 %v6512
      %v7092 = vpop.f32.mrf.mxu0
      %v7093 = vadd.f32 0.0, %v7092
      %v7094 = vpop.f32.mrf.mxu0
      %v7095 = vpop.f32.mrf.mxu0
      %v7096 = vadd.f32 0.0, %v7095
      %v7097 = vpop.f32.mrf.mxu0
      %7098 = vmatprep.mubr.bf16.mxu0 0
      %7099 = vmatmul.mubr.bf16.gmra.mxu0 %v6515
      %v7100 = vpop.f32.mrf.mxu0
      %v7101 = vadd.f32 0.0, %v7100
      %v7102 = vpop.f32.mrf.mxu0
      %v7103 = vpop.f32.mrf.mxu0
      %v7104 = vadd.f32 0.0, %v7103
      %v7105 = vpop.f32.mrf.mxu0
      %7106 = vmatprep.mubr.bf16.mxu0 0
      %7107 = vmatmul.mubr.bf16.gmra.mxu0 %v6518
      %v7108 = vpop.f32.mrf.mxu0
      %v7109 = vadd.f32 0.0, %v7108
      %v7110 = vpop.f32.mrf.mxu0
      %v7111 = vpop.f32.mrf.mxu0
      %v7112 = vadd.f32 0.0, %v7111
      %v7113 = vpop.f32.mrf.mxu0
      %7114 = vmatprep.mubr.bf16.mxu0 0
      %7115 = vmatmul.mubr.bf16.gmra.mxu0 %v6521
      %v7116 = vpop.f32.mrf.mxu0
      %v7117 = vadd.f32 0.0, %v7116
      %v7118 = vpop.f32.mrf.mxu0
      %v7119 = vpop.f32.mrf.mxu0
      %v7120 = vadd.f32 0.0, %v7119
      %v7121 = vpop.f32.mrf.mxu0
      %7122 = vmatprep.mubr.bf16.mxu0 0
      %7123 = vmatmul.mubr.bf16.gmra.mxu0 %v6524
      %v7124 = vpop.f32.mrf.mxu0
      %v7125 = vadd.f32 0.0, %v7124
      %v7126 = vpop.f32.mrf.mxu0
      %v7127 = vpop.f32.mrf.mxu0
      %v7128 = vadd.f32 0.0, %v7127
      %v7129 = vpop.f32.mrf.mxu0
      %7130 = vmatprep.mubr.bf16.mxu0 0
      %7131 = vmatmul.mubr.bf16.gmra.mxu0 %v6527
      %v7132 = vpop.f32.mrf.mxu0
      %v7133 = vadd.f32 0.0, %v7132
      %v7134 = vpop.f32.mrf.mxu0
      %v7135 = vpop.f32.mrf.mxu0
      %v7136 = vadd.f32 0.0, %v7135
      %v7137 = vpop.f32.mrf.mxu0
      %7138 = vmatprep.mubr.bf16.mxu0 0
      %7139 = vmatmul.mubr.bf16.gmra.mxu0 %v6530
      %v7140 = vpop.f32.mrf.mxu0
      %v7141 = vadd.f32 0.0, %v7140
      %v7142 = vpop.f32.mrf.mxu0
      %v7143 = vpop.f32.mrf.mxu0
      %v7144 = vadd.f32 0.0, %v7143
      %v7145 = vpop.f32.mrf.mxu0
      %7146 = vmatprep.mubr.bf16.mxu0 0
      %7147 = vmatmul.mubr.bf16.gmra.mxu0 %v6533
      %v7148 = vpop.f32.mrf.mxu0
      %v7149 = vadd.f32 0.0, %v7148
      %v7150 = vpop.f32.mrf.mxu0
      %v7151 = vpop.f32.mrf.mxu0
      %v7152 = vpop.f32.mrf.mxu0
      %7153 = vdwg.mxu0
      %v7154 = vadd.f32 %v5508, %v6573
      %v7155 = vadd.f32 %v5509, %v6576
      %v7156 = vadd.f32 %v5510, %v6581
      %v7157 = vadd.f32 %v5511, %v6584
      %v7158 = vadd.f32 %v5512, %v6589
      %v7159 = vadd.f32 %v5513, %v6592
      %v7160 = vadd.f32 %v5514, %v6597
      %v7161 = vadd.f32 %v5515, %v6600
      %v7162 = vadd.f32 %v5516, %v6605
      %v7163 = vadd.f32 %v5517, %v6608
      %v7164 = vadd.f32 %v5518, %v6613
      %v7165 = vadd.f32 %v5519, %v6616
      %v7166 = vadd.f32 %v5520, %v6621
      %v7167 = vadd.f32 %v5521, %v6624
      %v7168 = vadd.f32 %v5522, %v6629
      %v7169 = vadd.f32 %v5523, %v6632
      %v7170 = vadd.f32 %v5524, %v6637
      %v7171 = vadd.f32 %v5525, %v6640
      %v7172 = vadd.f32 %v5526, %v6645
      %v7173 = vadd.f32 %v5527, %v6648
      %v7174 = vadd.f32 %v5528, %v6653
      %v7175 = vadd.f32 %v5529, %v6656
      %v7176 = vadd.f32 %v5530, %v6661
      %v7177 = vadd.f32 %v5531, %v6664
      %v7178 = vadd.f32 %v5532, %v6669
      %v7179 = vadd.f32 %v5533, %v6672
      %v7180 = vadd.f32 %v5534, %v6677
      %v7181 = vadd.f32 %v5535, %v6680
      %v7182 = vadd.f32 %v5536, %v6685
      %v7183 = vadd.f32 %v5537, %v6688
      %v7184 = vadd.f32 %v5538, %v6693
      %v7185 = vadd.f32 %v5539, %v6696
      %v7186 = vadd.f32 %v5540, %v6701
      %v7187 = vadd.f32 %v5541, %v6704
      %v7188 = vadd.f32 %v5542, %v6709
      %v7189 = vadd.f32 %v5543, %v6712
      %v7190 = vadd.f32 %v5544, %v6717
      %v7191 = vadd.f32 %v5545, %v6720
      %v7192 = vadd.f32 %v5546, %v6725
      %v7193 = vadd.f32 %v5547, %v6728
      %v7194 = vadd.f32 %v5548, %v6733
      %v7195 = vadd.f32 %v5549, %v6736
      %v7196 = vadd.f32 %v5550, %v6741
      %v7197 = vadd.f32 %v5551, %v6744
      %v7198 = vadd.f32 %v5552, %v6749
      %v7199 = vadd.f32 %v5553, %v6752
      %v7200 = vadd.f32 %v5554, %v6757
      %v7201 = vadd.f32 %v5555, %v6760
      %v7202 = vadd.f32 %v5556, %v6765
      %v7203 = vadd.f32 %v5557, %v6768
      %v7204 = vadd.f32 %v5558, %v6773
      %v7205 = vadd.f32 %v5559, %v6776
      %v7206 = vadd.f32 %v5560, %v6781
      %v7207 = vadd.f32 %v5561, %v6784
      %v7208 = vadd.f32 %v5562, %v6789
      %v7209 = vadd.f32 %v5563, %v6792
      %v7210 = vadd.f32 %v5564, %v6797
      %v7211 = vadd.f32 %v5565, %v6800
      %v7212 = vadd.f32 %v5566, %v6805
      %v7213 = vadd.f32 %v5567, %v6808
      %v7214 = vadd.f32 %v5568, %v6813
      %v7215 = vadd.f32 %v5569, %v6816
      %v7216 = vadd.f32 %v5570, %v6821
      %v7217 = vadd.f32 %v5571, %v6824
      %v7218 = vadd.f32 %v5572, %v6829
      %v7219 = vadd.f32 %v5573, %v6832
      %v7220 = vadd.f32 %v5574, %v6837
      %v7221 = vadd.f32 %v5575, %v6840
      %v7222 = vadd.f32 %v5576, %v6845
      %v7223 = vadd.f32 %v5577, %v6848
      %v7224 = vadd.f32 %v5578, %v6853
      %v7225 = vadd.f32 %v5579, %v6856
      %v7226 = vadd.f32 %v5580, %v6861
      %v7227 = vadd.f32 %v5581, %v6864
      %v7228 = vadd.f32 %v5582, %v6869
      %v7229 = vadd.f32 %v5583, %v6872
      %v7230 = vadd.f32 %v5584, %v6877
      %v7231 = vadd.f32 %v5585, %v6880
      %v7232 = vadd.f32 %v5586, %v6885
      %v7233 = vadd.f32 %v5587, %v6888
      %v7234 = vadd.f32 %v5588, %v6893
      %v7235 = vadd.f32 %v5589, %v6896
      %v7236 = vadd.f32 %v5590, %v6901
      %v7237 = vadd.f32 %v5591, %v6904
      %v7238 = vadd.f32 %v5592, %v6909
      %v7239 = vadd.f32 %v5593, %v6912
      %v7240 = vadd.f32 %v5594, %v6917
      %v7241 = vadd.f32 %v5595, %v6920
      %v7242 = vadd.f32 %v5596, %v6925
      %v7243 = vadd.f32 %v5597, %v6928
      %v7244 = vadd.f32 %v5598, %v6933
      %v7245 = vadd.f32 %v5599, %v6936
      %v7246 = vadd.f32 %v5600, %v6941
      %v7247 = vadd.f32 %v5601, %v6944
      %v7248 = vadd.f32 %v5602, %v6949
      %v7249 = vadd.f32 %v5603, %v6952
      %v7250 = vadd.f32 %v5604, %v6957
      %v7251 = vadd.f32 %v5605, %v6960
      %v7252 = vadd.f32 %v5606, %v6965
      %v7253 = vadd.f32 %v5607, %v6968
      %v7254 = vadd.f32 %v5608, %v6973
      %v7255 = vadd.f32 %v5609, %v6976
      %v7256 = vadd.f32 %v5610, %v6981
      %v7257 = vadd.f32 %v5611, %v6984
      %v7258 = vadd.f32 %v5612, %v6989
      %v7259 = vadd.f32 %v5613, %v6992
      %v7260 = vadd.f32 %v5614, %v6997
      %v7261 = vadd.f32 %v5615, %v7000
      %v7262 = vadd.f32 %v5616, %v7005
      %v7263 = vadd.f32 %v5617, %v7008
      %v7264 = vadd.f32 %v5618, %v7013
      %v7265 = vadd.f32 %v5619, %v7016
      %v7266 = vadd.f32 %v5620, %v7021
      %v7267 = vadd.f32 %v5621, %v7024
      %v7268 = vadd.f32 %v5622, %v7029
      %v7269 = vadd.f32 %v5623, %v7032
      %v7270 = vadd.f32 %v5624, %v7037
      %v7271 = vadd.f32 %v5625, %v7040
      %v7272 = vadd.f32 %v5626, %v7045
      %v7273 = vadd.f32 %v5627, %v7048
      %v7274 = vadd.f32 %v5628, %v7053
      %v7275 = vadd.f32 %v5629, %v7056
      %v7276 = vadd.f32 %v5630, %v7061
      %v7277 = vadd.f32 %v5631, %v7064
      %v7278 = vadd.f32 %v5632, %v7069
      %v7279 = vadd.f32 %v5633, %v7072
      %v7280 = vadd.f32 %v5634, %v7077
      %v7281 = vadd.f32 %v5635, %v7080
      %v7282 = vadd.f32 %v5636, %v7085
      %v7283 = vadd.f32 %v5637, %v7088
      %v7284 = vadd.f32 %v5638, %v7093
      %v7285 = vadd.f32 %v5639, %v7096
      %v7286 = vadd.f32 %v5640, %v7101
      %v7287 = vadd.f32 %v5641, %v7104
      %v7288 = vadd.f32 %v5642, %v7109
      %v7289 = vadd.f32 %v5643, %v7112
      %v7290 = vadd.f32 %v5644, %v7117
      %v7291 = vadd.f32 %v5645, %v7120
      %v7292 = vadd.f32 %v5646, %v7125
      %v7293 = vadd.f32 %v5647, %v7128
      %v7294 = vadd.f32 %v5648, %v7133
      %v7295 = vadd.f32 %v5649, %v7136
      %v7296 = vadd.f32 %v5650, %v7141
      %v7297 = vadd.f32 %v5651, %v7144
      %v7298 = vadd.f32 %v5652, %v7149
      %v7299 = vld [vmem:[%s165 + $0x10] sm:$0xc]
      %s7300 = scalar_lea.vmem %s1, 10
      %v7301 = vld [vmem:[%s7300] sm:$0x3]
      %v7303 = vunpack.c.l.b16 %v7299
      %v7304 = vpack.c.b16 %v4308, %v7303
      %vm7305 = vcmask 1045504
      %v7306 = vrot.slane %v7304, 2
      %v7307 = vrot.slane %v4453, 2
      %v7308 = vsel %vm7305, %v7306, %v7307
      %v7309 = vrot.slane %v4454, 2
      %v7310 = vsel %vm7305, %v7307, %v7309
      %v7311 = vrot.slane %v4455, 2
      %v7312 = vsel %vm7305, %v7309, %v7311
      %v7313 = vrot.slane %v4456, 2
      %v7314 = vsel %vm7305, %v7311, %v7313
      %v7315 = vrot.slane %v4457, 2
      %v7316 = vsel %vm7305, %v7313, %v7315
      %v7317 = vrot.slane %v4458, 2
      %v7318 = vsel %vm7305, %v7315, %v7317
      %v7319 = vrot.slane %v4459, 2
      %v7320 = vsel %vm7305, %v7317, %v7319
      %v7321 = vrot.slane %v4460, 2
      %v7322 = vsel %vm7305, %v7319, %v7321
      %v7323 = vrot.slane %v4461, 2
      %v7324 = vsel %vm7305, %v7321, %v7323
      %v7325 = vrot.slane %v4462, 2
      %v7326 = vsel %vm7305, %v7323, %v7325
      %v7327 = vrot.slane %v4463, 2
      %v7328 = vsel %vm7305, %v7325, %v7327
      %v7329 = vrot.slane %v4464, 2
      %v7330 = vsel %vm7305, %v7327, %v7329
      %v7331 = vrot.slane %v4465, 2
      %v7332 = vsel %vm7305, %v7329, %v7331
      %v7333 = vrot.slane %v4466, 2
      %v7334 = vsel %vm7305, %v7331, %v7333
      %v7335 = vrot.slane %v4467, 2
      %v7336 = vsel %vm7305, %v7333, %v7335
      %v7337 = vrot.slane %v4468, 2
      %v7338 = vsel %vm7305, %v7335, %v7337
      %v7339 = vrot.slane %v4469, 2
      %v7340 = vsel %vm7305, %v7337, %v7339
      %v7341 = vrot.slane %v4470, 2
      %v7342 = vsel %vm7305, %v7339, %v7341
      %v7343 = vrot.slane %v4471, 2
      %v7344 = vsel %vm7305, %v7341, %v7343
      %v7345 = vrot.slane %v4472, 2
      %v7346 = vsel %vm7305, %v7343, %v7345
      %v7347 = vrot.slane %v4473, 2
      %v7348 = vsel %vm7305, %v7345, %v7347
      %v7349 = vrot.slane %v4474, 2
      %v7350 = vsel %vm7305, %v7347, %v7349
      %v7351 = vrot.slane %v4475, 2
      %v7352 = vsel %vm7305, %v7349, %v7351
      %v7353 = vrot.slane %v4476, 2
      %v7354 = vsel %vm7305, %v7351, %v7353
      %v7355 = vrot.slane %v4477, 2
      %v7356 = vsel %vm7305, %v7353, %v7355
      %v7357 = vrot.slane %v4478, 2
      %v7358 = vsel %vm7305, %v7355, %v7357
      %v7359 = vrot.slane %v4479, 2
      %v7360 = vsel %vm7305, %v7357, %v7359
      %v7361 = vrot.slane %v4480, 2
      %v7362 = vsel %vm7305, %v7359, %v7361
      %v7363 = vrot.slane %v4481, 2
      %v7364 = vsel %vm7305, %v7361, %v7363
      %v7365 = vrot.slane %v4482, 2
      %v7366 = vsel %vm7305, %v7363, %v7365
      %v7367 = vrot.slane %v4483, 2
      %v7368 = vsel %vm7305, %v7365, %v7367
      %v7369 = vrot.slane %v4484, 2
      %v7370 = vsel %vm7305, %v7367, %v7369
      %v7371 = vrot.slane %v4485, 2
      %v7372 = vsel %vm7305, %v7369, %v7371
      %v7373 = vrot.slane %v4486, 2
      %v7374 = vsel %vm7305, %v7371, %v7373
      %v7375 = vrot.slane %v4487, 2
      %v7376 = vsel %vm7305, %v7373, %v7375
      %v7377 = vrot.slane %v4488, 2
      %v7378 = vsel %vm7305, %v7375, %v7377
      %v7379 = vrot.slane %v4489, 2
      %v7380 = vsel %vm7305, %v7377, %v7379
      %v7381 = vrot.slane %v4490, 2
      %v7382 = vsel %vm7305, %v7379, %v7381
      %v7383 = vrot.slane %v4491, 2
      %v7384 = vsel %vm7305, %v7381, %v7383
      %v7385 = vrot.slane %v4492, 2
      %v7386 = vsel %vm7305, %v7383, %v7385
      %v7387 = vrot.slane %v4493, 2
      %v7388 = vsel %vm7305, %v7385, %v7387
      %v7389 = vrot.slane %v4494, 2
      %v7390 = vsel %vm7305, %v7387, %v7389
      %v7391 = vrot.slane %v4495, 2
      %v7392 = vsel %vm7305, %v7389, %v7391
      %v7393 = vrot.slane %v4496, 2
      %v7394 = vsel %vm7305, %v7391, %v7393
      %v7395 = vrot.slane %v4497, 2
      %v7396 = vsel %vm7305, %v7393, %v7395
      %v7397 = vrot.slane %v4498, 2
      %v7398 = vsel %vm7305, %v7395, %v7397
      %v7399 = vrot.slane %v4499, 2
      %v7400 = vsel %vm7305, %v7397, %v7399
      %v7401 = vrot.slane %v4500, 2
      %v7402 = vsel %vm7305, %v7399, %v7401
      %v7403 = vrot.slane %v4501, 2
      %v7404 = vsel %vm7305, %v7401, %v7403
      %v7405 = vrot.slane %v4502, 2
      %v7406 = vsel %vm7305, %v7403, %v7405
      %v7407 = vrot.slane %v4503, 2
      %v7408 = vsel %vm7305, %v7405, %v7407
      %v7409 = vrot.slane %v4504, 2
      %v7410 = vsel %vm7305, %v7407, %v7409
      %v7411 = vrot.slane %v4505, 2
      %v7412 = vsel %vm7305, %v7409, %v7411
      %v7413 = vrot.slane %v4506, 2
      %v7414 = vsel %vm7305, %v7411, %v7413
      %v7415 = vrot.slane %v4507, 2
      %v7416 = vsel %vm7305, %v7413, %v7415
      %v7417 = vrot.slane %v4508, 2
      %v7418 = vsel %vm7305, %v7415, %v7417
      %v7419 = vrot.slane %v4509, 2
      %v7420 = vsel %vm7305, %v7417, %v7419
      %v7421 = vrot.slane %v4510, 2
      %v7422 = vsel %vm7305, %v7419, %v7421
      %v7423 = vrot.slane %v4511, 2
      %v7424 = vsel %vm7305, %v7421, %v7423
      %v7425 = vrot.slane %v4512, 2
      %v7426 = vsel %vm7305, %v7423, %v7425
      %v7427 = vrot.slane %v4513, 2
      %v7428 = vsel %vm7305, %v7425, %v7427
      %v7429 = vrot.slane %v4514, 2
      %v7430 = vsel %vm7305, %v7427, %v7429
      %v7431 = vrot.slane %v4515, 2
      %v7432 = vsel %vm7305, %v7429, %v7431
      %v7433 = vrot.slane %v4516, 2
      %v7434 = vsel %vm7305, %v7431, %v7433
      %v7435 = vrot.slane %v4517, 2
      %v7436 = vsel %vm7305, %v7433, %v7435
      %v7437 = vrot.slane %v4518, 2
      %v7438 = vsel %vm7305, %v7435, %v7437
      %v7439 = vrot.slane %v4519, 2
      %v7440 = vsel %vm7305, %v7437, %v7439
      %v7441 = vrot.slane %v4520, 2
      %v7442 = vsel %vm7305, %v7439, %v7441
      %v7443 = vrot.slane %v4521, 2
      %v7444 = vsel %vm7305, %v7441, %v7443
      %v7445 = vrot.slane %v4522, 2
      %v7446 = vsel %vm7305, %v7443, %v7445
      %v7447 = vrot.slane %v4523, 2
      %v7448 = vsel %vm7305, %v7445, %v7447
      %v7449 = vrot.slane %v5658, 2
      %v7450 = vsel %vm7305, %v7447, %v7449
      %v7452 = vsel %vm1268, %v7308, 0
      %v7455 = vsel %vm1268, %v7310, 0
      %v7458 = vsel %vm1268, %v7312, 0
      %v7461 = vsel %vm1268, %v7314, 0
      %v7464 = vsel %vm1268, %v7316, 0
      %v7467 = vsel %vm1268, %v7318, 0
      %v7470 = vsel %vm1268, %v7320, 0
      %v7473 = vsel %vm1268, %v7322, 0
      %v7476 = vsel %vm1268, %v7324, 0
      %v7479 = vsel %vm1268, %v7326, 0
      %v7482 = vsel %vm1268, %v7328, 0
      %v7485 = vsel %vm1268, %v7330, 0
      %v7488 = vsel %vm1268, %v7332, 0
      %v7491 = vsel %vm1268, %v7334, 0
      %v7494 = vsel %vm1268, %v7336, 0
      %v7497 = vsel %vm1268, %v7338, 0
      %v7500 = vsel %vm1268, %v7340, 0
      %v7503 = vsel %vm1268, %v7342, 0
      %v7506 = vsel %vm1268, %v7344, 0
      %v7509 = vsel %vm1268, %v7346, 0
      %v7512 = vsel %vm1268, %v7348, 0
      %v7515 = vsel %vm1268, %v7350, 0
      %v7518 = vsel %vm1268, %v7352, 0
      %v7521 = vsel %vm1268, %v7354, 0
      %v7524 = vsel %vm1268, %v7356, 0
      %v7527 = vsel %vm1268, %v7358, 0
      %v7530 = vsel %vm1268, %v7360, 0
      %v7533 = vsel %vm1268, %v7362, 0
      %v7536 = vsel %vm1268, %v7364, 0
      %v7539 = vsel %vm1268, %v7366, 0
      %v7542 = vsel %vm1268, %v7368, 0
      %v7545 = vsel %vm1268, %v7370, 0
      %v7548 = vsel %vm1268, %v7372, 0
      %v7551 = vsel %vm1268, %v7374, 0
      %v7554 = vsel %vm1268, %v7376, 0
      %v7557 = vsel %vm1268, %v7378, 0
      %v7560 = vsel %vm1268, %v7380, 0
      %v7563 = vsel %vm1268, %v7382, 0
      %v7566 = vsel %vm1268, %v7384, 0
      %v7569 = vsel %vm1268, %v7386, 0
      %v7572 = vsel %vm1268, %v7388, 0
      %v7575 = vsel %vm1268, %v7390, 0
      %v7578 = vsel %vm1268, %v7392, 0
      %v7581 = vsel %vm1268, %v7394, 0
      %v7584 = vsel %vm1268, %v7396, 0
      %v7587 = vsel %vm1268, %v7398, 0
      %v7590 = vsel %vm1268, %v7400, 0
      %v7593 = vsel %vm1268, %v7402, 0
      %v7596 = vsel %vm1268, %v7404, 0
      %v7599 = vsel %vm1268, %v7406, 0
      %v7602 = vsel %vm1268, %v7408, 0
      %v7605 = vsel %vm1268, %v7410, 0
      %v7608 = vsel %vm1268, %v7412, 0
      %v7611 = vsel %vm1268, %v7414, 0
      %v7614 = vsel %vm1268, %v7416, 0
      %v7617 = vsel %vm1268, %v7418, 0
      %v7620 = vsel %vm1268, %v7420, 0
      %v7623 = vsel %vm1268, %v7422, 0
      %v7626 = vsel %vm1268, %v7424, 0
      %v7629 = vsel %vm1268, %v7426, 0
      %v7632 = vsel %vm1268, %v7428, 0
      %v7635 = vsel %vm1268, %v7430, 0
      %v7638 = vsel %vm1268, %v7432, 0
      %v7641 = vsel %vm1268, %v7434, 0
      %v7644 = vsel %vm1268, %v7436, 0
      %v7647 = vsel %vm1268, %v7438, 0
      %v7650 = vsel %vm1268, %v7440, 0
      %v7653 = vsel %vm1268, %v7442, 0
      %v7656 = vsel %vm1268, %v7444, 0
      %v7659 = vsel %vm1268, %v7446, 0
      %v7662 = vsel %vm1268, %v7448, 0
      %v7665 = vsel %vm1268, %v7450, 0
      %v7668 = vsel %vm1268, %v7449, 0
      %v7671 = vand.u32 %v7301, %v1491
      %7673 = vmatprep.subr.bf16.mxu0 0
      %7674 = vmatpush1.bf16.msra.mxu0 0
      %7675 = vmatprep.subr.bf16.mxu0 0
      %7676 = vmatpush1.bf16.msra.mxu0 0
      %7677 = vmatprep.subr.bf16.mxu0 0
      %7678 = vmatpush1.bf16.msra.mxu0 0
      %7679 = vmatprep.subr.bf16.mxu0 0
      %7680 = vmatpush1.bf16.msra.mxu0 0
      %7681 = vmatprep.subr.bf16.mxu0 0
      %7682 = vmatpush1.bf16.msra.mxu0 0
      %7683 = vmatprep.subr.bf16.mxu0 0
      %7684 = vmatpush1.bf16.msra.mxu0 0
      %7685 = vmatprep.subr.bf16.mxu0 0
      %7686 = vmatpush1.bf16.msra.mxu0 0
      %7687 = vmatprep.subr.bf16.mxu0 0
      %7688 = vmatpush1.bf16.msra.mxu0 %v7671
      %7689 = vmatprep.subr.bf16.mxu0 0
      %7690 = vmatpush2.bf16.msra.mxu0 0
      %7691 = vmatprep.subr.bf16.mxu0 0
      %7692 = vmatpush2.bf16.msra.mxu0 0
      %7693 = vmatprep.subr.bf16.mxu0 0
      %7694 = vmatpush2.bf16.msra.mxu0 0
      %7695 = vmatprep.subr.bf16.mxu0 0
      %7696 = vmatpush2.bf16.msra.mxu0 0
      %7697 = vmatprep.subr.bf16.mxu0 0
      %7698 = vmatpush2.bf16.msra.mxu0 0
      %7699 = vmatprep.subr.bf16.mxu0 0
      %7700 = vmatpush2.bf16.msra.mxu0 0
      %7701 = vmatprep.subr.bf16.mxu0 0
      %7702 = vmatpush2.bf16.msra.mxu0 0
      %7703 = vmatprep.subr.bf16.mxu0 0
      %7704 = vmatpush2.bf16.msra.mxu0 0
      %7705 = vmatprep.mubr.bf16.mxu0 0
      %7706 = vmatmul.mubr.bf16.gmra.mxu0 %v7452
      %v7707 = vpop.f32.mrf.mxu0
      %v7708 = vadd.f32 0.0, %v7707
      %v7709 = vpop.f32.mrf.mxu0
      %v7710 = vpop.f32.mrf.mxu0
      %v7711 = vadd.f32 0.0, %v7710
      %v7712 = vpop.f32.mrf.mxu0
      %7713 = vmatprep.mubr.bf16.mxu0 0
      %7714 = vmatmul.mubr.bf16.gmra.mxu0 %v7455
      %v7715 = vpop.f32.mrf.mxu0
      %v7716 = vadd.f32 0.0, %v7715
      %v7717 = vpop.f32.mrf.mxu0
      %v7718 = vpop.f32.mrf.mxu0
      %v7719 = vadd.f32 0.0, %v7718
      %v7720 = vpop.f32.mrf.mxu0
      %7721 = vmatprep.mubr.bf16.mxu0 0
      %7722 = vmatmul.mubr.bf16.gmra.mxu0 %v7458
      %v7723 = vpop.f32.mrf.mxu0
      %v7724 = vadd.f32 0.0, %v7723
      %v7725 = vpop.f32.mrf.mxu0
      %v7726 = vpop.f32.mrf.mxu0
      %v7727 = vadd.f32 0.0, %v7726
      %v7728 = vpop.f32.mrf.mxu0
      %7729 = vmatprep.mubr.bf16.mxu0 0
      %7730 = vmatmul.mubr.bf16.gmra.mxu0 %v7461
      %v7731 = vpop.f32.mrf.mxu0
      %v7732 = vadd.f32 0.0, %v7731
      %v7733 = vpop.f32.mrf.mxu0
      %v7734 = vpop.f32.mrf.mxu0
      %v7735 = vadd.f32 0.0, %v7734
      %v7736 = vpop.f32.mrf.mxu0
      %7737 = vmatprep.mubr.bf16.mxu0 0
      %7738 = vmatmul.mubr.bf16.gmra.mxu0 %v7464
      %v7739 = vpop.f32.mrf.mxu0
      %v7740 = vadd.f32 0.0, %v7739
      %v7741 = vpop.f32.mrf.mxu0
      %v7742 = vpop.f32.mrf.mxu0
      %v7743 = vadd.f32 0.0, %v7742
      %v7744 = vpop.f32.mrf.mxu0
      %7745 = vmatprep.mubr.bf16.mxu0 0
      %7746 = vmatmul.mubr.bf16.gmra.mxu0 %v7467
      %v7747 = vpop.f32.mrf.mxu0
      %v7748 = vadd.f32 0.0, %v7747
      %v7749 = vpop.f32.mrf.mxu0
      %v7750 = vpop.f32.mrf.mxu0
      %v7751 = vadd.f32 0.0, %v7750
      %v7752 = vpop.f32.mrf.mxu0
      %7753 = vmatprep.mubr.bf16.mxu0 0
      %7754 = vmatmul.mubr.bf16.gmra.mxu0 %v7470
      %v7755 = vpop.f32.mrf.mxu0
      %v7756 = vadd.f32 0.0, %v7755
      %v7757 = vpop.f32.mrf.mxu0
      %v7758 = vpop.f32.mrf.mxu0
      %v7759 = vadd.f32 0.0, %v7758
      %v7760 = vpop.f32.mrf.mxu0
      %7761 = vmatprep.mubr.bf16.mxu0 0
      %7762 = vmatmul.mubr.bf16.gmra.mxu0 %v7473
      %v7763 = vpop.f32.mrf.mxu0
      %v7764 = vadd.f32 0.0, %v7763
      %v7765 = vpop.f32.mrf.mxu0
      %v7766 = vpop.f32.mrf.mxu0
      %v7767 = vadd.f32 0.0, %v7766
      %v7768 = vpop.f32.mrf.mxu0
      %7769 = vmatprep.mubr.bf16.mxu0 0
      %7770 = vmatmul.mubr.bf16.gmra.mxu0 %v7476
      %v7771 = vpop.f32.mrf.mxu0
      %v7772 = vadd.f32 0.0, %v7771
      %v7773 = vpop.f32.mrf.mxu0
      %v7774 = vpop.f32.mrf.mxu0
      %v7775 = vadd.f32 0.0, %v7774
      %v7776 = vpop.f32.mrf.mxu0
      %7777 = vmatprep.mubr.bf16.mxu0 0
      %7778 = vmatmul.mubr.bf16.gmra.mxu0 %v7479
      %v7779 = vpop.f32.mrf.mxu0
      %v7780 = vadd.f32 0.0, %v7779
      %v7781 = vpop.f32.mrf.mxu0
      %v7782 = vpop.f32.mrf.mxu0
      %v7783 = vadd.f32 0.0, %v7782
      %v7784 = vpop.f32.mrf.mxu0
      %7785 = vmatprep.mubr.bf16.mxu0 0
      %7786 = vmatmul.mubr.bf16.gmra.mxu0 %v7482
      %v7787 = vpop.f32.mrf.mxu0
      %v7788 = vadd.f32 0.0, %v7787
      %v7789 = vpop.f32.mrf.mxu0
      %v7790 = vpop.f32.mrf.mxu0
      %v7791 = vadd.f32 0.0, %v7790
      %v7792 = vpop.f32.mrf.mxu0
      %7793 = vmatprep.mubr.bf16.mxu0 0
      %7794 = vmatmul.mubr.bf16.gmra.mxu0 %v7485
      %v7795 = vpop.f32.mrf.mxu0
      %v7796 = vadd.f32 0.0, %v7795
      %v7797 = vpop.f32.mrf.mxu0
      %v7798 = vpop.f32.mrf.mxu0
      %v7799 = vadd.f32 0.0, %v7798
      %v7800 = vpop.f32.mrf.mxu0
      %7801 = vmatprep.mubr.bf16.mxu0 0
      %7802 = vmatmul.mubr.bf16.gmra.mxu0 %v7488
      %v7803 = vpop.f32.mrf.mxu0
      %v7804 = vadd.f32 0.0, %v7803
      %v7805 = vpop.f32.mrf.mxu0
      %v7806 = vpop.f32.mrf.mxu0
      %v7807 = vadd.f32 0.0, %v7806
      %v7808 = vpop.f32.mrf.mxu0
      %7809 = vmatprep.mubr.bf16.mxu0 0
      %7810 = vmatmul.mubr.bf16.gmra.mxu0 %v7491
      %v7811 = vpop.f32.mrf.mxu0
      %v7812 = vadd.f32 0.0, %v7811
      %v7813 = vpop.f32.mrf.mxu0
      %v7814 = vpop.f32.mrf.mxu0
      %v7815 = vadd.f32 0.0, %v7814
      %v7816 = vpop.f32.mrf.mxu0
      %7817 = vmatprep.mubr.bf16.mxu0 0
      %7818 = vmatmul.mubr.bf16.gmra.mxu0 %v7494
      %v7819 = vpop.f32.mrf.mxu0
      %v7820 = vadd.f32 0.0, %v7819
      %v7821 = vpop.f32.mrf.mxu0
      %v7822 = vpop.f32.mrf.mxu0
      %v7823 = vadd.f32 0.0, %v7822
      %v7824 = vpop.f32.mrf.mxu0
      %7825 = vmatprep.mubr.bf16.mxu0 0
      %7826 = vmatmul.mubr.bf16.gmra.mxu0 %v7497
      %v7827 = vpop.f32.mrf.mxu0
      %v7828 = vadd.f32 0.0, %v7827
      %v7829 = vpop.f32.mrf.mxu0
      %v7830 = vpop.f32.mrf.mxu0
      %v7831 = vadd.f32 0.0, %v7830
      %v7832 = vpop.f32.mrf.mxu0
      %7833 = vmatprep.mubr.bf16.mxu0 0
      %7834 = vmatmul.mubr.bf16.gmra.mxu0 %v7500
      %v7835 = vpop.f32.mrf.mxu0
      %v7836 = vadd.f32 0.0, %v7835
      %v7837 = vpop.f32.mrf.mxu0
      %v7838 = vpop.f32.mrf.mxu0
      %v7839 = vadd.f32 0.0, %v7838
      %v7840 = vpop.f32.mrf.mxu0
      %7841 = vmatprep.mubr.bf16.mxu0 0
      %7842 = vmatmul.mubr.bf16.gmra.mxu0 %v7503
      %v7843 = vpop.f32.mrf.mxu0
      %v7844 = vadd.f32 0.0, %v7843
      %v7845 = vpop.f32.mrf.mxu0
      %v7846 = vpop.f32.mrf.mxu0
      %v7847 = vadd.f32 0.0, %v7846
      %v7848 = vpop.f32.mrf.mxu0
      %7849 = vmatprep.mubr.bf16.mxu0 0
      %7850 = vmatmul.mubr.bf16.gmra.mxu0 %v7506
      %v7851 = vpop.f32.mrf.mxu0
      %v7852 = vadd.f32 0.0, %v7851
      %v7853 = vpop.f32.mrf.mxu0
      %v7854 = vpop.f32.mrf.mxu0
      %v7855 = vadd.f32 0.0, %v7854
      %v7856 = vpop.f32.mrf.mxu0
      %7857 = vmatprep.mubr.bf16.mxu0 0
      %7858 = vmatmul.mubr.bf16.gmra.mxu0 %v7509
      %v7859 = vpop.f32.mrf.mxu0
      %v7860 = vadd.f32 0.0, %v7859
      %v7861 = vpop.f32.mrf.mxu0
      %v7862 = vpop.f32.mrf.mxu0
      %v7863 = vadd.f32 0.0, %v7862
      %v7864 = vpop.f32.mrf.mxu0
      %7865 = vmatprep.mubr.bf16.mxu0 0
      %7866 = vmatmul.mubr.bf16.gmra.mxu0 %v7512
      %v7867 = vpop.f32.mrf.mxu0
      %v7868 = vadd.f32 0.0, %v7867
      %v7869 = vpop.f32.mrf.mxu0
      %v7870 = vpop.f32.mrf.mxu0
      %v7871 = vadd.f32 0.0, %v7870
      %v7872 = vpop.f32.mrf.mxu0
      %7873 = vmatprep.mubr.bf16.mxu0 0
      %7874 = vmatmul.mubr.bf16.gmra.mxu0 %v7515
      %v7875 = vpop.f32.mrf.mxu0
      %v7876 = vadd.f32 0.0, %v7875
      %v7877 = vpop.f32.mrf.mxu0
      %v7878 = vpop.f32.mrf.mxu0
      %v7879 = vadd.f32 0.0, %v7878
      %v7880 = vpop.f32.mrf.mxu0
      %7881 = vmatprep.mubr.bf16.mxu0 0
      %7882 = vmatmul.mubr.bf16.gmra.mxu0 %v7518
      %v7883 = vpop.f32.mrf.mxu0
      %v7884 = vadd.f32 0.0, %v7883
      %v7885 = vpop.f32.mrf.mxu0
      %v7886 = vpop.f32.mrf.mxu0
      %v7887 = vadd.f32 0.0, %v7886
      %v7888 = vpop.f32.mrf.mxu0
      %7889 = vmatprep.mubr.bf16.mxu0 0
      %7890 = vmatmul.mubr.bf16.gmra.mxu0 %v7521
      %v7891 = vpop.f32.mrf.mxu0
      %v7892 = vadd.f32 0.0, %v7891
      %v7893 = vpop.f32.mrf.mxu0
      %v7894 = vpop.f32.mrf.mxu0
      %v7895 = vadd.f32 0.0, %v7894
      %v7896 = vpop.f32.mrf.mxu0
      %7897 = vmatprep.mubr.bf16.mxu0 0
      %7898 = vmatmul.mubr.bf16.gmra.mxu0 %v7524
      %v7899 = vpop.f32.mrf.mxu0
      %v7900 = vadd.f32 0.0, %v7899
      %v7901 = vpop.f32.mrf.mxu0
      %v7902 = vpop.f32.mrf.mxu0
      %v7903 = vadd.f32 0.0, %v7902
      %v7904 = vpop.f32.mrf.mxu0
      %7905 = vmatprep.mubr.bf16.mxu0 0
      %7906 = vmatmul.mubr.bf16.gmra.mxu0 %v7527
      %v7907 = vpop.f32.mrf.mxu0
      %v7908 = vadd.f32 0.0, %v7907
      %v7909 = vpop.f32.mrf.mxu0
      %v7910 = vpop.f32.mrf.mxu0
      %v7911 = vadd.f32 0.0, %v7910
      %v7912 = vpop.f32.mrf.mxu0
      %7913 = vmatprep.mubr.bf16.mxu0 0
      %7914 = vmatmul.mubr.bf16.gmra.mxu0 %v7530
      %v7915 = vpop.f32.mrf.mxu0
      %v7916 = vadd.f32 0.0, %v7915
      %v7917 = vpop.f32.mrf.mxu0
      %v7918 = vpop.f32.mrf.mxu0
      %v7919 = vadd.f32 0.0, %v7918
      %v7920 = vpop.f32.mrf.mxu0
      %7921 = vmatprep.mubr.bf16.mxu0 0
      %7922 = vmatmul.mubr.bf16.gmra.mxu0 %v7533
      %v7923 = vpop.f32.mrf.mxu0
      %v7924 = vadd.f32 0.0, %v7923
      %v7925 = vpop.f32.mrf.mxu0
      %v7926 = vpop.f32.mrf.mxu0
      %v7927 = vadd.f32 0.0, %v7926
      %v7928 = vpop.f32.mrf.mxu0
      %7929 = vmatprep.mubr.bf16.mxu0 0
      %7930 = vmatmul.mubr.bf16.gmra.mxu0 %v7536
      %v7931 = vpop.f32.mrf.mxu0
      %v7932 = vadd.f32 0.0, %v7931
      %v7933 = vpop.f32.mrf.mxu0
      %v7934 = vpop.f32.mrf.mxu0
      %v7935 = vadd.f32 0.0, %v7934
      %v7936 = vpop.f32.mrf.mxu0
      %7937 = vmatprep.mubr.bf16.mxu0 0
      %7938 = vmatmul.mubr.bf16.gmra.mxu0 %v7539
      %v7939 = vpop.f32.mrf.mxu0
      %v7940 = vadd.f32 0.0, %v7939
      %v7941 = vpop.f32.mrf.mxu0
      %v7942 = vpop.f32.mrf.mxu0
      %v7943 = vadd.f32 0.0, %v7942
      %v7944 = vpop.f32.mrf.mxu0
      %7945 = vmatprep.mubr.bf16.mxu0 0
      %7946 = vmatmul.mubr.bf16.gmra.mxu0 %v7542
      %v7947 = vpop.f32.mrf.mxu0
      %v7948 = vadd.f32 0.0, %v7947
      %v7949 = vpop.f32.mrf.mxu0
      %v7950 = vpop.f32.mrf.mxu0
      %v7951 = vadd.f32 0.0, %v7950
      %v7952 = vpop.f32.mrf.mxu0
      %7953 = vmatprep.mubr.bf16.mxu0 0
      %7954 = vmatmul.mubr.bf16.gmra.mxu0 %v7545
      %v7955 = vpop.f32.mrf.mxu0
      %v7956 = vadd.f32 0.0, %v7955
      %v7957 = vpop.f32.mrf.mxu0
      %v7958 = vpop.f32.mrf.mxu0
      %v7959 = vadd.f32 0.0, %v7958
      %v7960 = vpop.f32.mrf.mxu0
      %7961 = vmatprep.mubr.bf16.mxu0 0
      %7962 = vmatmul.mubr.bf16.gmra.mxu0 %v7548
      %v7963 = vpop.f32.mrf.mxu0
      %v7964 = vadd.f32 0.0, %v7963
      %v7965 = vpop.f32.mrf.mxu0
      %v7966 = vpop.f32.mrf.mxu0
      %v7967 = vadd.f32 0.0, %v7966
      %v7968 = vpop.f32.mrf.mxu0
      %7969 = vmatprep.mubr.bf16.mxu0 0
      %7970 = vmatmul.mubr.bf16.gmra.mxu0 %v7551
      %v7971 = vpop.f32.mrf.mxu0
      %v7972 = vadd.f32 0.0, %v7971
      %v7973 = vpop.f32.mrf.mxu0
      %v7974 = vpop.f32.mrf.mxu0
      %v7975 = vadd.f32 0.0, %v7974
      %v7976 = vpop.f32.mrf.mxu0
      %7977 = vmatprep.mubr.bf16.mxu0 0
      %7978 = vmatmul.mubr.bf16.gmra.mxu0 %v7554
      %v7979 = vpop.f32.mrf.mxu0
      %v7980 = vadd.f32 0.0, %v7979
      %v7981 = vpop.f32.mrf.mxu0
      %v7982 = vpop.f32.mrf.mxu0
      %v7983 = vadd.f32 0.0, %v7982
      %v7984 = vpop.f32.mrf.mxu0
      %7985 = vmatprep.mubr.bf16.mxu0 0
      %7986 = vmatmul.mubr.bf16.gmra.mxu0 %v7557
      %v7987 = vpop.f32.mrf.mxu0
      %v7988 = vadd.f32 0.0, %v7987
      %v7989 = vpop.f32.mrf.mxu0
      %v7990 = vpop.f32.mrf.mxu0
      %v7991 = vadd.f32 0.0, %v7990
      %v7992 = vpop.f32.mrf.mxu0
      %7993 = vmatprep.mubr.bf16.mxu0 0
      %7994 = vmatmul.mubr.bf16.gmra.mxu0 %v7560
      %v7995 = vpop.f32.mrf.mxu0
      %v7996 = vadd.f32 0.0, %v7995
      %v7997 = vpop.f32.mrf.mxu0
      %v7998 = vpop.f32.mrf.mxu0
      %v7999 = vadd.f32 0.0, %v7998
      %v8000 = vpop.f32.mrf.mxu0
      %8001 = vmatprep.mubr.bf16.mxu0 0
      %8002 = vmatmul.mubr.bf16.gmra.mxu0 %v7563
      %v8003 = vpop.f32.mrf.mxu0
      %v8004 = vadd.f32 0.0, %v8003
      %v8005 = vpop.f32.mrf.mxu0
      %v8006 = vpop.f32.mrf.mxu0
      %v8007 = vadd.f32 0.0, %v8006
      %v8008 = vpop.f32.mrf.mxu0
      %8009 = vmatprep.mubr.bf16.mxu0 0
      %8010 = vmatmul.mubr.bf16.gmra.mxu0 %v7566
      %v8011 = vpop.f32.mrf.mxu0
      %v8012 = vadd.f32 0.0, %v8011
      %v8013 = vpop.f32.mrf.mxu0
      %v8014 = vpop.f32.mrf.mxu0
      %v8015 = vadd.f32 0.0, %v8014
      %v8016 = vpop.f32.mrf.mxu0
      %8017 = vmatprep.mubr.bf16.mxu0 0
      %8018 = vmatmul.mubr.bf16.gmra.mxu0 %v7569
      %v8019 = vpop.f32.mrf.mxu0
      %v8020 = vadd.f32 0.0, %v8019
      %v8021 = vpop.f32.mrf.mxu0
      %v8022 = vpop.f32.mrf.mxu0
      %v8023 = vadd.f32 0.0, %v8022
      %v8024 = vpop.f32.mrf.mxu0
      %8025 = vmatprep.mubr.bf16.mxu0 0
      %8026 = vmatmul.mubr.bf16.gmra.mxu0 %v7572
      %v8027 = vpop.f32.mrf.mxu0
      %v8028 = vadd.f32 0.0, %v8027
      %v8029 = vpop.f32.mrf.mxu0
      %v8030 = vpop.f32.mrf.mxu0
      %v8031 = vadd.f32 0.0, %v8030
      %v8032 = vpop.f32.mrf.mxu0
      %8033 = vmatprep.mubr.bf16.mxu0 0
      %8034 = vmatmul.mubr.bf16.gmra.mxu0 %v7575
      %v8035 = vpop.f32.mrf.mxu0
      %v8036 = vadd.f32 0.0, %v8035
      %v8037 = vpop.f32.mrf.mxu0
      %v8038 = vpop.f32.mrf.mxu0
      %v8039 = vadd.f32 0.0, %v8038
      %v8040 = vpop.f32.mrf.mxu0
      %8041 = vmatprep.mubr.bf16.mxu0 0
      %8042 = vmatmul.mubr.bf16.gmra.mxu0 %v7578
      %v8043 = vpop.f32.mrf.mxu0
      %v8044 = vadd.f32 0.0, %v8043
      %v8045 = vpop.f32.mrf.mxu0
      %v8046 = vpop.f32.mrf.mxu0
      %v8047 = vadd.f32 0.0, %v8046
      %v8048 = vpop.f32.mrf.mxu0
      %8049 = vmatprep.mubr.bf16.mxu0 0
      %8050 = vmatmul.mubr.bf16.gmra.mxu0 %v7581
      %v8051 = vpop.f32.mrf.mxu0
      %v8052 = vadd.f32 0.0, %v8051
      %v8053 = vpop.f32.mrf.mxu0
      %v8054 = vpop.f32.mrf.mxu0
      %v8055 = vadd.f32 0.0, %v8054
      %v8056 = vpop.f32.mrf.mxu0
      %8057 = vmatprep.mubr.bf16.mxu0 0
      %8058 = vmatmul.mubr.bf16.gmra.mxu0 %v7584
      %v8059 = vpop.f32.mrf.mxu0
      %v8060 = vadd.f32 0.0, %v8059
      %v8061 = vpop.f32.mrf.mxu0
      %v8062 = vpop.f32.mrf.mxu0
      %v8063 = vadd.f32 0.0, %v8062
      %v8064 = vpop.f32.mrf.mxu0
      %8065 = vmatprep.mubr.bf16.mxu0 0
      %8066 = vmatmul.mubr.bf16.gmra.mxu0 %v7587
      %v8067 = vpop.f32.mrf.mxu0
      %v8068 = vadd.f32 0.0, %v8067
      %v8069 = vpop.f32.mrf.mxu0
      %v8070 = vpop.f32.mrf.mxu0
      %v8071 = vadd.f32 0.0, %v8070
      %v8072 = vpop.f32.mrf.mxu0
      %8073 = vmatprep.mubr.bf16.mxu0 0
      %8074 = vmatmul.mubr.bf16.gmra.mxu0 %v7590
      %v8075 = vpop.f32.mrf.mxu0
      %v8076 = vadd.f32 0.0, %v8075
      %v8077 = vpop.f32.mrf.mxu0
      %v8078 = vpop.f32.mrf.mxu0
      %v8079 = vadd.f32 0.0, %v8078
      %v8080 = vpop.f32.mrf.mxu0
      %8081 = vmatprep.mubr.bf16.mxu0 0
      %8082 = vmatmul.mubr.bf16.gmra.mxu0 %v7593
      %v8083 = vpop.f32.mrf.mxu0
      %v8084 = vadd.f32 0.0, %v8083
      %v8085 = vpop.f32.mrf.mxu0
      %v8086 = vpop.f32.mrf.mxu0
      %v8087 = vadd.f32 0.0, %v8086
      %v8088 = vpop.f32.mrf.mxu0
      %8089 = vmatprep.mubr.bf16.mxu0 0
      %8090 = vmatmul.mubr.bf16.gmra.mxu0 %v7596
      %v8091 = vpop.f32.mrf.mxu0
      %v8092 = vadd.f32 0.0, %v8091
      %v8093 = vpop.f32.mrf.mxu0
      %v8094 = vpop.f32.mrf.mxu0
      %v8095 = vadd.f32 0.0, %v8094
      %v8096 = vpop.f32.mrf.mxu0
      %8097 = vmatprep.mubr.bf16.mxu0 0
      %8098 = vmatmul.mubr.bf16.gmra.mxu0 %v7599
      %v8099 = vpop.f32.mrf.mxu0
      %v8100 = vadd.f32 0.0, %v8099
      %v8101 = vpop.f32.mrf.mxu0
      %v8102 = vpop.f32.mrf.mxu0
      %v8103 = vadd.f32 0.0, %v8102
      %v8104 = vpop.f32.mrf.mxu0
      %8105 = vmatprep.mubr.bf16.mxu0 0
      %8106 = vmatmul.mubr.bf16.gmra.mxu0 %v7602
      %v8107 = vpop.f32.mrf.mxu0
      %v8108 = vadd.f32 0.0, %v8107
      %v8109 = vpop.f32.mrf.mxu0
      %v8110 = vpop.f32.mrf.mxu0
      %v8111 = vadd.f32 0.0, %v8110
      %v8112 = vpop.f32.mrf.mxu0
      %8113 = vmatprep.mubr.bf16.mxu0 0
      %8114 = vmatmul.mubr.bf16.gmra.mxu0 %v7605
      %v8115 = vpop.f32.mrf.mxu0
      %v8116 = vadd.f32 0.0, %v8115
      %v8117 = vpop.f32.mrf.mxu0
      %v8118 = vpop.f32.mrf.mxu0
      %v8119 = vadd.f32 0.0, %v8118
      %v8120 = vpop.f32.mrf.mxu0
      %8121 = vmatprep.mubr.bf16.mxu0 0
      %8122 = vmatmul.mubr.bf16.gmra.mxu0 %v7608
      %v8123 = vpop.f32.mrf.mxu0
      %v8124 = vadd.f32 0.0, %v8123
      %v8125 = vpop.f32.mrf.mxu0
      %v8126 = vpop.f32.mrf.mxu0
      %v8127 = vadd.f32 0.0, %v8126
      %v8128 = vpop.f32.mrf.mxu0
      %8129 = vmatprep.mubr.bf16.mxu0 0
      %8130 = vmatmul.mubr.bf16.gmra.mxu0 %v7611
      %v8131 = vpop.f32.mrf.mxu0
      %v8132 = vadd.f32 0.0, %v8131
      %v8133 = vpop.f32.mrf.mxu0
      %v8134 = vpop.f32.mrf.mxu0
      %v8135 = vadd.f32 0.0, %v8134
      %v8136 = vpop.f32.mrf.mxu0
      %8137 = vmatprep.mubr.bf16.mxu0 0
      %8138 = vmatmul.mubr.bf16.gmra.mxu0 %v7614
      %v8139 = vpop.f32.mrf.mxu0
      %v8140 = vadd.f32 0.0, %v8139
      %v8141 = vpop.f32.mrf.mxu0
      %v8142 = vpop.f32.mrf.mxu0
      %v8143 = vadd.f32 0.0, %v8142
      %v8144 = vpop.f32.mrf.mxu0
      %8145 = vmatprep.mubr.bf16.mxu0 0
      %8146 = vmatmul.mubr.bf16.gmra.mxu0 %v7617
      %v8147 = vpop.f32.mrf.mxu0
      %v8148 = vadd.f32 0.0, %v8147
      %v8149 = vpop.f32.mrf.mxu0
      %v8150 = vpop.f32.mrf.mxu0
      %v8151 = vadd.f32 0.0, %v8150
      %v8152 = vpop.f32.mrf.mxu0
      %8153 = vmatprep.mubr.bf16.mxu0 0
      %8154 = vmatmul.mubr.bf16.gmra.mxu0 %v7620
      %v8155 = vpop.f32.mrf.mxu0
      %v8156 = vadd.f32 0.0, %v8155
      %v8157 = vpop.f32.mrf.mxu0
      %v8158 = vpop.f32.mrf.mxu0
      %v8159 = vadd.f32 0.0, %v8158
      %v8160 = vpop.f32.mrf.mxu0
      %8161 = vmatprep.mubr.bf16.mxu0 0
      %8162 = vmatmul.mubr.bf16.gmra.mxu0 %v7623
      %v8163 = vpop.f32.mrf.mxu0
      %v8164 = vadd.f32 0.0, %v8163
      %v8165 = vpop.f32.mrf.mxu0
      %v8166 = vpop.f32.mrf.mxu0
      %v8167 = vadd.f32 0.0, %v8166
      %v8168 = vpop.f32.mrf.mxu0
      %8169 = vmatprep.mubr.bf16.mxu0 0
      %8170 = vmatmul.mubr.bf16.gmra.mxu0 %v7626
      %v8171 = vpop.f32.mrf.mxu0
      %v8172 = vadd.f32 0.0, %v8171
      %v8173 = vpop.f32.mrf.mxu0
      %v8174 = vpop.f32.mrf.mxu0
      %v8175 = vadd.f32 0.0, %v8174
      %v8176 = vpop.f32.mrf.mxu0
      %8177 = vmatprep.mubr.bf16.mxu0 0
      %8178 = vmatmul.mubr.bf16.gmra.mxu0 %v7629
      %v8179 = vpop.f32.mrf.mxu0
      %v8180 = vadd.f32 0.0, %v8179
      %v8181 = vpop.f32.mrf.mxu0
      %v8182 = vpop.f32.mrf.mxu0
      %v8183 = vadd.f32 0.0, %v8182
      %v8184 = vpop.f32.mrf.mxu0
      %8185 = vmatprep.mubr.bf16.mxu0 0
      %8186 = vmatmul.mubr.bf16.gmra.mxu0 %v7632
      %v8187 = vpop.f32.mrf.mxu0
      %v8188 = vadd.f32 0.0, %v8187
      %v8189 = vpop.f32.mrf.mxu0
      %v8190 = vpop.f32.mrf.mxu0
      %v8191 = vadd.f32 0.0, %v8190
      %v8192 = vpop.f32.mrf.mxu0
      %8193 = vmatprep.mubr.bf16.mxu0 0
      %8194 = vmatmul.mubr.bf16.gmra.mxu0 %v7635
      %v8195 = vpop.f32.mrf.mxu0
      %v8196 = vadd.f32 0.0, %v8195
      %v8197 = vpop.f32.mrf.mxu0
      %v8198 = vpop.f32.mrf.mxu0
      %v8199 = vadd.f32 0.0, %v8198
      %v8200 = vpop.f32.mrf.mxu0
      %8201 = vmatprep.mubr.bf16.mxu0 0
      %8202 = vmatmul.mubr.bf16.gmra.mxu0 %v7638
      %v8203 = vpop.f32.mrf.mxu0
      %v8204 = vadd.f32 0.0, %v8203
      %v8205 = vpop.f32.mrf.mxu0
      %v8206 = vpop.f32.mrf.mxu0
      %v8207 = vadd.f32 0.0, %v8206
      %v8208 = vpop.f32.mrf.mxu0
      %8209 = vmatprep.mubr.bf16.mxu0 0
      %8210 = vmatmul.mubr.bf16.gmra.mxu0 %v7641
      %v8211 = vpop.f32.mrf.mxu0
      %v8212 = vadd.f32 0.0, %v8211
      %v8213 = vpop.f32.mrf.mxu0
      %v8214 = vpop.f32.mrf.mxu0
      %v8215 = vadd.f32 0.0, %v8214
      %v8216 = vpop.f32.mrf.mxu0
      %8217 = vmatprep.mubr.bf16.mxu0 0
      %8218 = vmatmul.mubr.bf16.gmra.mxu0 %v7644
      %v8219 = vpop.f32.mrf.mxu0
      %v8220 = vadd.f32 0.0, %v8219
      %v8221 = vpop.f32.mrf.mxu0
      %v8222 = vpop.f32.mrf.mxu0
      %v8223 = vadd.f32 0.0, %v8222
      %v8224 = vpop.f32.mrf.mxu0
      %8225 = vmatprep.mubr.bf16.mxu0 0
      %8226 = vmatmul.mubr.bf16.gmra.mxu0 %v7647
      %v8227 = vpop.f32.mrf.mxu0
      %v8228 = vadd.f32 0.0, %v8227
      %v8229 = vpop.f32.mrf.mxu0
      %v8230 = vpop.f32.mrf.mxu0
      %v8231 = vadd.f32 0.0, %v8230
      %v8232 = vpop.f32.mrf.mxu0
      %8233 = vmatprep.mubr.bf16.mxu0 0
      %8234 = vmatmul.mubr.bf16.gmra.mxu0 %v7650
      %v8235 = vpop.f32.mrf.mxu0
      %v8236 = vadd.f32 0.0, %v8235
      %v8237 = vpop.f32.mrf.mxu0
      %v8238 = vpop.f32.mrf.mxu0
      %v8239 = vadd.f32 0.0, %v8238
      %v8240 = vpop.f32.mrf.mxu0
      %8241 = vmatprep.mubr.bf16.mxu0 0
      %8242 = vmatmul.mubr.bf16.gmra.mxu0 %v7653
      %v8243 = vpop.f32.mrf.mxu0
      %v8244 = vadd.f32 0.0, %v8243
      %v8245 = vpop.f32.mrf.mxu0
      %v8246 = vpop.f32.mrf.mxu0
      %v8247 = vadd.f32 0.0, %v8246
      %v8248 = vpop.f32.mrf.mxu0
      %8249 = vmatprep.mubr.bf16.mxu0 0
      %8250 = vmatmul.mubr.bf16.gmra.mxu0 %v7656
      %v8251 = vpop.f32.mrf.mxu0
      %v8252 = vadd.f32 0.0, %v8251
      %v8253 = vpop.f32.mrf.mxu0
      %v8254 = vpop.f32.mrf.mxu0
      %v8255 = vadd.f32 0.0, %v8254
      %v8256 = vpop.f32.mrf.mxu0
      %8257 = vmatprep.mubr.bf16.mxu0 0
      %8258 = vmatmul.mubr.bf16.gmra.mxu0 %v7659
      %v8259 = vpop.f32.mrf.mxu0
      %v8260 = vadd.f32 0.0, %v8259
      %v8261 = vpop.f32.mrf.mxu0
      %v8262 = vpop.f32.mrf.mxu0
      %v8263 = vadd.f32 0.0, %v8262
      %v8264 = vpop.f32.mrf.mxu0
      %8265 = vmatprep.mubr.bf16.mxu0 0
      %8266 = vmatmul.mubr.bf16.gmra.mxu0 %v7662
      %v8267 = vpop.f32.mrf.mxu0
      %v8268 = vadd.f32 0.0, %v8267
      %v8269 = vpop.f32.mrf.mxu0
      %v8270 = vpop.f32.mrf.mxu0
      %v8271 = vadd.f32 0.0, %v8270
      %v8272 = vpop.f32.mrf.mxu0
      %8273 = vmatprep.mubr.bf16.mxu0 0
      %8274 = vmatmul.mubr.bf16.gmra.mxu0 %v7665
      %v8275 = vpop.f32.mrf.mxu0
      %v8276 = vadd.f32 0.0, %v8275
      %v8277 = vpop.f32.mrf.mxu0
      %v8278 = vpop.f32.mrf.mxu0
      %v8279 = vadd.f32 0.0, %v8278
      %v8280 = vpop.f32.mrf.mxu0
      %8281 = vmatprep.mubr.bf16.mxu0 0
      %8282 = vmatmul.mubr.bf16.gmra.mxu0 %v7668
      %v8283 = vpop.f32.mrf.mxu0
      %v8284 = vadd.f32 0.0, %v8283
      %v8285 = vpop.f32.mrf.mxu0
      %v8286 = vpop.f32.mrf.mxu0
      %v8287 = vpop.f32.mrf.mxu0
      %8288 = vdwg.mxu0
      %v8289 = vadd.f32 %v7154, %v7708
      %v8290 = vadd.f32 %v7155, %v7711
      %v8291 = vadd.f32 %v7156, %v7716
      %v8292 = vadd.f32 %v7157, %v7719
      %v8293 = vadd.f32 %v7158, %v7724
      %v8294 = vadd.f32 %v7159, %v7727
      %v8295 = vadd.f32 %v7160, %v7732
      %v8296 = vadd.f32 %v7161, %v7735
      %v8297 = vadd.f32 %v7162, %v7740
      %v8298 = vadd.f32 %v7163, %v7743
      %v8299 = vadd.f32 %v7164, %v7748
      %v8300 = vadd.f32 %v7165, %v7751
      %v8301 = vadd.f32 %v7166, %v7756
      %v8302 = vadd.f32 %v7167, %v7759
      %v8303 = vadd.f32 %v7168, %v7764
      %v8304 = vadd.f32 %v7169, %v7767
      %v8305 = vadd.f32 %v7170, %v7772
      %v8306 = vadd.f32 %v7171, %v7775
      %v8307 = vadd.f32 %v7172, %v7780
      %v8308 = vadd.f32 %v7173, %v7783
      %v8309 = vadd.f32 %v7174, %v7788
      %v8310 = vadd.f32 %v7175, %v7791
      %v8311 = vadd.f32 %v7176, %v7796
      %v8312 = vadd.f32 %v7177, %v7799
      %v8313 = vadd.f32 %v7178, %v7804
      %v8314 = vadd.f32 %v7179, %v7807
      %v8315 = vadd.f32 %v7180, %v7812
      %v8316 = vadd.f32 %v7181, %v7815
      %v8317 = vadd.f32 %v7182, %v7820
      %v8318 = vadd.f32 %v7183, %v7823
      %v8319 = vadd.f32 %v7184, %v7828
      %v8320 = vadd.f32 %v7185, %v7831
      %v8321 = vadd.f32 %v7186, %v7836
      %v8322 = vadd.f32 %v7187, %v7839
      %v8323 = vadd.f32 %v7188, %v7844
      %v8324 = vadd.f32 %v7189, %v7847
      %v8325 = vadd.f32 %v7190, %v7852
      %v8326 = vadd.f32 %v7191, %v7855
      %v8327 = vadd.f32 %v7192, %v7860
      %v8328 = vadd.f32 %v7193, %v7863
      %v8329 = vadd.f32 %v7194, %v7868
      %v8330 = vadd.f32 %v7195, %v7871
      %v8331 = vadd.f32 %v7196, %v7876
      %v8332 = vadd.f32 %v7197, %v7879
      %v8333 = vadd.f32 %v7198, %v7884
      %v8334 = vadd.f32 %v7199, %v7887
      %v8335 = vadd.f32 %v7200, %v7892
      %v8336 = vadd.f32 %v7201, %v7895
      %v8337 = vadd.f32 %v7202, %v7900
      %v8338 = vadd.f32 %v7203, %v7903
      %v8339 = vadd.f32 %v7204, %v7908
      %v8340 = vadd.f32 %v7205, %v7911
      %v8341 = vadd.f32 %v7206, %v7916
      %v8342 = vadd.f32 %v7207, %v7919
      %v8343 = vadd.f32 %v7208, %v7924
      %v8344 = vadd.f32 %v7209, %v7927
      %v8345 = vadd.f32 %v7210, %v7932
      %v8346 = vadd.f32 %v7211, %v7935
      %v8347 = vadd.f32 %v7212, %v7940
      %v8348 = vadd.f32 %v7213, %v7943
      %v8349 = vadd.f32 %v7214, %v7948
      %v8350 = vadd.f32 %v7215, %v7951
      %v8351 = vadd.f32 %v7216, %v7956
      %v8352 = vadd.f32 %v7217, %v7959
      %v8353 = vadd.f32 %v7218, %v7964
      %v8354 = vadd.f32 %v7219, %v7967
      %v8355 = vadd.f32 %v7220, %v7972
      %v8356 = vadd.f32 %v7221, %v7975
      %v8357 = vadd.f32 %v7222, %v7980
      %v8358 = vadd.f32 %v7223, %v7983
      %v8359 = vadd.f32 %v7224, %v7988
      %v8360 = vadd.f32 %v7225, %v7991
      %v8361 = vadd.f32 %v7226, %v7996
      %v8362 = vadd.f32 %v7227, %v7999
      %v8363 = vadd.f32 %v7228, %v8004
      %v8364 = vadd.f32 %v7229, %v8007
      %v8365 = vadd.f32 %v7230, %v8012
      %v8366 = vadd.f32 %v7231, %v8015
      %v8367 = vadd.f32 %v7232, %v8020
      %v8368 = vadd.f32 %v7233, %v8023
      %v8369 = vadd.f32 %v7234, %v8028
      %v8370 = vadd.f32 %v7235, %v8031
      %v8371 = vadd.f32 %v7236, %v8036
      %v8372 = vadd.f32 %v7237, %v8039
      %v8373 = vadd.f32 %v7238, %v8044
      %v8374 = vadd.f32 %v7239, %v8047
      %v8375 = vadd.f32 %v7240, %v8052
      %v8376 = vadd.f32 %v7241, %v8055
      %v8377 = vadd.f32 %v7242, %v8060
      %v8378 = vadd.f32 %v7243, %v8063
      %v8379 = vadd.f32 %v7244, %v8068
      %v8380 = vadd.f32 %v7245, %v8071
      %v8381 = vadd.f32 %v7246, %v8076
      %v8382 = vadd.f32 %v7247, %v8079
      %v8383 = vadd.f32 %v7248, %v8084
      %v8384 = vadd.f32 %v7249, %v8087
      %v8385 = vadd.f32 %v7250, %v8092
      %v8386 = vadd.f32 %v7251, %v8095
      %v8387 = vadd.f32 %v7252, %v8100
      %v8388 = vadd.f32 %v7253, %v8103
      %v8389 = vadd.f32 %v7254, %v8108
      %v8390 = vadd.f32 %v7255, %v8111
      %v8391 = vadd.f32 %v7256, %v8116
      %v8392 = vadd.f32 %v7257, %v8119
      %v8393 = vadd.f32 %v7258, %v8124
      %v8394 = vadd.f32 %v7259, %v8127
      %v8395 = vadd.f32 %v7260, %v8132
      %v8396 = vadd.f32 %v7261, %v8135
      %v8397 = vadd.f32 %v7262, %v8140
      %v8398 = vadd.f32 %v7263, %v8143
      %v8399 = vadd.f32 %v7264, %v8148
      %v8400 = vadd.f32 %v7265, %v8151
      %v8401 = vadd.f32 %v7266, %v8156
      %v8402 = vadd.f32 %v7267, %v8159
      %v8403 = vadd.f32 %v7268, %v8164
      %v8404 = vadd.f32 %v7269, %v8167
      %v8405 = vadd.f32 %v7270, %v8172
      %v8406 = vadd.f32 %v7271, %v8175
      %v8407 = vadd.f32 %v7272, %v8180
      %v8408 = vadd.f32 %v7273, %v8183
      %v8409 = vadd.f32 %v7274, %v8188
      %v8410 = vadd.f32 %v7275, %v8191
      %v8411 = vadd.f32 %v7276, %v8196
      %v8412 = vadd.f32 %v7277, %v8199
      %v8413 = vadd.f32 %v7278, %v8204
      %v8414 = vadd.f32 %v7279, %v8207
      %v8415 = vadd.f32 %v7280, %v8212
      %v8416 = vadd.f32 %v7281, %v8215
      %v8417 = vadd.f32 %v7282, %v8220
      %v8418 = vadd.f32 %v7283, %v8223
      %v8419 = vadd.f32 %v7284, %v8228
      %v8420 = vadd.f32 %v7285, %v8231
      %v8421 = vadd.f32 %v7286, %v8236
      %v8422 = vadd.f32 %v7287, %v8239
      %v8423 = vadd.f32 %v7288, %v8244
      %v8424 = vadd.f32 %v7289, %v8247
      %v8425 = vadd.f32 %v7290, %v8252
      %v8426 = vadd.f32 %v7291, %v8255
      %v8427 = vadd.f32 %v7292, %v8260
      %v8428 = vadd.f32 %v7293, %v8263
      %v8429 = vadd.f32 %v7294, %v8268
      %v8430 = vadd.f32 %v7295, %v8271
      %v8431 = vadd.f32 %v7296, %v8276
      %v8432 = vadd.f32 %v7297, %v8279
      %v8433 = vadd.f32 %v7298, %v8284
      %v8434 = vld [vmem:[%s165 + $0x20] sm:$0xc]
      %v8435 = vld [vmem:[%s165 + $0x24] sm:$0xf]
      %v8436 = vld [vmem:[%s165 + $0x28] sm:$0xf]
      %v8437 = vld [vmem:[%s165 + $0x2c] sm:$0xf]
      %v8438 = vld [vmem:[%s165 + $0x30] sm:$0xf]
      %v8439 = vld [vmem:[%s165 + $0x34] sm:$0xf]
      %v8440 = vld [vmem:[%s165 + $0x38] sm:$0xf]
      %v8441 = vld [vmem:[%s165 + $0x3c] sm:$0xf]
      %v8442 = vld [vmem:[%s165 + $0x40] sm:$0xf]
      %v8443 = vld [vmem:[%s165 + $0x44] sm:$0xf]
      %v8444 = vld [vmem:[%s165 + $0x48] sm:$0xf]
      %v8445 = vld [vmem:[%s165 + $0x4c] sm:$0xf]
      %v8446 = vld [vmem:[%s165 + $0x50] sm:$0xf]
      %v8447 = vld [vmem:[%s165 + $0x54] sm:$0xf]
      %v8448 = vld [vmem:[%s165 + $0x58] sm:$0xf]
      %v8449 = vld [vmem:[%s165 + $0x5c] sm:$0xf]
      %v8450 = vld [vmem:[%s165 + $0x60] sm:$0xf]
      %v8451 = vld [vmem:[%s165 + $0x64] sm:$0xf]
      %v8452 = vld [vmem:[%s165 + $0x68] sm:$0xf]
      %v8453 = vld [vmem:[%s165 + $0x6c] sm:$0xf]
      %v8454 = vld [vmem:[%s165 + $0x70] sm:$0xf]
      %v8455 = vld [vmem:[%s165 + $0x74] sm:$0xf]
      %v8456 = vld [vmem:[%s165 + $0x78] sm:$0xf]
      %v8457 = vld [vmem:[%s165 + $0x7c] sm:$0xf]
      %v8458 = vld [vmem:[%s165 + $0x80] sm:$0xf]
      %v8459 = vld [vmem:[%s165 + $0x84] sm:$0xf]
      %v8460 = vld [vmem:[%s165 + $0x88] sm:$0xf]
      %v8461 = vld [vmem:[%s165 + $0x8c] sm:$0xf]
      %v8462 = vld [vmem:[%s165 + $0x90] sm:$0xf]
      %v8463 = vld [vmem:[%s165 + $0x94] sm:$0xf]
      %v8464 = vld [vmem:[%s165 + $0x98] sm:$0xf]
      %v8465 = vld [vmem:[%s165 + $0x9c] sm:$0xf]
      %v8466 = vld [vmem:[%s165 + $0xa0] sm:$0xf]
      %v8467 = vld [vmem:[%s165 + $0xa4] sm:$0xf]
      %v8468 = vld [vmem:[%s165 + $0xa8] sm:$0xf]
      %v8469 = vld [vmem:[%s165 + $0xac] sm:$0xf]
      %v8470 = vld [vmem:[%s165 + $0xb0] sm:$0xf]
      %v8471 = vld [vmem:[%s165 + $0xb4] sm:$0xf]
      %v8472 = vld [vmem:[%s165 + $0xb8] sm:$0xf]
      %v8473 = vld [vmem:[%s165 + $0xbc] sm:$0xf]
      %v8474 = vld [vmem:[%s165 + $0xc0] sm:$0xf]
      %v8475 = vld [vmem:[%s165 + $0xc4] sm:$0xf]
      %v8476 = vld [vmem:[%s165 + $0xc8] sm:$0xf]
      %v8477 = vld [vmem:[%s165 + $0xcc] sm:$0xf]
      %v8478 = vld [vmem:[%s165 + $0xd0] sm:$0xf]
      %v8479 = vld [vmem:[%s165 + $0xd4] sm:$0xf]
      %v8480 = vld [vmem:[%s165 + $0xd8] sm:$0xf]
      %v8481 = vld [vmem:[%s165 + $0xdc] sm:$0xf]
      %v8482 = vld [vmem:[%s165 + $0xe0] sm:$0xf]
      %v8483 = vld [vmem:[%s165 + $0xe4] sm:$0xf]
      %v8484 = vld [vmem:[%s165 + $0xe8] sm:$0xf]
      %v8485 = vld [vmem:[%s165 + $0xec] sm:$0xf]
      %v8486 = vld [vmem:[%s165 + $0xf0] sm:$0xf]
      %v8487 = vld [vmem:[%s165 + $0xf4] sm:$0xf]
      %v8488 = vld [vmem:[%s165 + $0xf8] sm:$0xf]
      %v8489 = vld [vmem:[%s165 + $0xfc] sm:$0xf]
      %v8490 = vld [vmem:[%s165 + $0x100] sm:$0xf]
      %v8491 = vld [vmem:[%s165 + $0x104] sm:$0xf]
      %v8492 = vld [vmem:[%s165 + $0x108] sm:$0xf]
      %v8493 = vld [vmem:[%s165 + $0x10c] sm:$0xf]
      %v8494 = vld [vmem:[%s165 + $0x110] sm:$0xf]
      %v8495 = vld [vmem:[%s165 + $0x114] sm:$0xf]
      %v8496 = vld [vmem:[%s165 + $0x118] sm:$0xf]
      %v8497 = vld [vmem:[%s165 + $0x11c] sm:$0xf]
      %v8498 = vld [vmem:[%s165 + $0x120] sm:$0xf]
      %v8499 = vld [vmem:[%s165 + $0x124] sm:$0xf]
      %v8500 = vld [vmem:[%s165 + $0x128] sm:$0xf]
      %v8501 = vld [vmem:[%s165 + $0x12c] sm:$0xf]
      %v8502 = vld [vmem:[%s165 + $0x130] sm:$0xf]
      %v8503 = vld [vmem:[%s165 + $0x134] sm:$0xf]
      %v8504 = vld [vmem:[%s165 + $0x138] sm:$0xf]
      %v8505 = vld [vmem:[%s165 + $0x13c] sm:$0xf]
      %v8506 = vld [vmem:[%s165 + $0x140] sm:$0xf]
      %v8507 = vld [vmem:[%s165 + $0x144] sm:$0xf]
      %v8508 = vld [vmem:[%s165 + $0x148] sm:$0xf]
      %v8509 = vld [vmem:[%s165 + $0x14c] sm:$0xf]
      %v8510 = vld [vmem:[%s165 + $0x150] sm:$0xf]
      %v8511 = vld [vmem:[%s165 + $0x154] sm:$0xf]
      %v8512 = vld [vmem:[%s165 + $0x158] sm:$0xf]
      %v8513 = vld [vmem:[%s165 + $0x15c] sm:$0xf]
      %v8514 = vld [vmem:[%s165 + $0x160] sm:$0xf]
      %v8515 = vld [vmem:[%s165 + $0x164] sm:$0xf]
      %v8516 = vld [vmem:[%s165 + $0x168] sm:$0xf]
      %v8517 = vld [vmem:[%s165 + $0x16c] sm:$0xf]
      %v8518 = vld [vmem:[%s165 + $0x170] sm:$0xf]
      %v8519 = vld [vmem:[%s165 + $0x174] sm:$0xf]
      %v8520 = vld [vmem:[%s165 + $0x178] sm:$0xf]
      %v8521 = vld [vmem:[%s165 + $0x17c] sm:$0xf]
      %v8522 = vld [vmem:[%s165 + $0x180] sm:$0xf]
      %v8523 = vld [vmem:[%s165 + $0x184] sm:$0xf]
      %v8524 = vld [vmem:[%s165 + $0x188] sm:$0xf]
      %v8525 = vld [vmem:[%s165 + $0x18c] sm:$0xf]
      %v8526 = vld [vmem:[%s165 + $0x190] sm:$0xf]
      %v8527 = vld [vmem:[%s165 + $0x194] sm:$0xf]
      %v8528 = vld [vmem:[%s165 + $0x198] sm:$0xf]
      %v8529 = vld [vmem:[%s165 + $0x19c] sm:$0xf]
      %v8530 = vld [vmem:[%s165 + $0x1a0] sm:$0xf]
      %v8531 = vld [vmem:[%s165 + $0x1a4] sm:$0xf]
      %v8532 = vld [vmem:[%s165 + $0x1a8] sm:$0xf]
      %v8533 = vld [vmem:[%s165 + $0x1ac] sm:$0xf]
      %v8534 = vld [vmem:[%s165 + $0x1b0] sm:$0xf]
      %v8535 = vld [vmem:[%s165 + $0x1b4] sm:$0xf]
      %v8536 = vld [vmem:[%s165 + $0x1b8] sm:$0xf]
      %v8537 = vld [vmem:[%s165 + $0x1bc] sm:$0xf]
      %v8538 = vld [vmem:[%s165 + $0x1c0] sm:$0xf]
      %v8539 = vld [vmem:[%s165 + $0x1c4] sm:$0xf]
      %v8540 = vld [vmem:[%s165 + $0x1c8] sm:$0xf]
      %v8541 = vld [vmem:[%s165 + $0x1cc] sm:$0xf]
      %v8542 = vld [vmem:[%s165 + $0x1d0] sm:$0xf]
      %v8543 = vld [vmem:[%s165 + $0x1d4] sm:$0xf]
      %v8544 = vld [vmem:[%s165 + $0x1d8] sm:$0xf]
      %v8545 = vld [vmem:[%s165 + $0x1dc] sm:$0xf]
      %v8546 = vld [vmem:[%s165 + $0x1e0] sm:$0xf]
      %v8547 = vld [vmem:[%s165 + $0x1e4] sm:$0xf]
      %v8548 = vld [vmem:[%s165 + $0x1e8] sm:$0xf]
      %v8549 = vld [vmem:[%s165 + $0x1ec] sm:$0xf]
      %v8550 = vld [vmem:[%s165 + $0x1f0] sm:$0xf]
      %v8551 = vld [vmem:[%s165 + $0x1f4] sm:$0xf]
      %v8552 = vld [vmem:[%s165 + $0x1f8] sm:$0xf]
      %v8553 = vld [vmem:[%s165 + $0x1fc] sm:$0xf]
      %v8554 = vld [vmem:[%s165 + $0x200] sm:$0xf]
      %v8555 = vld [vmem:[%s165 + $0x204] sm:$0xf]
      %v8556 = vld [vmem:[%s165 + $0x208] sm:$0xf]
      %v8557 = vld [vmem:[%s165 + $0x20c] sm:$0xf]
      %v8558 = vld [vmem:[%s165 + $0x210] sm:$0xf]
      %v8559 = vld [vmem:[%s165 + $0x214] sm:$0xf]
      %v8560 = vld [vmem:[%s165 + $0x218] sm:$0xf]
      %v8561 = vld [vmem:[%s165 + $0x21c] sm:$0xf]
      %v8562 = vld [vmem:[%s165 + $0x220] sm:$0xf]
      %v8563 = vld [vmem:[%s165 + $0x224] sm:$0xf]
      %v8564 = vld [vmem:[%s165 + $0x228] sm:$0xf]
      %v8565 = vld [vmem:[%s165 + $0x22c] sm:$0xf]
      %v8566 = vld [vmem:[%s165 + $0x230] sm:$0xf]
      %v8567 = vld [vmem:[%s165 + $0x234] sm:$0xf]
      %v8568 = vld [vmem:[%s165 + $0x238] sm:$0xf]
      %v8569 = vld [vmem:[%s165 + $0x23c] sm:$0xf]
      %v8570 = vld [vmem:[%s165 + $0x240] sm:$0xf]
      %v8571 = vld [vmem:[%s165 + $0x244] sm:$0xf]
      %v8572 = vld [vmem:[%s165 + $0x248] sm:$0xf]
      %v8573 = vld [vmem:[%s165 + $0x24c] sm:$0xf]
      %v8574 = vld [vmem:[%s165 + $0x250] sm:$0xf]
      %v8575 = vld [vmem:[%s165 + $0x254] sm:$0xf]
      %v8576 = vld [vmem:[%s165 + $0x258] sm:$0xf]
      %v8577 = vld [vmem:[%s165 + $0x25c] sm:$0xf]
      %v8578 = vld [vmem:[%s165 + $0x260] sm:$0xf]
      %s8579 = scalar_lea.vmem %s1, 12
      %v8580 = vld [vmem:[%s8579] sm:$0x3]
      %v8726 = vunpack.c.l.b16 %v8434
      %v8727 = vunpack.c.l.b16 %v8435
      %v8728 = vunpack.c.l.b16 %v8436
      %v8729 = vunpack.c.l.b16 %v8437
      %v8730 = vunpack.c.l.b16 %v8438
      %v8731 = vunpack.c.l.b16 %v8439
      %v8732 = vunpack.c.l.b16 %v8440
      %v8733 = vunpack.c.l.b16 %v8441
      %v8734 = vunpack.c.l.b16 %v8442
      %v8735 = vunpack.c.l.b16 %v8443
      %v8736 = vunpack.c.l.b16 %v8444
      %v8737 = vunpack.c.l.b16 %v8445
      %v8738 = vunpack.c.l.b16 %v8446
      %v8739 = vunpack.c.l.b16 %v8447
      %v8740 = vunpack.c.l.b16 %v8448
      %v8741 = vunpack.c.l.b16 %v8449
      %v8742 = vunpack.c.l.b16 %v8450
      %v8743 = vunpack.c.l.b16 %v8451
      %v8744 = vunpack.c.l.b16 %v8452
      %v8745 = vunpack.c.l.b16 %v8453
      %v8746 = vunpack.c.l.b16 %v8454
      %v8747 = vunpack.c.l.b16 %v8455
      %v8748 = vunpack.c.l.b16 %v8456
      %v8749 = vunpack.c.l.b16 %v8457
      %v8750 = vunpack.c.l.b16 %v8458
      %v8751 = vunpack.c.l.b16 %v8459
      %v8752 = vunpack.c.l.b16 %v8460
      %v8753 = vunpack.c.l.b16 %v8461
      %v8754 = vunpack.c.l.b16 %v8462
      %v8755 = vunpack.c.l.b16 %v8463
      %v8756 = vunpack.c.l.b16 %v8464
      %v8757 = vunpack.c.l.b16 %v8465
      %v8758 = vunpack.c.l.b16 %v8466
      %v8759 = vunpack.c.l.b16 %v8467
      %v8760 = vunpack.c.l.b16 %v8468
      %v8761 = vunpack.c.l.b16 %v8469
      %v8762 = vunpack.c.l.b16 %v8470
      %v8763 = vunpack.c.l.b16 %v8471
      %v8764 = vunpack.c.l.b16 %v8472
      %v8765 = vunpack.c.l.b16 %v8473
      %v8766 = vunpack.c.l.b16 %v8474
      %v8767 = vunpack.c.l.b16 %v8475
      %v8768 = vunpack.c.l.b16 %v8476
      %v8769 = vunpack.c.l.b16 %v8477
      %v8770 = vunpack.c.l.b16 %v8478
      %v8771 = vunpack.c.l.b16 %v8479
      %v8772 = vunpack.c.l.b16 %v8480
      %v8773 = vunpack.c.l.b16 %v8481
      %v8774 = vunpack.c.l.b16 %v8482
      %v8775 = vunpack.c.l.b16 %v8483
      %v8776 = vunpack.c.l.b16 %v8484
      %v8777 = vunpack.c.l.b16 %v8485
      %v8778 = vunpack.c.l.b16 %v8486
      %v8779 = vunpack.c.l.b16 %v8487
      %v8780 = vunpack.c.l.b16 %v8488
      %v8781 = vunpack.c.l.b16 %v8489
      %v8782 = vunpack.c.l.b16 %v8490
      %v8783 = vunpack.c.l.b16 %v8491
      %v8784 = vunpack.c.l.b16 %v8492
      %v8785 = vunpack.c.l.b16 %v8493
      %v8786 = vunpack.c.l.b16 %v8494
      %v8787 = vunpack.c.l.b16 %v8495
      %v8788 = vunpack.c.l.b16 %v8496
      %v8789 = vunpack.c.l.b16 %v8497
      %v8790 = vunpack.c.l.b16 %v8498
      %v8791 = vunpack.c.l.b16 %v8499
      %v8792 = vunpack.c.l.b16 %v8500
      %v8793 = vunpack.c.l.b16 %v8501
      %v8794 = vunpack.c.l.b16 %v8502
      %v8795 = vunpack.c.l.b16 %v8503
      %v8796 = vunpack.c.l.b16 %v8504
      %v8797 = vunpack.c.l.b16 %v8505
      %v8798 = vunpack.c.l.b16 %v8506
      %v8799 = vunpack.c.l.b16 %v8507
      %v8800 = vunpack.c.l.b16 %v8508
      %v8801 = vunpack.c.l.b16 %v8509
      %v8802 = vunpack.c.l.b16 %v8510
      %v8803 = vunpack.c.l.b16 %v8511
      %v8804 = vunpack.c.l.b16 %v8512
      %v8805 = vunpack.c.l.b16 %v8513
      %v8806 = vunpack.c.l.b16 %v8514
      %v8807 = vunpack.c.l.b16 %v8515
      %v8808 = vunpack.c.l.b16 %v8516
      %v8809 = vunpack.c.l.b16 %v8517
      %v8810 = vunpack.c.l.b16 %v8518
      %v8811 = vunpack.c.l.b16 %v8519
      %v8812 = vunpack.c.l.b16 %v8520
      %v8813 = vunpack.c.l.b16 %v8521
      %v8814 = vunpack.c.l.b16 %v8522
      %v8815 = vunpack.c.l.b16 %v8523
      %v8816 = vunpack.c.l.b16 %v8524
      %v8817 = vunpack.c.l.b16 %v8525
      %v8818 = vunpack.c.l.b16 %v8526
      %v8819 = vunpack.c.l.b16 %v8527
      %v8820 = vunpack.c.l.b16 %v8528
      %v8821 = vunpack.c.l.b16 %v8529
      %v8822 = vunpack.c.l.b16 %v8530
      %v8823 = vunpack.c.l.b16 %v8531
      %v8824 = vunpack.c.l.b16 %v8532
      %v8825 = vunpack.c.l.b16 %v8533
      %v8826 = vunpack.c.l.b16 %v8534
      %v8827 = vunpack.c.l.b16 %v8535
      %v8828 = vunpack.c.l.b16 %v8536
      %v8829 = vunpack.c.l.b16 %v8537
      %v8830 = vunpack.c.l.b16 %v8538
      %v8831 = vunpack.c.l.b16 %v8539
      %v8832 = vunpack.c.l.b16 %v8540
      %v8833 = vunpack.c.l.b16 %v8541
      %v8834 = vunpack.c.l.b16 %v8542
      %v8835 = vunpack.c.l.b16 %v8543
      %v8836 = vunpack.c.l.b16 %v8544
      %v8837 = vunpack.c.l.b16 %v8545
      %v8838 = vunpack.c.l.b16 %v8546
      %v8839 = vunpack.c.l.b16 %v8547
      %v8840 = vunpack.c.l.b16 %v8548
      %v8841 = vunpack.c.l.b16 %v8549
      %v8842 = vunpack.c.l.b16 %v8550
      %v8843 = vunpack.c.l.b16 %v8551
      %v8844 = vunpack.c.l.b16 %v8552
      %v8845 = vunpack.c.l.b16 %v8553
      %v8846 = vunpack.c.l.b16 %v8554
      %v8847 = vunpack.c.l.b16 %v8555
      %v8848 = vunpack.c.l.b16 %v8556
      %v8849 = vunpack.c.l.b16 %v8557
      %v8850 = vunpack.c.l.b16 %v8558
      %v8851 = vunpack.c.l.b16 %v8559
      %v8852 = vunpack.c.l.b16 %v8560
      %v8853 = vunpack.c.l.b16 %v8561
      %v8854 = vunpack.c.l.b16 %v8562
      %v8855 = vunpack.c.l.b16 %v8563
      %v8856 = vunpack.c.l.b16 %v8564
      %v8857 = vunpack.c.l.b16 %v8565
      %v8858 = vunpack.c.l.b16 %v8566
      %v8859 = vunpack.c.l.b16 %v8567
      %v8860 = vunpack.c.l.b16 %v8568
      %v8861 = vunpack.c.l.b16 %v8569
      %v8862 = vunpack.c.l.b16 %v8570
      %v8863 = vunpack.c.l.b16 %v8571
      %v8864 = vunpack.c.l.b16 %v8572
      %v8865 = vunpack.c.l.b16 %v8573
      %v8866 = vunpack.c.l.b16 %v8574
      %v8867 = vunpack.c.l.b16 %v8575
      %v8868 = vunpack.c.l.b16 %v8576
      %v8869 = vunpack.c.l.b16 %v8577
      %v8870 = vunpack.c.l.b16 %v8578
      %v8871 = vpack.c.b16 %v8727, %v8726
      %v8872 = vpack.c.b16 %v8729, %v8728
      %v8873 = vpack.c.b16 %v8731, %v8730
      %v8874 = vpack.c.b16 %v8733, %v8732
      %v8875 = vpack.c.b16 %v8735, %v8734
      %v8876 = vpack.c.b16 %v8737, %v8736
      %v8877 = vpack.c.b16 %v8739, %v8738
      %v8878 = vpack.c.b16 %v8741, %v8740
      %v8879 = vpack.c.b16 %v8743, %v8742
      %v8880 = vpack.c.b16 %v8745, %v8744
      %v8881 = vpack.c.b16 %v8747, %v8746
      %v8882 = vpack.c.b16 %v8749, %v8748
      %v8883 = vpack.c.b16 %v8751, %v8750
      %v8884 = vpack.c.b16 %v8753, %v8752
      %v8885 = vpack.c.b16 %v8755, %v8754
      %v8886 = vpack.c.b16 %v8757, %v8756
      %v8887 = vpack.c.b16 %v8759, %v8758
      %v8888 = vpack.c.b16 %v8761, %v8760
      %v8889 = vpack.c.b16 %v8763, %v8762
      %v8890 = vpack.c.b16 %v8765, %v8764
      %v8891 = vpack.c.b16 %v8767, %v8766
      %v8892 = vpack.c.b16 %v8769, %v8768
      %v8893 = vpack.c.b16 %v8771, %v8770
      %v8894 = vpack.c.b16 %v8773, %v8772
      %v8895 = vpack.c.b16 %v8775, %v8774
      %v8896 = vpack.c.b16 %v8777, %v8776
      %v8897 = vpack.c.b16 %v8779, %v8778
      %v8898 = vpack.c.b16 %v8781, %v8780
      %v8899 = vpack.c.b16 %v8783, %v8782
      %v8900 = vpack.c.b16 %v8785, %v8784
      %v8901 = vpack.c.b16 %v8787, %v8786
      %v8902 = vpack.c.b16 %v8789, %v8788
      %v8903 = vpack.c.b16 %v8791, %v8790
      %v8904 = vpack.c.b16 %v8793, %v8792
      %v8905 = vpack.c.b16 %v8795, %v8794
      %v8906 = vpack.c.b16 %v8797, %v8796
      %v8907 = vpack.c.b16 %v8799, %v8798
      %v8908 = vpack.c.b16 %v8801, %v8800
      %v8909 = vpack.c.b16 %v8803, %v8802
      %v8910 = vpack.c.b16 %v8805, %v8804
      %v8911 = vpack.c.b16 %v8807, %v8806
      %v8912 = vpack.c.b16 %v8809, %v8808
      %v8913 = vpack.c.b16 %v8811, %v8810
      %v8914 = vpack.c.b16 %v8813, %v8812
      %v8915 = vpack.c.b16 %v8815, %v8814
      %v8916 = vpack.c.b16 %v8817, %v8816
      %v8917 = vpack.c.b16 %v8819, %v8818
      %v8918 = vpack.c.b16 %v8821, %v8820
      %v8919 = vpack.c.b16 %v8823, %v8822
      %v8920 = vpack.c.b16 %v8825, %v8824
      %v8921 = vpack.c.b16 %v8827, %v8826
      %v8922 = vpack.c.b16 %v8829, %v8828
      %v8923 = vpack.c.b16 %v8831, %v8830
      %v8924 = vpack.c.b16 %v8833, %v8832
      %v8925 = vpack.c.b16 %v8835, %v8834
      %v8926 = vpack.c.b16 %v8837, %v8836
      %v8927 = vpack.c.b16 %v8839, %v8838
      %v8928 = vpack.c.b16 %v8841, %v8840
      %v8929 = vpack.c.b16 %v8843, %v8842
      %v8930 = vpack.c.b16 %v8845, %v8844
      %v8931 = vpack.c.b16 %v8847, %v8846
      %v8932 = vpack.c.b16 %v8849, %v8848
      %v8933 = vpack.c.b16 %v8851, %v8850
      %v8934 = vpack.c.b16 %v8853, %v8852
      %v8935 = vpack.c.b16 %v8855, %v8854
      %v8936 = vpack.c.b16 %v8857, %v8856
      %v8937 = vpack.c.b16 %v8859, %v8858
      %v8938 = vpack.c.b16 %v8861, %v8860
      %v8939 = vpack.c.b16 %v8863, %v8862
      %v8940 = vpack.c.b16 %v8865, %v8864
      %v8941 = vpack.c.b16 %v8867, %v8866
      %v8942 = vpack.c.b16 %v8869, %v8868
      %v8943 = vpack.c.b16 %v8870, %v8870
      %v8944 = vrot.slane %v8871, 2
      %v8945 = vrot.slane %v8872, 2
      %v8946 = vsel %vm7305, %v8944, %v8945
      %v8947 = vrot.slane %v8873, 2
      %v8948 = vsel %vm7305, %v8945, %v8947
      %v8949 = vrot.slane %v8874, 2
      %v8950 = vsel %vm7305, %v8947, %v8949
      %v8951 = vrot.slane %v8875, 2
      %v8952 = vsel %vm7305, %v8949, %v8951
      %v8953 = vrot.slane %v8876, 2
      %v8954 = vsel %vm7305, %v8951, %v8953
      %v8955 = vrot.slane %v8877, 2
      %v8956 = vsel %vm7305, %v8953, %v8955
      %v8957 = vrot.slane %v8878, 2
      %v8958 = vsel %vm7305, %v8955, %v8957
      %v8959 = vrot.slane %v8879, 2
      %v8960 = vsel %vm7305, %v8957, %v8959
      %v8961 = vrot.slane %v8880, 2
      %v8962 = vsel %vm7305, %v8959, %v8961
      %v8963 = vrot.slane %v8881, 2
      %v8964 = vsel %vm7305, %v8961, %v8963
      %v8965 = vrot.slane %v8882, 2
      %v8966 = vsel %vm7305, %v8963, %v8965
      %v8967 = vrot.slane %v8883, 2
      %v8968 = vsel %vm7305, %v8965, %v8967
      %v8969 = vrot.slane %v8884, 2
      %v8970 = vsel %vm7305, %v8967, %v8969
      %v8971 = vrot.slane %v8885, 2
      %v8972 = vsel %vm7305, %v8969, %v8971
      %v8973 = vrot.slane %v8886, 2
      %v8974 = vsel %vm7305, %v8971, %v8973
      %v8975 = vrot.slane %v8887, 2
      %v8976 = vsel %vm7305, %v8973, %v8975
      %v8977 = vrot.slane %v8888, 2
      %v8978 = vsel %vm7305, %v8975, %v8977
      %v8979 = vrot.slane %v8889, 2
      %v8980 = vsel %vm7305, %v8977, %v8979
      %v8981 = vrot.slane %v8890, 2
      %v8982 = vsel %vm7305, %v8979, %v8981
      %v8983 = vrot.slane %v8891, 2
      %v8984 = vsel %vm7305, %v8981, %v8983
      %v8985 = vrot.slane %v8892, 2
      %v8986 = vsel %vm7305, %v8983, %v8985
      %v8987 = vrot.slane %v8893, 2
      %v8988 = vsel %vm7305, %v8985, %v8987
      %v8989 = vrot.slane %v8894, 2
      %v8990 = vsel %vm7305, %v8987, %v8989
      %v8991 = vrot.slane %v8895, 2
      %v8992 = vsel %vm7305, %v8989, %v8991
      %v8993 = vrot.slane %v8896, 2
      %v8994 = vsel %vm7305, %v8991, %v8993
      %v8995 = vrot.slane %v8897, 2
      %v8996 = vsel %vm7305, %v8993, %v8995
      %v8997 = vrot.slane %v8898, 2
      %v8998 = vsel %vm7305, %v8995, %v8997
      %v8999 = vrot.slane %v8899, 2
      %v9000 = vsel %vm7305, %v8997, %v8999
      %v9001 = vrot.slane %v8900, 2
      %v9002 = vsel %vm7305, %v8999, %v9001
      %v9003 = vrot.slane %v8901, 2
      %v9004 = vsel %vm7305, %v9001, %v9003
      %v9005 = vrot.slane %v8902, 2
      %v9006 = vsel %vm7305, %v9003, %v9005
      %v9007 = vrot.slane %v8903, 2
      %v9008 = vsel %vm7305, %v9005, %v9007
      %v9009 = vrot.slane %v8904, 2
      %v9010 = vsel %vm7305, %v9007, %v9009
      %v9011 = vrot.slane %v8905, 2
      %v9012 = vsel %vm7305, %v9009, %v9011
      %v9013 = vrot.slane %v8906, 2
      %v9014 = vsel %vm7305, %v9011, %v9013
      %v9015 = vrot.slane %v8907, 2
      %v9016 = vsel %vm7305, %v9013, %v9015
      %v9017 = vrot.slane %v8908, 2
      %v9018 = vsel %vm7305, %v9015, %v9017
      %v9019 = vrot.slane %v8909, 2
      %v9020 = vsel %vm7305, %v9017, %v9019
      %v9021 = vrot.slane %v8910, 2
      %v9022 = vsel %vm7305, %v9019, %v9021
      %v9023 = vrot.slane %v8911, 2
      %v9024 = vsel %vm7305, %v9021, %v9023
      %v9025 = vrot.slane %v8912, 2
      %v9026 = vsel %vm7305, %v9023, %v9025
      %v9027 = vrot.slane %v8913, 2
      %v9028 = vsel %vm7305, %v9025, %v9027
      %v9029 = vrot.slane %v8914, 2
      %v9030 = vsel %vm7305, %v9027, %v9029
      %v9031 = vrot.slane %v8915, 2
      %v9032 = vsel %vm7305, %v9029, %v9031
      %v9033 = vrot.slane %v8916, 2
      %v9034 = vsel %vm7305, %v9031, %v9033
      %v9035 = vrot.slane %v8917, 2
      %v9036 = vsel %vm7305, %v9033, %v9035
      %v9037 = vrot.slane %v8918, 2
      %v9038 = vsel %vm7305, %v9035, %v9037
      %v9039 = vrot.slane %v8919, 2
      %v9040 = vsel %vm7305, %v9037, %v9039
      %v9041 = vrot.slane %v8920, 2
      %v9042 = vsel %vm7305, %v9039, %v9041
      %v9043 = vrot.slane %v8921, 2
      %v9044 = vsel %vm7305, %v9041, %v9043
      %v9045 = vrot.slane %v8922, 2
      %v9046 = vsel %vm7305, %v9043, %v9045
      %v9047 = vrot.slane %v8923, 2
      %v9048 = vsel %vm7305, %v9045, %v9047
      %v9049 = vrot.slane %v8924, 2
      %v9050 = vsel %vm7305, %v9047, %v9049
      %v9051 = vrot.slane %v8925, 2
      %v9052 = vsel %vm7305, %v9049, %v9051
      %v9053 = vrot.slane %v8926, 2
      %v9054 = vsel %vm7305, %v9051, %v9053
      %v9055 = vrot.slane %v8927, 2
      %v9056 = vsel %vm7305, %v9053, %v9055
      %v9057 = vrot.slane %v8928, 2
      %v9058 = vsel %vm7305, %v9055, %v9057
      %v9059 = vrot.slane %v8929, 2
      %v9060 = vsel %vm7305, %v9057, %v9059
      %v9061 = vrot.slane %v8930, 2
      %v9062 = vsel %vm7305, %v9059, %v9061
      %v9063 = vrot.slane %v8931, 2
      %v9064 = vsel %vm7305, %v9061, %v9063
      %v9065 = vrot.slane %v8932, 2
      %v9066 = vsel %vm7305, %v9063, %v9065
      %v9067 = vrot.slane %v8933, 2
      %v9068 = vsel %vm7305, %v9065, %v9067
      %v9069 = vrot.slane %v8934, 2
      %v9070 = vsel %vm7305, %v9067, %v9069
      %v9071 = vrot.slane %v8935, 2
      %v9072 = vsel %vm7305, %v9069, %v9071
      %v9073 = vrot.slane %v8936, 2
      %v9074 = vsel %vm7305, %v9071, %v9073
      %v9075 = vrot.slane %v8937, 2
      %v9076 = vsel %vm7305, %v9073, %v9075
      %v9077 = vrot.slane %v8938, 2
      %v9078 = vsel %vm7305, %v9075, %v9077
      %v9079 = vrot.slane %v8939, 2
      %v9080 = vsel %vm7305, %v9077, %v9079
      %v9081 = vrot.slane %v8940, 2
      %v9082 = vsel %vm7305, %v9079, %v9081
      %v9083 = vrot.slane %v8941, 2
      %v9084 = vsel %vm7305, %v9081, %v9083
      %v9085 = vrot.slane %v8942, 2
      %v9086 = vsel %vm7305, %v9083, %v9085
      %v9087 = vrot.slane %v8943, 2
      %v9088 = vsel %vm7305, %v9085, %v9087
      %v9090 = vsel %vm1268, %v8946, 0
      %v9093 = vsel %vm1268, %v8948, 0
      %v9096 = vsel %vm1268, %v8950, 0
      %v9099 = vsel %vm1268, %v8952, 0
      %v9102 = vsel %vm1268, %v8954, 0
      %v9105 = vsel %vm1268, %v8956, 0
      %v9108 = vsel %vm1268, %v8958, 0
      %v9111 = vsel %vm1268, %v8960, 0
      %v9114 = vsel %vm1268, %v8962, 0
      %v9117 = vsel %vm1268, %v8964, 0
      %v9120 = vsel %vm1268, %v8966, 0
      %v9123 = vsel %vm1268, %v8968, 0
      %v9126 = vsel %vm1268, %v8970, 0
      %v9129 = vsel %vm1268, %v8972, 0
      %v9132 = vsel %vm1268, %v8974, 0
      %v9135 = vsel %vm1268, %v8976, 0
      %v9138 = vsel %vm1268, %v8978, 0
      %v9141 = vsel %vm1268, %v8980, 0
      %v9144 = vsel %vm1268, %v8982, 0
      %v9147 = vsel %vm1268, %v8984, 0
      %v9150 = vsel %vm1268, %v8986, 0
      %v9153 = vsel %vm1268, %v8988, 0
      %v9156 = vsel %vm1268, %v8990, 0
      %v9159 = vsel %vm1268, %v8992, 0
      %v9162 = vsel %vm1268, %v8994, 0
      %v9165 = vsel %vm1268, %v8996, 0
      %v9168 = vsel %vm1268, %v8998, 0
      %v9171 = vsel %vm1268, %v9000, 0
      %v9174 = vsel %vm1268, %v9002, 0
      %v9177 = vsel %vm1268, %v9004, 0
      %v9180 = vsel %vm1268, %v9006, 0
      %v9183 = vsel %vm1268, %v9008, 0
      %v9186 = vsel %vm1268, %v9010, 0
      %v9189 = vsel %vm1268, %v9012, 0
      %v9192 = vsel %vm1268, %v9014, 0
      %v9195 = vsel %vm1268, %v9016, 0
      %v9198 = vsel %vm1268, %v9018, 0
      %v9201 = vsel %vm1268, %v9020, 0
      %v9204 = vsel %vm1268, %v9022, 0
      %v9207 = vsel %vm1268, %v9024, 0
      %v9210 = vsel %vm1268, %v9026, 0
      %v9213 = vsel %vm1268, %v9028, 0
      %v9216 = vsel %vm1268, %v9030, 0
      %v9219 = vsel %vm1268, %v9032, 0
      %v9222 = vsel %vm1268, %v9034, 0
      %v9225 = vsel %vm1268, %v9036, 0
      %v9228 = vsel %vm1268, %v9038, 0
      %v9231 = vsel %vm1268, %v9040, 0
      %v9234 = vsel %vm1268, %v9042, 0
      %v9237 = vsel %vm1268, %v9044, 0
      %v9240 = vsel %vm1268, %v9046, 0
      %v9243 = vsel %vm1268, %v9048, 0
      %v9246 = vsel %vm1268, %v9050, 0
      %v9249 = vsel %vm1268, %v9052, 0
      %v9252 = vsel %vm1268, %v9054, 0
      %v9255 = vsel %vm1268, %v9056, 0
      %v9258 = vsel %vm1268, %v9058, 0
      %v9261 = vsel %vm1268, %v9060, 0
      %v9264 = vsel %vm1268, %v9062, 0
      %v9267 = vsel %vm1268, %v9064, 0
      %v9270 = vsel %vm1268, %v9066, 0
      %v9273 = vsel %vm1268, %v9068, 0
      %v9276 = vsel %vm1268, %v9070, 0
      %v9279 = vsel %vm1268, %v9072, 0
      %v9282 = vsel %vm1268, %v9074, 0
      %v9285 = vsel %vm1268, %v9076, 0
      %v9288 = vsel %vm1268, %v9078, 0
      %v9291 = vsel %vm1268, %v9080, 0
      %v9294 = vsel %vm1268, %v9082, 0
      %v9297 = vsel %vm1268, %v9084, 0
      %v9300 = vsel %vm1268, %v9086, 0
      %v9303 = vsel %vm1268, %v9088, 0
      %v9306 = vsel %vm1268, %v9087, 0
      %v9309 = vand.u32 %v8580, %v1491
      %9311 = vmatprep.subr.bf16.mxu0 0
      %9312 = vmatpush1.bf16.msra.mxu0 0
      %9313 = vmatprep.subr.bf16.mxu0 0
      %9314 = vmatpush1.bf16.msra.mxu0 0
      %9315 = vmatprep.subr.bf16.mxu0 0
      %9316 = vmatpush1.bf16.msra.mxu0 0
      %9317 = vmatprep.subr.bf16.mxu0 0
      %9318 = vmatpush1.bf16.msra.mxu0 0
      %9319 = vmatprep.subr.bf16.mxu0 0
      %9320 = vmatpush1.bf16.msra.mxu0 0
      %9321 = vmatprep.subr.bf16.mxu0 0
      %9322 = vmatpush1.bf16.msra.mxu0 0
      %9323 = vmatprep.subr.bf16.mxu0 0
      %9324 = vmatpush1.bf16.msra.mxu0 0
      %9325 = vmatprep.subr.bf16.mxu0 0
      %9326 = vmatpush1.bf16.msra.mxu0 %v9309
      %9327 = vmatprep.subr.bf16.mxu0 0
      %9328 = vmatpush2.bf16.msra.mxu0 0
      %9329 = vmatprep.subr.bf16.mxu0 0
      %9330 = vmatpush2.bf16.msra.mxu0 0
      %9331 = vmatprep.subr.bf16.mxu0 0
      %9332 = vmatpush2.bf16.msra.mxu0 0
      %9333 = vmatprep.subr.bf16.mxu0 0
      %9334 = vmatpush2.bf16.msra.mxu0 0
      %9335 = vmatprep.subr.bf16.mxu0 0
      %9336 = vmatpush2.bf16.msra.mxu0 0
      %9337 = vmatprep.subr.bf16.mxu0 0
      %9338 = vmatpush2.bf16.msra.mxu0 0
      %9339 = vmatprep.subr.bf16.mxu0 0
      %9340 = vmatpush2.bf16.msra.mxu0 0
      %9341 = vmatprep.subr.bf16.mxu0 0
      %9342 = vmatpush2.bf16.msra.mxu0 0
      %9343 = vmatprep.mubr.bf16.mxu0 0
      %9344 = vmatmul.mubr.bf16.gmra.mxu0 %v9090
      %v9345 = vpop.f32.mrf.mxu0
      %v9346 = vadd.f32 0.0, %v9345
      %v9347 = vpop.f32.mrf.mxu0
      %v9348 = vpop.f32.mrf.mxu0
      %v9349 = vadd.f32 0.0, %v9348
      %v9350 = vpop.f32.mrf.mxu0
      %9351 = vmatprep.mubr.bf16.mxu0 0
      %9352 = vmatmul.mubr.bf16.gmra.mxu0 %v9093
      %v9353 = vpop.f32.mrf.mxu0
      %v9354 = vadd.f32 0.0, %v9353
      %v9355 = vpop.f32.mrf.mxu0
      %v9356 = vpop.f32.mrf.mxu0
      %v9357 = vadd.f32 0.0, %v9356
      %v9358 = vpop.f32.mrf.mxu0
      %9359 = vmatprep.mubr.bf16.mxu0 0
      %9360 = vmatmul.mubr.bf16.gmra.mxu0 %v9096
      %v9361 = vpop.f32.mrf.mxu0
      %v9362 = vadd.f32 0.0, %v9361
      %v9363 = vpop.f32.mrf.mxu0
      %v9364 = vpop.f32.mrf.mxu0
      %v9365 = vadd.f32 0.0, %v9364
      %v9366 = vpop.f32.mrf.mxu0
      %9367 = vmatprep.mubr.bf16.mxu0 0
      %9368 = vmatmul.mubr.bf16.gmra.mxu0 %v9099
      %v9369 = vpop.f32.mrf.mxu0
      %v9370 = vadd.f32 0.0, %v9369
      %v9371 = vpop.f32.mrf.mxu0
      %v9372 = vpop.f32.mrf.mxu0
      %v9373 = vadd.f32 0.0, %v9372
      %v9374 = vpop.f32.mrf.mxu0
      %9375 = vmatprep.mubr.bf16.mxu0 0
      %9376 = vmatmul.mubr.bf16.gmra.mxu0 %v9102
      %v9377 = vpop.f32.mrf.mxu0
      %v9378 = vadd.f32 0.0, %v9377
      %v9379 = vpop.f32.mrf.mxu0
      %v9380 = vpop.f32.mrf.mxu0
      %v9381 = vadd.f32 0.0, %v9380
      %v9382 = vpop.f32.mrf.mxu0
      %9383 = vmatprep.mubr.bf16.mxu0 0
      %9384 = vmatmul.mubr.bf16.gmra.mxu0 %v9105
      %v9385 = vpop.f32.mrf.mxu0
      %v9386 = vadd.f32 0.0, %v9385
      %v9387 = vpop.f32.mrf.mxu0
      %v9388 = vpop.f32.mrf.mxu0
      %v9389 = vadd.f32 0.0, %v9388
      %v9390 = vpop.f32.mrf.mxu0
      %9391 = vmatprep.mubr.bf16.mxu0 0
      %9392 = vmatmul.mubr.bf16.gmra.mxu0 %v9108
      %v9393 = vpop.f32.mrf.mxu0
      %v9394 = vadd.f32 0.0, %v9393
      %v9395 = vpop.f32.mrf.mxu0
      %v9396 = vpop.f32.mrf.mxu0
      %v9397 = vadd.f32 0.0, %v9396
      %v9398 = vpop.f32.mrf.mxu0
      %9399 = vmatprep.mubr.bf16.mxu0 0
      %9400 = vmatmul.mubr.bf16.gmra.mxu0 %v9111
      %v9401 = vpop.f32.mrf.mxu0
      %v9402 = vadd.f32 0.0, %v9401
      %v9403 = vpop.f32.mrf.mxu0
      %v9404 = vpop.f32.mrf.mxu0
      %v9405 = vadd.f32 0.0, %v9404
      %v9406 = vpop.f32.mrf.mxu0
      %9407 = vmatprep.mubr.bf16.mxu0 0
      %9408 = vmatmul.mubr.bf16.gmra.mxu0 %v9114
      %v9409 = vpop.f32.mrf.mxu0
      %v9410 = vadd.f32 0.0, %v9409
      %v9411 = vpop.f32.mrf.mxu0
      %v9412 = vpop.f32.mrf.mxu0
      %v9413 = vadd.f32 0.0, %v9412
      %v9414 = vpop.f32.mrf.mxu0
      %9415 = vmatprep.mubr.bf16.mxu0 0
      %9416 = vmatmul.mubr.bf16.gmra.mxu0 %v9117
      %v9417 = vpop.f32.mrf.mxu0
      %v9418 = vadd.f32 0.0, %v9417
      %v9419 = vpop.f32.mrf.mxu0
      %v9420 = vpop.f32.mrf.mxu0
      %v9421 = vadd.f32 0.0, %v9420
      %v9422 = vpop.f32.mrf.mxu0
      %9423 = vmatprep.mubr.bf16.mxu0 0
      %9424 = vmatmul.mubr.bf16.gmra.mxu0 %v9120
      %v9425 = vpop.f32.mrf.mxu0
      %v9426 = vadd.f32 0.0, %v9425
      %v9427 = vpop.f32.mrf.mxu0
      %v9428 = vpop.f32.mrf.mxu0
      %v9429 = vadd.f32 0.0, %v9428
      %v9430 = vpop.f32.mrf.mxu0
      %9431 = vmatprep.mubr.bf16.mxu0 0
      %9432 = vmatmul.mubr.bf16.gmra.mxu0 %v9123
      %v9433 = vpop.f32.mrf.mxu0
      %v9434 = vadd.f32 0.0, %v9433
      %v9435 = vpop.f32.mrf.mxu0
      %v9436 = vpop.f32.mrf.mxu0
      %v9437 = vadd.f32 0.0, %v9436
      %v9438 = vpop.f32.mrf.mxu0
      %9439 = vmatprep.mubr.bf16.mxu0 0
      %9440 = vmatmul.mubr.bf16.gmra.mxu0 %v9126
      %v9441 = vpop.f32.mrf.mxu0
      %v9442 = vadd.f32 0.0, %v9441
      %v9443 = vpop.f32.mrf.mxu0
      %v9444 = vpop.f32.mrf.mxu0
      %v9445 = vadd.f32 0.0, %v9444
      %v9446 = vpop.f32.mrf.mxu0
      %9447 = vmatprep.mubr.bf16.mxu0 0
      %9448 = vmatmul.mubr.bf16.gmra.mxu0 %v9129
      %v9449 = vpop.f32.mrf.mxu0
      %v9450 = vadd.f32 0.0, %v9449
      %v9451 = vpop.f32.mrf.mxu0
      %v9452 = vpop.f32.mrf.mxu0
      %v9453 = vadd.f32 0.0, %v9452
      %v9454 = vpop.f32.mrf.mxu0
      %9455 = vmatprep.mubr.bf16.mxu0 0
      %9456 = vmatmul.mubr.bf16.gmra.mxu0 %v9132
      %v9457 = vpop.f32.mrf.mxu0
      %v9458 = vadd.f32 0.0, %v9457
      %v9459 = vpop.f32.mrf.mxu0
      %v9460 = vpop.f32.mrf.mxu0
      %v9461 = vadd.f32 0.0, %v9460
      %v9462 = vpop.f32.mrf.mxu0
      %9463 = vmatprep.mubr.bf16.mxu0 0
      %9464 = vmatmul.mubr.bf16.gmra.mxu0 %v9135
      %v9465 = vpop.f32.mrf.mxu0
      %v9466 = vadd.f32 0.0, %v9465
      %v9467 = vpop.f32.mrf.mxu0
      %v9468 = vpop.f32.mrf.mxu0
      %v9469 = vadd.f32 0.0, %v9468
      %v9470 = vpop.f32.mrf.mxu0
      %9471 = vmatprep.mubr.bf16.mxu0 0
      %9472 = vmatmul.mubr.bf16.gmra.mxu0 %v9138
      %v9473 = vpop.f32.mrf.mxu0
      %v9474 = vadd.f32 0.0, %v9473
      %v9475 = vpop.f32.mrf.mxu0
      %v9476 = vpop.f32.mrf.mxu0
      %v9477 = vadd.f32 0.0, %v9476
      %v9478 = vpop.f32.mrf.mxu0
      %9479 = vmatprep.mubr.bf16.mxu0 0
      %9480 = vmatmul.mubr.bf16.gmra.mxu0 %v9141
      %v9481 = vpop.f32.mrf.mxu0
      %v9482 = vadd.f32 0.0, %v9481
      %v9483 = vpop.f32.mrf.mxu0
      %v9484 = vpop.f32.mrf.mxu0
      %v9485 = vadd.f32 0.0, %v9484
      %v9486 = vpop.f32.mrf.mxu0
      %9487 = vmatprep.mubr.bf16.mxu0 0
      %9488 = vmatmul.mubr.bf16.gmra.mxu0 %v9144
      %v9489 = vpop.f32.mrf.mxu0
      %v9490 = vadd.f32 0.0, %v9489
      %v9491 = vpop.f32.mrf.mxu0
      %v9492 = vpop.f32.mrf.mxu0
      %v9493 = vadd.f32 0.0, %v9492
      %v9494 = vpop.f32.mrf.mxu0
      %9495 = vmatprep.mubr.bf16.mxu0 0
      %9496 = vmatmul.mubr.bf16.gmra.mxu0 %v9147
      %v9497 = vpop.f32.mrf.mxu0
      %v9498 = vadd.f32 0.0, %v9497
      %v9499 = vpop.f32.mrf.mxu0
      %v9500 = vpop.f32.mrf.mxu0
      %v9501 = vadd.f32 0.0, %v9500
      %v9502 = vpop.f32.mrf.mxu0
      %9503 = vmatprep.mubr.bf16.mxu0 0
      %9504 = vmatmul.mubr.bf16.gmra.mxu0 %v9150
      %v9505 = vpop.f32.mrf.mxu0
      %v9506 = vadd.f32 0.0, %v9505
      %v9507 = vpop.f32.mrf.mxu0
      %v9508 = vpop.f32.mrf.mxu0
      %v9509 = vadd.f32 0.0, %v9508
      %v9510 = vpop.f32.mrf.mxu0
      %9511 = vmatprep.mubr.bf16.mxu0 0
      %9512 = vmatmul.mubr.bf16.gmra.mxu0 %v9153
      %v9513 = vpop.f32.mrf.mxu0
      %v9514 = vadd.f32 0.0, %v9513
      %v9515 = vpop.f32.mrf.mxu0
      %v9516 = vpop.f32.mrf.mxu0
      %v9517 = vadd.f32 0.0, %v9516
      %v9518 = vpop.f32.mrf.mxu0
      %9519 = vmatprep.mubr.bf16.mxu0 0
      %9520 = vmatmul.mubr.bf16.gmra.mxu0 %v9156
      %v9521 = vpop.f32.mrf.mxu0
      %v9522 = vadd.f32 0.0, %v9521
      %v9523 = vpop.f32.mrf.mxu0
      %v9524 = vpop.f32.mrf.mxu0
      %v9525 = vadd.f32 0.0, %v9524
      %v9526 = vpop.f32.mrf.mxu0
      %9527 = vmatprep.mubr.bf16.mxu0 0
      %9528 = vmatmul.mubr.bf16.gmra.mxu0 %v9159
      %v9529 = vpop.f32.mrf.mxu0
      %v9530 = vadd.f32 0.0, %v9529
      %v9531 = vpop.f32.mrf.mxu0
      %v9532 = vpop.f32.mrf.mxu0
      %v9533 = vadd.f32 0.0, %v9532
      %v9534 = vpop.f32.mrf.mxu0
      %9535 = vmatprep.mubr.bf16.mxu0 0
      %9536 = vmatmul.mubr.bf16.gmra.mxu0 %v9162
      %v9537 = vpop.f32.mrf.mxu0
      %v9538 = vadd.f32 0.0, %v9537
      %v9539 = vpop.f32.mrf.mxu0
      %v9540 = vpop.f32.mrf.mxu0
      %v9541 = vadd.f32 0.0, %v9540
      %v9542 = vpop.f32.mrf.mxu0
      %9543 = vmatprep.mubr.bf16.mxu0 0
      %9544 = vmatmul.mubr.bf16.gmra.mxu0 %v9165
      %v9545 = vpop.f32.mrf.mxu0
      %v9546 = vadd.f32 0.0, %v9545
      %v9547 = vpop.f32.mrf.mxu0
      %v9548 = vpop.f32.mrf.mxu0
      %v9549 = vadd.f32 0.0, %v9548
      %v9550 = vpop.f32.mrf.mxu0
      %9551 = vmatprep.mubr.bf16.mxu0 0
      %9552 = vmatmul.mubr.bf16.gmra.mxu0 %v9168
      %v9553 = vpop.f32.mrf.mxu0
      %v9554 = vadd.f32 0.0, %v9553
      %v9555 = vpop.f32.mrf.mxu0
      %v9556 = vpop.f32.mrf.mxu0
      %v9557 = vadd.f32 0.0, %v9556
      %v9558 = vpop.f32.mrf.mxu0
      %9559 = vmatprep.mubr.bf16.mxu0 0
      %9560 = vmatmul.mubr.bf16.gmra.mxu0 %v9171
      %v9561 = vpop.f32.mrf.mxu0
      %v9562 = vadd.f32 0.0, %v9561
      %v9563 = vpop.f32.mrf.mxu0
      %v9564 = vpop.f32.mrf.mxu0
      %v9565 = vadd.f32 0.0, %v9564
      %v9566 = vpop.f32.mrf.mxu0
      %9567 = vmatprep.mubr.bf16.mxu0 0
      %9568 = vmatmul.mubr.bf16.gmra.mxu0 %v9174
      %v9569 = vpop.f32.mrf.mxu0
      %v9570 = vadd.f32 0.0, %v9569
      %v9571 = vpop.f32.mrf.mxu0
      %v9572 = vpop.f32.mrf.mxu0
      %v9573 = vadd.f32 0.0, %v9572
      %v9574 = vpop.f32.mrf.mxu0
      %9575 = vmatprep.mubr.bf16.mxu0 0
      %9576 = vmatmul.mubr.bf16.gmra.mxu0 %v9177
      %v9577 = vpop.f32.mrf.mxu0
      %v9578 = vadd.f32 0.0, %v9577
      %v9579 = vpop.f32.mrf.mxu0
      %v9580 = vpop.f32.mrf.mxu0
      %v9581 = vadd.f32 0.0, %v9580
      %v9582 = vpop.f32.mrf.mxu0
      %9583 = vmatprep.mubr.bf16.mxu0 0
      %9584 = vmatmul.mubr.bf16.gmra.mxu0 %v9180
      %v9585 = vpop.f32.mrf.mxu0
      %v9586 = vadd.f32 0.0, %v9585
      %v9587 = vpop.f32.mrf.mxu0
      %v9588 = vpop.f32.mrf.mxu0
      %v9589 = vadd.f32 0.0, %v9588
      %v9590 = vpop.f32.mrf.mxu0
      %9591 = vmatprep.mubr.bf16.mxu0 0
      %9592 = vmatmul.mubr.bf16.gmra.mxu0 %v9183
      %v9593 = vpop.f32.mrf.mxu0
      %v9594 = vadd.f32 0.0, %v9593
      %v9595 = vpop.f32.mrf.mxu0
      %v9596 = vpop.f32.mrf.mxu0
      %v9597 = vadd.f32 0.0, %v9596
      %v9598 = vpop.f32.mrf.mxu0
      %9599 = vmatprep.mubr.bf16.mxu0 0
      %9600 = vmatmul.mubr.bf16.gmra.mxu0 %v9186
      %v9601 = vpop.f32.mrf.mxu0
      %v9602 = vadd.f32 0.0, %v9601
      %v9603 = vpop.f32.mrf.mxu0
      %v9604 = vpop.f32.mrf.mxu0
      %v9605 = vadd.f32 0.0, %v9604
      %v9606 = vpop.f32.mrf.mxu0
      %9607 = vmatprep.mubr.bf16.mxu0 0
      %9608 = vmatmul.mubr.bf16.gmra.mxu0 %v9189
      %v9609 = vpop.f32.mrf.mxu0
      %v9610 = vadd.f32 0.0, %v9609
      %v9611 = vpop.f32.mrf.mxu0
      %v9612 = vpop.f32.mrf.mxu0
      %v9613 = vadd.f32 0.0, %v9612
      %v9614 = vpop.f32.mrf.mxu0
      %9615 = vmatprep.mubr.bf16.mxu0 0
      %9616 = vmatmul.mubr.bf16.gmra.mxu0 %v9192
      %v9617 = vpop.f32.mrf.mxu0
      %v9618 = vadd.f32 0.0, %v9617
      %v9619 = vpop.f32.mrf.mxu0
      %v9620 = vpop.f32.mrf.mxu0
      %v9621 = vadd.f32 0.0, %v9620
      %v9622 = vpop.f32.mrf.mxu0
      %9623 = vmatprep.mubr.bf16.mxu0 0
      %9624 = vmatmul.mubr.bf16.gmra.mxu0 %v9195
      %v9625 = vpop.f32.mrf.mxu0
      %v9626 = vadd.f32 0.0, %v9625
      %v9627 = vpop.f32.mrf.mxu0
      %v9628 = vpop.f32.mrf.mxu0
      %v9629 = vadd.f32 0.0, %v9628
      %v9630 = vpop.f32.mrf.mxu0
      %9631 = vmatprep.mubr.bf16.mxu0 0
      %9632 = vmatmul.mubr.bf16.gmra.mxu0 %v9198
      %v9633 = vpop.f32.mrf.mxu0
      %v9634 = vadd.f32 0.0, %v9633
      %v9635 = vpop.f32.mrf.mxu0
      %v9636 = vpop.f32.mrf.mxu0
      %v9637 = vadd.f32 0.0, %v9636
      %v9638 = vpop.f32.mrf.mxu0
      %9639 = vmatprep.mubr.bf16.mxu0 0
      %9640 = vmatmul.mubr.bf16.gmra.mxu0 %v9201
      %v9641 = vpop.f32.mrf.mxu0
      %v9642 = vadd.f32 0.0, %v9641
      %v9643 = vpop.f32.mrf.mxu0
      %v9644 = vpop.f32.mrf.mxu0
      %v9645 = vadd.f32 0.0, %v9644
      %v9646 = vpop.f32.mrf.mxu0
      %9647 = vmatprep.mubr.bf16.mxu0 0
      %9648 = vmatmul.mubr.bf16.gmra.mxu0 %v9204
      %v9649 = vpop.f32.mrf.mxu0
      %v9650 = vadd.f32 0.0, %v9649
      %v9651 = vpop.f32.mrf.mxu0
      %v9652 = vpop.f32.mrf.mxu0
      %v9653 = vadd.f32 0.0, %v9652
      %v9654 = vpop.f32.mrf.mxu0
      %9655 = vmatprep.mubr.bf16.mxu0 0
      %9656 = vmatmul.mubr.bf16.gmra.mxu0 %v9207
      %v9657 = vpop.f32.mrf.mxu0
      %v9658 = vadd.f32 0.0, %v9657
      %v9659 = vpop.f32.mrf.mxu0
      %v9660 = vpop.f32.mrf.mxu0
      %v9661 = vadd.f32 0.0, %v9660
      %v9662 = vpop.f32.mrf.mxu0
      %9663 = vmatprep.mubr.bf16.mxu0 0
      %9664 = vmatmul.mubr.bf16.gmra.mxu0 %v9210
      %v9665 = vpop.f32.mrf.mxu0
      %v9666 = vadd.f32 0.0, %v9665
      %v9667 = vpop.f32.mrf.mxu0
      %v9668 = vpop.f32.mrf.mxu0
      %v9669 = vadd.f32 0.0, %v9668
      %v9670 = vpop.f32.mrf.mxu0
      %9671 = vmatprep.mubr.bf16.mxu0 0
      %9672 = vmatmul.mubr.bf16.gmra.mxu0 %v9213
      %v9673 = vpop.f32.mrf.mxu0
      %v9674 = vadd.f32 0.0, %v9673
      %v9675 = vpop.f32.mrf.mxu0
      %v9676 = vpop.f32.mrf.mxu0
      %v9677 = vadd.f32 0.0, %v9676
      %v9678 = vpop.f32.mrf.mxu0
      %9679 = vmatprep.mubr.bf16.mxu0 0
      %9680 = vmatmul.mubr.bf16.gmra.mxu0 %v9216
      %v9681 = vpop.f32.mrf.mxu0
      %v9682 = vadd.f32 0.0, %v9681
      %v9683 = vpop.f32.mrf.mxu0
      %v9684 = vpop.f32.mrf.mxu0
      %v9685 = vadd.f32 0.0, %v9684
      %v9686 = vpop.f32.mrf.mxu0
      %9687 = vmatprep.mubr.bf16.mxu0 0
      %9688 = vmatmul.mubr.bf16.gmra.mxu0 %v9219
      %v9689 = vpop.f32.mrf.mxu0
      %v9690 = vadd.f32 0.0, %v9689
      %v9691 = vpop.f32.mrf.mxu0
      %v9692 = vpop.f32.mrf.mxu0
      %v9693 = vadd.f32 0.0, %v9692
      %v9694 = vpop.f32.mrf.mxu0
      %9695 = vmatprep.mubr.bf16.mxu0 0
      %9696 = vmatmul.mubr.bf16.gmra.mxu0 %v9222
      %v9697 = vpop.f32.mrf.mxu0
      %v9698 = vadd.f32 0.0, %v9697
      %v9699 = vpop.f32.mrf.mxu0
      %v9700 = vpop.f32.mrf.mxu0
      %v9701 = vadd.f32 0.0, %v9700
      %v9702 = vpop.f32.mrf.mxu0
      %9703 = vmatprep.mubr.bf16.mxu0 0
      %9704 = vmatmul.mubr.bf16.gmra.mxu0 %v9225
      %v9705 = vpop.f32.mrf.mxu0
      %v9706 = vadd.f32 0.0, %v9705
      %v9707 = vpop.f32.mrf.mxu0
      %v9708 = vpop.f32.mrf.mxu0
      %v9709 = vadd.f32 0.0, %v9708
      %v9710 = vpop.f32.mrf.mxu0
      %9711 = vmatprep.mubr.bf16.mxu0 0
      %9712 = vmatmul.mubr.bf16.gmra.mxu0 %v9228
      %v9713 = vpop.f32.mrf.mxu0
      %v9714 = vadd.f32 0.0, %v9713
      %v9715 = vpop.f32.mrf.mxu0
      %v9716 = vpop.f32.mrf.mxu0
      %v9717 = vadd.f32 0.0, %v9716
      %v9718 = vpop.f32.mrf.mxu0
      %9719 = vmatprep.mubr.bf16.mxu0 0
      %9720 = vmatmul.mubr.bf16.gmra.mxu0 %v9231
      %v9721 = vpop.f32.mrf.mxu0
      %v9722 = vadd.f32 0.0, %v9721
      %v9723 = vpop.f32.mrf.mxu0
      %v9724 = vpop.f32.mrf.mxu0
      %v9725 = vadd.f32 0.0, %v9724
      %v9726 = vpop.f32.mrf.mxu0
      %9727 = vmatprep.mubr.bf16.mxu0 0
      %9728 = vmatmul.mubr.bf16.gmra.mxu0 %v9234
      %v9729 = vpop.f32.mrf.mxu0
      %v9730 = vadd.f32 0.0, %v9729
      %v9731 = vpop.f32.mrf.mxu0
      %v9732 = vpop.f32.mrf.mxu0
      %v9733 = vadd.f32 0.0, %v9732
      %v9734 = vpop.f32.mrf.mxu0
      %9735 = vmatprep.mubr.bf16.mxu0 0
      %9736 = vmatmul.mubr.bf16.gmra.mxu0 %v9237
      %v9737 = vpop.f32.mrf.mxu0
      %v9738 = vadd.f32 0.0, %v9737
      %v9739 = vpop.f32.mrf.mxu0
      %v9740 = vpop.f32.mrf.mxu0
      %v9741 = vadd.f32 0.0, %v9740
      %v9742 = vpop.f32.mrf.mxu0
      %9743 = vmatprep.mubr.bf16.mxu0 0
      %9744 = vmatmul.mubr.bf16.gmra.mxu0 %v9240
      %v9745 = vpop.f32.mrf.mxu0
      %v9746 = vadd.f32 0.0, %v9745
      %v9747 = vpop.f32.mrf.mxu0
      %v9748 = vpop.f32.mrf.mxu0
      %v9749 = vadd.f32 0.0, %v9748
      %v9750 = vpop.f32.mrf.mxu0
      %9751 = vmatprep.mubr.bf16.mxu0 0
      %9752 = vmatmul.mubr.bf16.gmra.mxu0 %v9243
      %v9753 = vpop.f32.mrf.mxu0
      %v9754 = vadd.f32 0.0, %v9753
      %v9755 = vpop.f32.mrf.mxu0
      %v9756 = vpop.f32.mrf.mxu0
      %v9757 = vadd.f32 0.0, %v9756
      %v9758 = vpop.f32.mrf.mxu0
      %9759 = vmatprep.mubr.bf16.mxu0 0
      %9760 = vmatmul.mubr.bf16.gmra.mxu0 %v9246
      %v9761 = vpop.f32.mrf.mxu0
      %v9762 = vadd.f32 0.0, %v9761
      %v9763 = vpop.f32.mrf.mxu0
      %v9764 = vpop.f32.mrf.mxu0
      %v9765 = vadd.f32 0.0, %v9764
      %v9766 = vpop.f32.mrf.mxu0
      %9767 = vmatprep.mubr.bf16.mxu0 0
      %9768 = vmatmul.mubr.bf16.gmra.mxu0 %v9249
      %v9769 = vpop.f32.mrf.mxu0
      %v9770 = vadd.f32 0.0, %v9769
      %v9771 = vpop.f32.mrf.mxu0
      %v9772 = vpop.f32.mrf.mxu0
      %v9773 = vadd.f32 0.0, %v9772
      %v9774 = vpop.f32.mrf.mxu0
      %9775 = vmatprep.mubr.bf16.mxu0 0
      %9776 = vmatmul.mubr.bf16.gmra.mxu0 %v9252
      %v9777 = vpop.f32.mrf.mxu0
      %v9778 = vadd.f32 0.0, %v9777
      %v9779 = vpop.f32.mrf.mxu0
      %v9780 = vpop.f32.mrf.mxu0
      %v9781 = vadd.f32 0.0, %v9780
      %v9782 = vpop.f32.mrf.mxu0
      %9783 = vmatprep.mubr.bf16.mxu0 0
      %9784 = vmatmul.mubr.bf16.gmra.mxu0 %v9255
      %v9785 = vpop.f32.mrf.mxu0
      %v9786 = vadd.f32 0.0, %v9785
      %v9787 = vpop.f32.mrf.mxu0
      %v9788 = vpop.f32.mrf.mxu0
      %v9789 = vadd.f32 0.0, %v9788
      %v9790 = vpop.f32.mrf.mxu0
      %9791 = vmatprep.mubr.bf16.mxu0 0
      %9792 = vmatmul.mubr.bf16.gmra.mxu0 %v9258
      %v9793 = vpop.f32.mrf.mxu0
      %v9794 = vadd.f32 0.0, %v9793
      %v9795 = vpop.f32.mrf.mxu0
      %v9796 = vpop.f32.mrf.mxu0
      %v9797 = vadd.f32 0.0, %v9796
      %v9798 = vpop.f32.mrf.mxu0
      %9799 = vmatprep.mubr.bf16.mxu0 0
      %9800 = vmatmul.mubr.bf16.gmra.mxu0 %v9261
      %v9801 = vpop.f32.mrf.mxu0
      %v9802 = vadd.f32 0.0, %v9801
      %v9803 = vpop.f32.mrf.mxu0
      %v9804 = vpop.f32.mrf.mxu0
      %v9805 = vadd.f32 0.0, %v9804
      %v9806 = vpop.f32.mrf.mxu0
      %9807 = vmatprep.mubr.bf16.mxu0 0
      %9808 = vmatmul.mubr.bf16.gmra.mxu0 %v9264
      %v9809 = vpop.f32.mrf.mxu0
      %v9810 = vadd.f32 0.0, %v9809
      %v9811 = vpop.f32.mrf.mxu0
      %v9812 = vpop.f32.mrf.mxu0
      %v9813 = vadd.f32 0.0, %v9812
      %v9814 = vpop.f32.mrf.mxu0
      %9815 = vmatprep.mubr.bf16.mxu0 0
      %9816 = vmatmul.mubr.bf16.gmra.mxu0 %v9267
      %v9817 = vpop.f32.mrf.mxu0
      %v9818 = vadd.f32 0.0, %v9817
      %v9819 = vpop.f32.mrf.mxu0
      %v9820 = vpop.f32.mrf.mxu0
      %v9821 = vadd.f32 0.0, %v9820
      %v9822 = vpop.f32.mrf.mxu0
      %9823 = vmatprep.mubr.bf16.mxu0 0
      %9824 = vmatmul.mubr.bf16.gmra.mxu0 %v9270
      %v9825 = vpop.f32.mrf.mxu0
      %v9826 = vadd.f32 0.0, %v9825
      %v9827 = vpop.f32.mrf.mxu0
      %v9828 = vpop.f32.mrf.mxu0
      %v9829 = vadd.f32 0.0, %v9828
      %v9830 = vpop.f32.mrf.mxu0
      %9831 = vmatprep.mubr.bf16.mxu0 0
      %9832 = vmatmul.mubr.bf16.gmra.mxu0 %v9273
      %v9833 = vpop.f32.mrf.mxu0
      %v9834 = vadd.f32 0.0, %v9833
      %v9835 = vpop.f32.mrf.mxu0
      %v9836 = vpop.f32.mrf.mxu0
      %v9837 = vadd.f32 0.0, %v9836
      %v9838 = vpop.f32.mrf.mxu0
      %9839 = vmatprep.mubr.bf16.mxu0 0
      %9840 = vmatmul.mubr.bf16.gmra.mxu0 %v9276
      %v9841 = vpop.f32.mrf.mxu0
      %v9842 = vadd.f32 0.0, %v9841
      %v9843 = vpop.f32.mrf.mxu0
      %v9844 = vpop.f32.mrf.mxu0
      %v9845 = vadd.f32 0.0, %v9844
      %v9846 = vpop.f32.mrf.mxu0
      %9847 = vmatprep.mubr.bf16.mxu0 0
      %9848 = vmatmul.mubr.bf16.gmra.mxu0 %v9279
      %v9849 = vpop.f32.mrf.mxu0
      %v9850 = vadd.f32 0.0, %v9849
      %v9851 = vpop.f32.mrf.mxu0
      %v9852 = vpop.f32.mrf.mxu0
      %v9853 = vadd.f32 0.0, %v9852
      %v9854 = vpop.f32.mrf.mxu0
      %9855 = vmatprep.mubr.bf16.mxu0 0
      %9856 = vmatmul.mubr.bf16.gmra.mxu0 %v9282
      %v9857 = vpop.f32.mrf.mxu0
      %v9858 = vadd.f32 0.0, %v9857
      %v9859 = vpop.f32.mrf.mxu0
      %v9860 = vpop.f32.mrf.mxu0
      %v9861 = vadd.f32 0.0, %v9860
      %v9862 = vpop.f32.mrf.mxu0
      %9863 = vmatprep.mubr.bf16.mxu0 0
      %9864 = vmatmul.mubr.bf16.gmra.mxu0 %v9285
      %v9865 = vpop.f32.mrf.mxu0
      %v9866 = vadd.f32 0.0, %v9865
      %v9867 = vpop.f32.mrf.mxu0
      %v9868 = vpop.f32.mrf.mxu0
      %v9869 = vadd.f32 0.0, %v9868
      %v9870 = vpop.f32.mrf.mxu0
      %9871 = vmatprep.mubr.bf16.mxu0 0
      %9872 = vmatmul.mubr.bf16.gmra.mxu0 %v9288
      %v9873 = vpop.f32.mrf.mxu0
      %v9874 = vadd.f32 0.0, %v9873
      %v9875 = vpop.f32.mrf.mxu0
      %v9876 = vpop.f32.mrf.mxu0
      %v9877 = vadd.f32 0.0, %v9876
      %v9878 = vpop.f32.mrf.mxu0
      %9879 = vmatprep.mubr.bf16.mxu0 0
      %9880 = vmatmul.mubr.bf16.gmra.mxu0 %v9291
      %v9881 = vpop.f32.mrf.mxu0
      %v9882 = vadd.f32 0.0, %v9881
      %v9883 = vpop.f32.mrf.mxu0
      %v9884 = vpop.f32.mrf.mxu0
      %v9885 = vadd.f32 0.0, %v9884
      %v9886 = vpop.f32.mrf.mxu0
      %9887 = vmatprep.mubr.bf16.mxu0 0
      %9888 = vmatmul.mubr.bf16.gmra.mxu0 %v9294
      %v9889 = vpop.f32.mrf.mxu0
      %v9890 = vadd.f32 0.0, %v9889
      %v9891 = vpop.f32.mrf.mxu0
      %v9892 = vpop.f32.mrf.mxu0
      %v9893 = vadd.f32 0.0, %v9892
      %v9894 = vpop.f32.mrf.mxu0
      %9895 = vmatprep.mubr.bf16.mxu0 0
      %9896 = vmatmul.mubr.bf16.gmra.mxu0 %v9297
      %v9897 = vpop.f32.mrf.mxu0
      %v9898 = vadd.f32 0.0, %v9897
      %v9899 = vpop.f32.mrf.mxu0
      %v9900 = vpop.f32.mrf.mxu0
      %v9901 = vadd.f32 0.0, %v9900
      %v9902 = vpop.f32.mrf.mxu0
      %9903 = vmatprep.mubr.bf16.mxu0 0
      %9904 = vmatmul.mubr.bf16.gmra.mxu0 %v9300
      %v9905 = vpop.f32.mrf.mxu0
      %v9906 = vadd.f32 0.0, %v9905
      %v9907 = vpop.f32.mrf.mxu0
      %v9908 = vpop.f32.mrf.mxu0
      %v9909 = vadd.f32 0.0, %v9908
      %v9910 = vpop.f32.mrf.mxu0
      %9911 = vmatprep.mubr.bf16.mxu0 0
      %9912 = vmatmul.mubr.bf16.gmra.mxu0 %v9303
      %v9913 = vpop.f32.mrf.mxu0
      %v9914 = vadd.f32 0.0, %v9913
      %v9915 = vpop.f32.mrf.mxu0
      %v9916 = vpop.f32.mrf.mxu0
      %v9917 = vadd.f32 0.0, %v9916
      %v9918 = vpop.f32.mrf.mxu0
      %9919 = vmatprep.mubr.bf16.mxu0 0
      %9920 = vmatmul.mubr.bf16.gmra.mxu0 %v9306
      %v9921 = vpop.f32.mrf.mxu0
      %v9922 = vadd.f32 0.0, %v9921
      %v9923 = vpop.f32.mrf.mxu0
      %v9924 = vpop.f32.mrf.mxu0
      %v9925 = vpop.f32.mrf.mxu0
      %9926 = vdwg.mxu0
      %v9927 = vadd.f32 %v8289, %v9346
      %v9928 = vadd.f32 %v8290, %v9349
      %v9929 = vadd.f32 %v8291, %v9354
      %v9930 = vadd.f32 %v8292, %v9357
      %v9931 = vadd.f32 %v8293, %v9362
      %v9932 = vadd.f32 %v8294, %v9365
      %v9933 = vadd.f32 %v8295, %v9370
      %v9934 = vadd.f32 %v8296, %v9373
      %v9935 = vadd.f32 %v8297, %v9378
      %v9936 = vadd.f32 %v8298, %v9381
      %v9937 = vadd.f32 %v8299, %v9386
      %v9938 = vadd.f32 %v8300, %v9389
      %v9939 = vadd.f32 %v8301, %v9394
      %v9940 = vadd.f32 %v8302, %v9397
      %v9941 = vadd.f32 %v8303, %v9402
      %v9942 = vadd.f32 %v8304, %v9405
      %v9943 = vadd.f32 %v8305, %v9410
      %v9944 = vadd.f32 %v8306, %v9413
      %v9945 = vadd.f32 %v8307, %v9418
      %v9946 = vadd.f32 %v8308, %v9421
      %v9947 = vadd.f32 %v8309, %v9426
      %v9948 = vadd.f32 %v8310, %v9429
      %v9949 = vadd.f32 %v8311, %v9434
      %v9950 = vadd.f32 %v8312, %v9437
      %v9951 = vadd.f32 %v8313, %v9442
      %v9952 = vadd.f32 %v8314, %v9445
      %v9953 = vadd.f32 %v8315, %v9450
      %v9954 = vadd.f32 %v8316, %v9453
      %v9955 = vadd.f32 %v8317, %v9458
      %v9956 = vadd.f32 %v8318, %v9461
      %v9957 = vadd.f32 %v8319, %v9466
      %v9958 = vadd.f32 %v8320, %v9469
      %v9959 = vadd.f32 %v8321, %v9474
      %v9960 = vadd.f32 %v8322, %v9477
      %v9961 = vadd.f32 %v8323, %v9482
      %v9962 = vadd.f32 %v8324, %v9485
      %v9963 = vadd.f32 %v8325, %v9490
      %v9964 = vadd.f32 %v8326, %v9493
      %v9965 = vadd.f32 %v8327, %v9498
      %v9966 = vadd.f32 %v8328, %v9501
      %v9967 = vadd.f32 %v8329, %v9506
      %v9968 = vadd.f32 %v8330, %v9509
      %v9969 = vadd.f32 %v8331, %v9514
      %v9970 = vadd.f32 %v8332, %v9517
      %v9971 = vadd.f32 %v8333, %v9522
      %v9972 = vadd.f32 %v8334, %v9525
      %v9973 = vadd.f32 %v8335, %v9530
      %v9974 = vadd.f32 %v8336, %v9533
      %v9975 = vadd.f32 %v8337, %v9538
      %v9976 = vadd.f32 %v8338, %v9541
      %v9977 = vadd.f32 %v8339, %v9546
      %v9978 = vadd.f32 %v8340, %v9549
      %v9979 = vadd.f32 %v8341, %v9554
      %v9980 = vadd.f32 %v8342, %v9557
      %v9981 = vadd.f32 %v8343, %v9562
      %v9982 = vadd.f32 %v8344, %v9565
      %v9983 = vadd.f32 %v8345, %v9570
      %v9984 = vadd.f32 %v8346, %v9573
      %v9985 = vadd.f32 %v8347, %v9578
      %v9986 = vadd.f32 %v8348, %v9581
      %v9987 = vadd.f32 %v8349, %v9586
      %v9988 = vadd.f32 %v8350, %v9589
      %v9989 = vadd.f32 %v8351, %v9594
      %v9990 = vadd.f32 %v8352, %v9597
      %v9991 = vadd.f32 %v8353, %v9602
      %v9992 = vadd.f32 %v8354, %v9605
      %v9993 = vadd.f32 %v8355, %v9610
      %v9994 = vadd.f32 %v8356, %v9613
      %v9995 = vadd.f32 %v8357, %v9618
      %v9996 = vadd.f32 %v8358, %v9621
      %v9997 = vadd.f32 %v8359, %v9626
      %v9998 = vadd.f32 %v8360, %v9629
      %v9999 = vadd.f32 %v8361, %v9634
      %v10000 = vadd.f32 %v8362, %v9637
      %v10001 = vadd.f32 %v8363, %v9642
      %v10002 = vadd.f32 %v8364, %v9645
      %v10003 = vadd.f32 %v8365, %v9650
      %v10004 = vadd.f32 %v8366, %v9653
      %v10005 = vadd.f32 %v8367, %v9658
      %v10006 = vadd.f32 %v8368, %v9661
      %v10007 = vadd.f32 %v8369, %v9666
      %v10008 = vadd.f32 %v8370, %v9669
      %v10009 = vadd.f32 %v8371, %v9674
      %v10010 = vadd.f32 %v8372, %v9677
      %v10011 = vadd.f32 %v8373, %v9682
      %v10012 = vadd.f32 %v8374, %v9685
      %v10013 = vadd.f32 %v8375, %v9690
      %v10014 = vadd.f32 %v8376, %v9693
      %v10015 = vadd.f32 %v8377, %v9698
      %v10016 = vadd.f32 %v8378, %v9701
      %v10017 = vadd.f32 %v8379, %v9706
      %v10018 = vadd.f32 %v8380, %v9709
      %v10019 = vadd.f32 %v8381, %v9714
      %v10020 = vadd.f32 %v8382, %v9717
      %v10021 = vadd.f32 %v8383, %v9722
      %v10022 = vadd.f32 %v8384, %v9725
      %v10023 = vadd.f32 %v8385, %v9730
      %v10024 = vadd.f32 %v8386, %v9733
      %v10025 = vadd.f32 %v8387, %v9738
      %v10026 = vadd.f32 %v8388, %v9741
      %v10027 = vadd.f32 %v8389, %v9746
      %v10028 = vadd.f32 %v8390, %v9749
      %v10029 = vadd.f32 %v8391, %v9754
      %v10030 = vadd.f32 %v8392, %v9757
      %v10031 = vadd.f32 %v8393, %v9762
      %v10032 = vadd.f32 %v8394, %v9765
      %v10033 = vadd.f32 %v8395, %v9770
      %v10034 = vadd.f32 %v8396, %v9773
      %v10035 = vadd.f32 %v8397, %v9778
      %v10036 = vadd.f32 %v8398, %v9781
      %v10037 = vadd.f32 %v8399, %v9786
      %v10038 = vadd.f32 %v8400, %v9789
      %v10039 = vadd.f32 %v8401, %v9794
      %v10040 = vadd.f32 %v8402, %v9797
      %v10041 = vadd.f32 %v8403, %v9802
      %v10042 = vadd.f32 %v8404, %v9805
      %v10043 = vadd.f32 %v8405, %v9810
      %v10044 = vadd.f32 %v8406, %v9813
      %v10045 = vadd.f32 %v8407, %v9818
      %v10046 = vadd.f32 %v8408, %v9821
      %v10047 = vadd.f32 %v8409, %v9826
      %v10048 = vadd.f32 %v8410, %v9829
      %v10049 = vadd.f32 %v8411, %v9834
      %v10050 = vadd.f32 %v8412, %v9837
      %v10051 = vadd.f32 %v8413, %v9842
      %v10052 = vadd.f32 %v8414, %v9845
      %v10053 = vadd.f32 %v8415, %v9850
      %v10054 = vadd.f32 %v8416, %v9853
      %v10055 = vadd.f32 %v8417, %v9858
      %v10056 = vadd.f32 %v8418, %v9861
      %v10057 = vadd.f32 %v8419, %v9866
      %v10058 = vadd.f32 %v8420, %v9869
      %v10059 = vadd.f32 %v8421, %v9874
      %v10060 = vadd.f32 %v8422, %v9877
      %v10061 = vadd.f32 %v8423, %v9882
      %v10062 = vadd.f32 %v8424, %v9885
      %v10063 = vadd.f32 %v8425, %v9890
      %v10064 = vadd.f32 %v8426, %v9893
      %v10065 = vadd.f32 %v8427, %v9898
      %v10066 = vadd.f32 %v8428, %v9901
      %v10067 = vadd.f32 %v8429, %v9906
      %v10068 = vadd.f32 %v8430, %v9909
      %v10069 = vadd.f32 %v8431, %v9914
      %v10070 = vadd.f32 %v8432, %v9917
      %v10071 = vadd.f32 %v8433, %v9922
      %v10072 = vld [vmem:[%s165 + $0x20] sm:$0xc]
      %v10073 = vld [vmem:[%s165 + $0x24] sm:$0xf]
      %v10074 = vld [vmem:[%s165 + $0x28] sm:$0xf]
      %v10075 = vld [vmem:[%s165 + $0x2c] sm:$0xf]
      %v10076 = vld [vmem:[%s165 + $0x30] sm:$0xf]
      %v10077 = vld [vmem:[%s165 + $0x34] sm:$0xf]
      %v10078 = vld [vmem:[%s165 + $0x38] sm:$0xf]
      %v10079 = vld [vmem:[%s165 + $0x3c] sm:$0xf]
      %v10080 = vld [vmem:[%s165 + $0x40] sm:$0xf]
      %v10081 = vld [vmem:[%s165 + $0x44] sm:$0xf]
      %v10082 = vld [vmem:[%s165 + $0x48] sm:$0xf]
      %v10083 = vld [vmem:[%s165 + $0x4c] sm:$0xf]
      %v10084 = vld [vmem:[%s165 + $0x50] sm:$0xf]
      %v10085 = vld [vmem:[%s165 + $0x54] sm:$0xf]
      %v10086 = vld [vmem:[%s165 + $0x58] sm:$0xf]
      %v10087 = vld [vmem:[%s165 + $0x5c] sm:$0xf]
      %v10088 = vld [vmem:[%s165 + $0x60] sm:$0xf]
      %v10089 = vld [vmem:[%s165 + $0x64] sm:$0xf]
      %v10090 = vld [vmem:[%s165 + $0x68] sm:$0xf]
      %v10091 = vld [vmem:[%s165 + $0x6c] sm:$0xf]
      %v10092 = vld [vmem:[%s165 + $0x70] sm:$0xf]
      %v10093 = vld [vmem:[%s165 + $0x74] sm:$0xf]
      %v10094 = vld [vmem:[%s165 + $0x78] sm:$0xf]
      %v10095 = vld [vmem:[%s165 + $0x7c] sm:$0xf]
      %v10096 = vld [vmem:[%s165 + $0x80] sm:$0xf]
      %v10097 = vld [vmem:[%s165 + $0x84] sm:$0xf]
      %v10098 = vld [vmem:[%s165 + $0x88] sm:$0xf]
      %v10099 = vld [vmem:[%s165 + $0x8c] sm:$0xf]
      %v10100 = vld [vmem:[%s165 + $0x90] sm:$0xf]
      %v10101 = vld [vmem:[%s165 + $0x94] sm:$0xf]
      %v10102 = vld [vmem:[%s165 + $0x98] sm:$0xf]
      %v10103 = vld [vmem:[%s165 + $0x9c] sm:$0xf]
      %v10104 = vld [vmem:[%s165 + $0xa0] sm:$0xf]
      %v10105 = vld [vmem:[%s165 + $0xa4] sm:$0xf]
      %v10106 = vld [vmem:[%s165 + $0xa8] sm:$0xf]
      %v10107 = vld [vmem:[%s165 + $0xac] sm:$0xf]
      %v10108 = vld [vmem:[%s165 + $0xb0] sm:$0xf]
      %v10109 = vld [vmem:[%s165 + $0xb4] sm:$0xf]
      %v10110 = vld [vmem:[%s165 + $0xb8] sm:$0xf]
      %v10111 = vld [vmem:[%s165 + $0xbc] sm:$0xf]
      %v10112 = vld [vmem:[%s165 + $0xc0] sm:$0xf]
      %v10113 = vld [vmem:[%s165 + $0xc4] sm:$0xf]
      %v10114 = vld [vmem:[%s165 + $0xc8] sm:$0xf]
      %v10115 = vld [vmem:[%s165 + $0xcc] sm:$0xf]
      %v10116 = vld [vmem:[%s165 + $0xd0] sm:$0xf]
      %v10117 = vld [vmem:[%s165 + $0xd4] sm:$0xf]
      %v10118 = vld [vmem:[%s165 + $0xd8] sm:$0xf]
      %v10119 = vld [vmem:[%s165 + $0xdc] sm:$0xf]
      %v10120 = vld [vmem:[%s165 + $0xe0] sm:$0xf]
      %v10121 = vld [vmem:[%s165 + $0xe4] sm:$0xf]
      %v10122 = vld [vmem:[%s165 + $0xe8] sm:$0xf]
      %v10123 = vld [vmem:[%s165 + $0xec] sm:$0xf]
      %v10124 = vld [vmem:[%s165 + $0xf0] sm:$0xf]
      %v10125 = vld [vmem:[%s165 + $0xf4] sm:$0xf]
      %v10126 = vld [vmem:[%s165 + $0xf8] sm:$0xf]
      %v10127 = vld [vmem:[%s165 + $0xfc] sm:$0xf]
      %v10128 = vld [vmem:[%s165 + $0x100] sm:$0xf]
      %v10129 = vld [vmem:[%s165 + $0x104] sm:$0xf]
      %v10130 = vld [vmem:[%s165 + $0x108] sm:$0xf]
      %v10131 = vld [vmem:[%s165 + $0x10c] sm:$0xf]
      %v10132 = vld [vmem:[%s165 + $0x110] sm:$0xf]
      %v10133 = vld [vmem:[%s165 + $0x114] sm:$0xf]
      %v10134 = vld [vmem:[%s165 + $0x118] sm:$0xf]
      %v10135 = vld [vmem:[%s165 + $0x11c] sm:$0xf]
      %v10136 = vld [vmem:[%s165 + $0x120] sm:$0xf]
      %v10137 = vld [vmem:[%s165 + $0x124] sm:$0xf]
      %v10138 = vld [vmem:[%s165 + $0x128] sm:$0xf]
      %v10139 = vld [vmem:[%s165 + $0x12c] sm:$0xf]
      %v10140 = vld [vmem:[%s165 + $0x130] sm:$0xf]
      %v10141 = vld [vmem:[%s165 + $0x134] sm:$0xf]
      %v10142 = vld [vmem:[%s165 + $0x138] sm:$0xf]
      %v10143 = vld [vmem:[%s165 + $0x13c] sm:$0xf]
      %v10144 = vld [vmem:[%s165 + $0x140] sm:$0xf]
      %v10145 = vld [vmem:[%s165 + $0x144] sm:$0xf]
      %v10146 = vld [vmem:[%s165 + $0x148] sm:$0xf]
      %v10147 = vld [vmem:[%s165 + $0x14c] sm:$0xf]
      %v10148 = vld [vmem:[%s165 + $0x150] sm:$0xf]
      %v10149 = vld [vmem:[%s165 + $0x154] sm:$0xf]
      %v10150 = vld [vmem:[%s165 + $0x158] sm:$0xf]
      %v10151 = vld [vmem:[%s165 + $0x15c] sm:$0xf]
      %v10152 = vld [vmem:[%s165 + $0x160] sm:$0xf]
      %v10153 = vld [vmem:[%s165 + $0x164] sm:$0xf]
      %v10154 = vld [vmem:[%s165 + $0x168] sm:$0xf]
      %v10155 = vld [vmem:[%s165 + $0x16c] sm:$0xf]
      %v10156 = vld [vmem:[%s165 + $0x170] sm:$0xf]
      %v10157 = vld [vmem:[%s165 + $0x174] sm:$0xf]
      %v10158 = vld [vmem:[%s165 + $0x178] sm:$0xf]
      %v10159 = vld [vmem:[%s165 + $0x17c] sm:$0xf]
      %v10160 = vld [vmem:[%s165 + $0x180] sm:$0xf]
      %v10161 = vld [vmem:[%s165 + $0x184] sm:$0xf]
      %v10162 = vld [vmem:[%s165 + $0x188] sm:$0xf]
      %v10163 = vld [vmem:[%s165 + $0x18c] sm:$0xf]
      %v10164 = vld [vmem:[%s165 + $0x190] sm:$0xf]
      %v10165 = vld [vmem:[%s165 + $0x194] sm:$0xf]
      %v10166 = vld [vmem:[%s165 + $0x198] sm:$0xf]
      %v10167 = vld [vmem:[%s165 + $0x19c] sm:$0xf]
      %v10168 = vld [vmem:[%s165 + $0x1a0] sm:$0xf]
      %v10169 = vld [vmem:[%s165 + $0x1a4] sm:$0xf]
      %v10170 = vld [vmem:[%s165 + $0x1a8] sm:$0xf]
      %v10171 = vld [vmem:[%s165 + $0x1ac] sm:$0xf]
      %v10172 = vld [vmem:[%s165 + $0x1b0] sm:$0xf]
      %v10173 = vld [vmem:[%s165 + $0x1b4] sm:$0xf]
      %v10174 = vld [vmem:[%s165 + $0x1b8] sm:$0xf]
      %v10175 = vld [vmem:[%s165 + $0x1bc] sm:$0xf]
      %v10176 = vld [vmem:[%s165 + $0x1c0] sm:$0xf]
      %v10177 = vld [vmem:[%s165 + $0x1c4] sm:$0xf]
      %v10178 = vld [vmem:[%s165 + $0x1c8] sm:$0xf]
      %v10179 = vld [vmem:[%s165 + $0x1cc] sm:$0xf]
      %v10180 = vld [vmem:[%s165 + $0x1d0] sm:$0xf]
      %v10181 = vld [vmem:[%s165 + $0x1d4] sm:$0xf]
      %v10182 = vld [vmem:[%s165 + $0x1d8] sm:$0xf]
      %v10183 = vld [vmem:[%s165 + $0x1dc] sm:$0xf]
      %v10184 = vld [vmem:[%s165 + $0x1e0] sm:$0xf]
      %v10185 = vld [vmem:[%s165 + $0x1e4] sm:$0xf]
      %v10186 = vld [vmem:[%s165 + $0x1e8] sm:$0xf]
      %v10187 = vld [vmem:[%s165 + $0x1ec] sm:$0xf]
      %v10188 = vld [vmem:[%s165 + $0x1f0] sm:$0xf]
      %v10189 = vld [vmem:[%s165 + $0x1f4] sm:$0xf]
      %v10190 = vld [vmem:[%s165 + $0x1f8] sm:$0xf]
      %v10191 = vld [vmem:[%s165 + $0x1fc] sm:$0xf]
      %v10192 = vld [vmem:[%s165 + $0x200] sm:$0xf]
      %v10193 = vld [vmem:[%s165 + $0x204] sm:$0xf]
      %v10194 = vld [vmem:[%s165 + $0x208] sm:$0xf]
      %v10195 = vld [vmem:[%s165 + $0x20c] sm:$0xf]
      %v10196 = vld [vmem:[%s165 + $0x210] sm:$0xf]
      %v10197 = vld [vmem:[%s165 + $0x214] sm:$0xf]
      %v10198 = vld [vmem:[%s165 + $0x218] sm:$0xf]
      %v10199 = vld [vmem:[%s165 + $0x21c] sm:$0xf]
      %v10200 = vld [vmem:[%s165 + $0x220] sm:$0xf]
      %v10201 = vld [vmem:[%s165 + $0x224] sm:$0xf]
      %v10202 = vld [vmem:[%s165 + $0x228] sm:$0xf]
      %v10203 = vld [vmem:[%s165 + $0x22c] sm:$0xf]
      %v10204 = vld [vmem:[%s165 + $0x230] sm:$0xf]
      %v10205 = vld [vmem:[%s165 + $0x234] sm:$0xf]
      %v10206 = vld [vmem:[%s165 + $0x238] sm:$0xf]
      %v10207 = vld [vmem:[%s165 + $0x23c] sm:$0xf]
      %v10208 = vld [vmem:[%s165 + $0x240] sm:$0xf]
      %v10209 = vld [vmem:[%s165 + $0x244] sm:$0xf]
      %v10210 = vld [vmem:[%s165 + $0x248] sm:$0xf]
      %v10211 = vld [vmem:[%s165 + $0x24c] sm:$0xf]
      %v10212 = vld [vmem:[%s165 + $0x250] sm:$0xf]
      %v10213 = vld [vmem:[%s165 + $0x254] sm:$0xf]
      %v10214 = vld [vmem:[%s165 + $0x258] sm:$0xf]
      %v10215 = vld [vmem:[%s165 + $0x25c] sm:$0xf]
      %v10216 = vld [vmem:[%s165 + $0x260] sm:$0xf]
      %v10217 = vld [vmem:[%s165 + $0x264] sm:$0x1]
      %s10218 = scalar_lea.vmem %s1, 14
      %v10219 = vld [vmem:[%s10218] sm:$0x3]
      %v10366 = vunpack.c.l.b16 %v10072
      %v10367 = vunpack.c.l.b16 %v10073
      %v10368 = vunpack.c.l.b16 %v10074
      %v10369 = vunpack.c.l.b16 %v10075
      %v10370 = vunpack.c.l.b16 %v10076
      %v10371 = vunpack.c.l.b16 %v10077
      %v10372 = vunpack.c.l.b16 %v10078
      %v10373 = vunpack.c.l.b16 %v10079
      %v10374 = vunpack.c.l.b16 %v10080
      %v10375 = vunpack.c.l.b16 %v10081
      %v10376 = vunpack.c.l.b16 %v10082
      %v10377 = vunpack.c.l.b16 %v10083
      %v10378 = vunpack.c.l.b16 %v10084
      %v10379 = vunpack.c.l.b16 %v10085
      %v10380 = vunpack.c.l.b16 %v10086
      %v10381 = vunpack.c.l.b16 %v10087
      %v10382 = vunpack.c.l.b16 %v10088
      %v10383 = vunpack.c.l.b16 %v10089
      %v10384 = vunpack.c.l.b16 %v10090
      %v10385 = vunpack.c.l.b16 %v10091
      %v10386 = vunpack.c.l.b16 %v10092
      %v10387 = vunpack.c.l.b16 %v10093
      %v10388 = vunpack.c.l.b16 %v10094
      %v10389 = vunpack.c.l.b16 %v10095
      %v10390 = vunpack.c.l.b16 %v10096
      %v10391 = vunpack.c.l.b16 %v10097
      %v10392 = vunpack.c.l.b16 %v10098
      %v10393 = vunpack.c.l.b16 %v10099
      %v10394 = vunpack.c.l.b16 %v10100
      %v10395 = vunpack.c.l.b16 %v10101
      %v10396 = vunpack.c.l.b16 %v10102
      %v10397 = vunpack.c.l.b16 %v10103
      %v10398 = vunpack.c.l.b16 %v10104
      %v10399 = vunpack.c.l.b16 %v10105
      %v10400 = vunpack.c.l.b16 %v10106
      %v10401 = vunpack.c.l.b16 %v10107
      %v10402 = vunpack.c.l.b16 %v10108
      %v10403 = vunpack.c.l.b16 %v10109
      %v10404 = vunpack.c.l.b16 %v10110
      %v10405 = vunpack.c.l.b16 %v10111
      %v10406 = vunpack.c.l.b16 %v10112
      %v10407 = vunpack.c.l.b16 %v10113
      %v10408 = vunpack.c.l.b16 %v10114
      %v10409 = vunpack.c.l.b16 %v10115
      %v10410 = vunpack.c.l.b16 %v10116
      %v10411 = vunpack.c.l.b16 %v10117
      %v10412 = vunpack.c.l.b16 %v10118
      %v10413 = vunpack.c.l.b16 %v10119
      %v10414 = vunpack.c.l.b16 %v10120
      %v10415 = vunpack.c.l.b16 %v10121
      %v10416 = vunpack.c.l.b16 %v10122
      %v10417 = vunpack.c.l.b16 %v10123
      %v10418 = vunpack.c.l.b16 %v10124
      %v10419 = vunpack.c.l.b16 %v10125
      %v10420 = vunpack.c.l.b16 %v10126
      %v10421 = vunpack.c.l.b16 %v10127
      %v10422 = vunpack.c.l.b16 %v10128
      %v10423 = vunpack.c.l.b16 %v10129
      %v10424 = vunpack.c.l.b16 %v10130
      %v10425 = vunpack.c.l.b16 %v10131
      %v10426 = vunpack.c.l.b16 %v10132
      %v10427 = vunpack.c.l.b16 %v10133
      %v10428 = vunpack.c.l.b16 %v10134
      %v10429 = vunpack.c.l.b16 %v10135
      %v10430 = vunpack.c.l.b16 %v10136
      %v10431 = vunpack.c.l.b16 %v10137
      %v10432 = vunpack.c.l.b16 %v10138
      %v10433 = vunpack.c.l.b16 %v10139
      %v10434 = vunpack.c.l.b16 %v10140
      %v10435 = vunpack.c.l.b16 %v10141
      %v10436 = vunpack.c.l.b16 %v10142
      %v10437 = vunpack.c.l.b16 %v10143
      %v10438 = vunpack.c.l.b16 %v10144
      %v10439 = vunpack.c.l.b16 %v10145
      %v10440 = vunpack.c.l.b16 %v10146
      %v10441 = vunpack.c.l.b16 %v10147
      %v10442 = vunpack.c.l.b16 %v10148
      %v10443 = vunpack.c.l.b16 %v10149
      %v10444 = vunpack.c.l.b16 %v10150
      %v10445 = vunpack.c.l.b16 %v10151
      %v10446 = vunpack.c.l.b16 %v10152
      %v10447 = vunpack.c.l.b16 %v10153
      %v10448 = vunpack.c.l.b16 %v10154
      %v10449 = vunpack.c.l.b16 %v10155
      %v10450 = vunpack.c.l.b16 %v10156
      %v10451 = vunpack.c.l.b16 %v10157
      %v10452 = vunpack.c.l.b16 %v10158
      %v10453 = vunpack.c.l.b16 %v10159
      %v10454 = vunpack.c.l.b16 %v10160
      %v10455 = vunpack.c.l.b16 %v10161
      %v10456 = vunpack.c.l.b16 %v10162
      %v10457 = vunpack.c.l.b16 %v10163
      %v10458 = vunpack.c.l.b16 %v10164
      %v10459 = vunpack.c.l.b16 %v10165
      %v10460 = vunpack.c.l.b16 %v10166
      %v10461 = vunpack.c.l.b16 %v10167
      %v10462 = vunpack.c.l.b16 %v10168
      %v10463 = vunpack.c.l.b16 %v10169
      %v10464 = vunpack.c.l.b16 %v10170
      %v10465 = vunpack.c.l.b16 %v10171
      %v10466 = vunpack.c.l.b16 %v10172
      %v10467 = vunpack.c.l.b16 %v10173
      %v10468 = vunpack.c.l.b16 %v10174
      %v10469 = vunpack.c.l.b16 %v10175
      %v10470 = vunpack.c.l.b16 %v10176
      %v10471 = vunpack.c.l.b16 %v10177
      %v10472 = vunpack.c.l.b16 %v10178
      %v10473 = vunpack.c.l.b16 %v10179
      %v10474 = vunpack.c.l.b16 %v10180
      %v10475 = vunpack.c.l.b16 %v10181
      %v10476 = vunpack.c.l.b16 %v10182
      %v10477 = vunpack.c.l.b16 %v10183
      %v10478 = vunpack.c.l.b16 %v10184
      %v10479 = vunpack.c.l.b16 %v10185
      %v10480 = vunpack.c.l.b16 %v10186
      %v10481 = vunpack.c.l.b16 %v10187
      %v10482 = vunpack.c.l.b16 %v10188
      %v10483 = vunpack.c.l.b16 %v10189
      %v10484 = vunpack.c.l.b16 %v10190
      %v10485 = vunpack.c.l.b16 %v10191
      %v10486 = vunpack.c.l.b16 %v10192
      %v10487 = vunpack.c.l.b16 %v10193
      %v10488 = vunpack.c.l.b16 %v10194
      %v10489 = vunpack.c.l.b16 %v10195
      %v10490 = vunpack.c.l.b16 %v10196
      %v10491 = vunpack.c.l.b16 %v10197
      %v10492 = vunpack.c.l.b16 %v10198
      %v10493 = vunpack.c.l.b16 %v10199
      %v10494 = vunpack.c.l.b16 %v10200
      %v10495 = vunpack.c.l.b16 %v10201
      %v10496 = vunpack.c.l.b16 %v10202
      %v10497 = vunpack.c.l.b16 %v10203
      %v10498 = vunpack.c.l.b16 %v10204
      %v10499 = vunpack.c.l.b16 %v10205
      %v10500 = vunpack.c.l.b16 %v10206
      %v10501 = vunpack.c.l.b16 %v10207
      %v10502 = vunpack.c.l.b16 %v10208
      %v10503 = vunpack.c.l.b16 %v10209
      %v10504 = vunpack.c.l.b16 %v10210
      %v10505 = vunpack.c.l.b16 %v10211
      %v10506 = vunpack.c.l.b16 %v10212
      %v10507 = vunpack.c.l.b16 %v10213
      %v10508 = vunpack.c.l.b16 %v10214
      %v10509 = vunpack.c.l.b16 %v10215
      %v10510 = vunpack.c.l.b16 %v10216
      %v10511 = vunpack.c.l.b16 %v10217
      %v10512 = vpack.c.b16 %v10367, %v10366
      %v10513 = vpack.c.b16 %v10369, %v10368
      %v10514 = vpack.c.b16 %v10371, %v10370
      %v10515 = vpack.c.b16 %v10373, %v10372
      %v10516 = vpack.c.b16 %v10375, %v10374
      %v10517 = vpack.c.b16 %v10377, %v10376
      %v10518 = vpack.c.b16 %v10379, %v10378
      %v10519 = vpack.c.b16 %v10381, %v10380
      %v10520 = vpack.c.b16 %v10383, %v10382
      %v10521 = vpack.c.b16 %v10385, %v10384
      %v10522 = vpack.c.b16 %v10387, %v10386
      %v10523 = vpack.c.b16 %v10389, %v10388
      %v10524 = vpack.c.b16 %v10391, %v10390
      %v10525 = vpack.c.b16 %v10393, %v10392
      %v10526 = vpack.c.b16 %v10395, %v10394
      %v10527 = vpack.c.b16 %v10397, %v10396
      %v10528 = vpack.c.b16 %v10399, %v10398
      %v10529 = vpack.c.b16 %v10401, %v10400
      %v10530 = vpack.c.b16 %v10403, %v10402
      %v10531 = vpack.c.b16 %v10405, %v10404
      %v10532 = vpack.c.b16 %v10407, %v10406
      %v10533 = vpack.c.b16 %v10409, %v10408
      %v10534 = vpack.c.b16 %v10411, %v10410
      %v10535 = vpack.c.b16 %v10413, %v10412
      %v10536 = vpack.c.b16 %v10415, %v10414
      %v10537 = vpack.c.b16 %v10417, %v10416
      %v10538 = vpack.c.b16 %v10419, %v10418
      %v10539 = vpack.c.b16 %v10421, %v10420
      %v10540 = vpack.c.b16 %v10423, %v10422
      %v10541 = vpack.c.b16 %v10425, %v10424
      %v10542 = vpack.c.b16 %v10427, %v10426
      %v10543 = vpack.c.b16 %v10429, %v10428
      %v10544 = vpack.c.b16 %v10431, %v10430
      %v10545 = vpack.c.b16 %v10433, %v10432
      %v10546 = vpack.c.b16 %v10435, %v10434
      %v10547 = vpack.c.b16 %v10437, %v10436
      %v10548 = vpack.c.b16 %v10439, %v10438
      %v10549 = vpack.c.b16 %v10441, %v10440
      %v10550 = vpack.c.b16 %v10443, %v10442
      %v10551 = vpack.c.b16 %v10445, %v10444
      %v10552 = vpack.c.b16 %v10447, %v10446
      %v10553 = vpack.c.b16 %v10449, %v10448
      %v10554 = vpack.c.b16 %v10451, %v10450
      %v10555 = vpack.c.b16 %v10453, %v10452
      %v10556 = vpack.c.b16 %v10455, %v10454
      %v10557 = vpack.c.b16 %v10457, %v10456
      %v10558 = vpack.c.b16 %v10459, %v10458
      %v10559 = vpack.c.b16 %v10461, %v10460
      %v10560 = vpack.c.b16 %v10463, %v10462
      %v10561 = vpack.c.b16 %v10465, %v10464
      %v10562 = vpack.c.b16 %v10467, %v10466
      %v10563 = vpack.c.b16 %v10469, %v10468
      %v10564 = vpack.c.b16 %v10471, %v10470
      %v10565 = vpack.c.b16 %v10473, %v10472
      %v10566 = vpack.c.b16 %v10475, %v10474
      %v10567 = vpack.c.b16 %v10477, %v10476
      %v10568 = vpack.c.b16 %v10479, %v10478
      %v10569 = vpack.c.b16 %v10481, %v10480
      %v10570 = vpack.c.b16 %v10483, %v10482
      %v10571 = vpack.c.b16 %v10485, %v10484
      %v10572 = vpack.c.b16 %v10487, %v10486
      %v10573 = vpack.c.b16 %v10489, %v10488
      %v10574 = vpack.c.b16 %v10491, %v10490
      %v10575 = vpack.c.b16 %v10493, %v10492
      %v10576 = vpack.c.b16 %v10495, %v10494
      %v10577 = vpack.c.b16 %v10497, %v10496
      %v10578 = vpack.c.b16 %v10499, %v10498
      %v10579 = vpack.c.b16 %v10501, %v10500
      %v10580 = vpack.c.b16 %v10503, %v10502
      %v10581 = vpack.c.b16 %v10505, %v10504
      %v10582 = vpack.c.b16 %v10507, %v10506
      %v10583 = vpack.c.b16 %v10509, %v10508
      %v10584 = vpack.c.b16 %v10511, %v10510
      %vm10585 = vsmask.f32 5376
      %v10587 = vshrl.u32 %v10512, 16
      %v10589 = vrot.slane %v10587, 2
      %v10590 = vshll.u32 %v10512, 16
      %v10592 = vrot.slane %v10590, 3
      %v10593 = vor.u32 %v10589, %v10592
      %v10595 = vshrl.u32 %v10513, 16
      %v10597 = vrot.slane %v10595, 2
      %v10598 = vshll.u32 %v10513, 16
      %v10600 = vrot.slane %v10598, 3
      %v10601 = vor.u32 %v10597, %v10600
      %v10602 = vsel %vm10585, %v10593, %v10601
      %v10604 = vshrl.u32 %v10514, 16
      %v10606 = vrot.slane %v10604, 2
      %v10607 = vshll.u32 %v10514, 16
      %v10609 = vrot.slane %v10607, 3
      %v10610 = vor.u32 %v10606, %v10609
      %v10611 = vsel %vm10585, %v10601, %v10610
      %v10613 = vshrl.u32 %v10515, 16
      %v10615 = vrot.slane %v10613, 2
      %v10616 = vshll.u32 %v10515, 16
      %v10618 = vrot.slane %v10616, 3
      %v10619 = vor.u32 %v10615, %v10618
      %v10620 = vsel %vm10585, %v10610, %v10619
      %v10622 = vshrl.u32 %v10516, 16
      %v10624 = vrot.slane %v10622, 2
      %v10625 = vshll.u32 %v10516, 16
      %v10627 = vrot.slane %v10625, 3
      %v10628 = vor.u32 %v10624, %v10627
      %v10629 = vsel %vm10585, %v10619, %v10628
      %v10631 = vshrl.u32 %v10517, 16
      %v10633 = vrot.slane %v10631, 2
      %v10634 = vshll.u32 %v10517, 16
      %v10636 = vrot.slane %v10634, 3
      %v10637 = vor.u32 %v10633, %v10636
      %v10638 = vsel %vm10585, %v10628, %v10637
      %v10640 = vshrl.u32 %v10518, 16
      %v10642 = vrot.slane %v10640, 2
      %v10643 = vshll.u32 %v10518, 16
      %v10645 = vrot.slane %v10643, 3
      %v10646 = vor.u32 %v10642, %v10645
      %v10647 = vsel %vm10585, %v10637, %v10646
      %v10649 = vshrl.u32 %v10519, 16
      %v10651 = vrot.slane %v10649, 2
      %v10652 = vshll.u32 %v10519, 16
      %v10654 = vrot.slane %v10652, 3
      %v10655 = vor.u32 %v10651, %v10654
      %v10656 = vsel %vm10585, %v10646, %v10655
      %v10658 = vshrl.u32 %v10520, 16
      %v10660 = vrot.slane %v10658, 2
      %v10661 = vshll.u32 %v10520, 16
      %v10663 = vrot.slane %v10661, 3
      %v10664 = vor.u32 %v10660, %v10663
      %v10665 = vsel %vm10585, %v10655, %v10664
      %v10667 = vshrl.u32 %v10521, 16
      %v10669 = vrot.slane %v10667, 2
      %v10670 = vshll.u32 %v10521, 16
      %v10672 = vrot.slane %v10670, 3
      %v10673 = vor.u32 %v10669, %v10672
      %v10674 = vsel %vm10585, %v10664, %v10673
      %v10676 = vshrl.u32 %v10522, 16
      %v10678 = vrot.slane %v10676, 2
      %v10679 = vshll.u32 %v10522, 16
      %v10681 = vrot.slane %v10679, 3
      %v10682 = vor.u32 %v10678, %v10681
      %v10683 = vsel %vm10585, %v10673, %v10682
      %v10685 = vshrl.u32 %v10523, 16
      %v10687 = vrot.slane %v10685, 2
      %v10688 = vshll.u32 %v10523, 16
      %v10690 = vrot.slane %v10688, 3
      %v10691 = vor.u32 %v10687, %v10690
      %v10692 = vsel %vm10585, %v10682, %v10691
      %v10694 = vshrl.u32 %v10524, 16
      %v10696 = vrot.slane %v10694, 2
      %v10697 = vshll.u32 %v10524, 16
      %v10699 = vrot.slane %v10697, 3
      %v10700 = vor.u32 %v10696, %v10699
      %v10701 = vsel %vm10585, %v10691, %v10700
      %v10703 = vshrl.u32 %v10525, 16
      %v10705 = vrot.slane %v10703, 2
      %v10706 = vshll.u32 %v10525, 16
      %v10708 = vrot.slane %v10706, 3
      %v10709 = vor.u32 %v10705, %v10708
      %v10710 = vsel %vm10585, %v10700, %v10709
      %v10712 = vshrl.u32 %v10526, 16
      %v10714 = vrot.slane %v10712, 2
      %v10715 = vshll.u32 %v10526, 16
      %v10717 = vrot.slane %v10715, 3
      %v10718 = vor.u32 %v10714, %v10717
      %v10719 = vsel %vm10585, %v10709, %v10718
      %v10721 = vshrl.u32 %v10527, 16
      %v10723 = vrot.slane %v10721, 2
      %v10724 = vshll.u32 %v10527, 16
      %v10726 = vrot.slane %v10724, 3
      %v10727 = vor.u32 %v10723, %v10726
      %v10728 = vsel %vm10585, %v10718, %v10727
      %v10730 = vshrl.u32 %v10528, 16
      %v10732 = vrot.slane %v10730, 2
      %v10733 = vshll.u32 %v10528, 16
      %v10735 = vrot.slane %v10733, 3
      %v10736 = vor.u32 %v10732, %v10735
      %v10737 = vsel %vm10585, %v10727, %v10736
      %v10739 = vshrl.u32 %v10529, 16
      %v10741 = vrot.slane %v10739, 2
      %v10742 = vshll.u32 %v10529, 16
      %v10744 = vrot.slane %v10742, 3
      %v10745 = vor.u32 %v10741, %v10744
      %v10746 = vsel %vm10585, %v10736, %v10745
      %v10748 = vshrl.u32 %v10530, 16
      %v10750 = vrot.slane %v10748, 2
      %v10751 = vshll.u32 %v10530, 16
      %v10753 = vrot.slane %v10751, 3
      %v10754 = vor.u32 %v10750, %v10753
      %v10755 = vsel %vm10585, %v10745, %v10754
      %v10757 = vshrl.u32 %v10531, 16
      %v10759 = vrot.slane %v10757, 2
      %v10760 = vshll.u32 %v10531, 16
      %v10762 = vrot.slane %v10760, 3
      %v10763 = vor.u32 %v10759, %v10762
      %v10764 = vsel %vm10585, %v10754, %v10763
      %v10766 = vshrl.u32 %v10532, 16
      %v10768 = vrot.slane %v10766, 2
      %v10769 = vshll.u32 %v10532, 16
      %v10771 = vrot.slane %v10769, 3
      %v10772 = vor.u32 %v10768, %v10771
      %v10773 = vsel %vm10585, %v10763, %v10772
      %v10775 = vshrl.u32 %v10533, 16
      %v10777 = vrot.slane %v10775, 2
      %v10778 = vshll.u32 %v10533, 16
      %v10780 = vrot.slane %v10778, 3
      %v10781 = vor.u32 %v10777, %v10780
      %v10782 = vsel %vm10585, %v10772, %v10781
      %v10784 = vshrl.u32 %v10534, 16
      %v10786 = vrot.slane %v10784, 2
      %v10787 = vshll.u32 %v10534, 16
      %v10789 = vrot.slane %v10787, 3
      %v10790 = vor.u32 %v10786, %v10789
      %v10791 = vsel %vm10585, %v10781, %v10790
      %v10793 = vshrl.u32 %v10535, 16
      %v10795 = vrot.slane %v10793, 2
      %v10796 = vshll.u32 %v10535, 16
      %v10798 = vrot.slane %v10796, 3
      %v10799 = vor.u32 %v10795, %v10798
      %v10800 = vsel %vm10585, %v10790, %v10799
      %v10802 = vshrl.u32 %v10536, 16
      %v10804 = vrot.slane %v10802, 2
      %v10805 = vshll.u32 %v10536, 16
      %v10807 = vrot.slane %v10805, 3
      %v10808 = vor.u32 %v10804, %v10807
      %v10809 = vsel %vm10585, %v10799, %v10808
      %v10811 = vshrl.u32 %v10537, 16
      %v10813 = vrot.slane %v10811, 2
      %v10814 = vshll.u32 %v10537, 16
      %v10816 = vrot.slane %v10814, 3
      %v10817 = vor.u32 %v10813, %v10816
      %v10818 = vsel %vm10585, %v10808, %v10817
      %v10820 = vshrl.u32 %v10538, 16
      %v10822 = vrot.slane %v10820, 2
      %v10823 = vshll.u32 %v10538, 16
      %v10825 = vrot.slane %v10823, 3
      %v10826 = vor.u32 %v10822, %v10825
      %v10827 = vsel %vm10585, %v10817, %v10826
      %v10829 = vshrl.u32 %v10539, 16
      %v10831 = vrot.slane %v10829, 2
      %v10832 = vshll.u32 %v10539, 16
      %v10834 = vrot.slane %v10832, 3
      %v10835 = vor.u32 %v10831, %v10834
      %v10836 = vsel %vm10585, %v10826, %v10835
      %v10838 = vshrl.u32 %v10540, 16
      %v10840 = vrot.slane %v10838, 2
      %v10841 = vshll.u32 %v10540, 16
      %v10843 = vrot.slane %v10841, 3
      %v10844 = vor.u32 %v10840, %v10843
      %v10845 = vsel %vm10585, %v10835, %v10844
      %v10847 = vshrl.u32 %v10541, 16
      %v10849 = vrot.slane %v10847, 2
      %v10850 = vshll.u32 %v10541, 16
      %v10852 = vrot.slane %v10850, 3
      %v10853 = vor.u32 %v10849, %v10852
      %v10854 = vsel %vm10585, %v10844, %v10853
      %v10856 = vshrl.u32 %v10542, 16
      %v10858 = vrot.slane %v10856, 2
      %v10859 = vshll.u32 %v10542, 16
      %v10861 = vrot.slane %v10859, 3
      %v10862 = vor.u32 %v10858, %v10861
      %v10863 = vsel %vm10585, %v10853, %v10862
      %v10865 = vshrl.u32 %v10543, 16
      %v10867 = vrot.slane %v10865, 2
      %v10868 = vshll.u32 %v10543, 16
      %v10870 = vrot.slane %v10868, 3
      %v10871 = vor.u32 %v10867, %v10870
      %v10872 = vsel %vm10585, %v10862, %v10871
      %v10874 = vshrl.u32 %v10544, 16
      %v10876 = vrot.slane %v10874, 2
      %v10877 = vshll.u32 %v10544, 16
      %v10879 = vrot.slane %v10877, 3
      %v10880 = vor.u32 %v10876, %v10879
      %v10881 = vsel %vm10585, %v10871, %v10880
      %v10883 = vshrl.u32 %v10545, 16
      %v10885 = vrot.slane %v10883, 2
      %v10886 = vshll.u32 %v10545, 16
      %v10888 = vrot.slane %v10886, 3
      %v10889 = vor.u32 %v10885, %v10888
      %v10890 = vsel %vm10585, %v10880, %v10889
      %v10892 = vshrl.u32 %v10546, 16
      %v10894 = vrot.slane %v10892, 2
      %v10895 = vshll.u32 %v10546, 16
      %v10897 = vrot.slane %v10895, 3
      %v10898 = vor.u32 %v10894, %v10897
      %v10899 = vsel %vm10585, %v10889, %v10898
      %v10901 = vshrl.u32 %v10547, 16
      %v10903 = vrot.slane %v10901, 2
      %v10904 = vshll.u32 %v10547, 16
      %v10906 = vrot.slane %v10904, 3
      %v10907 = vor.u32 %v10903, %v10906
      %v10908 = vsel %vm10585, %v10898, %v10907
      %v10910 = vshrl.u32 %v10548, 16
      %v10912 = vrot.slane %v10910, 2
      %v10913 = vshll.u32 %v10548, 16
      %v10915 = vrot.slane %v10913, 3
      %v10916 = vor.u32 %v10912, %v10915
      %v10917 = vsel %vm10585, %v10907, %v10916
      %v10919 = vshrl.u32 %v10549, 16
      %v10921 = vrot.slane %v10919, 2
      %v10922 = vshll.u32 %v10549, 16
      %v10924 = vrot.slane %v10922, 3
      %v10925 = vor.u32 %v10921, %v10924
      %v10926 = vsel %vm10585, %v10916, %v10925
      %v10928 = vshrl.u32 %v10550, 16
      %v10930 = vrot.slane %v10928, 2
      %v10931 = vshll.u32 %v10550, 16
      %v10933 = vrot.slane %v10931, 3
      %v10934 = vor.u32 %v10930, %v10933
      %v10935 = vsel %vm10585, %v10925, %v10934
      %v10937 = vshrl.u32 %v10551, 16
      %v10939 = vrot.slane %v10937, 2
      %v10940 = vshll.u32 %v10551, 16
      %v10942 = vrot.slane %v10940, 3
      %v10943 = vor.u32 %v10939, %v10942
      %v10944 = vsel %vm10585, %v10934, %v10943
      %v10946 = vshrl.u32 %v10552, 16
      %v10948 = vrot.slane %v10946, 2
      %v10949 = vshll.u32 %v10552, 16
      %v10951 = vrot.slane %v10949, 3
      %v10952 = vor.u32 %v10948, %v10951
      %v10953 = vsel %vm10585, %v10943, %v10952
      %v10955 = vshrl.u32 %v10553, 16
      %v10957 = vrot.slane %v10955, 2
      %v10958 = vshll.u32 %v10553, 16
      %v10960 = vrot.slane %v10958, 3
      %v10961 = vor.u32 %v10957, %v10960
      %v10962 = vsel %vm10585, %v10952, %v10961
      %v10964 = vshrl.u32 %v10554, 16
      %v10966 = vrot.slane %v10964, 2
      %v10967 = vshll.u32 %v10554, 16
      %v10969 = vrot.slane %v10967, 3
      %v10970 = vor.u32 %v10966, %v10969
      %v10971 = vsel %vm10585, %v10961, %v10970
      %v10973 = vshrl.u32 %v10555, 16
      %v10975 = vrot.slane %v10973, 2
      %v10976 = vshll.u32 %v10555, 16
      %v10978 = vrot.slane %v10976, 3
      %v10979 = vor.u32 %v10975, %v10978
      %v10980 = vsel %vm10585, %v10970, %v10979
      %v10982 = vshrl.u32 %v10556, 16
      %v10984 = vrot.slane %v10982, 2
      %v10985 = vshll.u32 %v10556, 16
      %v10987 = vrot.slane %v10985, 3
      %v10988 = vor.u32 %v10984, %v10987
      %v10989 = vsel %vm10585, %v10979, %v10988
      %v10991 = vshrl.u32 %v10557, 16
      %v10993 = vrot.slane %v10991, 2
      %v10994 = vshll.u32 %v10557, 16
      %v10996 = vrot.slane %v10994, 3
      %v10997 = vor.u32 %v10993, %v10996
      %v10998 = vsel %vm10585, %v10988, %v10997
      %v11000 = vshrl.u32 %v10558, 16
      %v11002 = vrot.slane %v11000, 2
      %v11003 = vshll.u32 %v10558, 16
      %v11005 = vrot.slane %v11003, 3
      %v11006 = vor.u32 %v11002, %v11005
      %v11007 = vsel %vm10585, %v10997, %v11006
      %v11009 = vshrl.u32 %v10559, 16
      %v11011 = vrot.slane %v11009, 2
      %v11012 = vshll.u32 %v10559, 16
      %v11014 = vrot.slane %v11012, 3
      %v11015 = vor.u32 %v11011, %v11014
      %v11016 = vsel %vm10585, %v11006, %v11015
      %v11018 = vshrl.u32 %v10560, 16
      %v11020 = vrot.slane %v11018, 2
      %v11021 = vshll.u32 %v10560, 16
      %v11023 = vrot.slane %v11021, 3
      %v11024 = vor.u32 %v11020, %v11023
      %v11025 = vsel %vm10585, %v11015, %v11024
      %v11027 = vshrl.u32 %v10561, 16
      %v11029 = vrot.slane %v11027, 2
      %v11030 = vshll.u32 %v10561, 16
      %v11032 = vrot.slane %v11030, 3
      %v11033 = vor.u32 %v11029, %v11032
      %v11034 = vsel %vm10585, %v11024, %v11033
      %v11036 = vshrl.u32 %v10562, 16
      %v11038 = vrot.slane %v11036, 2
      %v11039 = vshll.u32 %v10562, 16
      %v11041 = vrot.slane %v11039, 3
      %v11042 = vor.u32 %v11038, %v11041
      %v11043 = vsel %vm10585, %v11033, %v11042
      %v11045 = vshrl.u32 %v10563, 16
      %v11047 = vrot.slane %v11045, 2
      %v11048 = vshll.u32 %v10563, 16
      %v11050 = vrot.slane %v11048, 3
      %v11051 = vor.u32 %v11047, %v11050
      %v11052 = vsel %vm10585, %v11042, %v11051
      %v11054 = vshrl.u32 %v10564, 16
      %v11056 = vrot.slane %v11054, 2
      %v11057 = vshll.u32 %v10564, 16
      %v11059 = vrot.slane %v11057, 3
      %v11060 = vor.u32 %v11056, %v11059
      %v11061 = vsel %vm10585, %v11051, %v11060
      %v11063 = vshrl.u32 %v10565, 16
      %v11065 = vrot.slane %v11063, 2
      %v11066 = vshll.u32 %v10565, 16
      %v11068 = vrot.slane %v11066, 3
      %v11069 = vor.u32 %v11065, %v11068
      %v11070 = vsel %vm10585, %v11060, %v11069
      %v11072 = vshrl.u32 %v10566, 16
      %v11074 = vrot.slane %v11072, 2
      %v11075 = vshll.u32 %v10566, 16
      %v11077 = vrot.slane %v11075, 3
      %v11078 = vor.u32 %v11074, %v11077
      %v11079 = vsel %vm10585, %v11069, %v11078
      %v11081 = vshrl.u32 %v10567, 16
      %v11083 = vrot.slane %v11081, 2
      %v11084 = vshll.u32 %v10567, 16
      %v11086 = vrot.slane %v11084, 3
      %v11087 = vor.u32 %v11083, %v11086
      %v11088 = vsel %vm10585, %v11078, %v11087
      %v11090 = vshrl.u32 %v10568, 16
      %v11092 = vrot.slane %v11090, 2
      %v11093 = vshll.u32 %v10568, 16
      %v11095 = vrot.slane %v11093, 3
      %v11096 = vor.u32 %v11092, %v11095
      %v11097 = vsel %vm10585, %v11087, %v11096
      %v11099 = vshrl.u32 %v10569, 16
      %v11101 = vrot.slane %v11099, 2
      %v11102 = vshll.u32 %v10569, 16
      %v11104 = vrot.slane %v11102, 3
      %v11105 = vor.u32 %v11101, %v11104
      %v11106 = vsel %vm10585, %v11096, %v11105
      %v11108 = vshrl.u32 %v10570, 16
      %v11110 = vrot.slane %v11108, 2
      %v11111 = vshll.u32 %v10570, 16
      %v11113 = vrot.slane %v11111, 3
      %v11114 = vor.u32 %v11110, %v11113
      %v11115 = vsel %vm10585, %v11105, %v11114
      %v11117 = vshrl.u32 %v10571, 16
      %v11119 = vrot.slane %v11117, 2
      %v11120 = vshll.u32 %v10571, 16
      %v11122 = vrot.slane %v11120, 3
      %v11123 = vor.u32 %v11119, %v11122
      %v11124 = vsel %vm10585, %v11114, %v11123
      %v11126 = vshrl.u32 %v10572, 16
      %v11128 = vrot.slane %v11126, 2
      %v11129 = vshll.u32 %v10572, 16
      %v11131 = vrot.slane %v11129, 3
      %v11132 = vor.u32 %v11128, %v11131
      %v11133 = vsel %vm10585, %v11123, %v11132
      %v11135 = vshrl.u32 %v10573, 16
      %v11137 = vrot.slane %v11135, 2
      %v11138 = vshll.u32 %v10573, 16
      %v11140 = vrot.slane %v11138, 3
      %v11141 = vor.u32 %v11137, %v11140
      %v11142 = vsel %vm10585, %v11132, %v11141
      %v11144 = vshrl.u32 %v10574, 16
      %v11146 = vrot.slane %v11144, 2
      %v11147 = vshll.u32 %v10574, 16
      %v11149 = vrot.slane %v11147, 3
      %v11150 = vor.u32 %v11146, %v11149
      %v11151 = vsel %vm10585, %v11141, %v11150
      %v11153 = vshrl.u32 %v10575, 16
      %v11155 = vrot.slane %v11153, 2
      %v11156 = vshll.u32 %v10575, 16
      %v11158 = vrot.slane %v11156, 3
      %v11159 = vor.u32 %v11155, %v11158
      %v11160 = vsel %vm10585, %v11150, %v11159
      %v11162 = vshrl.u32 %v10576, 16
      %v11164 = vrot.slane %v11162, 2
      %v11165 = vshll.u32 %v10576, 16
      %v11167 = vrot.slane %v11165, 3
      %v11168 = vor.u32 %v11164, %v11167
      %v11169 = vsel %vm10585, %v11159, %v11168
      %v11171 = vshrl.u32 %v10577, 16
      %v11173 = vrot.slane %v11171, 2
      %v11174 = vshll.u32 %v10577, 16
      %v11176 = vrot.slane %v11174, 3
      %v11177 = vor.u32 %v11173, %v11176
      %v11178 = vsel %vm10585, %v11168, %v11177
      %v11180 = vshrl.u32 %v10578, 16
      %v11182 = vrot.slane %v11180, 2
      %v11183 = vshll.u32 %v10578, 16
      %v11185 = vrot.slane %v11183, 3
      %v11186 = vor.u32 %v11182, %v11185
      %v11187 = vsel %vm10585, %v11177, %v11186
      %v11189 = vshrl.u32 %v10579, 16
      %v11191 = vrot.slane %v11189, 2
      %v11192 = vshll.u32 %v10579, 16
      %v11194 = vrot.slane %v11192, 3
      %v11195 = vor.u32 %v11191, %v11194
      %v11196 = vsel %vm10585, %v11186, %v11195
      %v11198 = vshrl.u32 %v10580, 16
      %v11200 = vrot.slane %v11198, 2
      %v11201 = vshll.u32 %v10580, 16
      %v11203 = vrot.slane %v11201, 3
      %v11204 = vor.u32 %v11200, %v11203
      %v11205 = vsel %vm10585, %v11195, %v11204
      %v11207 = vshrl.u32 %v10581, 16
      %v11209 = vrot.slane %v11207, 2
      %v11210 = vshll.u32 %v10581, 16
      %v11212 = vrot.slane %v11210, 3
      %v11213 = vor.u32 %v11209, %v11212
      %v11214 = vsel %vm10585, %v11204, %v11213
      %v11216 = vshrl.u32 %v10582, 16
      %v11218 = vrot.slane %v11216, 2
      %v11219 = vshll.u32 %v10582, 16
      %v11221 = vrot.slane %v11219, 3
      %v11222 = vor.u32 %v11218, %v11221
      %v11223 = vsel %vm10585, %v11213, %v11222
      %v11225 = vshrl.u32 %v10583, 16
      %v11227 = vrot.slane %v11225, 2
      %v11228 = vshll.u32 %v10583, 16
      %v11230 = vrot.slane %v11228, 3
      %v11231 = vor.u32 %v11227, %v11230
      %v11232 = vsel %vm10585, %v11222, %v11231
      %v11234 = vshrl.u32 %v10584, 16
      %v11236 = vrot.slane %v11234, 2
      %v11237 = vshll.u32 %v10584, 16
      %v11239 = vrot.slane %v11237, 3
      %v11240 = vor.u32 %v11236, %v11239
      %v11241 = vsel %vm10585, %v11231, %v11240
      %v11243 = vsel %vm1268, %v10602, 0
      %v11246 = vsel %vm1268, %v10611, 0
      %v11249 = vsel %vm1268, %v10620, 0
      %v11252 = vsel %vm1268, %v10629, 0
      %v11255 = vsel %vm1268, %v10638, 0
      %v11258 = vsel %vm1268, %v10647, 0
      %v11261 = vsel %vm1268, %v10656, 0
      %v11264 = vsel %vm1268, %v10665, 0
      %v11267 = vsel %vm1268, %v10674, 0
      %v11270 = vsel %vm1268, %v10683, 0
      %v11273 = vsel %vm1268, %v10692, 0
      %v11276 = vsel %vm1268, %v10701, 0
      %v11279 = vsel %vm1268, %v10710, 0
      %v11282 = vsel %vm1268, %v10719, 0
      %v11285 = vsel %vm1268, %v10728, 0
      %v11288 = vsel %vm1268, %v10737, 0
      %v11291 = vsel %vm1268, %v10746, 0
      %v11294 = vsel %vm1268, %v10755, 0
      %v11297 = vsel %vm1268, %v10764, 0
      %v11300 = vsel %vm1268, %v10773, 0
      %v11303 = vsel %vm1268, %v10782, 0
      %v11306 = vsel %vm1268, %v10791, 0
      %v11309 = vsel %vm1268, %v10800, 0
      %v11312 = vsel %vm1268, %v10809, 0
      %v11315 = vsel %vm1268, %v10818, 0
      %v11318 = vsel %vm1268, %v10827, 0
      %v11321 = vsel %vm1268, %v10836, 0
      %v11324 = vsel %vm1268, %v10845, 0
      %v11327 = vsel %vm1268, %v10854, 0
      %v11330 = vsel %vm1268, %v10863, 0
      %v11333 = vsel %vm1268, %v10872, 0
      %v11336 = vsel %vm1268, %v10881, 0
      %v11339 = vsel %vm1268, %v10890, 0
      %v11342 = vsel %vm1268, %v10899, 0
      %v11345 = vsel %vm1268, %v10908, 0
      %v11348 = vsel %vm1268, %v10917, 0
      %v11351 = vsel %vm1268, %v10926, 0
      %v11354 = vsel %vm1268, %v10935, 0
      %v11357 = vsel %vm1268, %v10944, 0
      %v11360 = vsel %vm1268, %v10953, 0
      %v11363 = vsel %vm1268, %v10962, 0
      %v11366 = vsel %vm1268, %v10971, 0
      %v11369 = vsel %vm1268, %v10980, 0
      %v11372 = vsel %vm1268, %v10989, 0
      %v11375 = vsel %vm1268, %v10998, 0
      %v11378 = vsel %vm1268, %v11007, 0
      %v11381 = vsel %vm1268, %v11016, 0
      %v11384 = vsel %vm1268, %v11025, 0
      %v11387 = vsel %vm1268, %v11034, 0
      %v11390 = vsel %vm1268, %v11043, 0
      %v11393 = vsel %vm1268, %v11052, 0
      %v11396 = vsel %vm1268, %v11061, 0
      %v11399 = vsel %vm1268, %v11070, 0
      %v11402 = vsel %vm1268, %v11079, 0
      %v11405 = vsel %vm1268, %v11088, 0
      %v11408 = vsel %vm1268, %v11097, 0
      %v11411 = vsel %vm1268, %v11106, 0
      %v11414 = vsel %vm1268, %v11115, 0
      %v11417 = vsel %vm1268, %v11124, 0
      %v11420 = vsel %vm1268, %v11133, 0
      %v11423 = vsel %vm1268, %v11142, 0
      %v11426 = vsel %vm1268, %v11151, 0
      %v11429 = vsel %vm1268, %v11160, 0
      %v11432 = vsel %vm1268, %v11169, 0
      %v11435 = vsel %vm1268, %v11178, 0
      %v11438 = vsel %vm1268, %v11187, 0
      %v11441 = vsel %vm1268, %v11196, 0
      %v11444 = vsel %vm1268, %v11205, 0
      %v11447 = vsel %vm1268, %v11214, 0
      %v11450 = vsel %vm1268, %v11223, 0
      %v11453 = vsel %vm1268, %v11232, 0
      %v11456 = vsel %vm1268, %v11241, 0
      %v11459 = vsel %vm1268, %v11240, 0
      %v11462 = vand.u32 %v10219, %v1491
      %11464 = vmatprep.subr.bf16.mxu0 0
      %11465 = vmatpush1.bf16.msra.mxu0 0
      %11466 = vmatprep.subr.bf16.mxu0 0
      %11467 = vmatpush1.bf16.msra.mxu0 0
      %11468 = vmatprep.subr.bf16.mxu0 0
      %11469 = vmatpush1.bf16.msra.mxu0 0
      %11470 = vmatprep.subr.bf16.mxu0 0
      %11471 = vmatpush1.bf16.msra.mxu0 0
      %11472 = vmatprep.subr.bf16.mxu0 0
      %11473 = vmatpush1.bf16.msra.mxu0 0
      %11474 = vmatprep.subr.bf16.mxu0 0
      %11475 = vmatpush1.bf16.msra.mxu0 0
      %11476 = vmatprep.subr.bf16.mxu0 0
      %11477 = vmatpush1.bf16.msra.mxu0 0
      %11478 = vmatprep.subr.bf16.mxu0 0
      %11479 = vmatpush1.bf16.msra.mxu0 %v11462
      %11480 = vmatprep.subr.bf16.mxu0 0
      %11481 = vmatpush2.bf16.msra.mxu0 0
      %11482 = vmatprep.subr.bf16.mxu0 0
      %11483 = vmatpush2.bf16.msra.mxu0 0
      %11484 = vmatprep.subr.bf16.mxu0 0
      %11485 = vmatpush2.bf16.msra.mxu0 0
      %11486 = vmatprep.subr.bf16.mxu0 0
      %11487 = vmatpush2.bf16.msra.mxu0 0
      %11488 = vmatprep.subr.bf16.mxu0 0
      %11489 = vmatpush2.bf16.msra.mxu0 0
      %11490 = vmatprep.subr.bf16.mxu0 0
      %11491 = vmatpush2.bf16.msra.mxu0 0
      %11492 = vmatprep.subr.bf16.mxu0 0
      %11493 = vmatpush2.bf16.msra.mxu0 0
      %11494 = vmatprep.subr.bf16.mxu0 0
      %11495 = vmatpush2.bf16.msra.mxu0 0
      %11496 = vmatprep.mubr.bf16.mxu0 0
      %11497 = vmatmul.mubr.bf16.gmra.mxu0 %v11243
      %v11498 = vpop.f32.mrf.mxu0
      %v11499 = vadd.f32 0.0, %v11498
      %v11500 = vpop.f32.mrf.mxu0
      %v11501 = vpop.f32.mrf.mxu0
      %v11502 = vadd.f32 0.0, %v11501
      %v11503 = vpop.f32.mrf.mxu0
      %11504 = vmatprep.mubr.bf16.mxu0 0
      %11505 = vmatmul.mubr.bf16.gmra.mxu0 %v11246
      %v11506 = vpop.f32.mrf.mxu0
      %v11507 = vadd.f32 0.0, %v11506
      %v11508 = vpop.f32.mrf.mxu0
      %v11509 = vpop.f32.mrf.mxu0
      %v11510 = vadd.f32 0.0, %v11509
      %v11511 = vpop.f32.mrf.mxu0
      %11512 = vmatprep.mubr.bf16.mxu0 0
      %11513 = vmatmul.mubr.bf16.gmra.mxu0 %v11249
      %v11514 = vpop.f32.mrf.mxu0
      %v11515 = vadd.f32 0.0, %v11514
      %v11516 = vpop.f32.mrf.mxu0
      %v11517 = vpop.f32.mrf.mxu0
      %v11518 = vadd.f32 0.0, %v11517
      %v11519 = vpop.f32.mrf.mxu0
      %11520 = vmatprep.mubr.bf16.mxu0 0
      %11521 = vmatmul.mubr.bf16.gmra.mxu0 %v11252
      %v11522 = vpop.f32.mrf.mxu0
      %v11523 = vadd.f32 0.0, %v11522
      %v11524 = vpop.f32.mrf.mxu0
      %v11525 = vpop.f32.mrf.mxu0
      %v11526 = vadd.f32 0.0, %v11525
      %v11527 = vpop.f32.mrf.mxu0
      %11528 = vmatprep.mubr.bf16.mxu0 0
      %11529 = vmatmul.mubr.bf16.gmra.mxu0 %v11255
      %v11530 = vpop.f32.mrf.mxu0
      %v11531 = vadd.f32 0.0, %v11530
      %v11532 = vpop.f32.mrf.mxu0
      %v11533 = vpop.f32.mrf.mxu0
      %v11534 = vadd.f32 0.0, %v11533
      %v11535 = vpop.f32.mrf.mxu0
      %11536 = vmatprep.mubr.bf16.mxu0 0
      %11537 = vmatmul.mubr.bf16.gmra.mxu0 %v11258
      %v11538 = vpop.f32.mrf.mxu0
      %v11539 = vadd.f32 0.0, %v11538
      %v11540 = vpop.f32.mrf.mxu0
      %v11541 = vpop.f32.mrf.mxu0
      %v11542 = vadd.f32 0.0, %v11541
      %v11543 = vpop.f32.mrf.mxu0
      %11544 = vmatprep.mubr.bf16.mxu0 0
      %11545 = vmatmul.mubr.bf16.gmra.mxu0 %v11261
      %v11546 = vpop.f32.mrf.mxu0
      %v11547 = vadd.f32 0.0, %v11546
      %v11548 = vpop.f32.mrf.mxu0
      %v11549 = vpop.f32.mrf.mxu0
      %v11550 = vadd.f32 0.0, %v11549
      %v11551 = vpop.f32.mrf.mxu0
      %11552 = vmatprep.mubr.bf16.mxu0 0
      %11553 = vmatmul.mubr.bf16.gmra.mxu0 %v11264
      %v11554 = vpop.f32.mrf.mxu0
      %v11555 = vadd.f32 0.0, %v11554
      %v11556 = vpop.f32.mrf.mxu0
      %v11557 = vpop.f32.mrf.mxu0
      %v11558 = vadd.f32 0.0, %v11557
      %v11559 = vpop.f32.mrf.mxu0
      %11560 = vmatprep.mubr.bf16.mxu0 0
      %11561 = vmatmul.mubr.bf16.gmra.mxu0 %v11267
      %v11562 = vpop.f32.mrf.mxu0
      %v11563 = vadd.f32 0.0, %v11562
      %v11564 = vpop.f32.mrf.mxu0
      %v11565 = vpop.f32.mrf.mxu0
      %v11566 = vadd.f32 0.0, %v11565
      %v11567 = vpop.f32.mrf.mxu0
      %11568 = vmatprep.mubr.bf16.mxu0 0
      %11569 = vmatmul.mubr.bf16.gmra.mxu0 %v11270
      %v11570 = vpop.f32.mrf.mxu0
      %v11571 = vadd.f32 0.0, %v11570
      %v11572 = vpop.f32.mrf.mxu0
      %v11573 = vpop.f32.mrf.mxu0
      %v11574 = vadd.f32 0.0, %v11573
      %v11575 = vpop.f32.mrf.mxu0
      %11576 = vmatprep.mubr.bf16.mxu0 0
      %11577 = vmatmul.mubr.bf16.gmra.mxu0 %v11273
      %v11578 = vpop.f32.mrf.mxu0
      %v11579 = vadd.f32 0.0, %v11578
      %v11580 = vpop.f32.mrf.mxu0
      %v11581 = vpop.f32.mrf.mxu0
      %v11582 = vadd.f32 0.0, %v11581
      %v11583 = vpop.f32.mrf.mxu0
      %11584 = vmatprep.mubr.bf16.mxu0 0
      %11585 = vmatmul.mubr.bf16.gmra.mxu0 %v11276
      %v11586 = vpop.f32.mrf.mxu0
      %v11587 = vadd.f32 0.0, %v11586
      %v11588 = vpop.f32.mrf.mxu0
      %v11589 = vpop.f32.mrf.mxu0
      %v11590 = vadd.f32 0.0, %v11589
      %v11591 = vpop.f32.mrf.mxu0
      %11592 = vmatprep.mubr.bf16.mxu0 0
      %11593 = vmatmul.mubr.bf16.gmra.mxu0 %v11279
      %v11594 = vpop.f32.mrf.mxu0
      %v11595 = vadd.f32 0.0, %v11594
      %v11596 = vpop.f32.mrf.mxu0
      %v11597 = vpop.f32.mrf.mxu0
      %v11598 = vadd.f32 0.0, %v11597
      %v11599 = vpop.f32.mrf.mxu0
      %11600 = vmatprep.mubr.bf16.mxu0 0
      %11601 = vmatmul.mubr.bf16.gmra.mxu0 %v11282
      %v11602 = vpop.f32.mrf.mxu0
      %v11603 = vadd.f32 0.0, %v11602
      %v11604 = vpop.f32.mrf.mxu0
      %v11605 = vpop.f32.mrf.mxu0
      %v11606 = vadd.f32 0.0, %v11605
      %v11607 = vpop.f32.mrf.mxu0
      %11608 = vmatprep.mubr.bf16.mxu0 0
      %11609 = vmatmul.mubr.bf16.gmra.mxu0 %v11285
      %v11610 = vpop.f32.mrf.mxu0
      %v11611 = vadd.f32 0.0, %v11610
      %v11612 = vpop.f32.mrf.mxu0
      %v11613 = vpop.f32.mrf.mxu0
      %v11614 = vadd.f32 0.0, %v11613
      %v11615 = vpop.f32.mrf.mxu0
      %11616 = vmatprep.mubr.bf16.mxu0 0
      %11617 = vmatmul.mubr.bf16.gmra.mxu0 %v11288
      %v11618 = vpop.f32.mrf.mxu0
      %v11619 = vadd.f32 0.0, %v11618
      %v11620 = vpop.f32.mrf.mxu0
      %v11621 = vpop.f32.mrf.mxu0
      %v11622 = vadd.f32 0.0, %v11621
      %v11623 = vpop.f32.mrf.mxu0
      %11624 = vmatprep.mubr.bf16.mxu0 0
      %11625 = vmatmul.mubr.bf16.gmra.mxu0 %v11291
      %v11626 = vpop.f32.mrf.mxu0
      %v11627 = vadd.f32 0.0, %v11626
      %v11628 = vpop.f32.mrf.mxu0
      %v11629 = vpop.f32.mrf.mxu0
      %v11630 = vadd.f32 0.0, %v11629
      %v11631 = vpop.f32.mrf.mxu0
      %11632 = vmatprep.mubr.bf16.mxu0 0
      %11633 = vmatmul.mubr.bf16.gmra.mxu0 %v11294
      %v11634 = vpop.f32.mrf.mxu0
      %v11635 = vadd.f32 0.0, %v11634
      %v11636 = vpop.f32.mrf.mxu0
      %v11637 = vpop.f32.mrf.mxu0
      %v11638 = vadd.f32 0.0, %v11637
      %v11639 = vpop.f32.mrf.mxu0
      %11640 = vmatprep.mubr.bf16.mxu0 0
      %11641 = vmatmul.mubr.bf16.gmra.mxu0 %v11297
      %v11642 = vpop.f32.mrf.mxu0
      %v11643 = vadd.f32 0.0, %v11642
      %v11644 = vpop.f32.mrf.mxu0
      %v11645 = vpop.f32.mrf.mxu0
      %v11646 = vadd.f32 0.0, %v11645
      %v11647 = vpop.f32.mrf.mxu0
      %11648 = vmatprep.mubr.bf16.mxu0 0
      %11649 = vmatmul.mubr.bf16.gmra.mxu0 %v11300
      %v11650 = vpop.f32.mrf.mxu0
      %v11651 = vadd.f32 0.0, %v11650
      %v11652 = vpop.f32.mrf.mxu0
      %v11653 = vpop.f32.mrf.mxu0
      %v11654 = vadd.f32 0.0, %v11653
      %v11655 = vpop.f32.mrf.mxu0
      %11656 = vmatprep.mubr.bf16.mxu0 0
      %11657 = vmatmul.mubr.bf16.gmra.mxu0 %v11303
      %v11658 = vpop.f32.mrf.mxu0
      %v11659 = vadd.f32 0.0, %v11658
      %v11660 = vpop.f32.mrf.mxu0
      %v11661 = vpop.f32.mrf.mxu0
      %v11662 = vadd.f32 0.0, %v11661
      %v11663 = vpop.f32.mrf.mxu0
      %11664 = vmatprep.mubr.bf16.mxu0 0
      %11665 = vmatmul.mubr.bf16.gmra.mxu0 %v11306
      %v11666 = vpop.f32.mrf.mxu0
      %v11667 = vadd.f32 0.0, %v11666
      %v11668 = vpop.f32.mrf.mxu0
      %v11669 = vpop.f32.mrf.mxu0
      %v11670 = vadd.f32 0.0, %v11669
      %v11671 = vpop.f32.mrf.mxu0
      %11672 = vmatprep.mubr.bf16.mxu0 0
      %11673 = vmatmul.mubr.bf16.gmra.mxu0 %v11309
      %v11674 = vpop.f32.mrf.mxu0
      %v11675 = vadd.f32 0.0, %v11674
      %v11676 = vpop.f32.mrf.mxu0
      %v11677 = vpop.f32.mrf.mxu0
      %v11678 = vadd.f32 0.0, %v11677
      %v11679 = vpop.f32.mrf.mxu0
      %11680 = vmatprep.mubr.bf16.mxu0 0
      %11681 = vmatmul.mubr.bf16.gmra.mxu0 %v11312
      %v11682 = vpop.f32.mrf.mxu0
      %v11683 = vadd.f32 0.0, %v11682
      %v11684 = vpop.f32.mrf.mxu0
      %v11685 = vpop.f32.mrf.mxu0
      %v11686 = vadd.f32 0.0, %v11685
      %v11687 = vpop.f32.mrf.mxu0
      %11688 = vmatprep.mubr.bf16.mxu0 0
      %11689 = vmatmul.mubr.bf16.gmra.mxu0 %v11315
      %v11690 = vpop.f32.mrf.mxu0
      %v11691 = vadd.f32 0.0, %v11690
      %v11692 = vpop.f32.mrf.mxu0
      %v11693 = vpop.f32.mrf.mxu0
      %v11694 = vadd.f32 0.0, %v11693
      %v11695 = vpop.f32.mrf.mxu0
      %11696 = vmatprep.mubr.bf16.mxu0 0
      %11697 = vmatmul.mubr.bf16.gmra.mxu0 %v11318
      %v11698 = vpop.f32.mrf.mxu0
      %v11699 = vadd.f32 0.0, %v11698
      %v11700 = vpop.f32.mrf.mxu0
      %v11701 = vpop.f32.mrf.mxu0
      %v11702 = vadd.f32 0.0, %v11701
      %v11703 = vpop.f32.mrf.mxu0
      %11704 = vmatprep.mubr.bf16.mxu0 0
      %11705 = vmatmul.mubr.bf16.gmra.mxu0 %v11321
      %v11706 = vpop.f32.mrf.mxu0
      %v11707 = vadd.f32 0.0, %v11706
      %v11708 = vpop.f32.mrf.mxu0
      %v11709 = vpop.f32.mrf.mxu0
      %v11710 = vadd.f32 0.0, %v11709
      %v11711 = vpop.f32.mrf.mxu0
      %11712 = vmatprep.mubr.bf16.mxu0 0
      %11713 = vmatmul.mubr.bf16.gmra.mxu0 %v11324
      %v11714 = vpop.f32.mrf.mxu0
      %v11715 = vadd.f32 0.0, %v11714
      %v11716 = vpop.f32.mrf.mxu0
      %v11717 = vpop.f32.mrf.mxu0
      %v11718 = vadd.f32 0.0, %v11717
      %v11719 = vpop.f32.mrf.mxu0
      %11720 = vmatprep.mubr.bf16.mxu0 0
      %11721 = vmatmul.mubr.bf16.gmra.mxu0 %v11327
      %v11722 = vpop.f32.mrf.mxu0
      %v11723 = vadd.f32 0.0, %v11722
      %v11724 = vpop.f32.mrf.mxu0
      %v11725 = vpop.f32.mrf.mxu0
      %v11726 = vadd.f32 0.0, %v11725
      %v11727 = vpop.f32.mrf.mxu0
      %11728 = vmatprep.mubr.bf16.mxu0 0
      %11729 = vmatmul.mubr.bf16.gmra.mxu0 %v11330
      %v11730 = vpop.f32.mrf.mxu0
      %v11731 = vadd.f32 0.0, %v11730
      %v11732 = vpop.f32.mrf.mxu0
      %v11733 = vpop.f32.mrf.mxu0
      %v11734 = vadd.f32 0.0, %v11733
      %v11735 = vpop.f32.mrf.mxu0
      %11736 = vmatprep.mubr.bf16.mxu0 0
      %11737 = vmatmul.mubr.bf16.gmra.mxu0 %v11333
      %v11738 = vpop.f32.mrf.mxu0
      %v11739 = vadd.f32 0.0, %v11738
      %v11740 = vpop.f32.mrf.mxu0
      %v11741 = vpop.f32.mrf.mxu0
      %v11742 = vadd.f32 0.0, %v11741
      %v11743 = vpop.f32.mrf.mxu0
      %11744 = vmatprep.mubr.bf16.mxu0 0
      %11745 = vmatmul.mubr.bf16.gmra.mxu0 %v11336
      %v11746 = vpop.f32.mrf.mxu0
      %v11747 = vadd.f32 0.0, %v11746
      %v11748 = vpop.f32.mrf.mxu0
      %v11749 = vpop.f32.mrf.mxu0
      %v11750 = vadd.f32 0.0, %v11749
      %v11751 = vpop.f32.mrf.mxu0
      %11752 = vmatprep.mubr.bf16.mxu0 0
      %11753 = vmatmul.mubr.bf16.gmra.mxu0 %v11339
      %v11754 = vpop.f32.mrf.mxu0
      %v11755 = vadd.f32 0.0, %v11754
      %v11756 = vpop.f32.mrf.mxu0
      %v11757 = vpop.f32.mrf.mxu0
      %v11758 = vadd.f32 0.0, %v11757
      %v11759 = vpop.f32.mrf.mxu0
      %11760 = vmatprep.mubr.bf16.mxu0 0
      %11761 = vmatmul.mubr.bf16.gmra.mxu0 %v11342
      %v11762 = vpop.f32.mrf.mxu0
      %v11763 = vadd.f32 0.0, %v11762
      %v11764 = vpop.f32.mrf.mxu0
      %v11765 = vpop.f32.mrf.mxu0
      %v11766 = vadd.f32 0.0, %v11765
      %v11767 = vpop.f32.mrf.mxu0
      %11768 = vmatprep.mubr.bf16.mxu0 0
      %11769 = vmatmul.mubr.bf16.gmra.mxu0 %v11345
      %v11770 = vpop.f32.mrf.mxu0
      %v11771 = vadd.f32 0.0, %v11770
      %v11772 = vpop.f32.mrf.mxu0
      %v11773 = vpop.f32.mrf.mxu0
      %v11774 = vadd.f32 0.0, %v11773
      %v11775 = vpop.f32.mrf.mxu0
      %11776 = vmatprep.mubr.bf16.mxu0 0
      %11777 = vmatmul.mubr.bf16.gmra.mxu0 %v11348
      %v11778 = vpop.f32.mrf.mxu0
      %v11779 = vadd.f32 0.0, %v11778
      %v11780 = vpop.f32.mrf.mxu0
      %v11781 = vpop.f32.mrf.mxu0
      %v11782 = vadd.f32 0.0, %v11781
      %v11783 = vpop.f32.mrf.mxu0
      %11784 = vmatprep.mubr.bf16.mxu0 0
      %11785 = vmatmul.mubr.bf16.gmra.mxu0 %v11351
      %v11786 = vpop.f32.mrf.mxu0
      %v11787 = vadd.f32 0.0, %v11786
      %v11788 = vpop.f32.mrf.mxu0
      %v11789 = vpop.f32.mrf.mxu0
      %v11790 = vadd.f32 0.0, %v11789
      %v11791 = vpop.f32.mrf.mxu0
      %11792 = vmatprep.mubr.bf16.mxu0 0
      %11793 = vmatmul.mubr.bf16.gmra.mxu0 %v11354
      %v11794 = vpop.f32.mrf.mxu0
      %v11795 = vadd.f32 0.0, %v11794
      %v11796 = vpop.f32.mrf.mxu0
      %v11797 = vpop.f32.mrf.mxu0
      %v11798 = vadd.f32 0.0, %v11797
      %v11799 = vpop.f32.mrf.mxu0
      %11800 = vmatprep.mubr.bf16.mxu0 0
      %11801 = vmatmul.mubr.bf16.gmra.mxu0 %v11357
      %v11802 = vpop.f32.mrf.mxu0
      %v11803 = vadd.f32 0.0, %v11802
      %v11804 = vpop.f32.mrf.mxu0
      %v11805 = vpop.f32.mrf.mxu0
      %v11806 = vadd.f32 0.0, %v11805
      %v11807 = vpop.f32.mrf.mxu0
      %11808 = vmatprep.mubr.bf16.mxu0 0
      %11809 = vmatmul.mubr.bf16.gmra.mxu0 %v11360
      %v11810 = vpop.f32.mrf.mxu0
      %v11811 = vadd.f32 0.0, %v11810
      %v11812 = vpop.f32.mrf.mxu0
      %v11813 = vpop.f32.mrf.mxu0
      %v11814 = vadd.f32 0.0, %v11813
      %v11815 = vpop.f32.mrf.mxu0
      %11816 = vmatprep.mubr.bf16.mxu0 0
      %11817 = vmatmul.mubr.bf16.gmra.mxu0 %v11363
      %v11818 = vpop.f32.mrf.mxu0
      %v11819 = vadd.f32 0.0, %v11818
      %v11820 = vpop.f32.mrf.mxu0
      %v11821 = vpop.f32.mrf.mxu0
      %v11822 = vadd.f32 0.0, %v11821
      %v11823 = vpop.f32.mrf.mxu0
      %11824 = vmatprep.mubr.bf16.mxu0 0
      %11825 = vmatmul.mubr.bf16.gmra.mxu0 %v11366
      %v11826 = vpop.f32.mrf.mxu0
      %v11827 = vadd.f32 0.0, %v11826
      %v11828 = vpop.f32.mrf.mxu0
      %v11829 = vpop.f32.mrf.mxu0
      %v11830 = vadd.f32 0.0, %v11829
      %v11831 = vpop.f32.mrf.mxu0
      %11832 = vmatprep.mubr.bf16.mxu0 0
      %11833 = vmatmul.mubr.bf16.gmra.mxu0 %v11369
      %v11834 = vpop.f32.mrf.mxu0
      %v11835 = vadd.f32 0.0, %v11834
      %v11836 = vpop.f32.mrf.mxu0
      %v11837 = vpop.f32.mrf.mxu0
      %v11838 = vadd.f32 0.0, %v11837
      %v11839 = vpop.f32.mrf.mxu0
      %11840 = vmatprep.mubr.bf16.mxu0 0
      %11841 = vmatmul.mubr.bf16.gmra.mxu0 %v11372
      %v11842 = vpop.f32.mrf.mxu0
      %v11843 = vadd.f32 0.0, %v11842
      %v11844 = vpop.f32.mrf.mxu0
      %v11845 = vpop.f32.mrf.mxu0
      %v11846 = vadd.f32 0.0, %v11845
      %v11847 = vpop.f32.mrf.mxu0
      %11848 = vmatprep.mubr.bf16.mxu0 0
      %11849 = vmatmul.mubr.bf16.gmra.mxu0 %v11375
      %v11850 = vpop.f32.mrf.mxu0
      %v11851 = vadd.f32 0.0, %v11850
      %v11852 = vpop.f32.mrf.mxu0
      %v11853 = vpop.f32.mrf.mxu0
      %v11854 = vadd.f32 0.0, %v11853
      %v11855 = vpop.f32.mrf.mxu0
      %11856 = vmatprep.mubr.bf16.mxu0 0
      %11857 = vmatmul.mubr.bf16.gmra.mxu0 %v11378
      %v11858 = vpop.f32.mrf.mxu0
      %v11859 = vadd.f32 0.0, %v11858
      %v11860 = vpop.f32.mrf.mxu0
      %v11861 = vpop.f32.mrf.mxu0
      %v11862 = vadd.f32 0.0, %v11861
      %v11863 = vpop.f32.mrf.mxu0
      %11864 = vmatprep.mubr.bf16.mxu0 0
      %11865 = vmatmul.mubr.bf16.gmra.mxu0 %v11381
      %v11866 = vpop.f32.mrf.mxu0
      %v11867 = vadd.f32 0.0, %v11866
      %v11868 = vpop.f32.mrf.mxu0
      %v11869 = vpop.f32.mrf.mxu0
      %v11870 = vadd.f32 0.0, %v11869
      %v11871 = vpop.f32.mrf.mxu0
      %11872 = vmatprep.mubr.bf16.mxu0 0
      %11873 = vmatmul.mubr.bf16.gmra.mxu0 %v11384
      %v11874 = vpop.f32.mrf.mxu0
      %v11875 = vadd.f32 0.0, %v11874
      %v11876 = vpop.f32.mrf.mxu0
      %v11877 = vpop.f32.mrf.mxu0
      %v11878 = vadd.f32 0.0, %v11877
      %v11879 = vpop.f32.mrf.mxu0
      %11880 = vmatprep.mubr.bf16.mxu0 0
      %11881 = vmatmul.mubr.bf16.gmra.mxu0 %v11387
      %v11882 = vpop.f32.mrf.mxu0
      %v11883 = vadd.f32 0.0, %v11882
      %v11884 = vpop.f32.mrf.mxu0
      %v11885 = vpop.f32.mrf.mxu0
      %v11886 = vadd.f32 0.0, %v11885
      %v11887 = vpop.f32.mrf.mxu0
      %11888 = vmatprep.mubr.bf16.mxu0 0
      %11889 = vmatmul.mubr.bf16.gmra.mxu0 %v11390
      %v11890 = vpop.f32.mrf.mxu0
      %v11891 = vadd.f32 0.0, %v11890
      %v11892 = vpop.f32.mrf.mxu0
      %v11893 = vpop.f32.mrf.mxu0
      %v11894 = vadd.f32 0.0, %v11893
      %v11895 = vpop.f32.mrf.mxu0
      %11896 = vmatprep.mubr.bf16.mxu0 0
      %11897 = vmatmul.mubr.bf16.gmra.mxu0 %v11393
      %v11898 = vpop.f32.mrf.mxu0
      %v11899 = vadd.f32 0.0, %v11898
      %v11900 = vpop.f32.mrf.mxu0
      %v11901 = vpop.f32.mrf.mxu0
      %v11902 = vadd.f32 0.0, %v11901
      %v11903 = vpop.f32.mrf.mxu0
      %11904 = vmatprep.mubr.bf16.mxu0 0
      %11905 = vmatmul.mubr.bf16.gmra.mxu0 %v11396
      %v11906 = vpop.f32.mrf.mxu0
      %v11907 = vadd.f32 0.0, %v11906
      %v11908 = vpop.f32.mrf.mxu0
      %v11909 = vpop.f32.mrf.mxu0
      %v11910 = vadd.f32 0.0, %v11909
      %v11911 = vpop.f32.mrf.mxu0
      %11912 = vmatprep.mubr.bf16.mxu0 0
      %11913 = vmatmul.mubr.bf16.gmra.mxu0 %v11399
      %v11914 = vpop.f32.mrf.mxu0
      %v11915 = vadd.f32 0.0, %v11914
      %v11916 = vpop.f32.mrf.mxu0
      %v11917 = vpop.f32.mrf.mxu0
      %v11918 = vadd.f32 0.0, %v11917
      %v11919 = vpop.f32.mrf.mxu0
      %11920 = vmatprep.mubr.bf16.mxu0 0
      %11921 = vmatmul.mubr.bf16.gmra.mxu0 %v11402
      %v11922 = vpop.f32.mrf.mxu0
      %v11923 = vadd.f32 0.0, %v11922
      %v11924 = vpop.f32.mrf.mxu0
      %v11925 = vpop.f32.mrf.mxu0
      %v11926 = vadd.f32 0.0, %v11925
      %v11927 = vpop.f32.mrf.mxu0
      %11928 = vmatprep.mubr.bf16.mxu0 0
      %11929 = vmatmul.mubr.bf16.gmra.mxu0 %v11405
      %v11930 = vpop.f32.mrf.mxu0
      %v11931 = vadd.f32 0.0, %v11930
      %v11932 = vpop.f32.mrf.mxu0
      %v11933 = vpop.f32.mrf.mxu0
      %v11934 = vadd.f32 0.0, %v11933
      %v11935 = vpop.f32.mrf.mxu0
      %11936 = vmatprep.mubr.bf16.mxu0 0
      %11937 = vmatmul.mubr.bf16.gmra.mxu0 %v11408
      %v11938 = vpop.f32.mrf.mxu0
      %v11939 = vadd.f32 0.0, %v11938
      %v11940 = vpop.f32.mrf.mxu0
      %v11941 = vpop.f32.mrf.mxu0
      %v11942 = vadd.f32 0.0, %v11941
      %v11943 = vpop.f32.mrf.mxu0
      %11944 = vmatprep.mubr.bf16.mxu0 0
      %11945 = vmatmul.mubr.bf16.gmra.mxu0 %v11411
      %v11946 = vpop.f32.mrf.mxu0
      %v11947 = vadd.f32 0.0, %v11946
      %v11948 = vpop.f32.mrf.mxu0
      %v11949 = vpop.f32.mrf.mxu0
      %v11950 = vadd.f32 0.0, %v11949
      %v11951 = vpop.f32.mrf.mxu0
      %11952 = vmatprep.mubr.bf16.mxu0 0
      %11953 = vmatmul.mubr.bf16.gmra.mxu0 %v11414
      %v11954 = vpop.f32.mrf.mxu0
      %v11955 = vadd.f32 0.0, %v11954
      %v11956 = vpop.f32.mrf.mxu0
      %v11957 = vpop.f32.mrf.mxu0
      %v11958 = vadd.f32 0.0, %v11957
      %v11959 = vpop.f32.mrf.mxu0
      %11960 = vmatprep.mubr.bf16.mxu0 0
      %11961 = vmatmul.mubr.bf16.gmra.mxu0 %v11417
      %v11962 = vpop.f32.mrf.mxu0
      %v11963 = vadd.f32 0.0, %v11962
      %v11964 = vpop.f32.mrf.mxu0
      %v11965 = vpop.f32.mrf.mxu0
      %v11966 = vadd.f32 0.0, %v11965
      %v11967 = vpop.f32.mrf.mxu0
      %11968 = vmatprep.mubr.bf16.mxu0 0
      %11969 = vmatmul.mubr.bf16.gmra.mxu0 %v11420
      %v11970 = vpop.f32.mrf.mxu0
      %v11971 = vadd.f32 0.0, %v11970
      %v11972 = vpop.f32.mrf.mxu0
      %v11973 = vpop.f32.mrf.mxu0
      %v11974 = vadd.f32 0.0, %v11973
      %v11975 = vpop.f32.mrf.mxu0
      %11976 = vmatprep.mubr.bf16.mxu0 0
      %11977 = vmatmul.mubr.bf16.gmra.mxu0 %v11423
      %v11978 = vpop.f32.mrf.mxu0
      %v11979 = vadd.f32 0.0, %v11978
      %v11980 = vpop.f32.mrf.mxu0
      %v11981 = vpop.f32.mrf.mxu0
      %v11982 = vadd.f32 0.0, %v11981
      %v11983 = vpop.f32.mrf.mxu0
      %11984 = vmatprep.mubr.bf16.mxu0 0
      %11985 = vmatmul.mubr.bf16.gmra.mxu0 %v11426
      %v11986 = vpop.f32.mrf.mxu0
      %v11987 = vadd.f32 0.0, %v11986
      %v11988 = vpop.f32.mrf.mxu0
      %v11989 = vpop.f32.mrf.mxu0
      %v11990 = vadd.f32 0.0, %v11989
      %v11991 = vpop.f32.mrf.mxu0
      %11992 = vmatprep.mubr.bf16.mxu0 0
      %11993 = vmatmul.mubr.bf16.gmra.mxu0 %v11429
      %v11994 = vpop.f32.mrf.mxu0
      %v11995 = vadd.f32 0.0, %v11994
      %v11996 = vpop.f32.mrf.mxu0
      %v11997 = vpop.f32.mrf.mxu0
      %v11998 = vadd.f32 0.0, %v11997
      %v11999 = vpop.f32.mrf.mxu0
      %12000 = vmatprep.mubr.bf16.mxu0 0
      %12001 = vmatmul.mubr.bf16.gmra.mxu0 %v11432
      %v12002 = vpop.f32.mrf.mxu0
      %v12003 = vadd.f32 0.0, %v12002
      %v12004 = vpop.f32.mrf.mxu0
      %v12005 = vpop.f32.mrf.mxu0
      %v12006 = vadd.f32 0.0, %v12005
      %v12007 = vpop.f32.mrf.mxu0
      %12008 = vmatprep.mubr.bf16.mxu0 0
      %12009 = vmatmul.mubr.bf16.gmra.mxu0 %v11435
      %v12010 = vpop.f32.mrf.mxu0
      %v12011 = vadd.f32 0.0, %v12010
      %v12012 = vpop.f32.mrf.mxu0
      %v12013 = vpop.f32.mrf.mxu0
      %v12014 = vadd.f32 0.0, %v12013
      %v12015 = vpop.f32.mrf.mxu0
      %12016 = vmatprep.mubr.bf16.mxu0 0
      %12017 = vmatmul.mubr.bf16.gmra.mxu0 %v11438
      %v12018 = vpop.f32.mrf.mxu0
      %v12019 = vadd.f32 0.0, %v12018
      %v12020 = vpop.f32.mrf.mxu0
      %v12021 = vpop.f32.mrf.mxu0
      %v12022 = vadd.f32 0.0, %v12021
      %v12023 = vpop.f32.mrf.mxu0
      %12024 = vmatprep.mubr.bf16.mxu0 0
      %12025 = vmatmul.mubr.bf16.gmra.mxu0 %v11441
      %v12026 = vpop.f32.mrf.mxu0
      %v12027 = vadd.f32 0.0, %v12026
      %v12028 = vpop.f32.mrf.mxu0
      %v12029 = vpop.f32.mrf.mxu0
      %v12030 = vadd.f32 0.0, %v12029
      %v12031 = vpop.f32.mrf.mxu0
      %12032 = vmatprep.mubr.bf16.mxu0 0
      %12033 = vmatmul.mubr.bf16.gmra.mxu0 %v11444
      %v12034 = vpop.f32.mrf.mxu0
      %v12035 = vadd.f32 0.0, %v12034
      %v12036 = vpop.f32.mrf.mxu0
      %v12037 = vpop.f32.mrf.mxu0
      %v12038 = vadd.f32 0.0, %v12037
      %v12039 = vpop.f32.mrf.mxu0
      %12040 = vmatprep.mubr.bf16.mxu0 0
      %12041 = vmatmul.mubr.bf16.gmra.mxu0 %v11447
      %v12042 = vpop.f32.mrf.mxu0
      %v12043 = vadd.f32 0.0, %v12042
      %v12044 = vpop.f32.mrf.mxu0
      %v12045 = vpop.f32.mrf.mxu0
      %v12046 = vadd.f32 0.0, %v12045
      %v12047 = vpop.f32.mrf.mxu0
      %12048 = vmatprep.mubr.bf16.mxu0 0
      %12049 = vmatmul.mubr.bf16.gmra.mxu0 %v11450
      %v12050 = vpop.f32.mrf.mxu0
      %v12051 = vadd.f32 0.0, %v12050
      %v12052 = vpop.f32.mrf.mxu0
      %v12053 = vpop.f32.mrf.mxu0
      %v12054 = vadd.f32 0.0, %v12053
      %v12055 = vpop.f32.mrf.mxu0
      %12056 = vmatprep.mubr.bf16.mxu0 0
      %12057 = vmatmul.mubr.bf16.gmra.mxu0 %v11453
      %v12058 = vpop.f32.mrf.mxu0
      %v12059 = vadd.f32 0.0, %v12058
      %v12060 = vpop.f32.mrf.mxu0
      %v12061 = vpop.f32.mrf.mxu0
      %v12062 = vadd.f32 0.0, %v12061
      %v12063 = vpop.f32.mrf.mxu0
      %12064 = vmatprep.mubr.bf16.mxu0 0
      %12065 = vmatmul.mubr.bf16.gmra.mxu0 %v11456
      %v12066 = vpop.f32.mrf.mxu0
      %v12067 = vadd.f32 0.0, %v12066
      %v12068 = vpop.f32.mrf.mxu0
      %v12069 = vpop.f32.mrf.mxu0
      %v12070 = vadd.f32 0.0, %v12069
      %v12071 = vpop.f32.mrf.mxu0
      %12072 = vmatprep.mubr.bf16.mxu0 0
      %12073 = vmatmul.mubr.bf16.gmra.mxu0 %v11459
      %v12074 = vpop.f32.mrf.mxu0
      %v12075 = vadd.f32 0.0, %v12074
      %v12076 = vpop.f32.mrf.mxu0
      %v12077 = vpop.f32.mrf.mxu0
      %v12078 = vpop.f32.mrf.mxu0
      %12079 = vdwg.mxu0
      %v12080 = vadd.f32 %v9927, %v11499
      %v12081 = vadd.f32 %v9928, %v11502
      %v12082 = vadd.f32 %v9929, %v11507
      %v12083 = vadd.f32 %v9930, %v11510
      %v12084 = vadd.f32 %v9931, %v11515
      %v12085 = vadd.f32 %v9932, %v11518
      %v12086 = vadd.f32 %v9933, %v11523
      %v12087 = vadd.f32 %v9934, %v11526
      %v12088 = vadd.f32 %v9935, %v11531
      %v12089 = vadd.f32 %v9936, %v11534
      %v12090 = vadd.f32 %v9937, %v11539
      %v12091 = vadd.f32 %v9938, %v11542
      %v12092 = vadd.f32 %v9939, %v11547
      %v12093 = vadd.f32 %v9940, %v11550
      %v12094 = vadd.f32 %v9941, %v11555
      %v12095 = vadd.f32 %v9942, %v11558
      %v12096 = vadd.f32 %v9943, %v11563
      %v12097 = vadd.f32 %v9944, %v11566
      %v12098 = vadd.f32 %v9945, %v11571
      %v12099 = vadd.f32 %v9946, %v11574
      %v12100 = vadd.f32 %v9947, %v11579
      %v12101 = vadd.f32 %v9948, %v11582
      %v12102 = vadd.f32 %v9949, %v11587
      %v12103 = vadd.f32 %v9950, %v11590
      %v12104 = vadd.f32 %v9951, %v11595
      %v12105 = vadd.f32 %v9952, %v11598
      %v12106 = vadd.f32 %v9953, %v11603
      %v12107 = vadd.f32 %v9954, %v11606
      %v12108 = vadd.f32 %v9955, %v11611
      %v12109 = vadd.f32 %v9956, %v11614
      %v12110 = vadd.f32 %v9957, %v11619
      %v12111 = vadd.f32 %v9958, %v11622
      %v12112 = vadd.f32 %v9959, %v11627
      %v12113 = vadd.f32 %v9960, %v11630
      %v12114 = vadd.f32 %v9961, %v11635
      %v12115 = vadd.f32 %v9962, %v11638
      %v12116 = vadd.f32 %v9963, %v11643
      %v12117 = vadd.f32 %v9964, %v11646
      %v12118 = vadd.f32 %v9965, %v11651
      %v12119 = vadd.f32 %v9966, %v11654
      %v12120 = vadd.f32 %v9967, %v11659
      %v12121 = vadd.f32 %v9968, %v11662
      %v12122 = vadd.f32 %v9969, %v11667
      %v12123 = vadd.f32 %v9970, %v11670
      %v12124 = vadd.f32 %v9971, %v11675
      %v12125 = vadd.f32 %v9972, %v11678
      %v12126 = vadd.f32 %v9973, %v11683
      %v12127 = vadd.f32 %v9974, %v11686
      %v12128 = vadd.f32 %v9975, %v11691
      %v12129 = vadd.f32 %v9976, %v11694
      %v12130 = vadd.f32 %v9977, %v11699
      %v12131 = vadd.f32 %v9978, %v11702
      %v12132 = vadd.f32 %v9979, %v11707
      %v12133 = vadd.f32 %v9980, %v11710
      %v12134 = vadd.f32 %v9981, %v11715
      %v12135 = vadd.f32 %v9982, %v11718
      %v12136 = vadd.f32 %v9983, %v11723
      %v12137 = vadd.f32 %v9984, %v11726
      %v12138 = vadd.f32 %v9985, %v11731
      %v12139 = vadd.f32 %v9986, %v11734
      %v12140 = vadd.f32 %v9987, %v11739
      %v12141 = vadd.f32 %v9988, %v11742
      %v12142 = vadd.f32 %v9989, %v11747
      %v12143 = vadd.f32 %v9990, %v11750
      %v12144 = vadd.f32 %v9991, %v11755
      %v12145 = vadd.f32 %v9992, %v11758
      %v12146 = vadd.f32 %v9993, %v11763
      %v12147 = vadd.f32 %v9994, %v11766
      %v12148 = vadd.f32 %v9995, %v11771
      %v12149 = vadd.f32 %v9996, %v11774
      %v12150 = vadd.f32 %v9997, %v11779
      %v12151 = vadd.f32 %v9998, %v11782
      %v12152 = vadd.f32 %v9999, %v11787
      %v12153 = vadd.f32 %v10000, %v11790
      %v12154 = vadd.f32 %v10001, %v11795
      %v12155 = vadd.f32 %v10002, %v11798
      %v12156 = vadd.f32 %v10003, %v11803
      %v12157 = vadd.f32 %v10004, %v11806
      %v12158 = vadd.f32 %v10005, %v11811
      %v12159 = vadd.f32 %v10006, %v11814
      %v12160 = vadd.f32 %v10007, %v11819
      %v12161 = vadd.f32 %v10008, %v11822
      %v12162 = vadd.f32 %v10009, %v11827
      %v12163 = vadd.f32 %v10010, %v11830
      %v12164 = vadd.f32 %v10011, %v11835
      %v12165 = vadd.f32 %v10012, %v11838
      %v12166 = vadd.f32 %v10013, %v11843
      %v12167 = vadd.f32 %v10014, %v11846
      %v12168 = vadd.f32 %v10015, %v11851
      %v12169 = vadd.f32 %v10016, %v11854
      %v12170 = vadd.f32 %v10017, %v11859
      %v12171 = vadd.f32 %v10018, %v11862
      %v12172 = vadd.f32 %v10019, %v11867
      %v12173 = vadd.f32 %v10020, %v11870
      %v12174 = vadd.f32 %v10021, %v11875
      %v12175 = vadd.f32 %v10022, %v11878
      %v12176 = vadd.f32 %v10023, %v11883
      %v12177 = vadd.f32 %v10024, %v11886
      %v12178 = vadd.f32 %v10025, %v11891
      %v12179 = vadd.f32 %v10026, %v11894
      %v12180 = vadd.f32 %v10027, %v11899
      %v12181 = vadd.f32 %v10028, %v11902
      %v12182 = vadd.f32 %v10029, %v11907
      %v12183 = vadd.f32 %v10030, %v11910
      %v12184 = vadd.f32 %v10031, %v11915
      %v12185 = vadd.f32 %v10032, %v11918
      %v12186 = vadd.f32 %v10033, %v11923
      %v12187 = vadd.f32 %v10034, %v11926
      %v12188 = vadd.f32 %v10035, %v11931
      %v12189 = vadd.f32 %v10036, %v11934
      %v12190 = vadd.f32 %v10037, %v11939
      %v12191 = vadd.f32 %v10038, %v11942
      %v12192 = vadd.f32 %v10039, %v11947
      %v12193 = vadd.f32 %v10040, %v11950
      %v12194 = vadd.f32 %v10041, %v11955
      %v12195 = vadd.f32 %v10042, %v11958
      %v12196 = vadd.f32 %v10043, %v11963
      %v12197 = vadd.f32 %v10044, %v11966
      %v12198 = vadd.f32 %v10045, %v11971
      %v12199 = vadd.f32 %v10046, %v11974
      %v12200 = vadd.f32 %v10047, %v11979
      %v12201 = vadd.f32 %v10048, %v11982
      %v12202 = vadd.f32 %v10049, %v11987
      %v12203 = vadd.f32 %v10050, %v11990
      %v12204 = vadd.f32 %v10051, %v11995
      %v12205 = vadd.f32 %v10052, %v11998
      %v12206 = vadd.f32 %v10053, %v12003
      %v12207 = vadd.f32 %v10054, %v12006
      %v12208 = vadd.f32 %v10055, %v12011
      %v12209 = vadd.f32 %v10056, %v12014
      %v12210 = vadd.f32 %v10057, %v12019
      %v12211 = vadd.f32 %v10058, %v12022
      %v12212 = vadd.f32 %v10059, %v12027
      %v12213 = vadd.f32 %v10060, %v12030
      %v12214 = vadd.f32 %v10061, %v12035
      %v12215 = vadd.f32 %v10062, %v12038
      %v12216 = vadd.f32 %v10063, %v12043
      %v12217 = vadd.f32 %v10064, %v12046
      %v12218 = vadd.f32 %v10065, %v12051
      %v12219 = vadd.f32 %v10066, %v12054
      %v12220 = vadd.f32 %v10067, %v12059
      %v12221 = vadd.f32 %v10068, %v12062
      %v12222 = vadd.f32 %v10069, %v12067
      %v12223 = vadd.f32 %v10070, %v12070
      %v12224 = vadd.f32 %v10071, %v12075
      %v12225 = vld [vmem:[%s165 + $0x20] sm:$0x8]
      %s12226 = scalar_lea.vmem %s1, 16
      %v12227 = vld [vmem:[%s12226] sm:$0x3]
      %v12229 = vunpack.c.l.b16 %v12225
      %v12230 = vpack.c.b16 %v10367, %v12229
      %vm12231 = vcmask 1044480
      %v12232 = vrot.slane %v12230, 3
      %v12233 = vrot.slane %v10513, 3
      %v12234 = vsel %vm12231, %v12232, %v12233
      %v12235 = vrot.slane %v10514, 3
      %v12236 = vsel %vm12231, %v12233, %v12235
      %v12237 = vrot.slane %v10515, 3
      %v12238 = vsel %vm12231, %v12235, %v12237
      %v12239 = vrot.slane %v10516, 3
      %v12240 = vsel %vm12231, %v12237, %v12239
      %v12241 = vrot.slane %v10517, 3
      %v12242 = vsel %vm12231, %v12239, %v12241
      %v12243 = vrot.slane %v10518, 3
      %v12244 = vsel %vm12231, %v12241, %v12243
      %v12245 = vrot.slane %v10519, 3
      %v12246 = vsel %vm12231, %v12243, %v12245
      %v12247 = vrot.slane %v10520, 3
      %v12248 = vsel %vm12231, %v12245, %v12247
      %v12249 = vrot.slane %v10521, 3
      %v12250 = vsel %vm12231, %v12247, %v12249
      %v12251 = vrot.slane %v10522, 3
      %v12252 = vsel %vm12231, %v12249, %v12251
      %v12253 = vrot.slane %v10523, 3
      %v12254 = vsel %vm12231, %v12251, %v12253
      %v12255 = vrot.slane %v10524, 3
      %v12256 = vsel %vm12231, %v12253, %v12255
      %v12257 = vrot.slane %v10525, 3
      %v12258 = vsel %vm12231, %v12255, %v12257
      %v12259 = vrot.slane %v10526, 3
      %v12260 = vsel %vm12231, %v12257, %v12259
      %v12261 = vrot.slane %v10527, 3
      %v12262 = vsel %vm12231, %v12259, %v12261
      %v12263 = vrot.slane %v10528, 3
      %v12264 = vsel %vm12231, %v12261, %v12263
      %v12265 = vrot.slane %v10529, 3
      %v12266 = vsel %vm12231, %v12263, %v12265
      %v12267 = vrot.slane %v10530, 3
      %v12268 = vsel %vm12231, %v12265, %v12267
      %v12269 = vrot.slane %v10531, 3
      %v12270 = vsel %vm12231, %v12267, %v12269
      %v12271 = vrot.slane %v10532, 3
      %v12272 = vsel %vm12231, %v12269, %v12271
      %v12273 = vrot.slane %v10533, 3
      %v12274 = vsel %vm12231, %v12271, %v12273
      %v12275 = vrot.slane %v10534, 3
      %v12276 = vsel %vm12231, %v12273, %v12275
      %v12277 = vrot.slane %v10535, 3
      %v12278 = vsel %vm12231, %v12275, %v12277
      %v12279 = vrot.slane %v10536, 3
      %v12280 = vsel %vm12231, %v12277, %v12279
      %v12281 = vrot.slane %v10537, 3
      %v12282 = vsel %vm12231, %v12279, %v12281
      %v12283 = vrot.slane %v10538, 3
      %v12284 = vsel %vm12231, %v12281, %v12283
      %v12285 = vrot.slane %v10539, 3
      %v12286 = vsel %vm12231, %v12283, %v12285
      %v12287 = vrot.slane %v10540, 3
      %v12288 = vsel %vm12231, %v12285, %v12287
      %v12289 = vrot.slane %v10541, 3
      %v12290 = vsel %vm12231, %v12287, %v12289
      %v12291 = vrot.slane %v10542, 3
      %v12292 = vsel %vm12231, %v12289, %v12291
      %v12293 = vrot.slane %v10543, 3
      %v12294 = vsel %vm12231, %v12291, %v12293
      %v12295 = vrot.slane %v10544, 3
      %v12296 = vsel %vm12231, %v12293, %v12295
      %v12297 = vrot.slane %v10545, 3
      %v12298 = vsel %vm12231, %v12295, %v12297
      %v12299 = vrot.slane %v10546, 3
      %v12300 = vsel %vm12231, %v12297, %v12299
      %v12301 = vrot.slane %v10547, 3
      %v12302 = vsel %vm12231, %v12299, %v12301
      %v12303 = vrot.slane %v10548, 3
      %v12304 = vsel %vm12231, %v12301, %v12303
      %v12305 = vrot.slane %v10549, 3
      %v12306 = vsel %vm12231, %v12303, %v12305
      %v12307 = vrot.slane %v10550, 3
      %v12308 = vsel %vm12231, %v12305, %v12307
      %v12309 = vrot.slane %v10551, 3
      %v12310 = vsel %vm12231, %v12307, %v12309
      %v12311 = vrot.slane %v10552, 3
      %v12312 = vsel %vm12231, %v12309, %v12311
      %v12313 = vrot.slane %v10553, 3
      %v12314 = vsel %vm12231, %v12311, %v12313
      %v12315 = vrot.slane %v10554, 3
      %v12316 = vsel %vm12231, %v12313, %v12315
      %v12317 = vrot.slane %v10555, 3
      %v12318 = vsel %vm12231, %v12315, %v12317
      %v12319 = vrot.slane %v10556, 3
      %v12320 = vsel %vm12231, %v12317, %v12319
      %v12321 = vrot.slane %v10557, 3
      %v12322 = vsel %vm12231, %v12319, %v12321
      %v12323 = vrot.slane %v10558, 3
      %v12324 = vsel %vm12231, %v12321, %v12323
      %v12325 = vrot.slane %v10559, 3
      %v12326 = vsel %vm12231, %v12323, %v12325
      %v12327 = vrot.slane %v10560, 3
      %v12328 = vsel %vm12231, %v12325, %v12327
      %v12329 = vrot.slane %v10561, 3
      %v12330 = vsel %vm12231, %v12327, %v12329
      %v12331 = vrot.slane %v10562, 3
      %v12332 = vsel %vm12231, %v12329, %v12331
      %v12333 = vrot.slane %v10563, 3
      %v12334 = vsel %vm12231, %v12331, %v12333
      %v12335 = vrot.slane %v10564, 3
      %v12336 = vsel %vm12231, %v12333, %v12335
      %v12337 = vrot.slane %v10565, 3
      %v12338 = vsel %vm12231, %v12335, %v12337
      %v12339 = vrot.slane %v10566, 3
      %v12340 = vsel %vm12231, %v12337, %v12339
      %v12341 = vrot.slane %v10567, 3
      %v12342 = vsel %vm12231, %v12339, %v12341
      %v12343 = vrot.slane %v10568, 3
      %v12344 = vsel %vm12231, %v12341, %v12343
      %v12345 = vrot.slane %v10569, 3
      %v12346 = vsel %vm12231, %v12343, %v12345
      %v12347 = vrot.slane %v10570, 3
      %v12348 = vsel %vm12231, %v12345, %v12347
      %v12349 = vrot.slane %v10571, 3
      %v12350 = vsel %vm12231, %v12347, %v12349
      %v12351 = vrot.slane %v10572, 3
      %v12352 = vsel %vm12231, %v12349, %v12351
      %v12353 = vrot.slane %v10573, 3
      %v12354 = vsel %vm12231, %v12351, %v12353
      %v12355 = vrot.slane %v10574, 3
      %v12356 = vsel %vm12231, %v12353, %v12355
      %v12357 = vrot.slane %v10575, 3
      %v12358 = vsel %vm12231, %v12355, %v12357
      %v12359 = vrot.slane %v10576, 3
      %v12360 = vsel %vm12231, %v12357, %v12359
      %v12361 = vrot.slane %v10577, 3
      %v12362 = vsel %vm12231, %v12359, %v12361
      %v12363 = vrot.slane %v10578, 3
      %v12364 = vsel %vm12231, %v12361, %v12363
      %v12365 = vrot.slane %v10579, 3
      %v12366 = vsel %vm12231, %v12363, %v12365
      %v12367 = vrot.slane %v10580, 3
      %v12368 = vsel %vm12231, %v12365, %v12367
      %v12369 = vrot.slane %v10581, 3
      %v12370 = vsel %vm12231, %v12367, %v12369
      %v12371 = vrot.slane %v10582, 3
      %v12372 = vsel %vm12231, %v12369, %v12371
      %v12373 = vrot.slane %v10583, 3
      %v12374 = vsel %vm12231, %v12371, %v12373
      %v12375 = vrot.slane %v10584, 3
      %v12376 = vsel %vm12231, %v12373, %v12375
      %v12378 = vsel %vm1268, %v12234, 0
      %v12381 = vsel %vm1268, %v12236, 0
      %v12384 = vsel %vm1268, %v12238, 0
      %v12387 = vsel %vm1268, %v12240, 0
      %v12390 = vsel %vm1268, %v12242, 0
      %v12393 = vsel %vm1268, %v12244, 0
      %v12396 = vsel %vm1268, %v12246, 0
      %v12399 = vsel %vm1268, %v12248, 0
      %v12402 = vsel %vm1268, %v12250, 0
      %v12405 = vsel %vm1268, %v12252, 0
      %v12408 = vsel %vm1268, %v12254, 0
      %v12411 = vsel %vm1268, %v12256, 0
      %v12414 = vsel %vm1268, %v12258, 0
      %v12417 = vsel %vm1268, %v12260, 0
      %v12420 = vsel %vm1268, %v12262, 0
      %v12423 = vsel %vm1268, %v12264, 0
      %v12426 = vsel %vm1268, %v12266, 0
      %v12429 = vsel %vm1268, %v12268, 0
      %v12432 = vsel %vm1268, %v12270, 0
      %v12435 = vsel %vm1268, %v12272, 0
      %v12438 = vsel %vm1268, %v12274, 0
      %v12441 = vsel %vm1268, %v12276, 0
      %v12444 = vsel %vm1268, %v12278, 0
      %v12447 = vsel %vm1268, %v12280, 0
      %v12450 = vsel %vm1268, %v12282, 0
      %v12453 = vsel %vm1268, %v12284, 0
      %v12456 = vsel %vm1268, %v12286, 0
      %v12459 = vsel %vm1268, %v12288, 0
      %v12462 = vsel %vm1268, %v12290, 0
      %v12465 = vsel %vm1268, %v12292, 0
      %v12468 = vsel %vm1268, %v12294, 0
      %v12471 = vsel %vm1268, %v12296, 0
      %v12474 = vsel %vm1268, %v12298, 0
      %v12477 = vsel %vm1268, %v12300, 0
      %v12480 = vsel %vm1268, %v12302, 0
      %v12483 = vsel %vm1268, %v12304, 0
      %v12486 = vsel %vm1268, %v12306, 0
      %v12489 = vsel %vm1268, %v12308, 0
      %v12492 = vsel %vm1268, %v12310, 0
      %v12495 = vsel %vm1268, %v12312, 0
      %v12498 = vsel %vm1268, %v12314, 0
      %v12501 = vsel %vm1268, %v12316, 0
      %v12504 = vsel %vm1268, %v12318, 0
      %v12507 = vsel %vm1268, %v12320, 0
      %v12510 = vsel %vm1268, %v12322, 0
      %v12513 = vsel %vm1268, %v12324, 0
      %v12516 = vsel %vm1268, %v12326, 0
      %v12519 = vsel %vm1268, %v12328, 0
      %v12522 = vsel %vm1268, %v12330, 0
      %v12525 = vsel %vm1268, %v12332, 0
      %v12528 = vsel %vm1268, %v12334, 0
      %v12531 = vsel %vm1268, %v12336, 0
      %v12534 = vsel %vm1268, %v12338, 0
      %v12537 = vsel %vm1268, %v12340, 0
      %v12540 = vsel %vm1268, %v12342, 0
      %v12543 = vsel %vm1268, %v12344, 0
      %v12546 = vsel %vm1268, %v12346, 0
      %v12549 = vsel %vm1268, %v12348, 0
      %v12552 = vsel %vm1268, %v12350, 0
      %v12555 = vsel %vm1268, %v12352, 0
      %v12558 = vsel %vm1268, %v12354, 0
      %v12561 = vsel %vm1268, %v12356, 0
      %v12564 = vsel %vm1268, %v12358, 0
      %v12567 = vsel %vm1268, %v12360, 0
      %v12570 = vsel %vm1268, %v12362, 0
      %v12573 = vsel %vm1268, %v12364, 0
      %v12576 = vsel %vm1268, %v12366, 0
      %v12579 = vsel %vm1268, %v12368, 0
      %v12582 = vsel %vm1268, %v12370, 0
      %v12585 = vsel %vm1268, %v12372, 0
      %v12588 = vsel %vm1268, %v12374, 0
      %v12591 = vsel %vm1268, %v12376, 0
      %v12594 = vsel %vm1268, %v12375, 0
      %v12597 = vand.u32 %v12227, %v1491
      %12599 = vmatprep.subr.bf16.mxu0 0
      %12600 = vmatpush1.bf16.msra.mxu0 0
      %12601 = vmatprep.subr.bf16.mxu0 0
      %12602 = vmatpush1.bf16.msra.mxu0 0
      %12603 = vmatprep.subr.bf16.mxu0 0
      %12604 = vmatpush1.bf16.msra.mxu0 0
      %12605 = vmatprep.subr.bf16.mxu0 0
      %12606 = vmatpush1.bf16.msra.mxu0 0
      %12607 = vmatprep.subr.bf16.mxu0 0
      %12608 = vmatpush1.bf16.msra.mxu0 0
      %12609 = vmatprep.subr.bf16.mxu0 0
      %12610 = vmatpush1.bf16.msra.mxu0 0
      %12611 = vmatprep.subr.bf16.mxu0 0
      %12612 = vmatpush1.bf16.msra.mxu0 0
      %12613 = vmatprep.subr.bf16.mxu0 0
      %12614 = vmatpush1.bf16.msra.mxu0 %v12597
      %12615 = vmatprep.subr.bf16.mxu0 0
      %12616 = vmatpush2.bf16.msra.mxu0 0
      %12617 = vmatprep.subr.bf16.mxu0 0
      %12618 = vmatpush2.bf16.msra.mxu0 0
      %12619 = vmatprep.subr.bf16.mxu0 0
      %12620 = vmatpush2.bf16.msra.mxu0 0
      %12621 = vmatprep.subr.bf16.mxu0 0
      %12622 = vmatpush2.bf16.msra.mxu0 0
      %12623 = vmatprep.subr.bf16.mxu0 0
      %12624 = vmatpush2.bf16.msra.mxu0 0
      %12625 = vmatprep.subr.bf16.mxu0 0
      %12626 = vmatpush2.bf16.msra.mxu0 0
      %12627 = vmatprep.subr.bf16.mxu0 0
      %12628 = vmatpush2.bf16.msra.mxu0 0
      %12629 = vmatprep.subr.bf16.mxu0 0
      %12630 = vmatpush2.bf16.msra.mxu0 0
      %12631 = vmatprep.mubr.bf16.mxu0 0
      %12632 = vmatmul.mubr.bf16.gmra.mxu0 %v12378
      %v12633 = vpop.f32.mrf.mxu0
      %v12634 = vadd.f32 0.0, %v12633
      %v12635 = vpop.f32.mrf.mxu0
      %v12636 = vpop.f32.mrf.mxu0
      %v12637 = vadd.f32 0.0, %v12636
      %v12638 = vpop.f32.mrf.mxu0
      %12639 = vmatprep.mubr.bf16.mxu0 0
      %12640 = vmatmul.mubr.bf16.gmra.mxu0 %v12381
      %v12641 = vpop.f32.mrf.mxu0
      %v12642 = vadd.f32 0.0, %v12641
      %v12643 = vpop.f32.mrf.mxu0
      %v12644 = vpop.f32.mrf.mxu0
      %v12645 = vadd.f32 0.0, %v12644
      %v12646 = vpop.f32.mrf.mxu0
      %12647 = vmatprep.mubr.bf16.mxu0 0
      %12648 = vmatmul.mubr.bf16.gmra.mxu0 %v12384
      %v12649 = vpop.f32.mrf.mxu0
      %v12650 = vadd.f32 0.0, %v12649
      %v12651 = vpop.f32.mrf.mxu0
      %v12652 = vpop.f32.mrf.mxu0
      %v12653 = vadd.f32 0.0, %v12652
      %v12654 = vpop.f32.mrf.mxu0
      %12655 = vmatprep.mubr.bf16.mxu0 0
      %12656 = vmatmul.mubr.bf16.gmra.mxu0 %v12387
      %v12657 = vpop.f32.mrf.mxu0
      %v12658 = vadd.f32 0.0, %v12657
      %v12659 = vpop.f32.mrf.mxu0
      %v12660 = vpop.f32.mrf.mxu0
      %v12661 = vadd.f32 0.0, %v12660
      %v12662 = vpop.f32.mrf.mxu0
      %12663 = vmatprep.mubr.bf16.mxu0 0
      %12664 = vmatmul.mubr.bf16.gmra.mxu0 %v12390
      %v12665 = vpop.f32.mrf.mxu0
      %v12666 = vadd.f32 0.0, %v12665
      %v12667 = vpop.f32.mrf.mxu0
      %v12668 = vpop.f32.mrf.mxu0
      %v12669 = vadd.f32 0.0, %v12668
      %v12670 = vpop.f32.mrf.mxu0
      %12671 = vmatprep.mubr.bf16.mxu0 0
      %12672 = vmatmul.mubr.bf16.gmra.mxu0 %v12393
      %v12673 = vpop.f32.mrf.mxu0
      %v12674 = vadd.f32 0.0, %v12673
      %v12675 = vpop.f32.mrf.mxu0
      %v12676 = vpop.f32.mrf.mxu0
      %v12677 = vadd.f32 0.0, %v12676
      %v12678 = vpop.f32.mrf.mxu0
      %12679 = vmatprep.mubr.bf16.mxu0 0
      %12680 = vmatmul.mubr.bf16.gmra.mxu0 %v12396
      %v12681 = vpop.f32.mrf.mxu0
      %v12682 = vadd.f32 0.0, %v12681
      %v12683 = vpop.f32.mrf.mxu0
      %v12684 = vpop.f32.mrf.mxu0
      %v12685 = vadd.f32 0.0, %v12684
      %v12686 = vpop.f32.mrf.mxu0
      %12687 = vmatprep.mubr.bf16.mxu0 0
      %12688 = vmatmul.mubr.bf16.gmra.mxu0 %v12399
      %v12689 = vpop.f32.mrf.mxu0
      %v12690 = vadd.f32 0.0, %v12689
      %v12691 = vpop.f32.mrf.mxu0
      %v12692 = vpop.f32.mrf.mxu0
      %v12693 = vadd.f32 0.0, %v12692
      %v12694 = vpop.f32.mrf.mxu0
      %12695 = vmatprep.mubr.bf16.mxu0 0
      %12696 = vmatmul.mubr.bf16.gmra.mxu0 %v12402
      %v12697 = vpop.f32.mrf.mxu0
      %v12698 = vadd.f32 0.0, %v12697
      %v12699 = vpop.f32.mrf.mxu0
      %v12700 = vpop.f32.mrf.mxu0
      %v12701 = vadd.f32 0.0, %v12700
      %v12702 = vpop.f32.mrf.mxu0
      %12703 = vmatprep.mubr.bf16.mxu0 0
      %12704 = vmatmul.mubr.bf16.gmra.mxu0 %v12405
      %v12705 = vpop.f32.mrf.mxu0
      %v12706 = vadd.f32 0.0, %v12705
      %v12707 = vpop.f32.mrf.mxu0
      %v12708 = vpop.f32.mrf.mxu0
      %v12709 = vadd.f32 0.0, %v12708
      %v12710 = vpop.f32.mrf.mxu0
      %12711 = vmatprep.mubr.bf16.mxu0 0
      %12712 = vmatmul.mubr.bf16.gmra.mxu0 %v12408
      %v12713 = vpop.f32.mrf.mxu0
      %v12714 = vadd.f32 0.0, %v12713
      %v12715 = vpop.f32.mrf.mxu0
      %v12716 = vpop.f32.mrf.mxu0
      %v12717 = vadd.f32 0.0, %v12716
      %v12718 = vpop.f32.mrf.mxu0
      %12719 = vmatprep.mubr.bf16.mxu0 0
      %12720 = vmatmul.mubr.bf16.gmra.mxu0 %v12411
      %v12721 = vpop.f32.mrf.mxu0
      %v12722 = vadd.f32 0.0, %v12721
      %v12723 = vpop.f32.mrf.mxu0
      %v12724 = vpop.f32.mrf.mxu0
      %v12725 = vadd.f32 0.0, %v12724
      %v12726 = vpop.f32.mrf.mxu0
      %12727 = vmatprep.mubr.bf16.mxu0 0
      %12728 = vmatmul.mubr.bf16.gmra.mxu0 %v12414
      %v12729 = vpop.f32.mrf.mxu0
      %v12730 = vadd.f32 0.0, %v12729
      %v12731 = vpop.f32.mrf.mxu0
      %v12732 = vpop.f32.mrf.mxu0
      %v12733 = vadd.f32 0.0, %v12732
      %v12734 = vpop.f32.mrf.mxu0
      %12735 = vmatprep.mubr.bf16.mxu0 0
      %12736 = vmatmul.mubr.bf16.gmra.mxu0 %v12417
      %v12737 = vpop.f32.mrf.mxu0
      %v12738 = vadd.f32 0.0, %v12737
      %v12739 = vpop.f32.mrf.mxu0
      %v12740 = vpop.f32.mrf.mxu0
      %v12741 = vadd.f32 0.0, %v12740
      %v12742 = vpop.f32.mrf.mxu0
      %12743 = vmatprep.mubr.bf16.mxu0 0
      %12744 = vmatmul.mubr.bf16.gmra.mxu0 %v12420
      %v12745 = vpop.f32.mrf.mxu0
      %v12746 = vadd.f32 0.0, %v12745
      %v12747 = vpop.f32.mrf.mxu0
      %v12748 = vpop.f32.mrf.mxu0
      %v12749 = vadd.f32 0.0, %v12748
      %v12750 = vpop.f32.mrf.mxu0
      %12751 = vmatprep.mubr.bf16.mxu0 0
      %12752 = vmatmul.mubr.bf16.gmra.mxu0 %v12423
      %v12753 = vpop.f32.mrf.mxu0
      %v12754 = vadd.f32 0.0, %v12753
      %v12755 = vpop.f32.mrf.mxu0
      %v12756 = vpop.f32.mrf.mxu0
      %v12757 = vadd.f32 0.0, %v12756
      %v12758 = vpop.f32.mrf.mxu0
      %12759 = vmatprep.mubr.bf16.mxu0 0
      %12760 = vmatmul.mubr.bf16.gmra.mxu0 %v12426
      %v12761 = vpop.f32.mrf.mxu0
      %v12762 = vadd.f32 0.0, %v12761
      %v12763 = vpop.f32.mrf.mxu0
      %v12764 = vpop.f32.mrf.mxu0
      %v12765 = vadd.f32 0.0, %v12764
      %v12766 = vpop.f32.mrf.mxu0
      %12767 = vmatprep.mubr.bf16.mxu0 0
      %12768 = vmatmul.mubr.bf16.gmra.mxu0 %v12429
      %v12769 = vpop.f32.mrf.mxu0
      %v12770 = vadd.f32 0.0, %v12769
      %v12771 = vpop.f32.mrf.mxu0
      %v12772 = vpop.f32.mrf.mxu0
      %v12773 = vadd.f32 0.0, %v12772
      %v12774 = vpop.f32.mrf.mxu0
      %12775 = vmatprep.mubr.bf16.mxu0 0
      %12776 = vmatmul.mubr.bf16.gmra.mxu0 %v12432
      %v12777 = vpop.f32.mrf.mxu0
      %v12778 = vadd.f32 0.0, %v12777
      %v12779 = vpop.f32.mrf.mxu0
      %v12780 = vpop.f32.mrf.mxu0
      %v12781 = vadd.f32 0.0, %v12780
      %v12782 = vpop.f32.mrf.mxu0
      %12783 = vmatprep.mubr.bf16.mxu0 0
      %12784 = vmatmul.mubr.bf16.gmra.mxu0 %v12435
      %v12785 = vpop.f32.mrf.mxu0
      %v12786 = vadd.f32 0.0, %v12785
      %v12787 = vpop.f32.mrf.mxu0
      %v12788 = vpop.f32.mrf.mxu0
      %v12789 = vadd.f32 0.0, %v12788
      %v12790 = vpop.f32.mrf.mxu0
      %12791 = vmatprep.mubr.bf16.mxu0 0
      %12792 = vmatmul.mubr.bf16.gmra.mxu0 %v12438
      %v12793 = vpop.f32.mrf.mxu0
      %v12794 = vadd.f32 0.0, %v12793
      %v12795 = vpop.f32.mrf.mxu0
      %v12796 = vpop.f32.mrf.mxu0
      %v12797 = vadd.f32 0.0, %v12796
      %v12798 = vpop.f32.mrf.mxu0
      %12799 = vmatprep.mubr.bf16.mxu0 0
      %12800 = vmatmul.mubr.bf16.gmra.mxu0 %v12441
      %v12801 = vpop.f32.mrf.mxu0
      %v12802 = vadd.f32 0.0, %v12801
      %v12803 = vpop.f32.mrf.mxu0
      %v12804 = vpop.f32.mrf.mxu0
      %v12805 = vadd.f32 0.0, %v12804
      %v12806 = vpop.f32.mrf.mxu0
      %12807 = vmatprep.mubr.bf16.mxu0 0
      %12808 = vmatmul.mubr.bf16.gmra.mxu0 %v12444
      %v12809 = vpop.f32.mrf.mxu0
      %v12810 = vadd.f32 0.0, %v12809
      %v12811 = vpop.f32.mrf.mxu0
      %v12812 = vpop.f32.mrf.mxu0
      %v12813 = vadd.f32 0.0, %v12812
      %v12814 = vpop.f32.mrf.mxu0
      %12815 = vmatprep.mubr.bf16.mxu0 0
      %12816 = vmatmul.mubr.bf16.gmra.mxu0 %v12447
      %v12817 = vpop.f32.mrf.mxu0
      %v12818 = vadd.f32 0.0, %v12817
      %v12819 = vpop.f32.mrf.mxu0
      %v12820 = vpop.f32.mrf.mxu0
      %v12821 = vadd.f32 0.0, %v12820
      %v12822 = vpop.f32.mrf.mxu0
      %12823 = vmatprep.mubr.bf16.mxu0 0
      %12824 = vmatmul.mubr.bf16.gmra.mxu0 %v12450
      %v12825 = vpop.f32.mrf.mxu0
      %v12826 = vadd.f32 0.0, %v12825
      %v12827 = vpop.f32.mrf.mxu0
      %v12828 = vpop.f32.mrf.mxu0
      %v12829 = vadd.f32 0.0, %v12828
      %v12830 = vpop.f32.mrf.mxu0
      %12831 = vmatprep.mubr.bf16.mxu0 0
      %12832 = vmatmul.mubr.bf16.gmra.mxu0 %v12453
      %v12833 = vpop.f32.mrf.mxu0
      %v12834 = vadd.f32 0.0, %v12833
      %v12835 = vpop.f32.mrf.mxu0
      %v12836 = vpop.f32.mrf.mxu0
      %v12837 = vadd.f32 0.0, %v12836
      %v12838 = vpop.f32.mrf.mxu0
      %12839 = vmatprep.mubr.bf16.mxu0 0
      %12840 = vmatmul.mubr.bf16.gmra.mxu0 %v12456
      %v12841 = vpop.f32.mrf.mxu0
      %v12842 = vadd.f32 0.0, %v12841
      %v12843 = vpop.f32.mrf.mxu0
      %v12844 = vpop.f32.mrf.mxu0
      %v12845 = vadd.f32 0.0, %v12844
      %v12846 = vpop.f32.mrf.mxu0
      %12847 = vmatprep.mubr.bf16.mxu0 0
      %12848 = vmatmul.mubr.bf16.gmra.mxu0 %v12459
      %v12849 = vpop.f32.mrf.mxu0
      %v12850 = vadd.f32 0.0, %v12849
      %v12851 = vpop.f32.mrf.mxu0
      %v12852 = vpop.f32.mrf.mxu0
      %v12853 = vadd.f32 0.0, %v12852
      %v12854 = vpop.f32.mrf.mxu0
      %12855 = vmatprep.mubr.bf16.mxu0 0
      %12856 = vmatmul.mubr.bf16.gmra.mxu0 %v12462
      %v12857 = vpop.f32.mrf.mxu0
      %v12858 = vadd.f32 0.0, %v12857
      %v12859 = vpop.f32.mrf.mxu0
      %v12860 = vpop.f32.mrf.mxu0
      %v12861 = vadd.f32 0.0, %v12860
      %v12862 = vpop.f32.mrf.mxu0
      %12863 = vmatprep.mubr.bf16.mxu0 0
      %12864 = vmatmul.mubr.bf16.gmra.mxu0 %v12465
      %v12865 = vpop.f32.mrf.mxu0
      %v12866 = vadd.f32 0.0, %v12865
      %v12867 = vpop.f32.mrf.mxu0
      %v12868 = vpop.f32.mrf.mxu0
      %v12869 = vadd.f32 0.0, %v12868
      %v12870 = vpop.f32.mrf.mxu0
      %12871 = vmatprep.mubr.bf16.mxu0 0
      %12872 = vmatmul.mubr.bf16.gmra.mxu0 %v12468
      %v12873 = vpop.f32.mrf.mxu0
      %v12874 = vadd.f32 0.0, %v12873
      %v12875 = vpop.f32.mrf.mxu0
      %v12876 = vpop.f32.mrf.mxu0
      %v12877 = vadd.f32 0.0, %v12876
      %v12878 = vpop.f32.mrf.mxu0
      %12879 = vmatprep.mubr.bf16.mxu0 0
      %12880 = vmatmul.mubr.bf16.gmra.mxu0 %v12471
      %v12881 = vpop.f32.mrf.mxu0
      %v12882 = vadd.f32 0.0, %v12881
      %v12883 = vpop.f32.mrf.mxu0
      %v12884 = vpop.f32.mrf.mxu0
      %v12885 = vadd.f32 0.0, %v12884
      %v12886 = vpop.f32.mrf.mxu0
      %12887 = vmatprep.mubr.bf16.mxu0 0
      %12888 = vmatmul.mubr.bf16.gmra.mxu0 %v12474
      %v12889 = vpop.f32.mrf.mxu0
      %v12890 = vadd.f32 0.0, %v12889
      %v12891 = vpop.f32.mrf.mxu0
      %v12892 = vpop.f32.mrf.mxu0
      %v12893 = vadd.f32 0.0, %v12892
      %v12894 = vpop.f32.mrf.mxu0
      %12895 = vmatprep.mubr.bf16.mxu0 0
      %12896 = vmatmul.mubr.bf16.gmra.mxu0 %v12477
      %v12897 = vpop.f32.mrf.mxu0
      %v12898 = vadd.f32 0.0, %v12897
      %v12899 = vpop.f32.mrf.mxu0
      %v12900 = vpop.f32.mrf.mxu0
      %v12901 = vadd.f32 0.0, %v12900
      %v12902 = vpop.f32.mrf.mxu0
      %12903 = vmatprep.mubr.bf16.mxu0 0
      %12904 = vmatmul.mubr.bf16.gmra.mxu0 %v12480
      %v12905 = vpop.f32.mrf.mxu0
      %v12906 = vadd.f32 0.0, %v12905
      %v12907 = vpop.f32.mrf.mxu0
      %v12908 = vpop.f32.mrf.mxu0
      %v12909 = vadd.f32 0.0, %v12908
      %v12910 = vpop.f32.mrf.mxu0
      %12911 = vmatprep.mubr.bf16.mxu0 0
      %12912 = vmatmul.mubr.bf16.gmra.mxu0 %v12483
      %v12913 = vpop.f32.mrf.mxu0
      %v12914 = vadd.f32 0.0, %v12913
      %v12915 = vpop.f32.mrf.mxu0
      %v12916 = vpop.f32.mrf.mxu0
      %v12917 = vadd.f32 0.0, %v12916
      %v12918 = vpop.f32.mrf.mxu0
      %12919 = vmatprep.mubr.bf16.mxu0 0
      %12920 = vmatmul.mubr.bf16.gmra.mxu0 %v12486
      %v12921 = vpop.f32.mrf.mxu0
      %v12922 = vadd.f32 0.0, %v12921
      %v12923 = vpop.f32.mrf.mxu0
      %v12924 = vpop.f32.mrf.mxu0
      %v12925 = vadd.f32 0.0, %v12924
      %v12926 = vpop.f32.mrf.mxu0
      %12927 = vmatprep.mubr.bf16.mxu0 0
      %12928 = vmatmul.mubr.bf16.gmra.mxu0 %v12489
      %v12929 = vpop.f32.mrf.mxu0
      %v12930 = vadd.f32 0.0, %v12929
      %v12931 = vpop.f32.mrf.mxu0
      %v12932 = vpop.f32.mrf.mxu0
      %v12933 = vadd.f32 0.0, %v12932
      %v12934 = vpop.f32.mrf.mxu0
      %12935 = vmatprep.mubr.bf16.mxu0 0
      %12936 = vmatmul.mubr.bf16.gmra.mxu0 %v12492
      %v12937 = vpop.f32.mrf.mxu0
      %v12938 = vadd.f32 0.0, %v12937
      %v12939 = vpop.f32.mrf.mxu0
      %v12940 = vpop.f32.mrf.mxu0
      %v12941 = vadd.f32 0.0, %v12940
      %v12942 = vpop.f32.mrf.mxu0
      %12943 = vmatprep.mubr.bf16.mxu0 0
      %12944 = vmatmul.mubr.bf16.gmra.mxu0 %v12495
      %v12945 = vpop.f32.mrf.mxu0
      %v12946 = vadd.f32 0.0, %v12945
      %v12947 = vpop.f32.mrf.mxu0
      %v12948 = vpop.f32.mrf.mxu0
      %v12949 = vadd.f32 0.0, %v12948
      %v12950 = vpop.f32.mrf.mxu0
      %12951 = vmatprep.mubr.bf16.mxu0 0
      %12952 = vmatmul.mubr.bf16.gmra.mxu0 %v12498
      %v12953 = vpop.f32.mrf.mxu0
      %v12954 = vadd.f32 0.0, %v12953
      %v12955 = vpop.f32.mrf.mxu0
      %v12956 = vpop.f32.mrf.mxu0
      %v12957 = vadd.f32 0.0, %v12956
      %v12958 = vpop.f32.mrf.mxu0
      %12959 = vmatprep.mubr.bf16.mxu0 0
      %12960 = vmatmul.mubr.bf16.gmra.mxu0 %v12501
      %v12961 = vpop.f32.mrf.mxu0
      %v12962 = vadd.f32 0.0, %v12961
      %v12963 = vpop.f32.mrf.mxu0
      %v12964 = vpop.f32.mrf.mxu0
      %v12965 = vadd.f32 0.0, %v12964
      %v12966 = vpop.f32.mrf.mxu0
      %12967 = vmatprep.mubr.bf16.mxu0 0
      %12968 = vmatmul.mubr.bf16.gmra.mxu0 %v12504
      %v12969 = vpop.f32.mrf.mxu0
      %v12970 = vadd.f32 0.0, %v12969
      %v12971 = vpop.f32.mrf.mxu0
      %v12972 = vpop.f32.mrf.mxu0
      %v12973 = vadd.f32 0.0, %v12972
      %v12974 = vpop.f32.mrf.mxu0
      %12975 = vmatprep.mubr.bf16.mxu0 0
      %12976 = vmatmul.mubr.bf16.gmra.mxu0 %v12507
      %v12977 = vpop.f32.mrf.mxu0
      %v12978 = vadd.f32 0.0, %v12977
      %v12979 = vpop.f32.mrf.mxu0
      %v12980 = vpop.f32.mrf.mxu0
      %v12981 = vadd.f32 0.0, %v12980
      %v12982 = vpop.f32.mrf.mxu0
      %12983 = vmatprep.mubr.bf16.mxu0 0
      %12984 = vmatmul.mubr.bf16.gmra.mxu0 %v12510
      %v12985 = vpop.f32.mrf.mxu0
      %v12986 = vadd.f32 0.0, %v12985
      %v12987 = vpop.f32.mrf.mxu0
      %v12988 = vpop.f32.mrf.mxu0
      %v12989 = vadd.f32 0.0, %v12988
      %v12990 = vpop.f32.mrf.mxu0
      %12991 = vmatprep.mubr.bf16.mxu0 0
      %12992 = vmatmul.mubr.bf16.gmra.mxu0 %v12513
      %v12993 = vpop.f32.mrf.mxu0
      %v12994 = vadd.f32 0.0, %v12993
      %v12995 = vpop.f32.mrf.mxu0
      %v12996 = vpop.f32.mrf.mxu0
      %v12997 = vadd.f32 0.0, %v12996
      %v12998 = vpop.f32.mrf.mxu0
      %12999 = vmatprep.mubr.bf16.mxu0 0
      %13000 = vmatmul.mubr.bf16.gmra.mxu0 %v12516
      %v13001 = vpop.f32.mrf.mxu0
      %v13002 = vadd.f32 0.0, %v13001
      %v13003 = vpop.f32.mrf.mxu0
      %v13004 = vpop.f32.mrf.mxu0
      %v13005 = vadd.f32 0.0, %v13004
      %v13006 = vpop.f32.mrf.mxu0
      %13007 = vmatprep.mubr.bf16.mxu0 0
      %13008 = vmatmul.mubr.bf16.gmra.mxu0 %v12519
      %v13009 = vpop.f32.mrf.mxu0
      %v13010 = vadd.f32 0.0, %v13009
      %v13011 = vpop.f32.mrf.mxu0
      %v13012 = vpop.f32.mrf.mxu0
      %v13013 = vadd.f32 0.0, %v13012
      %v13014 = vpop.f32.mrf.mxu0
      %13015 = vmatprep.mubr.bf16.mxu0 0
      %13016 = vmatmul.mubr.bf16.gmra.mxu0 %v12522
      %v13017 = vpop.f32.mrf.mxu0
      %v13018 = vadd.f32 0.0, %v13017
      %v13019 = vpop.f32.mrf.mxu0
      %v13020 = vpop.f32.mrf.mxu0
      %v13021 = vadd.f32 0.0, %v13020
      %v13022 = vpop.f32.mrf.mxu0
      %13023 = vmatprep.mubr.bf16.mxu0 0
      %13024 = vmatmul.mubr.bf16.gmra.mxu0 %v12525
      %v13025 = vpop.f32.mrf.mxu0
      %v13026 = vadd.f32 0.0, %v13025
      %v13027 = vpop.f32.mrf.mxu0
      %v13028 = vpop.f32.mrf.mxu0
      %v13029 = vadd.f32 0.0, %v13028
      %v13030 = vpop.f32.mrf.mxu0
      %13031 = vmatprep.mubr.bf16.mxu0 0
      %13032 = vmatmul.mubr.bf16.gmra.mxu0 %v12528
      %v13033 = vpop.f32.mrf.mxu0
      %v13034 = vadd.f32 0.0, %v13033
      %v13035 = vpop.f32.mrf.mxu0
      %v13036 = vpop.f32.mrf.mxu0
      %v13037 = vadd.f32 0.0, %v13036
      %v13038 = vpop.f32.mrf.mxu0
      %13039 = vmatprep.mubr.bf16.mxu0 0
      %13040 = vmatmul.mubr.bf16.gmra.mxu0 %v12531
      %v13041 = vpop.f32.mrf.mxu0
      %v13042 = vadd.f32 0.0, %v13041
      %v13043 = vpop.f32.mrf.mxu0
      %v13044 = vpop.f32.mrf.mxu0
      %v13045 = vadd.f32 0.0, %v13044
      %v13046 = vpop.f32.mrf.mxu0
      %13047 = vmatprep.mubr.bf16.mxu0 0
      %13048 = vmatmul.mubr.bf16.gmra.mxu0 %v12534
      %v13049 = vpop.f32.mrf.mxu0
      %v13050 = vadd.f32 0.0, %v13049
      %v13051 = vpop.f32.mrf.mxu0
      %v13052 = vpop.f32.mrf.mxu0
      %v13053 = vadd.f32 0.0, %v13052
      %v13054 = vpop.f32.mrf.mxu0
      %13055 = vmatprep.mubr.bf16.mxu0 0
      %13056 = vmatmul.mubr.bf16.gmra.mxu0 %v12537
      %v13057 = vpop.f32.mrf.mxu0
      %v13058 = vadd.f32 0.0, %v13057
      %v13059 = vpop.f32.mrf.mxu0
      %v13060 = vpop.f32.mrf.mxu0
      %v13061 = vadd.f32 0.0, %v13060
      %v13062 = vpop.f32.mrf.mxu0
      %13063 = vmatprep.mubr.bf16.mxu0 0
      %13064 = vmatmul.mubr.bf16.gmra.mxu0 %v12540
      %v13065 = vpop.f32.mrf.mxu0
      %v13066 = vadd.f32 0.0, %v13065
      %v13067 = vpop.f32.mrf.mxu0
      %v13068 = vpop.f32.mrf.mxu0
      %v13069 = vadd.f32 0.0, %v13068
      %v13070 = vpop.f32.mrf.mxu0
      %13071 = vmatprep.mubr.bf16.mxu0 0
      %13072 = vmatmul.mubr.bf16.gmra.mxu0 %v12543
      %v13073 = vpop.f32.mrf.mxu0
      %v13074 = vadd.f32 0.0, %v13073
      %v13075 = vpop.f32.mrf.mxu0
      %v13076 = vpop.f32.mrf.mxu0
      %v13077 = vadd.f32 0.0, %v13076
      %v13078 = vpop.f32.mrf.mxu0
      %13079 = vmatprep.mubr.bf16.mxu0 0
      %13080 = vmatmul.mubr.bf16.gmra.mxu0 %v12546
      %v13081 = vpop.f32.mrf.mxu0
      %v13082 = vadd.f32 0.0, %v13081
      %v13083 = vpop.f32.mrf.mxu0
      %v13084 = vpop.f32.mrf.mxu0
      %v13085 = vadd.f32 0.0, %v13084
      %v13086 = vpop.f32.mrf.mxu0
      %13087 = vmatprep.mubr.bf16.mxu0 0
      %13088 = vmatmul.mubr.bf16.gmra.mxu0 %v12549
      %v13089 = vpop.f32.mrf.mxu0
      %v13090 = vadd.f32 0.0, %v13089
      %v13091 = vpop.f32.mrf.mxu0
      %v13092 = vpop.f32.mrf.mxu0
      %v13093 = vadd.f32 0.0, %v13092
      %v13094 = vpop.f32.mrf.mxu0
      %13095 = vmatprep.mubr.bf16.mxu0 0
      %13096 = vmatmul.mubr.bf16.gmra.mxu0 %v12552
      %v13097 = vpop.f32.mrf.mxu0
      %v13098 = vadd.f32 0.0, %v13097
      %v13099 = vpop.f32.mrf.mxu0
      %v13100 = vpop.f32.mrf.mxu0
      %v13101 = vadd.f32 0.0, %v13100
      %v13102 = vpop.f32.mrf.mxu0
      %13103 = vmatprep.mubr.bf16.mxu0 0
      %13104 = vmatmul.mubr.bf16.gmra.mxu0 %v12555
      %v13105 = vpop.f32.mrf.mxu0
      %v13106 = vadd.f32 0.0, %v13105
      %v13107 = vpop.f32.mrf.mxu0
      %v13108 = vpop.f32.mrf.mxu0
      %v13109 = vadd.f32 0.0, %v13108
      %v13110 = vpop.f32.mrf.mxu0
      %13111 = vmatprep.mubr.bf16.mxu0 0
      %13112 = vmatmul.mubr.bf16.gmra.mxu0 %v12558
      %v13113 = vpop.f32.mrf.mxu0
      %v13114 = vadd.f32 0.0, %v13113
      %v13115 = vpop.f32.mrf.mxu0
      %v13116 = vpop.f32.mrf.mxu0
      %v13117 = vadd.f32 0.0, %v13116
      %v13118 = vpop.f32.mrf.mxu0
      %13119 = vmatprep.mubr.bf16.mxu0 0
      %13120 = vmatmul.mubr.bf16.gmra.mxu0 %v12561
      %v13121 = vpop.f32.mrf.mxu0
      %v13122 = vadd.f32 0.0, %v13121
      %v13123 = vpop.f32.mrf.mxu0
      %v13124 = vpop.f32.mrf.mxu0
      %v13125 = vadd.f32 0.0, %v13124
      %v13126 = vpop.f32.mrf.mxu0
      %13127 = vmatprep.mubr.bf16.mxu0 0
      %13128 = vmatmul.mubr.bf16.gmra.mxu0 %v12564
      %v13129 = vpop.f32.mrf.mxu0
      %v13130 = vadd.f32 0.0, %v13129
      %v13131 = vpop.f32.mrf.mxu0
      %v13132 = vpop.f32.mrf.mxu0
      %v13133 = vadd.f32 0.0, %v13132
      %v13134 = vpop.f32.mrf.mxu0
      %13135 = vmatprep.mubr.bf16.mxu0 0
      %13136 = vmatmul.mubr.bf16.gmra.mxu0 %v12567
      %v13137 = vpop.f32.mrf.mxu0
      %v13138 = vadd.f32 0.0, %v13137
      %v13139 = vpop.f32.mrf.mxu0
      %v13140 = vpop.f32.mrf.mxu0
      %v13141 = vadd.f32 0.0, %v13140
      %v13142 = vpop.f32.mrf.mxu0
      %13143 = vmatprep.mubr.bf16.mxu0 0
      %13144 = vmatmul.mubr.bf16.gmra.mxu0 %v12570
      %v13145 = vpop.f32.mrf.mxu0
      %v13146 = vadd.f32 0.0, %v13145
      %v13147 = vpop.f32.mrf.mxu0
      %v13148 = vpop.f32.mrf.mxu0
      %v13149 = vadd.f32 0.0, %v13148
      %v13150 = vpop.f32.mrf.mxu0
      %13151 = vmatprep.mubr.bf16.mxu0 0
      %13152 = vmatmul.mubr.bf16.gmra.mxu0 %v12573
      %v13153 = vpop.f32.mrf.mxu0
      %v13154 = vadd.f32 0.0, %v13153
      %v13155 = vpop.f32.mrf.mxu0
      %v13156 = vpop.f32.mrf.mxu0
      %v13157 = vadd.f32 0.0, %v13156
      %v13158 = vpop.f32.mrf.mxu0
      %13159 = vmatprep.mubr.bf16.mxu0 0
      %13160 = vmatmul.mubr.bf16.gmra.mxu0 %v12576
      %v13161 = vpop.f32.mrf.mxu0
      %v13162 = vadd.f32 0.0, %v13161
      %v13163 = vpop.f32.mrf.mxu0
      %v13164 = vpop.f32.mrf.mxu0
      %v13165 = vadd.f32 0.0, %v13164
      %v13166 = vpop.f32.mrf.mxu0
      %13167 = vmatprep.mubr.bf16.mxu0 0
      %13168 = vmatmul.mubr.bf16.gmra.mxu0 %v12579
      %v13169 = vpop.f32.mrf.mxu0
      %v13170 = vadd.f32 0.0, %v13169
      %v13171 = vpop.f32.mrf.mxu0
      %v13172 = vpop.f32.mrf.mxu0
      %v13173 = vadd.f32 0.0, %v13172
      %v13174 = vpop.f32.mrf.mxu0
      %13175 = vmatprep.mubr.bf16.mxu0 0
      %13176 = vmatmul.mubr.bf16.gmra.mxu0 %v12582
      %v13177 = vpop.f32.mrf.mxu0
      %v13178 = vadd.f32 0.0, %v13177
      %v13179 = vpop.f32.mrf.mxu0
      %v13180 = vpop.f32.mrf.mxu0
      %v13181 = vadd.f32 0.0, %v13180
      %v13182 = vpop.f32.mrf.mxu0
      %13183 = vmatprep.mubr.bf16.mxu0 0
      %13184 = vmatmul.mubr.bf16.gmra.mxu0 %v12585
      %v13185 = vpop.f32.mrf.mxu0
      %v13186 = vadd.f32 0.0, %v13185
      %v13187 = vpop.f32.mrf.mxu0
      %v13188 = vpop.f32.mrf.mxu0
      %v13189 = vadd.f32 0.0, %v13188
      %v13190 = vpop.f32.mrf.mxu0
      %13191 = vmatprep.mubr.bf16.mxu0 0
      %13192 = vmatmul.mubr.bf16.gmra.mxu0 %v12588
      %v13193 = vpop.f32.mrf.mxu0
      %v13194 = vadd.f32 0.0, %v13193
      %v13195 = vpop.f32.mrf.mxu0
      %v13196 = vpop.f32.mrf.mxu0
      %v13197 = vadd.f32 0.0, %v13196
      %v13198 = vpop.f32.mrf.mxu0
      %13199 = vmatprep.mubr.bf16.mxu0 0
      %13200 = vmatmul.mubr.bf16.gmra.mxu0 %v12591
      %v13201 = vpop.f32.mrf.mxu0
      %v13202 = vadd.f32 0.0, %v13201
      %v13203 = vpop.f32.mrf.mxu0
      %v13204 = vpop.f32.mrf.mxu0
      %v13205 = vadd.f32 0.0, %v13204
      %v13206 = vpop.f32.mrf.mxu0
      %13207 = vmatprep.mubr.bf16.mxu0 0
      %13208 = vmatmul.mubr.bf16.gmra.mxu0 %v12594
      %v13209 = vpop.f32.mrf.mxu0
      %v13210 = vadd.f32 0.0, %v13209
      %v13211 = vpop.f32.mrf.mxu0
      %v13212 = vpop.f32.mrf.mxu0
      %v13213 = vpop.f32.mrf.mxu0
      %13214 = vdwg.mxu0
      %v13215 = vadd.f32 %v12080, %v12634
      %v13216 = vadd.f32 %v12081, %v12637
      %v13217 = vadd.f32 %v12082, %v12642
      %v13218 = vadd.f32 %v12083, %v12645
      %v13219 = vadd.f32 %v12084, %v12650
      %v13220 = vadd.f32 %v12085, %v12653
      %v13221 = vadd.f32 %v12086, %v12658
      %v13222 = vadd.f32 %v12087, %v12661
      %v13223 = vadd.f32 %v12088, %v12666
      %v13224 = vadd.f32 %v12089, %v12669
      %v13225 = vadd.f32 %v12090, %v12674
      %v13226 = vadd.f32 %v12091, %v12677
      %v13227 = vadd.f32 %v12092, %v12682
      %v13228 = vadd.f32 %v12093, %v12685
      %v13229 = vadd.f32 %v12094, %v12690
      %v13230 = vadd.f32 %v12095, %v12693
      %v13231 = vadd.f32 %v12096, %v12698
      %v13232 = vadd.f32 %v12097, %v12701
      %v13233 = vadd.f32 %v12098, %v12706
      %v13234 = vadd.f32 %v12099, %v12709
      %v13235 = vadd.f32 %v12100, %v12714
      %v13236 = vadd.f32 %v12101, %v12717
      %v13237 = vadd.f32 %v12102, %v12722
      %v13238 = vadd.f32 %v12103, %v12725
      %v13239 = vadd.f32 %v12104, %v12730
      %v13240 = vadd.f32 %v12105, %v12733
      %v13241 = vadd.f32 %v12106, %v12738
      %v13242 = vadd.f32 %v12107, %v12741
      %v13243 = vadd.f32 %v12108, %v12746
      %v13244 = vadd.f32 %v12109, %v12749
      %v13245 = vadd.f32 %v12110, %v12754
      %v13246 = vadd.f32 %v12111, %v12757
      %v13247 = vadd.f32 %v12112, %v12762
      %v13248 = vadd.f32 %v12113, %v12765
      %v13249 = vadd.f32 %v12114, %v12770
      %v13250 = vadd.f32 %v12115, %v12773
      %v13251 = vadd.f32 %v12116, %v12778
      %v13252 = vadd.f32 %v12117, %v12781
      %v13253 = vadd.f32 %v12118, %v12786
      %v13254 = vadd.f32 %v12119, %v12789
      %v13255 = vadd.f32 %v12120, %v12794
      %v13256 = vadd.f32 %v12121, %v12797
      %v13257 = vadd.f32 %v12122, %v12802
      %v13258 = vadd.f32 %v12123, %v12805
      %v13259 = vadd.f32 %v12124, %v12810
      %v13260 = vadd.f32 %v12125, %v12813
      %v13261 = vadd.f32 %v12126, %v12818
      %v13262 = vadd.f32 %v12127, %v12821
      %v13263 = vadd.f32 %v12128, %v12826
      %v13264 = vadd.f32 %v12129, %v12829
      %v13265 = vadd.f32 %v12130, %v12834
      %v13266 = vadd.f32 %v12131, %v12837
      %v13267 = vadd.f32 %v12132, %v12842
      %v13268 = vadd.f32 %v12133, %v12845
      %v13269 = vadd.f32 %v12134, %v12850
      %v13270 = vadd.f32 %v12135, %v12853
      %v13271 = vadd.f32 %v12136, %v12858
      %v13272 = vadd.f32 %v12137, %v12861
      %v13273 = vadd.f32 %v12138, %v12866
      %v13274 = vadd.f32 %v12139, %v12869
      %v13275 = vadd.f32 %v12140, %v12874
      %v13276 = vadd.f32 %v12141, %v12877
      %v13277 = vadd.f32 %v12142, %v12882
      %v13278 = vadd.f32 %v12143, %v12885
      %v13279 = vadd.f32 %v12144, %v12890
      %v13280 = vadd.f32 %v12145, %v12893
      %v13281 = vadd.f32 %v12146, %v12898
      %v13282 = vadd.f32 %v12147, %v12901
      %v13283 = vadd.f32 %v12148, %v12906
      %v13284 = vadd.f32 %v12149, %v12909
      %v13285 = vadd.f32 %v12150, %v12914
      %v13286 = vadd.f32 %v12151, %v12917
      %v13287 = vadd.f32 %v12152, %v12922
      %v13288 = vadd.f32 %v12153, %v12925
      %v13289 = vadd.f32 %v12154, %v12930
      %v13290 = vadd.f32 %v12155, %v12933
      %v13291 = vadd.f32 %v12156, %v12938
      %v13292 = vadd.f32 %v12157, %v12941
      %v13293 = vadd.f32 %v12158, %v12946
      %v13294 = vadd.f32 %v12159, %v12949
      %v13295 = vadd.f32 %v12160, %v12954
      %v13296 = vadd.f32 %v12161, %v12957
      %v13297 = vadd.f32 %v12162, %v12962
      %v13298 = vadd.f32 %v12163, %v12965
      %v13299 = vadd.f32 %v12164, %v12970
      %v13300 = vadd.f32 %v12165, %v12973
      %v13301 = vadd.f32 %v12166, %v12978
      %v13302 = vadd.f32 %v12167, %v12981
      %v13303 = vadd.f32 %v12168, %v12986
      %v13304 = vadd.f32 %v12169, %v12989
      %v13305 = vadd.f32 %v12170, %v12994
      %v13306 = vadd.f32 %v12171, %v12997
      %v13307 = vadd.f32 %v12172, %v13002
      %v13308 = vadd.f32 %v12173, %v13005
      %v13309 = vadd.f32 %v12174, %v13010
      %v13310 = vadd.f32 %v12175, %v13013
      %v13311 = vadd.f32 %v12176, %v13018
      %v13312 = vadd.f32 %v12177, %v13021
      %v13313 = vadd.f32 %v12178, %v13026
      %v13314 = vadd.f32 %v12179, %v13029
      %v13315 = vadd.f32 %v12180, %v13034
      %v13316 = vadd.f32 %v12181, %v13037
      %v13317 = vadd.f32 %v12182, %v13042
      %v13318 = vadd.f32 %v12183, %v13045
      %v13319 = vadd.f32 %v12184, %v13050
      %v13320 = vadd.f32 %v12185, %v13053
      %v13321 = vadd.f32 %v12186, %v13058
      %v13322 = vadd.f32 %v12187, %v13061
      %v13323 = vadd.f32 %v12188, %v13066
      %v13324 = vadd.f32 %v12189, %v13069
      %v13325 = vadd.f32 %v12190, %v13074
      %v13326 = vadd.f32 %v12191, %v13077
      %v13327 = vadd.f32 %v12192, %v13082
      %v13328 = vadd.f32 %v12193, %v13085
      %v13329 = vadd.f32 %v12194, %v13090
      %v13330 = vadd.f32 %v12195, %v13093
      %v13331 = vadd.f32 %v12196, %v13098
      %v13332 = vadd.f32 %v12197, %v13101
      %v13333 = vadd.f32 %v12198, %v13106
      %v13334 = vadd.f32 %v12199, %v13109
      %v13335 = vadd.f32 %v12200, %v13114
      %v13336 = vadd.f32 %v12201, %v13117
      %v13337 = vadd.f32 %v12202, %v13122
      %v13338 = vadd.f32 %v12203, %v13125
      %v13339 = vadd.f32 %v12204, %v13130
      %v13340 = vadd.f32 %v12205, %v13133
      %v13341 = vadd.f32 %v12206, %v13138
      %v13342 = vadd.f32 %v12207, %v13141
      %v13343 = vadd.f32 %v12208, %v13146
      %v13344 = vadd.f32 %v12209, %v13149
      %v13345 = vadd.f32 %v12210, %v13154
      %v13346 = vadd.f32 %v12211, %v13157
      %v13347 = vadd.f32 %v12212, %v13162
      %v13348 = vadd.f32 %v12213, %v13165
      %v13349 = vadd.f32 %v12214, %v13170
      %v13350 = vadd.f32 %v12215, %v13173
      %v13351 = vadd.f32 %v12216, %v13178
      %v13352 = vadd.f32 %v12217, %v13181
      %v13353 = vadd.f32 %v12218, %v13186
      %v13354 = vadd.f32 %v12219, %v13189
      %v13355 = vadd.f32 %v12220, %v13194
      %v13356 = vadd.f32 %v12221, %v13197
      %v13357 = vadd.f32 %v12222, %v13202
      %v13358 = vadd.f32 %v12223, %v13205
      %v13359 = vadd.f32 %v12224, %v13210
      %v13360 = vld [vmem:[%s2] sm:$0x1]
      %v13361 = vlaneseq
      %v13362 = vshrl.u32 %v13361, 7
      %v13363 = vsub.s32 0, %v13362
      %v13364 = vrot.slane %v13360, %v13363
      %v13365 = vmul.f32 %v13215, %v13364
      %v13366 = vmul.f32 %v13216, %v13364
      %v13367 = vmul.f32 %v13217, %v13364
      %v13368 = vmul.f32 %v13218, %v13364
      %v13369 = vmul.f32 %v13219, %v13364
      %v13370 = vmul.f32 %v13220, %v13364
      %v13371 = vmul.f32 %v13221, %v13364
      %v13372 = vmul.f32 %v13222, %v13364
      %v13373 = vmul.f32 %v13223, %v13364
      %v13374 = vmul.f32 %v13224, %v13364
      %v13375 = vmul.f32 %v13225, %v13364
      %v13376 = vmul.f32 %v13226, %v13364
      %v13377 = vmul.f32 %v13227, %v13364
      %v13378 = vmul.f32 %v13228, %v13364
      %v13379 = vmul.f32 %v13229, %v13364
      %v13380 = vmul.f32 %v13230, %v13364
      %v13381 = vmul.f32 %v13231, %v13364
      %v13382 = vmul.f32 %v13232, %v13364
      %v13383 = vmul.f32 %v13233, %v13364
      %v13384 = vmul.f32 %v13234, %v13364
      %v13385 = vmul.f32 %v13235, %v13364
      %v13386 = vmul.f32 %v13236, %v13364
      %v13387 = vmul.f32 %v13237, %v13364
      %v13388 = vmul.f32 %v13238, %v13364
      %v13389 = vmul.f32 %v13239, %v13364
      %v13390 = vmul.f32 %v13240, %v13364
      %v13391 = vmul.f32 %v13241, %v13364
      %v13392 = vmul.f32 %v13242, %v13364
      %v13393 = vmul.f32 %v13243, %v13364
      %v13394 = vmul.f32 %v13244, %v13364
      %v13395 = vmul.f32 %v13245, %v13364
      %v13396 = vmul.f32 %v13246, %v13364
      %v13397 = vmul.f32 %v13247, %v13364
      %v13398 = vmul.f32 %v13248, %v13364
      %v13399 = vmul.f32 %v13249, %v13364
      %v13400 = vmul.f32 %v13250, %v13364
      %v13401 = vmul.f32 %v13251, %v13364
      %v13402 = vmul.f32 %v13252, %v13364
      %v13403 = vmul.f32 %v13253, %v13364
      %v13404 = vmul.f32 %v13254, %v13364
      %v13405 = vmul.f32 %v13255, %v13364
      %v13406 = vmul.f32 %v13256, %v13364
      %v13407 = vmul.f32 %v13257, %v13364
      %v13408 = vmul.f32 %v13258, %v13364
      %v13409 = vmul.f32 %v13259, %v13364
      %v13410 = vmul.f32 %v13260, %v13364
      %v13411 = vmul.f32 %v13261, %v13364
      %v13412 = vmul.f32 %v13262, %v13364
      %v13413 = vmul.f32 %v13263, %v13364
      %v13414 = vmul.f32 %v13264, %v13364
      %v13415 = vmul.f32 %v13265, %v13364
      %v13416 = vmul.f32 %v13266, %v13364
      %v13417 = vmul.f32 %v13267, %v13364
      %v13418 = vmul.f32 %v13268, %v13364
      %v13419 = vmul.f32 %v13269, %v13364
      %v13420 = vmul.f32 %v13270, %v13364
      %v13421 = vmul.f32 %v13271, %v13364
      %v13422 = vmul.f32 %v13272, %v13364
      %v13423 = vmul.f32 %v13273, %v13364
      %v13424 = vmul.f32 %v13274, %v13364
      %v13425 = vmul.f32 %v13275, %v13364
      %v13426 = vmul.f32 %v13276, %v13364
      %v13427 = vmul.f32 %v13277, %v13364
      %v13428 = vmul.f32 %v13278, %v13364
      %v13429 = vmul.f32 %v13279, %v13364
      %v13430 = vmul.f32 %v13280, %v13364
      %v13431 = vmul.f32 %v13281, %v13364
      %v13432 = vmul.f32 %v13282, %v13364
      %v13433 = vmul.f32 %v13283, %v13364
      %v13434 = vmul.f32 %v13284, %v13364
      %v13435 = vmul.f32 %v13285, %v13364
      %v13436 = vmul.f32 %v13286, %v13364
      %v13437 = vmul.f32 %v13287, %v13364
      %v13438 = vmul.f32 %v13288, %v13364
      %v13439 = vmul.f32 %v13289, %v13364
      %v13440 = vmul.f32 %v13290, %v13364
      %v13441 = vmul.f32 %v13291, %v13364
      %v13442 = vmul.f32 %v13292, %v13364
      %v13443 = vmul.f32 %v13293, %v13364
      %v13444 = vmul.f32 %v13294, %v13364
      %v13445 = vmul.f32 %v13295, %v13364
      %v13446 = vmul.f32 %v13296, %v13364
      %v13447 = vmul.f32 %v13297, %v13364
      %v13448 = vmul.f32 %v13298, %v13364
      %v13449 = vmul.f32 %v13299, %v13364
      %v13450 = vmul.f32 %v13300, %v13364
      %v13451 = vmul.f32 %v13301, %v13364
      %v13452 = vmul.f32 %v13302, %v13364
      %v13453 = vmul.f32 %v13303, %v13364
      %v13454 = vmul.f32 %v13304, %v13364
      %v13455 = vmul.f32 %v13305, %v13364
      %v13456 = vmul.f32 %v13306, %v13364
      %v13457 = vmul.f32 %v13307, %v13364
      %v13458 = vmul.f32 %v13308, %v13364
      %v13459 = vmul.f32 %v13309, %v13364
      %v13460 = vmul.f32 %v13310, %v13364
      %v13461 = vmul.f32 %v13311, %v13364
      %v13462 = vmul.f32 %v13312, %v13364
      %v13463 = vmul.f32 %v13313, %v13364
      %v13464 = vmul.f32 %v13314, %v13364
      %v13465 = vmul.f32 %v13315, %v13364
      %v13466 = vmul.f32 %v13316, %v13364
      %v13467 = vmul.f32 %v13317, %v13364
      %v13468 = vmul.f32 %v13318, %v13364
      %v13469 = vmul.f32 %v13319, %v13364
      %v13470 = vmul.f32 %v13320, %v13364
      %v13471 = vmul.f32 %v13321, %v13364
      %v13472 = vmul.f32 %v13322, %v13364
      %v13473 = vmul.f32 %v13323, %v13364
      %v13474 = vmul.f32 %v13324, %v13364
      %v13475 = vmul.f32 %v13325, %v13364
      %v13476 = vmul.f32 %v13326, %v13364
      %v13477 = vmul.f32 %v13327, %v13364
      %v13478 = vmul.f32 %v13328, %v13364
      %v13479 = vmul.f32 %v13329, %v13364
      %v13480 = vmul.f32 %v13330, %v13364
      %v13481 = vmul.f32 %v13331, %v13364
      %v13482 = vmul.f32 %v13332, %v13364
      %v13483 = vmul.f32 %v13333, %v13364
      %v13484 = vmul.f32 %v13334, %v13364
      %v13485 = vmul.f32 %v13335, %v13364
      %v13486 = vmul.f32 %v13336, %v13364
      %v13487 = vmul.f32 %v13337, %v13364
      %v13488 = vmul.f32 %v13338, %v13364
      %v13489 = vmul.f32 %v13339, %v13364
      %v13490 = vmul.f32 %v13340, %v13364
      %v13491 = vmul.f32 %v13341, %v13364
      %v13492 = vmul.f32 %v13342, %v13364
      %v13493 = vmul.f32 %v13343, %v13364
      %v13494 = vmul.f32 %v13344, %v13364
      %v13495 = vmul.f32 %v13345, %v13364
      %v13496 = vmul.f32 %v13346, %v13364
      %v13497 = vmul.f32 %v13347, %v13364
      %v13498 = vmul.f32 %v13348, %v13364
      %v13499 = vmul.f32 %v13349, %v13364
      %v13500 = vmul.f32 %v13350, %v13364
      %v13501 = vmul.f32 %v13351, %v13364
      %v13502 = vmul.f32 %v13352, %v13364
      %v13503 = vmul.f32 %v13353, %v13364
      %v13504 = vmul.f32 %v13354, %v13364
      %v13505 = vmul.f32 %v13355, %v13364
      %v13506 = vmul.f32 %v13356, %v13364
      %v13507 = vmul.f32 %v13357, %v13364
      %v13508 = vmul.f32 %v13358, %v13364
      %v13509 = vmul.f32 %v13359, %v13364
      %v13510 = vld [vmem:[%s2 + $0x1] sm:$0x1]
      %v13511 = vlaneseq
      %v13512 = vshrl.u32 %v13511, 7
      %v13513 = vsub.s32 0, %v13512
      %v13514 = vrot.slane %v13510, %v13513
      %v13515 = vadd.f32 %v13365, %v13514
      %v13516 = vadd.f32 %v13366, %v13514
      %v13517 = vadd.f32 %v13367, %v13514
      %v13518 = vadd.f32 %v13368, %v13514
      %v13519 = vadd.f32 %v13369, %v13514
      %v13520 = vadd.f32 %v13370, %v13514
      %v13521 = vadd.f32 %v13371, %v13514
      %v13522 = vadd.f32 %v13372, %v13514
      %v13523 = vadd.f32 %v13373, %v13514
      %v13524 = vadd.f32 %v13374, %v13514
      %v13525 = vadd.f32 %v13375, %v13514
      %v13526 = vadd.f32 %v13376, %v13514
      %v13527 = vadd.f32 %v13377, %v13514
      %v13528 = vadd.f32 %v13378, %v13514
      %v13529 = vadd.f32 %v13379, %v13514
      %v13530 = vadd.f32 %v13380, %v13514
      %v13531 = vadd.f32 %v13381, %v13514
      %v13532 = vadd.f32 %v13382, %v13514
      %v13533 = vadd.f32 %v13383, %v13514
      %v13534 = vadd.f32 %v13384, %v13514
      %v13535 = vadd.f32 %v13385, %v13514
      %v13536 = vadd.f32 %v13386, %v13514
      %v13537 = vadd.f32 %v13387, %v13514
      %v13538 = vadd.f32 %v13388, %v13514
      %v13539 = vadd.f32 %v13389, %v13514
      %v13540 = vadd.f32 %v13390, %v13514
      %v13541 = vadd.f32 %v13391, %v13514
      %v13542 = vadd.f32 %v13392, %v13514
      %v13543 = vadd.f32 %v13393, %v13514
      %v13544 = vadd.f32 %v13394, %v13514
      %v13545 = vadd.f32 %v13395, %v13514
      %v13546 = vadd.f32 %v13396, %v13514
      %v13547 = vadd.f32 %v13397, %v13514
      %v13548 = vadd.f32 %v13398, %v13514
      %v13549 = vadd.f32 %v13399, %v13514
      %v13550 = vadd.f32 %v13400, %v13514
      %v13551 = vadd.f32 %v13401, %v13514
      %v13552 = vadd.f32 %v13402, %v13514
      %v13553 = vadd.f32 %v13403, %v13514
      %v13554 = vadd.f32 %v13404, %v13514
      %v13555 = vadd.f32 %v13405, %v13514
      %v13556 = vadd.f32 %v13406, %v13514
      %v13557 = vadd.f32 %v13407, %v13514
      %v13558 = vadd.f32 %v13408, %v13514
      %v13559 = vadd.f32 %v13409, %v13514
      %v13560 = vadd.f32 %v13410, %v13514
      %v13561 = vadd.f32 %v13411, %v13514
      %v13562 = vadd.f32 %v13412, %v13514
      %v13563 = vadd.f32 %v13413, %v13514
      %v13564 = vadd.f32 %v13414, %v13514
      %v13565 = vadd.f32 %v13415, %v13514
      %v13566 = vadd.f32 %v13416, %v13514
      %v13567 = vadd.f32 %v13417, %v13514
      %v13568 = vadd.f32 %v13418, %v13514
      %v13569 = vadd.f32 %v13419, %v13514
      %v13570 = vadd.f32 %v13420, %v13514
      %v13571 = vadd.f32 %v13421, %v13514
      %v13572 = vadd.f32 %v13422, %v13514
      %v13573 = vadd.f32 %v13423, %v13514
      %v13574 = vadd.f32 %v13424, %v13514
      %v13575 = vadd.f32 %v13425, %v13514
      %v13576 = vadd.f32 %v13426, %v13514
      %v13577 = vadd.f32 %v13427, %v13514
      %v13578 = vadd.f32 %v13428, %v13514
      %v13579 = vadd.f32 %v13429, %v13514
      %v13580 = vadd.f32 %v13430, %v13514
      %v13581 = vadd.f32 %v13431, %v13514
      %v13582 = vadd.f32 %v13432, %v13514
      %v13583 = vadd.f32 %v13433, %v13514
      %v13584 = vadd.f32 %v13434, %v13514
      %v13585 = vadd.f32 %v13435, %v13514
      %v13586 = vadd.f32 %v13436, %v13514
      %v13587 = vadd.f32 %v13437, %v13514
      %v13588 = vadd.f32 %v13438, %v13514
      %v13589 = vadd.f32 %v13439, %v13514
      %v13590 = vadd.f32 %v13440, %v13514
      %v13591 = vadd.f32 %v13441, %v13514
      %v13592 = vadd.f32 %v13442, %v13514
      %v13593 = vadd.f32 %v13443, %v13514
      %v13594 = vadd.f32 %v13444, %v13514
      %v13595 = vadd.f32 %v13445, %v13514
      %v13596 = vadd.f32 %v13446, %v13514
      %v13597 = vadd.f32 %v13447, %v13514
      %v13598 = vadd.f32 %v13448, %v13514
      %v13599 = vadd.f32 %v13449, %v13514
      %v13600 = vadd.f32 %v13450, %v13514
      %v13601 = vadd.f32 %v13451, %v13514
      %v13602 = vadd.f32 %v13452, %v13514
      %v13603 = vadd.f32 %v13453, %v13514
      %v13604 = vadd.f32 %v13454, %v13514
      %v13605 = vadd.f32 %v13455, %v13514
      %v13606 = vadd.f32 %v13456, %v13514
      %v13607 = vadd.f32 %v13457, %v13514
      %v13608 = vadd.f32 %v13458, %v13514
      %v13609 = vadd.f32 %v13459, %v13514
      %v13610 = vadd.f32 %v13460, %v13514
      %v13611 = vadd.f32 %v13461, %v13514
      %v13612 = vadd.f32 %v13462, %v13514
      %v13613 = vadd.f32 %v13463, %v13514
      %v13614 = vadd.f32 %v13464, %v13514
      %v13615 = vadd.f32 %v13465, %v13514
      %v13616 = vadd.f32 %v13466, %v13514
      %v13617 = vadd.f32 %v13467, %v13514
      %v13618 = vadd.f32 %v13468, %v13514
      %v13619 = vadd.f32 %v13469, %v13514
      %v13620 = vadd.f32 %v13470, %v13514
      %v13621 = vadd.f32 %v13471, %v13514
      %v13622 = vadd.f32 %v13472, %v13514
      %v13623 = vadd.f32 %v13473, %v13514
      %v13624 = vadd.f32 %v13474, %v13514
      %v13625 = vadd.f32 %v13475, %v13514
      %v13626 = vadd.f32 %v13476, %v13514
      %v13627 = vadd.f32 %v13477, %v13514
      %v13628 = vadd.f32 %v13478, %v13514
      %v13629 = vadd.f32 %v13479, %v13514
      %v13630 = vadd.f32 %v13480, %v13514
      %v13631 = vadd.f32 %v13481, %v13514
      %v13632 = vadd.f32 %v13482, %v13514
      %v13633 = vadd.f32 %v13483, %v13514
      %v13634 = vadd.f32 %v13484, %v13514
      %v13635 = vadd.f32 %v13485, %v13514
      %v13636 = vadd.f32 %v13486, %v13514
      %v13637 = vadd.f32 %v13487, %v13514
      %v13638 = vadd.f32 %v13488, %v13514
      %v13639 = vadd.f32 %v13489, %v13514
      %v13640 = vadd.f32 %v13490, %v13514
      %v13641 = vadd.f32 %v13491, %v13514
      %v13642 = vadd.f32 %v13492, %v13514
      %v13643 = vadd.f32 %v13493, %v13514
      %v13644 = vadd.f32 %v13494, %v13514
      %v13645 = vadd.f32 %v13495, %v13514
      %v13646 = vadd.f32 %v13496, %v13514
      %v13647 = vadd.f32 %v13497, %v13514
      %v13648 = vadd.f32 %v13498, %v13514
      %v13649 = vadd.f32 %v13499, %v13514
      %v13650 = vadd.f32 %v13500, %v13514
      %v13651 = vadd.f32 %v13501, %v13514
      %v13652 = vadd.f32 %v13502, %v13514
      %v13653 = vadd.f32 %v13503, %v13514
      %v13654 = vadd.f32 %v13504, %v13514
      %v13655 = vadd.f32 %v13505, %v13514
      %v13656 = vadd.f32 %v13506, %v13514
      %v13657 = vadd.f32 %v13507, %v13514
      %v13658 = vadd.f32 %v13508, %v13514
      %v13659 = vadd.f32 %v13509, %v13514
      %v13660 = vmax.f32 %v13515, 0.0
      %v13661 = vmax.f32 %v13516, 0.0
      %v13662 = vmax.f32 %v13517, 0.0
      %v13663 = vmax.f32 %v13518, 0.0
      %v13664 = vmax.f32 %v13519, 0.0
      %v13665 = vmax.f32 %v13520, 0.0
      %v13666 = vmax.f32 %v13521, 0.0
      %v13667 = vmax.f32 %v13522, 0.0
      %v13668 = vmax.f32 %v13523, 0.0
      %v13669 = vmax.f32 %v13524, 0.0
      %v13670 = vmax.f32 %v13525, 0.0
      %v13671 = vmax.f32 %v13526, 0.0
      %v13672 = vmax.f32 %v13527, 0.0
      %v13673 = vmax.f32 %v13528, 0.0
      %v13674 = vmax.f32 %v13529, 0.0
      %v13675 = vmax.f32 %v13530, 0.0
      %v13676 = vmax.f32 %v13531, 0.0
      %v13677 = vmax.f32 %v13532, 0.0
      %v13678 = vmax.f32 %v13533, 0.0
      %v13679 = vmax.f32 %v13534, 0.0
      %v13680 = vmax.f32 %v13535, 0.0
      %v13681 = vmax.f32 %v13536, 0.0
      %v13682 = vmax.f32 %v13537, 0.0
      %v13683 = vmax.f32 %v13538, 0.0
      %v13684 = vmax.f32 %v13539, 0.0
      %v13685 = vmax.f32 %v13540, 0.0
      %v13686 = vmax.f32 %v13541, 0.0
      %v13687 = vmax.f32 %v13542, 0.0
      %v13688 = vmax.f32 %v13543, 0.0
      %v13689 = vmax.f32 %v13544, 0.0
      %v13690 = vmax.f32 %v13545, 0.0
      %v13691 = vmax.f32 %v13546, 0.0
      %v13692 = vmax.f32 %v13547, 0.0
      %v13693 = vmax.f32 %v13548, 0.0
      %v13694 = vmax.f32 %v13549, 0.0
      %v13695 = vmax.f32 %v13550, 0.0
      %v13696 = vmax.f32 %v13551, 0.0
      %v13697 = vmax.f32 %v13552, 0.0
      %v13698 = vmax.f32 %v13553, 0.0
      %v13699 = vmax.f32 %v13554, 0.0
      %v13700 = vmax.f32 %v13555, 0.0
      %v13701 = vmax.f32 %v13556, 0.0
      %v13702 = vmax.f32 %v13557, 0.0
      %v13703 = vmax.f32 %v13558, 0.0
      %v13704 = vmax.f32 %v13559, 0.0
      %v13705 = vmax.f32 %v13560, 0.0
      %v13706 = vmax.f32 %v13561, 0.0
      %v13707 = vmax.f32 %v13562, 0.0
      %v13708 = vmax.f32 %v13563, 0.0
      %v13709 = vmax.f32 %v13564, 0.0
      %v13710 = vmax.f32 %v13565, 0.0
      %v13711 = vmax.f32 %v13566, 0.0
      %v13712 = vmax.f32 %v13567, 0.0
      %v13713 = vmax.f32 %v13568, 0.0
      %v13714 = vmax.f32 %v13569, 0.0
      %v13715 = vmax.f32 %v13570, 0.0
      %v13716 = vmax.f32 %v13571, 0.0
      %v13717 = vmax.f32 %v13572, 0.0
      %v13718 = vmax.f32 %v13573, 0.0
      %v13719 = vmax.f32 %v13574, 0.0
      %v13720 = vmax.f32 %v13575, 0.0
      %v13721 = vmax.f32 %v13576, 0.0
      %v13722 = vmax.f32 %v13577, 0.0
      %v13723 = vmax.f32 %v13578, 0.0
      %v13724 = vmax.f32 %v13579, 0.0
      %v13725 = vmax.f32 %v13580, 0.0
      %v13726 = vmax.f32 %v13581, 0.0
      %v13727 = vmax.f32 %v13582, 0.0
      %v13728 = vmax.f32 %v13583, 0.0
      %v13729 = vmax.f32 %v13584, 0.0
      %v13730 = vmax.f32 %v13585, 0.0
      %v13731 = vmax.f32 %v13586, 0.0
      %v13732 = vmax.f32 %v13587, 0.0
      %v13733 = vmax.f32 %v13588, 0.0
      %v13734 = vmax.f32 %v13589, 0.0
      %v13735 = vmax.f32 %v13590, 0.0
      %v13736 = vmax.f32 %v13591, 0.0
      %v13737 = vmax.f32 %v13592, 0.0
      %v13738 = vmax.f32 %v13593, 0.0
      %v13739 = vmax.f32 %v13594, 0.0
      %v13740 = vmax.f32 %v13595, 0.0
      %v13741 = vmax.f32 %v13596, 0.0
      %v13742 = vmax.f32 %v13597, 0.0
      %v13743 = vmax.f32 %v13598, 0.0
      %v13744 = vmax.f32 %v13599, 0.0
      %v13745 = vmax.f32 %v13600, 0.0
      %v13746 = vmax.f32 %v13601, 0.0
      %v13747 = vmax.f32 %v13602, 0.0
      %v13748 = vmax.f32 %v13603, 0.0
      %v13749 = vmax.f32 %v13604, 0.0
      %v13750 = vmax.f32 %v13605, 0.0
      %v13751 = vmax.f32 %v13606, 0.0
      %v13752 = vmax.f32 %v13607, 0.0
      %v13753 = vmax.f32 %v13608, 0.0
      %v13754 = vmax.f32 %v13609, 0.0
      %v13755 = vmax.f32 %v13610, 0.0
      %v13756 = vmax.f32 %v13611, 0.0
      %v13757 = vmax.f32 %v13612, 0.0
      %v13758 = vmax.f32 %v13613, 0.0
      %v13759 = vmax.f32 %v13614, 0.0
      %v13760 = vmax.f32 %v13615, 0.0
      %v13761 = vmax.f32 %v13616, 0.0
      %v13762 = vmax.f32 %v13617, 0.0
      %v13763 = vmax.f32 %v13618, 0.0
      %v13764 = vmax.f32 %v13619, 0.0
      %v13765 = vmax.f32 %v13620, 0.0
      %v13766 = vmax.f32 %v13621, 0.0
      %v13767 = vmax.f32 %v13622, 0.0
      %v13768 = vmax.f32 %v13623, 0.0
      %v13769 = vmax.f32 %v13624, 0.0
      %v13770 = vmax.f32 %v13625, 0.0
      %v13771 = vmax.f32 %v13626, 0.0
      %v13772 = vmax.f32 %v13627, 0.0
      %v13773 = vmax.f32 %v13628, 0.0
      %v13774 = vmax.f32 %v13629, 0.0
      %v13775 = vmax.f32 %v13630, 0.0
      %v13776 = vmax.f32 %v13631, 0.0
      %v13777 = vmax.f32 %v13632, 0.0
      %v13778 = vmax.f32 %v13633, 0.0
      %v13779 = vmax.f32 %v13634, 0.0
      %v13780 = vmax.f32 %v13635, 0.0
      %v13781 = vmax.f32 %v13636, 0.0
      %v13782 = vmax.f32 %v13637, 0.0
      %v13783 = vmax.f32 %v13638, 0.0
      %v13784 = vmax.f32 %v13639, 0.0
      %v13785 = vmax.f32 %v13640, 0.0
      %v13786 = vmax.f32 %v13641, 0.0
      %v13787 = vmax.f32 %v13642, 0.0
      %v13788 = vmax.f32 %v13643, 0.0
      %v13789 = vmax.f32 %v13644, 0.0
      %v13790 = vmax.f32 %v13645, 0.0
      %v13791 = vmax.f32 %v13646, 0.0
      %v13792 = vmax.f32 %v13647, 0.0
      %v13793 = vmax.f32 %v13648, 0.0
      %v13794 = vmax.f32 %v13649, 0.0
      %v13795 = vmax.f32 %v13650, 0.0
      %v13796 = vmax.f32 %v13651, 0.0
      %v13797 = vmax.f32 %v13652, 0.0
      %v13798 = vmax.f32 %v13653, 0.0
      %v13799 = vmax.f32 %v13654, 0.0
      %v13800 = vmax.f32 %v13655, 0.0
      %v13801 = vmax.f32 %v13656, 0.0
      %v13802 = vmax.f32 %v13657, 0.0
      %v13803 = vmax.f32 %v13658, 0.0
      %v13804 = vmax.f32 %v13659, 0.0
      %v13805 = vpack.c.bf16 %v13661, %v13660
      %v13806 = vpack.c.bf16 %v13663, %v13662
      %v13807 = vpack.c.bf16 %v13665, %v13664
      %v13808 = vpack.c.bf16 %v13667, %v13666
      %v13809 = vpack.c.bf16 %v13669, %v13668
      %v13810 = vpack.c.bf16 %v13671, %v13670
      %v13811 = vpack.c.bf16 %v13673, %v13672
      %v13812 = vpack.c.bf16 %v13675, %v13674
      %v13813 = vpack.c.bf16 %v13677, %v13676
      %v13814 = vpack.c.bf16 %v13679, %v13678
      %v13815 = vpack.c.bf16 %v13681, %v13680
      %v13816 = vpack.c.bf16 %v13683, %v13682
      %v13817 = vpack.c.bf16 %v13685, %v13684
      %v13818 = vpack.c.bf16 %v13687, %v13686
      %v13819 = vpack.c.bf16 %v13689, %v13688
      %v13820 = vpack.c.bf16 %v13691, %v13690
      %v13821 = vpack.c.bf16 %v13693, %v13692
      %v13822 = vpack.c.bf16 %v13695, %v13694
      %v13823 = vpack.c.bf16 %v13697, %v13696
      %v13824 = vpack.c.bf16 %v13699, %v13698
      %v13825 = vpack.c.bf16 %v13701, %v13700
      %v13826 = vpack.c.bf16 %v13703, %v13702
      %v13827 = vpack.c.bf16 %v13705, %v13704
      %v13828 = vpack.c.bf16 %v13707, %v13706
      %v13829 = vpack.c.bf16 %v13709, %v13708
      %v13830 = vpack.c.bf16 %v13711, %v13710
      %v13831 = vpack.c.bf16 %v13713, %v13712
      %v13832 = vpack.c.bf16 %v13715, %v13714
      %v13833 = vpack.c.bf16 %v13717, %v13716
      %v13834 = vpack.c.bf16 %v13719, %v13718
      %v13835 = vpack.c.bf16 %v13721, %v13720
      %v13836 = vpack.c.bf16 %v13723, %v13722
      %v13837 = vpack.c.bf16 %v13725, %v13724
      %v13838 = vpack.c.bf16 %v13727, %v13726
      %v13839 = vpack.c.bf16 %v13729, %v13728
      %v13840 = vpack.c.bf16 %v13731, %v13730
      %v13841 = vpack.c.bf16 %v13733, %v13732
      %v13842 = vpack.c.bf16 %v13735, %v13734
      %v13843 = vpack.c.bf16 %v13737, %v13736
      %v13844 = vpack.c.bf16 %v13739, %v13738
      %v13845 = vpack.c.bf16 %v13741, %v13740
      %v13846 = vpack.c.bf16 %v13743, %v13742
      %v13847 = vpack.c.bf16 %v13745, %v13744
      %v13848 = vpack.c.bf16 %v13747, %v13746
      %v13849 = vpack.c.bf16 %v13749, %v13748
      %v13850 = vpack.c.bf16 %v13751, %v13750
      %v13851 = vpack.c.bf16 %v13753, %v13752
      %v13852 = vpack.c.bf16 %v13755, %v13754
      %v13853 = vpack.c.bf16 %v13757, %v13756
      %v13854 = vpack.c.bf16 %v13759, %v13758
      %v13855 = vpack.c.bf16 %v13761, %v13760
      %v13856 = vpack.c.bf16 %v13763, %v13762
      %v13857 = vpack.c.bf16 %v13765, %v13764
      %v13858 = vpack.c.bf16 %v13767, %v13766
      %v13859 = vpack.c.bf16 %v13769, %v13768
      %v13860 = vpack.c.bf16 %v13771, %v13770
      %v13861 = vpack.c.bf16 %v13773, %v13772
      %v13862 = vpack.c.bf16 %v13775, %v13774
      %v13863 = vpack.c.bf16 %v13777, %v13776
      %v13864 = vpack.c.bf16 %v13779, %v13778
      %v13865 = vpack.c.bf16 %v13781, %v13780
      %v13866 = vpack.c.bf16 %v13783, %v13782
      %v13867 = vpack.c.bf16 %v13785, %v13784
      %v13868 = vpack.c.bf16 %v13787, %v13786
      %v13869 = vpack.c.bf16 %v13789, %v13788
      %v13870 = vpack.c.bf16 %v13791, %v13790
      %v13871 = vpack.c.bf16 %v13793, %v13792
      %v13872 = vpack.c.bf16 %v13795, %v13794
      %v13873 = vpack.c.bf16 %v13797, %v13796
      %v13874 = vpack.c.bf16 %v13799, %v13798
      %v13875 = vpack.c.bf16 %v13801, %v13800
      %v13876 = vpack.c.bf16 %v13803, %v13802
      %v13877 = vpack.c.bf16 %v13804, %v13804
      %v13951 = vunpack.c.l.b16 %v13805
      %v13952 = vunpack.c.h.b16 %v13805
      %v13953 = vunpack.c.l.b16 %v13806
      %v13954 = vunpack.c.h.b16 %v13806
      %v13955 = vunpack.c.l.b16 %v13807
      %v13956 = vunpack.c.h.b16 %v13807
      %v13957 = vunpack.c.l.b16 %v13808
      %v13958 = vunpack.c.h.b16 %v13808
      %v13959 = vunpack.c.l.b16 %v13809
      %v13960 = vunpack.c.h.b16 %v13809
      %v13961 = vunpack.c.l.b16 %v13810
      %v13962 = vunpack.c.h.b16 %v13810
      %v13963 = vunpack.c.l.b16 %v13811
      %v13964 = vunpack.c.h.b16 %v13811
      %v13965 = vunpack.c.l.b16 %v13812
      %v13966 = vunpack.c.h.b16 %v13812
      %v13967 = vunpack.c.l.b16 %v13813
      %v13968 = vunpack.c.h.b16 %v13813
      %v13969 = vunpack.c.l.b16 %v13814
      %v13970 = vunpack.c.h.b16 %v13814
      %v13971 = vunpack.c.l.b16 %v13815
      %v13972 = vunpack.c.h.b16 %v13815
      %v13973 = vunpack.c.l.b16 %v13816
      %v13974 = vunpack.c.h.b16 %v13816
      %v13975 = vunpack.c.l.b16 %v13817
      %v13976 = vunpack.c.h.b16 %v13817
      %v13977 = vunpack.c.l.b16 %v13818
      %v13978 = vunpack.c.h.b16 %v13818
      %v13979 = vunpack.c.l.b16 %v13819
      %v13980 = vunpack.c.h.b16 %v13819
      %v13981 = vunpack.c.l.b16 %v13820
      %v13982 = vunpack.c.h.b16 %v13820
      %v13983 = vunpack.c.l.b16 %v13821
      %v13984 = vunpack.c.h.b16 %v13821
      %v13985 = vunpack.c.l.b16 %v13822
      %v13986 = vunpack.c.h.b16 %v13822
      %v13987 = vunpack.c.l.b16 %v13823
      %v13988 = vunpack.c.h.b16 %v13823
      %v13989 = vunpack.c.l.b16 %v13824
      %v13990 = vunpack.c.h.b16 %v13824
      %v13991 = vunpack.c.l.b16 %v13825
      %v13992 = vunpack.c.h.b16 %v13825
      %v13993 = vunpack.c.l.b16 %v13826
      %v13994 = vunpack.c.h.b16 %v13826
      %v13995 = vunpack.c.l.b16 %v13827
      %v13996 = vunpack.c.h.b16 %v13827
      %v13997 = vunpack.c.l.b16 %v13828
      %v13998 = vunpack.c.h.b16 %v13828
      %v13999 = vunpack.c.l.b16 %v13829
      %v14000 = vunpack.c.h.b16 %v13829
      %v14001 = vunpack.c.l.b16 %v13830
      %v14002 = vunpack.c.h.b16 %v13830
      %v14003 = vunpack.c.l.b16 %v13831
      %v14004 = vunpack.c.h.b16 %v13831
      %v14005 = vunpack.c.l.b16 %v13832
      %v14006 = vunpack.c.h.b16 %v13832
      %v14007 = vunpack.c.l.b16 %v13833
      %v14008 = vunpack.c.h.b16 %v13833
      %v14009 = vunpack.c.l.b16 %v13834
      %v14010 = vunpack.c.h.b16 %v13834
      %v14011 = vunpack.c.l.b16 %v13835
      %v14012 = vunpack.c.h.b16 %v13835
      %v14013 = vunpack.c.l.b16 %v13836
      %v14014 = vunpack.c.h.b16 %v13836
      %v14015 = vunpack.c.l.b16 %v13837
      %v14016 = vunpack.c.h.b16 %v13837
      %v14017 = vunpack.c.l.b16 %v13838
      %v14018 = vunpack.c.h.b16 %v13838
      %v14019 = vunpack.c.l.b16 %v13839
      %v14020 = vunpack.c.h.b16 %v13839
      %v14021 = vunpack.c.l.b16 %v13840
      %v14022 = vunpack.c.h.b16 %v13840
      %v14023 = vunpack.c.l.b16 %v13841
      %v14024 = vunpack.c.h.b16 %v13841
      %v14025 = vunpack.c.l.b16 %v13842
      %v14026 = vunpack.c.h.b16 %v13842
      %v14027 = vunpack.c.l.b16 %v13843
      %v14028 = vunpack.c.h.b16 %v13843
      %v14029 = vunpack.c.l.b16 %v13844
      %v14030 = vunpack.c.h.b16 %v13844
      %v14031 = vunpack.c.l.b16 %v13845
      %v14032 = vunpack.c.h.b16 %v13845
      %v14033 = vunpack.c.l.b16 %v13846
      %v14034 = vunpack.c.h.b16 %v13846
      %v14035 = vunpack.c.l.b16 %v13847
      %v14036 = vunpack.c.h.b16 %v13847
      %v14037 = vunpack.c.l.b16 %v13848
      %v14038 = vunpack.c.h.b16 %v13848
      %v14039 = vunpack.c.l.b16 %v13849
      %v14040 = vunpack.c.h.b16 %v13849
      %v14041 = vunpack.c.l.b16 %v13850
      %v14042 = vunpack.c.h.b16 %v13850
      %v14043 = vunpack.c.l.b16 %v13851
      %v14044 = vunpack.c.h.b16 %v13851
      %v14045 = vunpack.c.l.b16 %v13852
      %v14046 = vunpack.c.h.b16 %v13852
      %v14047 = vunpack.c.l.b16 %v13853
      %v14048 = vunpack.c.h.b16 %v13853
      %v14049 = vunpack.c.l.b16 %v13854
      %v14050 = vunpack.c.h.b16 %v13854
      %v14051 = vunpack.c.l.b16 %v13855
      %v14052 = vunpack.c.h.b16 %v13855
      %v14053 = vunpack.c.l.b16 %v13856
      %v14054 = vunpack.c.h.b16 %v13856
      %v14055 = vunpack.c.l.b16 %v13857
      %v14056 = vunpack.c.h.b16 %v13857
      %v14057 = vunpack.c.l.b16 %v13858
      %v14058 = vunpack.c.h.b16 %v13858
      %v14059 = vunpack.c.l.b16 %v13859
      %v14060 = vunpack.c.h.b16 %v13859
      %v14061 = vunpack.c.l.b16 %v13860
      %v14062 = vunpack.c.h.b16 %v13860
      %v14063 = vunpack.c.l.b16 %v13861
      %v14064 = vunpack.c.h.b16 %v13861
      %v14065 = vunpack.c.l.b16 %v13862
      %v14066 = vunpack.c.h.b16 %v13862
      %v14067 = vunpack.c.l.b16 %v13863
      %v14068 = vunpack.c.h.b16 %v13863
      %v14069 = vunpack.c.l.b16 %v13864
      %v14070 = vunpack.c.h.b16 %v13864
      %v14071 = vunpack.c.l.b16 %v13865
      %v14072 = vunpack.c.h.b16 %v13865
      %v14073 = vunpack.c.l.b16 %v13866
      %v14074 = vunpack.c.h.b16 %v13866
      %v14075 = vunpack.c.l.b16 %v13867
      %v14076 = vunpack.c.h.b16 %v13867
      %v14077 = vunpack.c.l.b16 %v13868
      %v14078 = vunpack.c.h.b16 %v13868
      %v14079 = vunpack.c.l.b16 %v13869
      %v14080 = vunpack.c.h.b16 %v13869
      %v14081 = vunpack.c.l.b16 %v13870
      %v14082 = vunpack.c.h.b16 %v13870
      %v14083 = vunpack.c.l.b16 %v13871
      %v14084 = vunpack.c.h.b16 %v13871
      %v14085 = vunpack.c.l.b16 %v13872
      %v14086 = vunpack.c.h.b16 %v13872
      %v14087 = vunpack.c.l.b16 %v13873
      %v14088 = vunpack.c.h.b16 %v13873
      %v14089 = vunpack.c.l.b16 %v13874
      %v14090 = vunpack.c.h.b16 %v13874
      %v14091 = vunpack.c.l.b16 %v13875
      %v14092 = vunpack.c.h.b16 %v13875
      %v14093 = vunpack.c.l.b16 %v13876
      %v14094 = vunpack.c.h.b16 %v13876
      %v14095 = vunpack.c.l.b16 %v13877
      %v14096 = vpack.c.b16 %v13951, %v13951
      %v14097 = vpack.c.b16 %v13952, %v13952
      %v14098 = vpack.c.b16 %v13953, %v13953
      %v14099 = vpack.c.b16 %v13954, %v13954
      %v14100 = vpack.c.b16 %v13955, %v13955
      %v14101 = vpack.c.b16 %v13956, %v13956
      %v14102 = vpack.c.b16 %v13957, %v13957
      %v14103 = vpack.c.b16 %v13958, %v13958
      %v14104 = vpack.c.b16 %v13959, %v13959
      %v14105 = vpack.c.b16 %v13960, %v13960
      %v14106 = vpack.c.b16 %v13961, %v13961
      %v14107 = vpack.c.b16 %v13962, %v13962
      %v14108 = vpack.c.b16 %v13963, %v13963
      %v14109 = vpack.c.b16 %v13964, %v13964
      %v14110 = vpack.c.b16 %v13965, %v13965
      %v14111 = vpack.c.b16 %v13966, %v13966
      %v14112 = vpack.c.b16 %v13967, %v13967
      %v14113 = vpack.c.b16 %v13968, %v13968
      %v14114 = vpack.c.b16 %v13969, %v13969
      %v14115 = vpack.c.b16 %v13970, %v13970
      %v14116 = vpack.c.b16 %v13971, %v13971
      %v14117 = vpack.c.b16 %v13972, %v13972
      %v14118 = vpack.c.b16 %v13973, %v13973
      %v14119 = vpack.c.b16 %v13974, %v13974
      %v14120 = vpack.c.b16 %v13975, %v13975
      %v14121 = vpack.c.b16 %v13976, %v13976
      %v14122 = vpack.c.b16 %v13977, %v13977
      %v14123 = vpack.c.b16 %v13978, %v13978
      %v14124 = vpack.c.b16 %v13979, %v13979
      %v14125 = vpack.c.b16 %v13980, %v13980
      %v14126 = vpack.c.b16 %v13981, %v13981
      %v14127 = vpack.c.b16 %v13982, %v13982
      %v14128 = vpack.c.b16 %v13983, %v13983
      %v14129 = vpack.c.b16 %v13984, %v13984
      %v14130 = vpack.c.b16 %v13985, %v13985
      %v14131 = vpack.c.b16 %v13986, %v13986
      %v14132 = vpack.c.b16 %v13987, %v13987
      %v14133 = vpack.c.b16 %v13988, %v13988
      %v14134 = vpack.c.b16 %v13989, %v13989
      %v14135 = vpack.c.b16 %v13990, %v13990
      %v14136 = vpack.c.b16 %v13991, %v13991
      %v14137 = vpack.c.b16 %v13992, %v13992
      %v14138 = vpack.c.b16 %v13993, %v13993
      %v14139 = vpack.c.b16 %v13994, %v13994
      %v14140 = vpack.c.b16 %v13995, %v13995
      %v14141 = vpack.c.b16 %v13996, %v13996
      %v14142 = vpack.c.b16 %v13997, %v13997
      %v14143 = vpack.c.b16 %v13998, %v13998
      %v14144 = vpack.c.b16 %v13999, %v13999
      %v14145 = vpack.c.b16 %v14000, %v14000
      %v14146 = vpack.c.b16 %v14001, %v14001
      %v14147 = vpack.c.b16 %v14002, %v14002
      %v14148 = vpack.c.b16 %v14003, %v14003
      %v14149 = vpack.c.b16 %v14004, %v14004
      %v14150 = vpack.c.b16 %v14005, %v14005
      %v14151 = vpack.c.b16 %v14006, %v14006
      %v14152 = vpack.c.b16 %v14007, %v14007
      %v14153 = vpack.c.b16 %v14008, %v14008
      %v14154 = vpack.c.b16 %v14009, %v14009
      %v14155 = vpack.c.b16 %v14010, %v14010
      %v14156 = vpack.c.b16 %v14011, %v14011
      %v14157 = vpack.c.b16 %v14012, %v14012
      %v14158 = vpack.c.b16 %v14013, %v14013
      %v14159 = vpack.c.b16 %v14014, %v14014
      %v14160 = vpack.c.b16 %v14015, %v14015
      %v14161 = vpack.c.b16 %v14016, %v14016
      %v14162 = vpack.c.b16 %v14017, %v14017
      %v14163 = vpack.c.b16 %v14018, %v14018
      %v14164 = vpack.c.b16 %v14019, %v14019
      %v14165 = vpack.c.b16 %v14020, %v14020
      %v14166 = vpack.c.b16 %v14021, %v14021
      %v14167 = vpack.c.b16 %v14022, %v14022
      %v14168 = vpack.c.b16 %v14023, %v14023
      %v14169 = vpack.c.b16 %v14024, %v14024
      %v14170 = vpack.c.b16 %v14025, %v14025
      %v14171 = vpack.c.b16 %v14026, %v14026
      %v14172 = vpack.c.b16 %v14027, %v14027
      %v14173 = vpack.c.b16 %v14028, %v14028
      %v14174 = vpack.c.b16 %v14029, %v14029
      %v14175 = vpack.c.b16 %v14030, %v14030
      %v14176 = vpack.c.b16 %v14031, %v14031
      %v14177 = vpack.c.b16 %v14032, %v14032
      %v14178 = vpack.c.b16 %v14033, %v14033
      %v14179 = vpack.c.b16 %v14034, %v14034
      %v14180 = vpack.c.b16 %v14035, %v14035
      %v14181 = vpack.c.b16 %v14036, %v14036
      %v14182 = vpack.c.b16 %v14037, %v14037
      %v14183 = vpack.c.b16 %v14038, %v14038
      %v14184 = vpack.c.b16 %v14039, %v14039
      %v14185 = vpack.c.b16 %v14040, %v14040
      %v14186 = vpack.c.b16 %v14041, %v14041
      %v14187 = vpack.c.b16 %v14042, %v14042
      %v14188 = vpack.c.b16 %v14043, %v14043
      %v14189 = vpack.c.b16 %v14044, %v14044
      %v14190 = vpack.c.b16 %v14045, %v14045
      %v14191 = vpack.c.b16 %v14046, %v14046
      %v14192 = vpack.c.b16 %v14047, %v14047
      %v14193 = vpack.c.b16 %v14048, %v14048
      %v14194 = vpack.c.b16 %v14049, %v14049
      %v14195 = vpack.c.b16 %v14050, %v14050
      %v14196 = vpack.c.b16 %v14051, %v14051
      %v14197 = vpack.c.b16 %v14052, %v14052
      %v14198 = vpack.c.b16 %v14053, %v14053
      %v14199 = vpack.c.b16 %v14054, %v14054
      %v14200 = vpack.c.b16 %v14055, %v14055
      %v14201 = vpack.c.b16 %v14056, %v14056
      %v14202 = vpack.c.b16 %v14057, %v14057
      %v14203 = vpack.c.b16 %v14058, %v14058
      %v14204 = vpack.c.b16 %v14059, %v14059
      %v14205 = vpack.c.b16 %v14060, %v14060
      %v14206 = vpack.c.b16 %v14061, %v14061
      %v14207 = vpack.c.b16 %v14062, %v14062
      %v14208 = vpack.c.b16 %v14063, %v14063
      %v14209 = vpack.c.b16 %v14064, %v14064
      %v14210 = vpack.c.b16 %v14065, %v14065
      %v14211 = vpack.c.b16 %v14066, %v14066
      %v14212 = vpack.c.b16 %v14067, %v14067
      %v14213 = vpack.c.b16 %v14068, %v14068
      %v14214 = vpack.c.b16 %v14069, %v14069
      %v14215 = vpack.c.b16 %v14070, %v14070
      %v14216 = vpack.c.b16 %v14071, %v14071
      %v14217 = vpack.c.b16 %v14072, %v14072
      %v14218 = vpack.c.b16 %v14073, %v14073
      %v14219 = vpack.c.b16 %v14074, %v14074
      %v14220 = vpack.c.b16 %v14075, %v14075
      %v14221 = vpack.c.b16 %v14076, %v14076
      %v14222 = vpack.c.b16 %v14077, %v14077
      %v14223 = vpack.c.b16 %v14078, %v14078
      %v14224 = vpack.c.b16 %v14079, %v14079
      %v14225 = vpack.c.b16 %v14080, %v14080
      %v14226 = vpack.c.b16 %v14081, %v14081
      %v14227 = vpack.c.b16 %v14082, %v14082
      %v14228 = vpack.c.b16 %v14083, %v14083
      %v14229 = vpack.c.b16 %v14084, %v14084
      %v14230 = vpack.c.b16 %v14085, %v14085
      %v14231 = vpack.c.b16 %v14086, %v14086
      %v14232 = vpack.c.b16 %v14087, %v14087
      %v14233 = vpack.c.b16 %v14088, %v14088
      %v14234 = vpack.c.b16 %v14089, %v14089
      %v14235 = vpack.c.b16 %v14090, %v14090
      %v14236 = vpack.c.b16 %v14091, %v14091
      %v14237 = vpack.c.b16 %v14092, %v14092
      %v14238 = vpack.c.b16 %v14093, %v14093
      %v14239 = vpack.c.b16 %v14094, %v14094
      %v14240 = vpack.c.b16 %v14095, %v14095
      %vm14386 = vcmask 519168
      %14387 = vst.msk [vmem:[%s170] sm:$0xf] %vm14386, %v14096
      %14388 = vst.msk [vmem:[%s170 + $0x4] sm:$0xf] %vm14386, %v14097
      %14389 = vst.msk [vmem:[%s170 + $0x8] sm:$0xf] %vm14386, %v14098
      %14390 = vst.msk [vmem:[%s170 + $0xc] sm:$0xf] %vm14386, %v14099
      %14391 = vst.msk [vmem:[%s170 + $0x10] sm:$0xf] %vm14386, %v14100
      %14392 = vst.msk [vmem:[%s170 + $0x14] sm:$0xf] %vm14386, %v14101
      %14393 = vst.msk [vmem:[%s170 + $0x18] sm:$0xf] %vm14386, %v14102
      %14394 = vst.msk [vmem:[%s170 + $0x1c] sm:$0xf] %vm14386, %v14103
      %14395 = vst.msk [vmem:[%s170 + $0x20] sm:$0xf] %vm14386, %v14104
      %14396 = vst.msk [vmem:[%s170 + $0x24] sm:$0xf] %vm14386, %v14105
      %14397 = vst.msk [vmem:[%s170 + $0x28] sm:$0xf] %vm14386, %v14106
      %14398 = vst.msk [vmem:[%s170 + $0x2c] sm:$0xf] %vm14386, %v14107
      %14399 = vst.msk [vmem:[%s170 + $0x30] sm:$0xf] %vm14386, %v14108
      %14400 = vst.msk [vmem:[%s170 + $0x34] sm:$0xf] %vm14386, %v14109
      %14401 = vst.msk [vmem:[%s170 + $0x38] sm:$0xf] %vm14386, %v14110
      %14402 = vst.msk [vmem:[%s170 + $0x3c] sm:$0xf] %vm14386, %v14111
      %14403 = vst.msk [vmem:[%s170 + $0x40] sm:$0xf] %vm14386, %v14112
      %14404 = vst.msk [vmem:[%s170 + $0x44] sm:$0xf] %vm14386, %v14113
      %14405 = vst.msk [vmem:[%s170 + $0x48] sm:$0xf] %vm14386, %v14114
      %14406 = vst.msk [vmem:[%s170 + $0x4c] sm:$0xf] %vm14386, %v14115
      %14407 = vst.msk [vmem:[%s170 + $0x50] sm:$0xf] %vm14386, %v14116
      %14408 = vst.msk [vmem:[%s170 + $0x54] sm:$0xf] %vm14386, %v14117
      %14409 = vst.msk [vmem:[%s170 + $0x58] sm:$0xf] %vm14386, %v14118
      %14410 = vst.msk [vmem:[%s170 + $0x5c] sm:$0xf] %vm14386, %v14119
      %14411 = vst.msk [vmem:[%s170 + $0x60] sm:$0xf] %vm14386, %v14120
      %14412 = vst.msk [vmem:[%s170 + $0x64] sm:$0xf] %vm14386, %v14121
      %14413 = vst.msk [vmem:[%s170 + $0x68] sm:$0xf] %vm14386, %v14122
      %14414 = vst.msk [vmem:[%s170 + $0x6c] sm:$0xf] %vm14386, %v14123
      %14415 = vst.msk [vmem:[%s170 + $0x70] sm:$0xf] %vm14386, %v14124
      %14416 = vst.msk [vmem:[%s170 + $0x74] sm:$0xf] %vm14386, %v14125
      %14417 = vst.msk [vmem:[%s170 + $0x78] sm:$0xf] %vm14386, %v14126
      %14418 = vst.msk [vmem:[%s170 + $0x7c] sm:$0xf] %vm14386, %v14127
      %14419 = vst.msk [vmem:[%s170 + $0x80] sm:$0xf] %vm14386, %v14128
      %14420 = vst.msk [vmem:[%s170 + $0x84] sm:$0xf] %vm14386, %v14129
      %14421 = vst.msk [vmem:[%s170 + $0x88] sm:$0xf] %vm14386, %v14130
      %14422 = vst.msk [vmem:[%s170 + $0x8c] sm:$0xf] %vm14386, %v14131
      %14423 = vst.msk [vmem:[%s170 + $0x90] sm:$0xf] %vm14386, %v14132
      %14424 = vst.msk [vmem:[%s170 + $0x94] sm:$0xf] %vm14386, %v14133
      %14425 = vst.msk [vmem:[%s170 + $0x98] sm:$0xf] %vm14386, %v14134
      %14426 = vst.msk [vmem:[%s170 + $0x9c] sm:$0xf] %vm14386, %v14135
      %14427 = vst.msk [vmem:[%s170 + $0xa0] sm:$0xf] %vm14386, %v14136
      %14428 = vst.msk [vmem:[%s170 + $0xa4] sm:$0xf] %vm14386, %v14137
      %14429 = vst.msk [vmem:[%s170 + $0xa8] sm:$0xf] %vm14386, %v14138
      %14430 = vst.msk [vmem:[%s170 + $0xac] sm:$0xf] %vm14386, %v14139
      %14431 = vst.msk [vmem:[%s170 + $0xb0] sm:$0xf] %vm14386, %v14140
      %14432 = vst.msk [vmem:[%s170 + $0xb4] sm:$0xf] %vm14386, %v14141
      %14433 = vst.msk [vmem:[%s170 + $0xb8] sm:$0xf] %vm14386, %v14142
      %14434 = vst.msk [vmem:[%s170 + $0xbc] sm:$0xf] %vm14386, %v14143
      %14435 = vst.msk [vmem:[%s170 + $0xc0] sm:$0xf] %vm14386, %v14144
      %14436 = vst.msk [vmem:[%s170 + $0xc4] sm:$0xf] %vm14386, %v14145
      %14437 = vst.msk [vmem:[%s170 + $0xc8] sm:$0xf] %vm14386, %v14146
      %14438 = vst.msk [vmem:[%s170 + $0xcc] sm:$0xf] %vm14386, %v14147
      %14439 = vst.msk [vmem:[%s170 + $0xd0] sm:$0xf] %vm14386, %v14148
      %14440 = vst.msk [vmem:[%s170 + $0xd4] sm:$0xf] %vm14386, %v14149
      %14441 = vst.msk [vmem:[%s170 + $0xd8] sm:$0xf] %vm14386, %v14150
      %14442 = vst.msk [vmem:[%s170 + $0xdc] sm:$0xf] %vm14386, %v14151
      %14443 = vst.msk [vmem:[%s170 + $0xe0] sm:$0xf] %vm14386, %v14152
      %14444 = vst.msk [vmem:[%s170 + $0xe4] sm:$0xf] %vm14386, %v14153
      %14445 = vst.msk [vmem:[%s170 + $0xe8] sm:$0xf] %vm14386, %v14154
      %14446 = vst.msk [vmem:[%s170 + $0xec] sm:$0xf] %vm14386, %v14155
      %14447 = vst.msk [vmem:[%s170 + $0xf0] sm:$0xf] %vm14386, %v14156
      %14448 = vst.msk [vmem:[%s170 + $0xf4] sm:$0xf] %vm14386, %v14157
      %14449 = vst.msk [vmem:[%s170 + $0xf8] sm:$0xf] %vm14386, %v14158
      %14450 = vst.msk [vmem:[%s170 + $0xfc] sm:$0xf] %vm14386, %v14159
      %14451 = vst.msk [vmem:[%s170 + $0x100] sm:$0xf] %vm14386, %v14160
      %14452 = vst.msk [vmem:[%s170 + $0x104] sm:$0xf] %vm14386, %v14161
      %14453 = vst.msk [vmem:[%s170 + $0x108] sm:$0xf] %vm14386, %v14162
      %14454 = vst.msk [vmem:[%s170 + $0x10c] sm:$0xf] %vm14386, %v14163
      %14455 = vst.msk [vmem:[%s170 + $0x110] sm:$0xf] %vm14386, %v14164
      %14456 = vst.msk [vmem:[%s170 + $0x114] sm:$0xf] %vm14386, %v14165
      %14457 = vst.msk [vmem:[%s170 + $0x118] sm:$0xf] %vm14386, %v14166
      %14458 = vst.msk [vmem:[%s170 + $0x11c] sm:$0xf] %vm14386, %v14167
      %14459 = vst.msk [vmem:[%s170 + $0x120] sm:$0xf] %vm14386, %v14168
      %14460 = vst.msk [vmem:[%s170 + $0x124] sm:$0xf] %vm14386, %v14169
      %14461 = vst.msk [vmem:[%s170 + $0x128] sm:$0xf] %vm14386, %v14170
      %14462 = vst.msk [vmem:[%s170 + $0x12c] sm:$0xf] %vm14386, %v14171
      %14463 = vst.msk [vmem:[%s170 + $0x130] sm:$0xf] %vm14386, %v14172
      %14464 = vst.msk [vmem:[%s170 + $0x134] sm:$0xf] %vm14386, %v14173
      %14465 = vst.msk [vmem:[%s170 + $0x138] sm:$0xf] %vm14386, %v14174
      %14466 = vst.msk [vmem:[%s170 + $0x13c] sm:$0xf] %vm14386, %v14175
      %14467 = vst.msk [vmem:[%s170 + $0x140] sm:$0xf] %vm14386, %v14176
      %14468 = vst.msk [vmem:[%s170 + $0x144] sm:$0xf] %vm14386, %v14177
      %14469 = vst.msk [vmem:[%s170 + $0x148] sm:$0xf] %vm14386, %v14178
      %14470 = vst.msk [vmem:[%s170 + $0x14c] sm:$0xf] %vm14386, %v14179
      %14471 = vst.msk [vmem:[%s170 + $0x150] sm:$0xf] %vm14386, %v14180
      %14472 = vst.msk [vmem:[%s170 + $0x154] sm:$0xf] %vm14386, %v14181
      %14473 = vst.msk [vmem:[%s170 + $0x158] sm:$0xf] %vm14386, %v14182
      %14474 = vst.msk [vmem:[%s170 + $0x15c] sm:$0xf] %vm14386, %v14183
      %14475 = vst.msk [vmem:[%s170 + $0x160] sm:$0xf] %vm14386, %v14184
      %14476 = vst.msk [vmem:[%s170 + $0x164] sm:$0xf] %vm14386, %v14185
      %14477 = vst.msk [vmem:[%s170 + $0x168] sm:$0xf] %vm14386, %v14186
      %14478 = vst.msk [vmem:[%s170 + $0x16c] sm:$0xf] %vm14386, %v14187
      %14479 = vst.msk [vmem:[%s170 + $0x170] sm:$0xf] %vm14386, %v14188
      %14480 = vst.msk [vmem:[%s170 + $0x174] sm:$0xf] %vm14386, %v14189
      %14481 = vst.msk [vmem:[%s170 + $0x178] sm:$0xf] %vm14386, %v14190
      %14482 = vst.msk [vmem:[%s170 + $0x17c] sm:$0xf] %vm14386, %v14191
      %14483 = vst.msk [vmem:[%s170 + $0x180] sm:$0xf] %vm14386, %v14192
      %14484 = vst.msk [vmem:[%s170 + $0x184] sm:$0xf] %vm14386, %v14193
      %14485 = vst.msk [vmem:[%s170 + $0x188] sm:$0xf] %vm14386, %v14194
      %14486 = vst.msk [vmem:[%s170 + $0x18c] sm:$0xf] %vm14386, %v14195
      %14487 = vst.msk [vmem:[%s170 + $0x190] sm:$0xf] %vm14386, %v14196
      %14488 = vst.msk [vmem:[%s170 + $0x194] sm:$0xf] %vm14386, %v14197
      %14489 = vst.msk [vmem:[%s170 + $0x198] sm:$0xf] %vm14386, %v14198
      %14490 = vst.msk [vmem:[%s170 + $0x19c] sm:$0xf] %vm14386, %v14199
      %14491 = vst.msk [vmem:[%s170 + $0x1a0] sm:$0xf] %vm14386, %v14200
      %14492 = vst.msk [vmem:[%s170 + $0x1a4] sm:$0xf] %vm14386, %v14201
      %14493 = vst.msk [vmem:[%s170 + $0x1a8] sm:$0xf] %vm14386, %v14202
      %14494 = vst.msk [vmem:[%s170 + $0x1ac] sm:$0xf] %vm14386, %v14203
      %14495 = vst.msk [vmem:[%s170 + $0x1b0] sm:$0xf] %vm14386, %v14204
      %14496 = vst.msk [vmem:[%s170 + $0x1b4] sm:$0xf] %vm14386, %v14205
      %14497 = vst.msk [vmem:[%s170 + $0x1b8] sm:$0xf] %vm14386, %v14206
      %14498 = vst.msk [vmem:[%s170 + $0x1bc] sm:$0xf] %vm14386, %v14207
      %14499 = vst.msk [vmem:[%s170 + $0x1c0] sm:$0xf] %vm14386, %v14208
      %14500 = vst.msk [vmem:[%s170 + $0x1c4] sm:$0xf] %vm14386, %v14209
      %14501 = vst.msk [vmem:[%s170 + $0x1c8] sm:$0xf] %vm14386, %v14210
      %14502 = vst.msk [vmem:[%s170 + $0x1cc] sm:$0xf] %vm14386, %v14211
      %14503 = vst.msk [vmem:[%s170 + $0x1d0] sm:$0xf] %vm14386, %v14212
      %14504 = vst.msk [vmem:[%s170 + $0x1d4] sm:$0xf] %vm14386, %v14213
      %14505 = vst.msk [vmem:[%s170 + $0x1d8] sm:$0xf] %vm14386, %v14214
      %14506 = vst.msk [vmem:[%s170 + $0x1dc] sm:$0xf] %vm14386, %v14215
      %14507 = vst.msk [vmem:[%s170 + $0x1e0] sm:$0xf] %vm14386, %v14216
      %14508 = vst.msk [vmem:[%s170 + $0x1e4] sm:$0xf] %vm14386, %v14217
      %14509 = vst.msk [vmem:[%s170 + $0x1e8] sm:$0xf] %vm14386, %v14218
      %14510 = vst.msk [vmem:[%s170 + $0x1ec] sm:$0xf] %vm14386, %v14219
      %14511 = vst.msk [vmem:[%s170 + $0x1f0] sm:$0xf] %vm14386, %v14220
      %14512 = vst.msk [vmem:[%s170 + $0x1f4] sm:$0xf] %vm14386, %v14221
      %14513 = vst.msk [vmem:[%s170 + $0x1f8] sm:$0xf] %vm14386, %v14222
      %14514 = vst.msk [vmem:[%s170 + $0x1fc] sm:$0xf] %vm14386, %v14223
      %14515 = vst.msk [vmem:[%s170 + $0x200] sm:$0xf] %vm14386, %v14224
      %14516 = vst.msk [vmem:[%s170 + $0x204] sm:$0xf] %vm14386, %v14225
      %14517 = vst.msk [vmem:[%s170 + $0x208] sm:$0xf] %vm14386, %v14226
      %14518 = vst.msk [vmem:[%s170 + $0x20c] sm:$0xf] %vm14386, %v14227
      %14519 = vst.msk [vmem:[%s170 + $0x210] sm:$0xf] %vm14386, %v14228
      %14520 = vst.msk [vmem:[%s170 + $0x214] sm:$0xf] %vm14386, %v14229
      %14521 = vst.msk [vmem:[%s170 + $0x218] sm:$0xf] %vm14386, %v14230
      %14522 = vst.msk [vmem:[%s170 + $0x21c] sm:$0xf] %vm14386, %v14231
      %14523 = vst.msk [vmem:[%s170 + $0x220] sm:$0xf] %vm14386, %v14232
      %14524 = vst.msk [vmem:[%s170 + $0x224] sm:$0xf] %vm14386, %v14233
      %14525 = vst.msk [vmem:[%s170 + $0x228] sm:$0xf] %vm14386, %v14234
      %14526 = vst.msk [vmem:[%s170 + $0x22c] sm:$0xf] %vm14386, %v14235
      %14527 = vst.msk [vmem:[%s170 + $0x230] sm:$0xf] %vm14386, %v14236
      %14528 = vst.msk [vmem:[%s170 + $0x234] sm:$0xf] %vm14386, %v14237
      %14529 = vst.msk [vmem:[%s170 + $0x238] sm:$0xf] %vm14386, %v14238
      %14530 = vst.msk [vmem:[%s170 + $0x23c] sm:$0xf] %vm14386, %v14239
      %vm14531 = vcmask 517120
      %14532 = vst.msk [vmem:[%s170 + $0x240] sm:$0x3] %vm14531, %v14240
      %p14533 = scmp.lt.s32.totalorder %s14, 1
      %s14534 = scalar_select %p14533, %s14, 1
      %s14535 = smul.addr %s14534, 145
      %s14536 = smul.addr %s14535, 4
      %s14537 = scalar_lea.vmem %s3, %s14536
      // Predicated region
      $region33: #{tpu_custom_call.1} parent=31 // pred_check
        %p14538 = pneg %p100
      $region34: #{tpu_custom_call.1} parent=31 // pred_check_branch
        %14540 = sbr.rel (%p14538) target = $region36
      $region35: #{tpu_custom_call.1} parent=31 // pred_region
        _
      $region36: #{tpu_custom_call.1} parent=31 // pred_fallthru
        _
    $region32: #{tpu_custom_call.1} parent=5 // pred_fallthru
      _
    %p14541 = scmp.le.s32.totalorder 2, %s9
    // Predicated region
    $region37: #{tpu_custom_call.1} parent=5 // pred_check
      %p14542 = pneg %p14541
    $region38: #{tpu_custom_call.1} parent=5 // pred_check_branch
      %14544 = sbr.rel (%p14542) target = $region40
    $region39: #{tpu_custom_call.1} parent=5 // pred_region
      %s14545 = ssub.s32 %s9, 2
      // Predicated region
      $region41: #{tpu_custom_call.1} parent=39 // pred_check
        %p14546 = pneg %p106
      $region42: #{tpu_custom_call.1} parent=39 // pred_check_branch
        %14548 = sbr.rel (%p14546) target = $region44
      $region43: #{tpu_custom_call.1} parent=39 // pred_region
        %p14549 = scmp.lt.s32.totalorder %s15, 1
        %s14550 = scalar_select %p14549, %s15, 1
        %s14551 = smul.addr %s14550, 145
        %s14552 = smul.addr %s14551, 4
        %s14553 = scalar_lea.vmem %s3, %s14552
      $region44: #{tpu_custom_call.1} parent=39 // pred_fallthru
        _
    $region40: #{tpu_custom_call.1} parent=5 // pred_fallthru
      _
  $region6: #{tpu_custom_call.1} parent=0 // loop_footer
    %s13 = sadd.s32 1, %s9
  $region7: #{tpu_custom_call.1} parent=0 // loop_footer_branch
    %8 = sbr.rel target = $region3
  $region8: #{tpu_custom_call.1} parent=0 // loop_exit
    _

</llo_original>
